<compile_context>
chip_gen: v7x
topology: tpu7x:2x2x1
jax: 0.10.0
libtpu: 0.0.40
codegen_flags: <defaults>
</compile_context>

<pallas_src>
import jax
import jax.numpy as jnp
import numpy as np
from jax.experimental import pallas as pl
from jax.experimental.pallas import tpu as pltpu


def _make_block_kernel(nb_layers, in_planes, growth_rate, H, W):
    L, C0, G = nb_layers, in_planes, growth_rate
    c_max = C0 + (L - 1) * G      # widest conv input (last layer)

    def kernel(*refs):
        x_ref = refs[0]                      # (1, H, W, C0)        f32
        layer_refs = refs[1:1 + 3 * L]       # per layer: scale(1,Cin), shift(1,Cin), w(9*Cin,G) bf16
        o_ref = refs[1 + 3 * L]              # (1, H, W, C_final)   f32  (resident feature map)
        pad_ref = refs[2 + 3 * L]            # (H+2, W+2, c_max)    bf16 scratch (padded activation)
        col_ref = refs[3 + 3 * L]            # (H, W, 9*c_max)      bf16 scratch (im2col patches)

        pdt = pad_ref.dtype

        # Zero ONLY the 1-pixel padding border, once per grid step (interior is rewritten
        # by every layer, border is never written again).
        pad_ref[0:1, :, :] = jnp.zeros((1, W + 2, c_max), pdt)
        pad_ref[H + 1:H + 2, :, :] = jnp.zeros((1, W + 2, c_max), pdt)
        pad_ref[:, 0:1, :] = jnp.zeros((H + 2, 1, c_max), pdt)
        pad_ref[:, W + 1:W + 2, :] = jnp.zeros((H + 2, 1, c_max), pdt)

        # Seed the resident feature map (== output block) with the original input channels.
        o_ref[:, :, :, :C0] = x_ref[...]

        for i in range(L):                                    # unrolled at trace time
            cin = C0 + i * G
            scale_ref = layer_refs[3 * i]
            shift_ref = layer_refs[3 * i + 1]
            w_ref = layer_refs[3 * i + 2]                     # (9*cin, G) bf16

            # BatchNorm (eval, folded to scale/shift) + ReLU, in f32, on the raw features.
            x = o_ref[0, :, :, :cin]                          # (H, W, cin) f32
            a = jnp.maximum(x * scale_ref[0] + shift_ref[0], 0.0)

            # Store activation into the padded-scratch interior as the bf16 MXU operand.
            pad_ref[1:H + 1, 1:W + 1, :cin] = a.astype(pdt)

            # im2col: col[h, w, t*cin + c] = pad[h + kh, w + kw, c],  t = kh*3 + kw
            for kh in range(3):
                for kw in range(3):
                    t = kh * 3 + kw
                    col_ref[:, :, t * cin:(t + 1) * cin] = pad_ref[kh:kh + H, kw:kw + W, :cin]

            # One MXU matmul per layer: (H*W, 9*cin) @ (9*cin, G), f32 accumulation.
            patches = col_ref[:, :, :9 * cin].reshape(H * W, 9 * cin)
            out = jnp.dot(patches, w_ref[...], preferred_element_type=jnp.float32)

            # torch.cat([x, out], dim=channel): write the new G channels in place.
            o_ref[:, :, :, cin:cin + G] = out.reshape(1, H, W, G).astype(o_ref.dtype)

    return kernel


def ten_dense_block_forward(x_nchw, params, growth_rate):
    """TenDenseBlock.forward as a single fused Pallas kernel (feature map resident in VMEM)."""
    x = jnp.transpose(x_nchw, (0, 2, 3, 1)).astype(jnp.float32)   # NCHW -> NHWC
    N, H, W, C0 = x.shape
    L = len(params)
    G = growth_rate
    c_final = C0 + L * G
    c_max = C0 + (L - 1) * G

    operands = [x]
    in_specs = [pl.BlockSpec((1, H, W, C0), lambda n: (n, 0, 0, 0))]
    for i, p in enumerate(params):
        cin = C0 + i * G
        # (3,3,cin,G) -> (9*cin, G); row index (kh*3+kw)*cin + c matches the im2col layout.
        w9 = p["w"].reshape(9 * cin, G).astype(jnp.bfloat16)
        operands += [p["scale"], p["shift"], w9]
        in_specs += [
            pl.BlockSpec((1, cin), lambda n: (0, 0)),
            pl.BlockSpec((1, cin), lambda n: (0, 0)),
            pl.BlockSpec((9 * cin, G), lambda n: (0, 0)),
        ]

    out = pl.pallas_call(
        _make_block_kernel(L, C0, G, H, W),
        out_shape=jax.ShapeDtypeStruct((N, H, W, c_final), jnp.float32),
        grid_spec=pltpu.PrefetchScalarGridSpec(
            num_scalar_prefetch=0,
            grid=(N,),                              # >= 2 steps -> both v7x TCs get work
            in_specs=in_specs,
            out_specs=pl.BlockSpec((1, H, W, c_final), lambda n: (n, 0, 0, 0)),
            scratch_shapes=[
                pltpu.VMEM((H + 2, W + 2, c_max), jnp.bfloat16),   # padded activation
                pltpu.VMEM((H, W, 9 * c_max), jnp.bfloat16),       # im2col patches
            ],
        ),
        compiler_params=pltpu.CompilerParams(
            dimension_semantics=("parallel",),
            vmem_limit_bytes=32 * 1024 * 1024,      # explicit budget, safe on v5e/v6e/v7x
        ),
    )(*operands)

    return jnp.transpose(out, (0, 3, 1, 2))         # NHWC -> NCHW


def init_params(key, nb_layers, in_planes, growth_rate):
    """Deterministic synthetic parameters for each dense layer (BN folded to scale/shift)."""
    eps = 1e-5
    params = []
    for i in range(nb_layers):
        cin = in_planes + i * growth_rate
        key, k_w, k_g, k_b, k_m, k_v = jax.random.split(key, 6)
        fan = 9 * cin
        w = jax.random.normal(k_w, (3, 3, cin, growth_rate), jnp.float32) * np.sqrt(2.0 / fan)
        gamma = 1.0 + 0.1 * jax.random.normal(k_g, (cin,), jnp.float32)
        beta = 0.1 * jax.random.normal(k_b, (cin,), jnp.float32)
        mean = 0.1 * jax.random.normal(k_m, (cin,), jnp.float32)
        var = jnp.abs(1.0 + 0.1 * jax.random.normal(k_v, (cin,), jnp.float32))
        scale = gamma / jnp.sqrt(var + eps)
        shift = beta - mean * scale
        params.append(dict(w=w,
                           scale=scale.reshape(1, cin),
                           shift=shift.reshape(1, cin)))
    return params


def reference_forward(x_nchw, params, growth_rate):
    """Pure-JAX f32 reference (same math, XLA conv) for verification."""
    x = jnp.transpose(x_nchw, (0, 2, 3, 1))
    for p in params:
        a = jnp.maximum(x * p["scale"][0] + p["shift"][0], 0.0)
        out = jax.lax.conv_general_dilated(
            a, p["w"], window_strides=(1, 1), padding="SAME",
            dimension_numbers=("NHWC", "HWIO", "NHWC"))
        x = jnp.concatenate([x, out], axis=-1)
    return jnp.transpose(x, (0, 3, 1, 2))


if __name__ == "__main__":
    nb_layers, in_planes, growth_rate = 3, 4, 4
    N, H, W = 2, 16, 16

    key = jax.random.PRNGKey(0)
    key, kx = jax.random.split(key)
    x = jax.random.normal(kx, (N, in_planes, H, W), jnp.float32)   # NCHW, like torch
    params = init_params(key, nb_layers, in_planes, growth_rate)

    y = ten_dense_block_forward(x, params, growth_rate)
    y = jax.block_until_ready(y)

    y_ref = reference_forward(x, params, growth_rate)
    # Kernel feeds the MXU bf16 operands (f32 accumulate); reference is all-f32,
    # so tolerance reflects bf16 operand rounding across 3 stacked layers.
    np.testing.assert_allclose(np.asarray(y), np.asarray(y_ref), rtol=5e-2, atol=5e-2)
    assert y.shape == (N, in_planes + nb_layers * growth_rate, H, W)

    print("KERNEL_OK")
</pallas_src>

<mosaic_0001>
module attributes {stable_mosaic.version = 11 : i64} {
  func.func @kernel(%arg0: i32, %arg1: memref<1x16x16x4xf32, #tpu.memory_space<vmem>>, %arg2: memref<1x4xf32, #tpu.memory_space<vmem>>, %arg3: memref<1x4xf32, #tpu.memory_space<vmem>>, %arg4: memref<36x4xbf16, #tpu.memory_space<vmem>>, %arg5: memref<1x8xf32, #tpu.memory_space<vmem>>, %arg6: memref<1x8xf32, #tpu.memory_space<vmem>>, %arg7: memref<72x4xbf16, #tpu.memory_space<vmem>>, %arg8: memref<1x12xf32, #tpu.memory_space<vmem>>, %arg9: memref<1x12xf32, #tpu.memory_space<vmem>>, %arg10: memref<108x4xbf16, #tpu.memory_space<vmem>>, %arg11: memref<1x16x16x16xf32, #tpu.memory_space<vmem>>, %arg12: memref<18x18x12xbf16, #tpu.memory_space<vmem>>, %arg13: memref<16x16x108xbf16, #tpu.memory_space<vmem>>) attributes {dimension_semantics = [#tpu.dimension_semantics<parallel>], iteration_bounds = array<i64: 2>, scalar_prefetch = 0 : i64, scratch_operands = 2 : i64, tpu.core_type = #tpu.core_type<tc>, window_params = [{transform_indices = @transform_0, window_bounds = array<i64: 1, 16, 16, 4>}, {pipeline_mode = #tpu.pipeline_mode<synchronous>, transform_indices = @transform_1, window_bounds = array<i64: 1, 4>}, {pipeline_mode = #tpu.pipeline_mode<synchronous>, transform_indices = @transform_2, window_bounds = array<i64: 1, 4>}, {pipeline_mode = #tpu.pipeline_mode<synchronous>, transform_indices = @transform_3, window_bounds = array<i64: 36, 4>}, {pipeline_mode = #tpu.pipeline_mode<synchronous>, transform_indices = @transform_4, window_bounds = array<i64: 1, 8>}, {pipeline_mode = #tpu.pipeline_mode<synchronous>, transform_indices = @transform_5, window_bounds = array<i64: 1, 8>}, {pipeline_mode = #tpu.pipeline_mode<synchronous>, transform_indices = @transform_6, window_bounds = array<i64: 72, 4>}, {pipeline_mode = #tpu.pipeline_mode<synchronous>, transform_indices = @transform_7, window_bounds = array<i64: 1, 12>}, {pipeline_mode = #tpu.pipeline_mode<synchronous>, transform_indices = @transform_8, window_bounds = array<i64: 1, 12>}, {pipeline_mode = #tpu.pipeline_mode<synchronous>, transform_indices = @transform_9, window_bounds = array<i64: 108, 4>}, {transform_indices = @transform_10, window_bounds = array<i64: 1, 16, 16, 16>}]} {
    %cst = arith.constant 0.000000e+00 : bf16
    %0 = vector.broadcast %cst : bf16 to vector<1x18x12xbf16>
    %c0 = arith.constant 0 : index
    %c0_0 = arith.constant 0 : index
    %c0_1 = arith.constant 0 : index
    %1 = vector.load %arg12[%c0, %c0_0, %c0_1] : memref<18x18x12xbf16, #tpu.memory_space<vmem>>, vector<1x18x12xbf16>
    tpu.vector_store %arg12[%c0, %c0_0, %c0_1], %0 {strides = array<i32>} : memref<18x18x12xbf16, #tpu.memory_space<vmem>>, vector<1x18x12xbf16>,
    %cst_2 = arith.constant 0.000000e+00 : bf16
    %2 = vector.broadcast %cst_2 : bf16 to vector<1x18x12xbf16>
    %c17 = arith.constant 17 : index
    %c0_3 = arith.constant 0 : index
    %c0_4 = arith.constant 0 : index
    %3 = vector.load %arg12[%c17, %c0_3, %c0_4] : memref<18x18x12xbf16, #tpu.memory_space<vmem>>, vector<1x18x12xbf16>
    tpu.vector_store %arg12[%c17, %c0_3, %c0_4], %2 {strides = array<i32>} : memref<18x18x12xbf16, #tpu.memory_space<vmem>>, vector<1x18x12xbf16>,
    %cst_5 = arith.constant 0.000000e+00 : bf16
    %4 = vector.broadcast %cst_5 : bf16 to vector<18x1x12xbf16>
    %c0_6 = arith.constant 0 : index
    %c0_7 = arith.constant 0 : index
    %c0_8 = arith.constant 0 : index
    %5 = vector.load %arg12[%c0_6, %c0_7, %c0_8] : memref<18x18x12xbf16, #tpu.memory_space<vmem>>, vector<18x1x12xbf16>
    tpu.vector_store %arg12[%c0_6, %c0_7, %c0_8], %4 {strides = array<i32>} : memref<18x18x12xbf16, #tpu.memory_space<vmem>>, vector<18x1x12xbf16>,
    %cst_9 = arith.constant 0.000000e+00 : bf16
    %6 = vector.broadcast %cst_9 : bf16 to vector<18x1x12xbf16>
    %c0_10 = arith.constant 0 : index
    %c17_11 = arith.constant 17 : index
    %c0_12 = arith.constant 0 : index
    %7 = vector.load %arg12[%c0_10, %c17_11, %c0_12] : memref<18x18x12xbf16, #tpu.memory_space<vmem>>, vector<18x1x12xbf16>
    tpu.vector_store %arg12[%c0_10, %c17_11, %c0_12], %6 {strides = array<i32>} : memref<18x18x12xbf16, #tpu.memory_space<vmem>>, vector<18x1x12xbf16>,
    %c0_13 = arith.constant 0 : index
    %c0_14 = arith.constant 0 : index
    %c0_15 = arith.constant 0 : index
    %c0_16 = arith.constant 0 : index
    %8 = vector.load %arg1[%c0_13, %c0_14, %c0_15, %c0_16] : memref<1x16x16x4xf32, #tpu.memory_space<vmem>>, vector<1x16x16x4xf32>
    %c0_17 = arith.constant 0 : index
    %c0_18 = arith.constant 0 : index
    %c0_19 = arith.constant 0 : index
    %c0_20 = arith.constant 0 : index
    %9 = vector.load %arg11[%c0_17, %c0_18, %c0_19, %c0_20] : memref<1x16x16x16xf32, #tpu.memory_space<vmem>>, vector<1x16x16x4xf32>
    tpu.vector_store %arg11[%c0_17, %c0_18, %c0_19, %c0_20], %8 {strides = array<i32>} : memref<1x16x16x16xf32, #tpu.memory_space<vmem>>, vector<1x16x16x4xf32>,
    %c0_21 = arith.constant 0 : index
    %c0_22 = arith.constant 0 : index
    %c0_23 = arith.constant 0 : index
    %c0_24 = arith.constant 0 : index
    %10 = vector.load %arg11[%c0_21, %c0_22, %c0_23, %c0_24] : memref<1x16x16x16xf32, #tpu.memory_space<vmem>>, vector<1x16x16x4xf32>
    %11 = vector.shape_cast %10 : vector<1x16x16x4xf32> to vector<16x16x4xf32>
    %c0_25 = arith.constant 0 : index
    %c0_26 = arith.constant 0 : index
    %12 = vector.load %arg2[%c0_25, %c0_26] : memref<1x4xf32, #tpu.memory_space<vmem>>, vector<1x4xf32>
    %13 = vector.shape_cast %12 : vector<1x4xf32> to vector<4xf32>
    %14 = vector.shape_cast %13 : vector<4xf32> to vector<1x1x4xf32>
    %15 = vector.broadcast %14 : vector<1x1x4xf32> to vector<16x16x4xf32>
    %16 = arith.mulf %11, %15 : vector<16x16x4xf32>
    %c0_27 = arith.constant 0 : index
    %c0_28 = arith.constant 0 : index
    %17 = vector.load %arg3[%c0_27, %c0_28] : memref<1x4xf32, #tpu.memory_space<vmem>>, vector<1x4xf32>
    %18 = vector.shape_cast %17 : vector<1x4xf32> to vector<4xf32>
    %19 = vector.shape_cast %18 : vector<4xf32> to vector<1x1x4xf32>
    %20 = vector.broadcast %19 : vector<1x1x4xf32> to vector<16x16x4xf32>
    %21 = arith.addf %16, %20 : vector<16x16x4xf32>
    %cst_29 = arith.constant 0.000000e+00 : f32
    %22 = vector.broadcast %cst_29 : f32 to vector<16x16x4xf32>
    %23 = arith.maximumf %21, %22 : vector<16x16x4xf32>
    %24 = arith.truncf %23 : vector<16x16x4xf32> to vector<16x16x4xbf16>
    %c1 = arith.constant 1 : index
    %c1_30 = arith.constant 1 : index
    %c0_31 = arith.constant 0 : index
    %25 = vector.load %arg12[%c1, %c1_30, %c0_31] : memref<18x18x12xbf16, #tpu.memory_space<vmem>>, vector<16x16x4xbf16>
    tpu.vector_store %arg12[%c1, %c1_30, %c0_31], %24 {strides = array<i32>} : memref<18x18x12xbf16, #tpu.memory_space<vmem>>, vector<16x16x4xbf16>,
    %c0_32 = arith.constant 0 : index
    %c0_33 = arith.constant 0 : index
    %c0_34 = arith.constant 0 : index
    %26 = vector.load %arg12[%c0_32, %c0_33, %c0_34] : memref<18x18x12xbf16, #tpu.memory_space<vmem>>, vector<16x16x4xbf16>
    %c0_35 = arith.constant 0 : index
    %c0_36 = arith.constant 0 : index
    %c0_37 = arith.constant 0 : index
    %27 = vector.load %arg13[%c0_35, %c0_36, %c0_37] : memref<16x16x108xbf16, #tpu.memory_space<vmem>>, vector<16x16x4xbf16>
    tpu.vector_store %arg13[%c0_35, %c0_36, %c0_37], %26 {strides = array<i32>} : memref<16x16x108xbf16, #tpu.memory_space<vmem>>, vector<16x16x4xbf16>,
    %c0_38 = arith.constant 0 : index
    %c1_39 = arith.constant 1 : index
    %c0_40 = arith.constant 0 : index
    %28 = vector.load %arg12[%c0_38, %c1_39, %c0_40] : memref<18x18x12xbf16, #tpu.memory_space<vmem>>, vector<16x16x4xbf16>
    %c0_41 = arith.constant 0 : index
    %c0_42 = arith.constant 0 : index
    %c4 = arith.constant 4 : index
    %29 = vector.load %arg13[%c0_41, %c0_42, %c4] : memref<16x16x108xbf16, #tpu.memory_space<vmem>>, vector<16x16x4xbf16>
    tpu.vector_store %arg13[%c0_41, %c0_42, %c4], %28 {strides = array<i32>} : memref<16x16x108xbf16, #tpu.memory_space<vmem>>, vector<16x16x4xbf16>,
    %c0_43 = arith.constant 0 : index
    %c2 = arith.constant 2 : index
    %c0_44 = arith.constant 0 : index
    %30 = vector.load %arg12[%c0_43, %c2, %c0_44] : memref<18x18x12xbf16, #tpu.memory_space<vmem>>, vector<16x16x4xbf16>
    %c0_45 = arith.constant 0 : index
    %c0_46 = arith.constant 0 : index
    %c8 = arith.constant 8 : index
    %31 = vector.load %arg13[%c0_45, %c0_46, %c8] : memref<16x16x108xbf16, #tpu.memory_space<vmem>>, vector<16x16x4xbf16>
    tpu.vector_store %arg13[%c0_45, %c0_46, %c8], %30 {strides = array<i32>} : memref<16x16x108xbf16, #tpu.memory_space<vmem>>, vector<16x16x4xbf16>,
    %c1_47 = arith.constant 1 : index
    %c0_48 = arith.constant 0 : index
    %c0_49 = arith.constant 0 : index
    %32 = vector.load %arg12[%c1_47, %c0_48, %c0_49] : memref<18x18x12xbf16, #tpu.memory_space<vmem>>, vector<16x16x4xbf16>
    %c0_50 = arith.constant 0 : index
    %c0_51 = arith.constant 0 : index
    %c12 = arith.constant 12 : index
    %33 = vector.load %arg13[%c0_50, %c0_51, %c12] : memref<16x16x108xbf16, #tpu.memory_space<vmem>>, vector<16x16x4xbf16>
    tpu.vector_store %arg13[%c0_50, %c0_51, %c12], %32 {strides = array<i32>} : memref<16x16x108xbf16, #tpu.memory_space<vmem>>, vector<16x16x4xbf16>,
    %c1_52 = arith.constant 1 : index
    %c1_53 = arith.constant 1 : index
    %c0_54 = arith.constant 0 : index
    %34 = vector.load %arg12[%c1_52, %c1_53, %c0_54] : memref<18x18x12xbf16, #tpu.memory_space<vmem>>, vector<16x16x4xbf16>
    %c0_55 = arith.constant 0 : index
    %c0_56 = arith.constant 0 : index
    %c16 = arith.constant 16 : index
    %35 = vector.load %arg13[%c0_55, %c0_56, %c16] : memref<16x16x108xbf16, #tpu.memory_space<vmem>>, vector<16x16x4xbf16>
    tpu.vector_store %arg13[%c0_55, %c0_56, %c16], %34 {strides = array<i32>} : memref<16x16x108xbf16, #tpu.memory_space<vmem>>, vector<16x16x4xbf16>,
    %c1_57 = arith.constant 1 : index
    %c2_58 = arith.constant 2 : index
    %c0_59 = arith.constant 0 : index
    %36 = vector.load %arg12[%c1_57, %c2_58, %c0_59] : memref<18x18x12xbf16, #tpu.memory_space<vmem>>, vector<16x16x4xbf16>
    %c0_60 = arith.constant 0 : index
    %c0_61 = arith.constant 0 : index
    %c20 = arith.constant 20 : index
    %37 = vector.load %arg13[%c0_60, %c0_61, %c20] : memref<16x16x108xbf16, #tpu.memory_space<vmem>>, vector<16x16x4xbf16>
    tpu.vector_store %arg13[%c0_60, %c0_61, %c20], %36 {strides = array<i32>} : memref<16x16x108xbf16, #tpu.memory_space<vmem>>, vector<16x16x4xbf16>,
    %c2_62 = arith.constant 2 : index
    %c0_63 = arith.constant 0 : index
    %c0_64 = arith.constant 0 : index
    %38 = vector.load %arg12[%c2_62, %c0_63, %c0_64] : memref<18x18x12xbf16, #tpu.memory_space<vmem>>, vector<16x16x4xbf16>
    %c0_65 = arith.constant 0 : index
    %c0_66 = arith.constant 0 : index
    %c24 = arith.constant 24 : index
    %39 = vector.load %arg13[%c0_65, %c0_66, %c24] : memref<16x16x108xbf16, #tpu.memory_space<vmem>>, vector<16x16x4xbf16>
    tpu.vector_store %arg13[%c0_65, %c0_66, %c24], %38 {strides = array<i32>} : memref<16x16x108xbf16, #tpu.memory_space<vmem>>, vector<16x16x4xbf16>,
    %c2_67 = arith.constant 2 : index
    %c1_68 = arith.constant 1 : index
    %c0_69 = arith.constant 0 : index
    %40 = vector.load %arg12[%c2_67, %c1_68, %c0_69] : memref<18x18x12xbf16, #tpu.memory_space<vmem>>, vector<16x16x4xbf16>
    %c0_70 = arith.constant 0 : index
    %c0_71 = arith.constant 0 : index
    %c28 = arith.constant 28 : index
    %41 = vector.load %arg13[%c0_70, %c0_71, %c28] : memref<16x16x108xbf16, #tpu.memory_space<vmem>>, vector<16x16x4xbf16>
    tpu.vector_store %arg13[%c0_70, %c0_71, %c28], %40 {strides = array<i32>} : memref<16x16x108xbf16, #tpu.memory_space<vmem>>, vector<16x16x4xbf16>,
    %c2_72 = arith.constant 2 : index
    %c2_73 = arith.constant 2 : index
    %c0_74 = arith.constant 0 : index
    %42 = vector.load %arg12[%c2_72, %c2_73, %c0_74] : memref<18x18x12xbf16, #tpu.memory_space<vmem>>, vector<16x16x4xbf16>
    %c0_75 = arith.constant 0 : index
    %c0_76 = arith.constant 0 : index
    %c32 = arith.constant 32 : index
    %43 = vector.load %arg13[%c0_75, %c0_76, %c32] : memref<16x16x108xbf16, #tpu.memory_space<vmem>>, vector<16x16x4xbf16>
    tpu.vector_store %arg13[%c0_75, %c0_76, %c32], %42 {strides = array<i32>} : memref<16x16x108xbf16, #tpu.memory_space<vmem>>, vector<16x16x4xbf16>,
    %c0_77 = arith.constant 0 : index
    %c0_78 = arith.constant 0 : index
    %c0_79 = arith.constant 0 : index
    %44 = vector.load %arg13[%c0_77, %c0_78, %c0_79] : memref<16x16x108xbf16, #tpu.memory_space<vmem>>, vector<16x16x36xbf16>
    %45 = vector.shape_cast %44 : vector<16x16x36xbf16> to vector<256x36xbf16>
    %c0_80 = arith.constant 0 : index
    %c0_81 = arith.constant 0 : index
    %46 = vector.load %arg4[%c0_80, %c0_81] : memref<36x4xbf16, #tpu.memory_space<vmem>>, vector<36x4xbf16>
    %cst_82 = arith.constant dense<0.000000e+00> : vector<256x4xf32>
    %47 = tpu.matmul %45, %46, %cst_82 {dimension_numbers = #tpu.dot_dimension_numbers<[1], [0], [0], [1], [0, 0, 1, 1], [], []>} : vector<256x36xbf16>, vector<36x4xbf16>, vector<256x4xf32> -> vector<256x4xf32>
    %48 = vector.shape_cast %47 : vector<256x4xf32> to vector<1x16x16x4xf32>
    %c0_83 = arith.constant 0 : index
    %c0_84 = arith.constant 0 : index
    %c0_85 = arith.constant 0 : index
    %c4_86 = arith.constant 4 : index
    %49 = vector.load %arg11[%c0_83, %c0_84, %c0_85, %c4_86] : memref<1x16x16x16xf32, #tpu.memory_space<vmem>>, vector<1x16x16x4xf32>
    tpu.vector_store %arg11[%c0_83, %c0_84, %c0_85, %c4_86], %48 {strides = array<i32>} : memref<1x16x16x16xf32, #tpu.memory_space<vmem>>, vector<1x16x16x4xf32>,
    %c0_87 = arith.constant 0 : index
    %c0_88 = arith.constant 0 : index
    %c0_89 = arith.constant 0 : index
    %c0_90 = arith.constant 0 : index
    %50 = vector.load %arg11[%c0_87, %c0_88, %c0_89, %c0_90] : memref<1x16x16x16xf32, #tpu.memory_space<vmem>>, vector<1x16x16x8xf32>
    %51 = vector.shape_cast %50 : vector<1x16x16x8xf32> to vector<16x16x8xf32>
    %c0_91 = arith.constant 0 : index
    %c0_92 = arith.constant 0 : index
    %52 = vector.load %arg5[%c0_91, %c0_92] : memref<1x8xf32, #tpu.memory_space<vmem>>, vector<1x8xf32>
    %53 = vector.shape_cast %52 : vector<1x8xf32> to vector<8xf32>
    %54 = vector.shape_cast %53 : vector<8xf32> to vector<1x1x8xf32>
    %55 = vector.broadcast %54 : vector<1x1x8xf32> to vector<16x16x8xf32>
    %56 = arith.mulf %51, %55 : vector<16x16x8xf32>
    %c0_93 = arith.constant 0 : index
    %c0_94 = arith.constant 0 : index
    %57 = vector.load %arg6[%c0_93, %c0_94] : memref<1x8xf32, #tpu.memory_space<vmem>>, vector<1x8xf32>
    %58 = vector.shape_cast %57 : vector<1x8xf32> to vector<8xf32>
    %59 = vector.shape_cast %58 : vector<8xf32> to vector<1x1x8xf32>
    %60 = vector.broadcast %59 : vector<1x1x8xf32> to vector<16x16x8xf32>
    %61 = arith.addf %56, %60 : vector<16x16x8xf32>
    %cst_95 = arith.constant 0.000000e+00 : f32
    %62 = vector.broadcast %cst_95 : f32 to vector<16x16x8xf32>
    %63 = arith.maximumf %61, %62 : vector<16x16x8xf32>
    %64 = arith.truncf %63 : vector<16x16x8xf32> to vector<16x16x8xbf16>
    %c1_96 = arith.constant 1 : index
    %c1_97 = arith.constant 1 : index
    %c0_98 = arith.constant 0 : index
    %65 = vector.load %arg12[%c1_96, %c1_97, %c0_98] : memref<18x18x12xbf16, #tpu.memory_space<vmem>>, vector<16x16x8xbf16>
    tpu.vector_store %arg12[%c1_96, %c1_97, %c0_98], %64 {strides = array<i32>} : memref<18x18x12xbf16, #tpu.memory_space<vmem>>, vector<16x16x8xbf16>,
    %c0_99 = arith.constant 0 : index
    %c0_100 = arith.constant 0 : index
    %c0_101 = arith.constant 0 : index
    %66 = vector.load %arg12[%c0_99, %c0_100, %c0_101] : memref<18x18x12xbf16, #tpu.memory_space<vmem>>, vector<16x16x8xbf16>
    %c0_102 = arith.constant 0 : index
    %c0_103 = arith.constant 0 : index
    %c0_104 = arith.constant 0 : index
    %67 = vector.load %arg13[%c0_102, %c0_103, %c0_104] : memref<16x16x108xbf16, #tpu.memory_space<vmem>>, vector<16x16x8xbf16>
    tpu.vector_store %arg13[%c0_102, %c0_103, %c0_104], %66 {strides = array<i32>} : memref<16x16x108xbf16, #tpu.memory_space<vmem>>, vector<16x16x8xbf16>,
    %c0_105 = arith.constant 0 : index
    %c1_106 = arith.constant 1 : index
    %c0_107 = arith.constant 0 : index
    %68 = vector.load %arg12[%c0_105, %c1_106, %c0_107] : memref<18x18x12xbf16, #tpu.memory_space<vmem>>, vector<16x16x8xbf16>
    %c0_108 = arith.constant 0 : index
    %c0_109 = arith.constant 0 : index
    %c8_110 = arith.constant 8 : index
    %69 = vector.load %arg13[%c0_108, %c0_109, %c8_110] : memref<16x16x108xbf16, #tpu.memory_space<vmem>>, vector<16x16x8xbf16>
    tpu.vector_store %arg13[%c0_108, %c0_109, %c8_110], %68 {strides = array<i32>} : memref<16x16x108xbf16, #tpu.memory_space<vmem>>, vector<16x16x8xbf16>,
    %c0_111 = arith.constant 0 : index
    %c2_112 = arith.constant 2 : index
    %c0_113 = arith.constant 0 : index
    %70 = vector.load %arg12[%c0_111, %c2_112, %c0_113] : memref<18x18x12xbf16, #tpu.memory_space<vmem>>, vector<16x16x8xbf16>
    %c0_114 = arith.constant 0 : index
    %c0_115 = arith.constant 0 : index
    %c16_116 = arith.constant 16 : index
    %71 = vector.load %arg13[%c0_114, %c0_115, %c16_116] : memref<16x16x108xbf16, #tpu.memory_space<vmem>>, vector<16x16x8xbf16>
    tpu.vector_store %arg13[%c0_114, %c0_115, %c16_116], %70 {strides = array<i32>} : memref<16x16x108xbf16, #tpu.memory_space<vmem>>, vector<16x16x8xbf16>,
    %c1_117 = arith.constant 1 : index
    %c0_118 = arith.constant 0 : index
    %c0_119 = arith.constant 0 : index
    %72 = vector.load %arg12[%c1_117, %c0_118, %c0_119] : memref<18x18x12xbf16, #tpu.memory_space<vmem>>, vector<16x16x8xbf16>
    %c0_120 = arith.constant 0 : index
    %c0_121 = arith.constant 0 : index
    %c24_122 = arith.constant 24 : index
    %73 = vector.load %arg13[%c0_120, %c0_121, %c24_122] : memref<16x16x108xbf16, #tpu.memory_space<vmem>>, vector<16x16x8xbf16>
    tpu.vector_store %arg13[%c0_120, %c0_121, %c24_122], %72 {strides = array<i32>} : memref<16x16x108xbf16, #tpu.memory_space<vmem>>, vector<16x16x8xbf16>,
    %c1_123 = arith.constant 1 : index
    %c1_124 = arith.constant 1 : index
    %c0_125 = arith.constant 0 : index
    %74 = vector.load %arg12[%c1_123, %c1_124, %c0_125] : memref<18x18x12xbf16, #tpu.memory_space<vmem>>, vector<16x16x8xbf16>
    %c0_126 = arith.constant 0 : index
    %c0_127 = arith.constant 0 : index
    %c32_128 = arith.constant 32 : index
    %75 = vector.load %arg13[%c0_126, %c0_127, %c32_128] : memref<16x16x108xbf16, #tpu.memory_space<vmem>>, vector<16x16x8xbf16>
    tpu.vector_store %arg13[%c0_126, %c0_127, %c32_128], %74 {strides = array<i32>} : memref<16x16x108xbf16, #tpu.memory_space<vmem>>, vector<16x16x8xbf16>,
    %c1_129 = arith.constant 1 : index
    %c2_130 = arith.constant 2 : index
    %c0_131 = arith.constant 0 : index
    %76 = vector.load %arg12[%c1_129, %c2_130, %c0_131] : memref<18x18x12xbf16, #tpu.memory_space<vmem>>, vector<16x16x8xbf16>
    %c0_132 = arith.constant 0 : index
    %c0_133 = arith.constant 0 : index
    %c40 = arith.constant 40 : index
    %77 = vector.load %arg13[%c0_132, %c0_133, %c40] : memref<16x16x108xbf16, #tpu.memory_space<vmem>>, vector<16x16x8xbf16>
    tpu.vector_store %arg13[%c0_132, %c0_133, %c40], %76 {strides = array<i32>} : memref<16x16x108xbf16, #tpu.memory_space<vmem>>, vector<16x16x8xbf16>,
    %c2_134 = arith.constant 2 : index
    %c0_135 = arith.constant 0 : index
    %c0_136 = arith.constant 0 : index
    %78 = vector.load %arg12[%c2_134, %c0_135, %c0_136] : memref<18x18x12xbf16, #tpu.memory_space<vmem>>, vector<16x16x8xbf16>
    %c0_137 = arith.constant 0 : index
    %c0_138 = arith.constant 0 : index
    %c48 = arith.constant 48 : index
    %79 = vector.load %arg13[%c0_137, %c0_138, %c48] : memref<16x16x108xbf16, #tpu.memory_space<vmem>>, vector<16x16x8xbf16>
    tpu.vector_store %arg13[%c0_137, %c0_138, %c48], %78 {strides = array<i32>} : memref<16x16x108xbf16, #tpu.memory_space<vmem>>, vector<16x16x8xbf16>,
    %c2_139 = arith.constant 2 : index
    %c1_140 = arith.constant 1 : index
    %c0_141 = arith.constant 0 : index
    %80 = vector.load %arg12[%c2_139, %c1_140, %c0_141] : memref<18x18x12xbf16, #tpu.memory_space<vmem>>, vector<16x16x8xbf16>
    %c0_142 = arith.constant 0 : index
    %c0_143 = arith.constant 0 : index
    %c56 = arith.constant 56 : index
    %81 = vector.load %arg13[%c0_142, %c0_143, %c56] : memref<16x16x108xbf16, #tpu.memory_space<vmem>>, vector<16x16x8xbf16>
    tpu.vector_store %arg13[%c0_142, %c0_143, %c56], %80 {strides = array<i32>} : memref<16x16x108xbf16, #tpu.memory_space<vmem>>, vector<16x16x8xbf16>,
    %c2_144 = arith.constant 2 : index
    %c2_145 = arith.constant 2 : index
    %c0_146 = arith.constant 0 : index
    %82 = vector.load %arg12[%c2_144, %c2_145, %c0_146] : memref<18x18x12xbf16, #tpu.memory_space<vmem>>, vector<16x16x8xbf16>
    %c0_147 = arith.constant 0 : index
    %c0_148 = arith.constant 0 : index
    %c64 = arith.constant 64 : index
    %83 = vector.load %arg13[%c0_147, %c0_148, %c64] : memref<16x16x108xbf16, #tpu.memory_space<vmem>>, vector<16x16x8xbf16>
    tpu.vector_store %arg13[%c0_147, %c0_148, %c64], %82 {strides = array<i32>} : memref<16x16x108xbf16, #tpu.memory_space<vmem>>, vector<16x16x8xbf16>,
    %c0_149 = arith.constant 0 : index
    %c0_150 = arith.constant 0 : index
    %c0_151 = arith.constant 0 : index
    %84 = vector.load %arg13[%c0_149, %c0_150, %c0_151] : memref<16x16x108xbf16, #tpu.memory_space<vmem>>, vector<16x16x72xbf16>
    %85 = vector.shape_cast %84 : vector<16x16x72xbf16> to vector<256x72xbf16>
    %c0_152 = arith.constant 0 : index
    %c0_153 = arith.constant 0 : index
    %86 = vector.load %arg7[%c0_152, %c0_153] : memref<72x4xbf16, #tpu.memory_space<vmem>>, vector<72x4xbf16>
    %cst_154 = arith.constant dense<0.000000e+00> : vector<256x4xf32>
    %87 = tpu.matmul %85, %86, %cst_154 {dimension_numbers = #tpu.dot_dimension_numbers<[1], [0], [0], [1], [0, 0, 1, 1], [], []>} : vector<256x72xbf16>, vector<72x4xbf16>, vector<256x4xf32> -> vector<256x4xf32>
    %88 = vector.shape_cast %87 : vector<256x4xf32> to vector<1x16x16x4xf32>
    %c0_155 = arith.constant 0 : index
    %c0_156 = arith.constant 0 : index
    %c0_157 = arith.constant 0 : index
    %c8_158 = arith.constant 8 : index
    %89 = vector.load %arg11[%c0_155, %c0_156, %c0_157, %c8_158] : memref<1x16x16x16xf32, #tpu.memory_space<vmem>>, vector<1x16x16x4xf32>
    tpu.vector_store %arg11[%c0_155, %c0_156, %c0_157, %c8_158], %88 {strides = array<i32>} : memref<1x16x16x16xf32, #tpu.memory_space<vmem>>, vector<1x16x16x4xf32>,
    %c0_159 = arith.constant 0 : index
    %c0_160 = arith.constant 0 : index
    %c0_161 = arith.constant 0 : index
    %c0_162 = arith.constant 0 : index
    %90 = vector.load %arg11[%c0_159, %c0_160, %c0_161, %c0_162] : memref<1x16x16x16xf32, #tpu.memory_space<vmem>>, vector<1x16x16x12xf32>
    %91 = vector.shape_cast %90 : vector<1x16x16x12xf32> to vector<16x16x12xf32>
    %c0_163 = arith.constant 0 : index
    %c0_164 = arith.constant 0 : index
    %92 = vector.load %arg8[%c0_163, %c0_164] : memref<1x12xf32, #tpu.memory_space<vmem>>, vector<1x12xf32>
    %93 = vector.shape_cast %92 : vector<1x12xf32> to vector<12xf32>
    %94 = vector.shape_cast %93 : vector<12xf32> to vector<1x1x12xf32>
    %95 = vector.broadcast %94 : vector<1x1x12xf32> to vector<16x16x12xf32>
    %96 = arith.mulf %91, %95 : vector<16x16x12xf32>
    %c0_165 = arith.constant 0 : index
    %c0_166 = arith.constant 0 : index
    %97 = vector.load %arg9[%c0_165, %c0_166] : memref<1x12xf32, #tpu.memory_space<vmem>>, vector<1x12xf32>
    %98 = vector.shape_cast %97 : vector<1x12xf32> to vector<12xf32>
    %99 = vector.shape_cast %98 : vector<12xf32> to vector<1x1x12xf32>
    %100 = vector.broadcast %99 : vector<1x1x12xf32> to vector<16x16x12xf32>
    %101 = arith.addf %96, %100 : vector<16x16x12xf32>
    %cst_167 = arith.constant 0.000000e+00 : f32
    %102 = vector.broadcast %cst_167 : f32 to vector<16x16x12xf32>
    %103 = arith.maximumf %101, %102 : vector<16x16x12xf32>
    %104 = arith.truncf %103 : vector<16x16x12xf32> to vector<16x16x12xbf16>
    %c1_168 = arith.constant 1 : index
    %c1_169 = arith.constant 1 : index
    %c0_170 = arith.constant 0 : index
    %105 = vector.load %arg12[%c1_168, %c1_169, %c0_170] : memref<18x18x12xbf16, #tpu.memory_space<vmem>>, vector<16x16x12xbf16>
    tpu.vector_store %arg12[%c1_168, %c1_169, %c0_170], %104 {strides = array<i32>} : memref<18x18x12xbf16, #tpu.memory_space<vmem>>, vector<16x16x12xbf16>,
    %c0_171 = arith.constant 0 : index
    %c0_172 = arith.constant 0 : index
    %c0_173 = arith.constant 0 : index
    %106 = vector.load %arg12[%c0_171, %c0_172, %c0_173] : memref<18x18x12xbf16, #tpu.memory_space<vmem>>, vector<16x16x12xbf16>
    %c0_174 = arith.constant 0 : index
    %c0_175 = arith.constant 0 : index
    %c0_176 = arith.constant 0 : index
    %107 = vector.load %arg13[%c0_174, %c0_175, %c0_176] : memref<16x16x108xbf16, #tpu.memory_space<vmem>>, vector<16x16x12xbf16>
    tpu.vector_store %arg13[%c0_174, %c0_175, %c0_176], %106 {strides = array<i32>} : memref<16x16x108xbf16, #tpu.memory_space<vmem>>, vector<16x16x12xbf16>,
    %c0_177 = arith.constant 0 : index
    %c1_178 = arith.constant 1 : index
    %c0_179 = arith.constant 0 : index
    %108 = vector.load %arg12[%c0_177, %c1_178, %c0_179] : memref<18x18x12xbf16, #tpu.memory_space<vmem>>, vector<16x16x12xbf16>
    %c0_180 = arith.constant 0 : index
    %c0_181 = arith.constant 0 : index
    %c12_182 = arith.constant 12 : index
    %109 = vector.load %arg13[%c0_180, %c0_181, %c12_182] : memref<16x16x108xbf16, #tpu.memory_space<vmem>>, vector<16x16x12xbf16>
    tpu.vector_store %arg13[%c0_180, %c0_181, %c12_182], %108 {strides = array<i32>} : memref<16x16x108xbf16, #tpu.memory_space<vmem>>, vector<16x16x12xbf16>,
    %c0_183 = arith.constant 0 : index
    %c2_184 = arith.constant 2 : index
    %c0_185 = arith.constant 0 : index
    %110 = vector.load %arg12[%c0_183, %c2_184, %c0_185] : memref<18x18x12xbf16, #tpu.memory_space<vmem>>, vector<16x16x12xbf16>
    %c0_186 = arith.constant 0 : index
    %c0_187 = arith.constant 0 : index
    %c24_188 = arith.constant 24 : index
    %111 = vector.load %arg13[%c0_186, %c0_187, %c24_188] : memref<16x16x108xbf16, #tpu.memory_space<vmem>>, vector<16x16x12xbf16>
    tpu.vector_store %arg13[%c0_186, %c0_187, %c24_188], %110 {strides = array<i32>} : memref<16x16x108xbf16, #tpu.memory_space<vmem>>, vector<16x16x12xbf16>,
    %c1_189 = arith.constant 1 : index
    %c0_190 = arith.constant 0 : index
    %c0_191 = arith.constant 0 : index
    %112 = vector.load %arg12[%c1_189, %c0_190, %c0_191] : memref<18x18x12xbf16, #tpu.memory_space<vmem>>, vector<16x16x12xbf16>
    %c0_192 = arith.constant 0 : index
    %c0_193 = arith.constant 0 : index
    %c36 = arith.constant 36 : index
    %113 = vector.load %arg13[%c0_192, %c0_193, %c36] : memref<16x16x108xbf16, #tpu.memory_space<vmem>>, vector<16x16x12xbf16>
    tpu.vector_store %arg13[%c0_192, %c0_193, %c36], %112 {strides = array<i32>} : memref<16x16x108xbf16, #tpu.memory_space<vmem>>, vector<16x16x12xbf16>,
    %c1_194 = arith.constant 1 : index
    %c1_195 = arith.constant 1 : index
    %c0_196 = arith.constant 0 : index
    %114 = vector.load %arg12[%c1_194, %c1_195, %c0_196] : memref<18x18x12xbf16, #tpu.memory_space<vmem>>, vector<16x16x12xbf16>
    %c0_197 = arith.constant 0 : index
    %c0_198 = arith.constant 0 : index
    %c48_199 = arith.constant 48 : index
    %115 = vector.load %arg13[%c0_197, %c0_198, %c48_199] : memref<16x16x108xbf16, #tpu.memory_space<vmem>>, vector<16x16x12xbf16>
    tpu.vector_store %arg13[%c0_197, %c0_198, %c48_199], %114 {strides = array<i32>} : memref<16x16x108xbf16, #tpu.memory_space<vmem>>, vector<16x16x12xbf16>,
    %c1_200 = arith.constant 1 : index
    %c2_201 = arith.constant 2 : index
    %c0_202 = arith.constant 0 : index
    %116 = vector.load %arg12[%c1_200, %c2_201, %c0_202] : memref<18x18x12xbf16, #tpu.memory_space<vmem>>, vector<16x16x12xbf16>
    %c0_203 = arith.constant 0 : index
    %c0_204 = arith.constant 0 : index
    %c60 = arith.constant 60 : index
    %117 = vector.load %arg13[%c0_203, %c0_204, %c60] : memref<16x16x108xbf16, #tpu.memory_space<vmem>>, vector<16x16x12xbf16>
    tpu.vector_store %arg13[%c0_203, %c0_204, %c60], %116 {strides = array<i32>} : memref<16x16x108xbf16, #tpu.memory_space<vmem>>, vector<16x16x12xbf16>,
    %c2_205 = arith.constant 2 : index
    %c0_206 = arith.constant 0 : index
    %c0_207 = arith.constant 0 : index
    %118 = vector.load %arg12[%c2_205, %c0_206, %c0_207] : memref<18x18x12xbf16, #tpu.memory_space<vmem>>, vector<16x16x12xbf16>
    %c0_208 = arith.constant 0 : index
    %c0_209 = arith.constant 0 : index
    %c72 = arith.constant 72 : index
    %119 = vector.load %arg13[%c0_208, %c0_209, %c72] : memref<16x16x108xbf16, #tpu.memory_space<vmem>>, vector<16x16x12xbf16>
    tpu.vector_store %arg13[%c0_208, %c0_209, %c72], %118 {strides = array<i32>} : memref<16x16x108xbf16, #tpu.memory_space<vmem>>, vector<16x16x12xbf16>,
    %c2_210 = arith.constant 2 : index
    %c1_211 = arith.constant 1 : index
    %c0_212 = arith.constant 0 : index
    %120 = vector.load %arg12[%c2_210, %c1_211, %c0_212] : memref<18x18x12xbf16, #tpu.memory_space<vmem>>, vector<16x16x12xbf16>
    %c0_213 = arith.constant 0 : index
    %c0_214 = arith.constant 0 : index
    %c84 = arith.constant 84 : index
    %121 = vector.load %arg13[%c0_213, %c0_214, %c84] : memref<16x16x108xbf16, #tpu.memory_space<vmem>>, vector<16x16x12xbf16>
    tpu.vector_store %arg13[%c0_213, %c0_214, %c84], %120 {strides = array<i32>} : memref<16x16x108xbf16, #tpu.memory_space<vmem>>, vector<16x16x12xbf16>,
    %c2_215 = arith.constant 2 : index
    %c2_216 = arith.constant 2 : index
    %c0_217 = arith.constant 0 : index
    %122 = vector.load %arg12[%c2_215, %c2_216, %c0_217] : memref<18x18x12xbf16, #tpu.memory_space<vmem>>, vector<16x16x12xbf16>
    %c0_218 = arith.constant 0 : index
    %c0_219 = arith.constant 0 : index
    %c96 = arith.constant 96 : index
    %123 = vector.load %arg13[%c0_218, %c0_219, %c96] : memref<16x16x108xbf16, #tpu.memory_space<vmem>>, vector<16x16x12xbf16>
    tpu.vector_store %arg13[%c0_218, %c0_219, %c96], %122 {strides = array<i32>} : memref<16x16x108xbf16, #tpu.memory_space<vmem>>, vector<16x16x12xbf16>,
    %c0_220 = arith.constant 0 : index
    %c0_221 = arith.constant 0 : index
    %c0_222 = arith.constant 0 : index
    %124 = vector.load %arg13[%c0_220, %c0_221, %c0_222] : memref<16x16x108xbf16, #tpu.memory_space<vmem>>, vector<16x16x108xbf16>
    %125 = vector.shape_cast %124 : vector<16x16x108xbf16> to vector<256x108xbf16>
    %c0_223 = arith.constant 0 : index
    %c0_224 = arith.constant 0 : index
    %126 = vector.load %arg10[%c0_223, %c0_224] : memref<108x4xbf16, #tpu.memory_space<vmem>>, vector<108x4xbf16>
    %cst_225 = arith.constant dense<0.000000e+00> : vector<256x4xf32>
    %127 = tpu.matmul %125, %126, %cst_225 {dimension_numbers = #tpu.dot_dimension_numbers<[1], [0], [0], [1], [0, 0, 1, 1], [], []>} : vector<256x108xbf16>, vector<108x4xbf16>, vector<256x4xf32> -> vector<256x4xf32>
    %128 = vector.shape_cast %127 : vector<256x4xf32> to vector<1x16x16x4xf32>
    %c0_226 = arith.constant 0 : index
    %c0_227 = arith.constant 0 : index
    %c0_228 = arith.constant 0 : index
    %c12_229 = arith.constant 12 : index
    %129 = vector.load %arg11[%c0_226, %c0_227, %c0_228, %c12_229] : memref<1x16x16x16xf32, #tpu.memory_space<vmem>>, vector<1x16x16x4xf32>
    tpu.vector_store %arg11[%c0_226, %c0_227, %c0_228, %c12_229], %128 {strides = array<i32>} : memref<1x16x16x16xf32, #tpu.memory_space<vmem>>, vector<1x16x16x4xf32>,
    return
  }
  func.func @transform_0(%arg0: i32) -> (i32, i32, i32, i32) {
    %c0_i32 = arith.constant 0 : i32
    %c0_i32_0 = arith.constant 0 : i32
    %c0_i32_1 = arith.constant 0 : i32
    %c0_i32_2 = arith.constant 0 : i32
    return %arg0, %c0_i32, %c0_i32_0, %c0_i32_1 : i32, i32, i32, i32
  }
  func.func @transform_1(%arg0: i32) -> (i32, i32) {
    %c0_i32 = arith.constant 0 : i32
    %c0_i32_0 = arith.constant 0 : i32
    %c0_i32_1 = arith.constant 0 : i32
    return %c0_i32, %c0_i32_0 : i32, i32
  }
  func.func @transform_2(%arg0: i32) -> (i32, i32) {
    %c0_i32 = arith.constant 0 : i32
    %c0_i32_0 = arith.constant 0 : i32
    %c0_i32_1 = arith.constant 0 : i32
    return %c0_i32, %c0_i32_0 : i32, i32
  }
  func.func @transform_3(%arg0: i32) -> (i32, i32) {
    %c0_i32 = arith.constant 0 : i32
    %c0_i32_0 = arith.constant 0 : i32
    %c0_i32_1 = arith.constant 0 : i32
    return %c0_i32, %c0_i32_0 : i32, i32
  }
  func.func @transform_4(%arg0: i32) -> (i32, i32) {
    %c0_i32 = arith.constant 0 : i32
    %c0_i32_0 = arith.constant 0 : i32
    %c0_i32_1 = arith.constant 0 : i32
    return %c0_i32, %c0_i32_0 : i32, i32
  }
  func.func @transform_5(%arg0: i32) -> (i32, i32) {
    %c0_i32 = arith.constant 0 : i32
    %c0_i32_0 = arith.constant 0 : i32
    %c0_i32_1 = arith.constant 0 : i32
    return %c0_i32, %c0_i32_0 : i32, i32
  }
  func.func @transform_6(%arg0: i32) -> (i32, i32) {
    %c0_i32 = arith.constant 0 : i32
    %c0_i32_0 = arith.constant 0 : i32
    %c0_i32_1 = arith.constant 0 : i32
    return %c0_i32, %c0_i32_0 : i32, i32
  }
  func.func @transform_7(%arg0: i32) -> (i32, i32) {
    %c0_i32 = arith.constant 0 : i32
    %c0_i32_0 = arith.constant 0 : i32
    %c0_i32_1 = arith.constant 0 : i32
    return %c0_i32, %c0_i32_0 : i32, i32
  }
  func.func @transform_8(%arg0: i32) -> (i32, i32) {
    %c0_i32 = arith.constant 0 : i32
    %c0_i32_0 = arith.constant 0 : i32
    %c0_i32_1 = arith.constant 0 : i32
    return %c0_i32, %c0_i32_0 : i32, i32
  }
  func.func @transform_9(%arg0: i32) -> (i32, i32) {
    %c0_i32 = arith.constant 0 : i32
    %c0_i32_0 = arith.constant 0 : i32
    %c0_i32_1 = arith.constant 0 : i32
    return %c0_i32, %c0_i32_0 : i32, i32
  }
  func.func @transform_10(%arg0: i32) -> (i32, i32, i32, i32) {
    %c0_i32 = arith.constant 0 : i32
    %c0_i32_0 = arith.constant 0 : i32
    %c0_i32_1 = arith.constant 0 : i32
    %c0_i32_2 = arith.constant 0 : i32
    return %arg0, %c0_i32, %c0_i32_0, %c0_i32_1 : i32, i32, i32, i32
  }
}

</mosaic_0001>

<llo_original>
// kernel: tpu_custom_call.1
$region0: #{tpu_custom_call.1}
  #allocation0 [shape = 'u32[]', space=smem, size = 0x4, offset = 0x4, fixed_abs, tag = 'smem constant byte address 0x4 - core index']
  #allocation1 [shape = 'u32[144,128]{1,0:T(1,128)}', space=vmem, size = 0x12000, scoped, tag = 'internal scratch']
  #allocation2 [shape = 'bf16[18,18,12]{2,1,0:T(8,128)(2,1)}', space=vmem, size = 0x1b000, scoped, tag = 'scratch operand']
  #allocation3 [shape = 'bf16[16,16,108]{2,1,0:T(16,128)(2,1)}', space=vmem, size = 0x10000, scoped, tag = 'scratch operand']
  %s0 = inlined_call_operand.vmem [shape: f32[2,16,16,4], index: 0, kind: input, shape index: {}]
  %s1 = inlined_call_operand.vmem [shape: f32[1,4], index: 1, kind: input, shape index: {}]
  %s2 = inlined_call_operand.vmem [shape: f32[1,4], index: 2, kind: input, shape index: {}]
  %s3 = inlined_call_operand.vmem [shape: bf16[36,4], index: 3, kind: input, shape index: {}]
  %s4 = inlined_call_operand.vmem [shape: f32[1,8], index: 4, kind: input, shape index: {}]
  %s5 = inlined_call_operand.vmem [shape: f32[1,8], index: 5, kind: input, shape index: {}]
  %s6 = inlined_call_operand.vmem [shape: bf16[72,4], index: 6, kind: input, shape index: {}]
  %s7 = inlined_call_operand.vmem [shape: f32[1,12], index: 7, kind: input, shape index: {}]
  %s8 = inlined_call_operand.vmem [shape: f32[1,12], index: 8, kind: input, shape index: {}]
  %s9 = inlined_call_operand.vmem [shape: bf16[108,4], index: 9, kind: input, shape index: {}]
  %s10 = inlined_call_operand.hbm [shape: f32[2,16,16,16], index: 10, kind: output, shape index: {}]
  %s11 = sld [smem:[#allocation0]]
  $region73: #{tpu_custom_call.1} parent=0
    _
  %s13 = ssub.s32 1, %s11
  %s14 = scalar_select 0, %s13, %s11
  $region1: #{tpu_custom_call.1} parent=0
    #allocation4 [shape = 'u8[262144]{0}', space=vmem, size = 0x40000, scoped, tag = 'output window, operand 0']
    #allocation5 [shape = 's32[2]{0}', space=sflag, size = 0x8, scoped, tag = 'scoped memory for tpu_custom_call.1']
    %15 = vsyncpa [#allocation5], 0
    %s16 = scalar_lea.sflag [#allocation5], 1
    %17 = vsyncpa %s16, 0
    loop: start=0, step=1, limit=4
    $region2: #{tpu_custom_call.1} parent=1 // loop_pre_header
      _
    $region3: #{tpu_custom_call.1} parent=1 // loop_header
      %s19 = sphi 0, %s23
      %p20 = scmp.ge.s32.totalorder %s19, 4
      %s29 = sphi 0, %s31
      %s32 = sphi 0, %s29
      %s33 = sphi 0, %s32
      %s49 = sphi 0, %s33
      %s53 = sphi 0, %s53
      %s55 = sphi 0, %s53
      %s56 = sphi 0, %s55
      %s70 = sphi 0, %s56
      %s74 = sphi 0, %s74
      %s76 = sphi 0, %s74
      %s77 = sphi 0, %s76
      %s91 = sphi 0, %s77
      %s95 = sphi 0, %s95
      %s97 = sphi 0, %s95
      %s98 = sphi 0, %s97
      %s112 = sphi 0, %s98
      %s116 = sphi 0, %s116
      %s118 = sphi 0, %s116
      %s119 = sphi 0, %s118
      %s133 = sphi 0, %s119
      %s137 = sphi 0, %s137
      %s139 = sphi 0, %s137
      %s140 = sphi 0, %s139
      %s154 = sphi 0, %s140
      %s158 = sphi 0, %s158
      %s160 = sphi 0, %s158
      %s161 = sphi 0, %s160
      %s175 = sphi 0, %s161
      %s179 = sphi 0, %s179
      %s181 = sphi 0, %s179
      %s182 = sphi 0, %s181
      %s196 = sphi 0, %s182
      %s200 = sphi 0, %s200
      %s202 = sphi 0, %s200
      %s203 = sphi 0, %s202
      %s217 = sphi 0, %s203
      %s221 = sphi 0, %s221
      %s223 = sphi 0, %s221
      %s224 = sphi 0, %s223
      %s238 = sphi 0, %s224
      %s244 = sphi 0, %s246
      %s247 = sphi 0, %s244
      %s248 = sphi 0, %s247
      %s264 = sphi 0, %s248
    $region4: #{tpu_custom_call.1} parent=1 // loop_header_branch
      %22 = sbr.rel (%p20) target = $region8
    $region5: #{tpu_custom_call.1} parent=1 // loop_body
      %s24 = ssub.s32 %s19, 1
      %s25 = ssub.s32 %s19, 2
      %s26 = sadd.s32 %s19, 1
      %s27 = ssub.s32 %s19, %s26
      %p28 = scmp.eq.s32.totalorder %s27, 0
      %s30 = sadd.s32 %s29, 1
      %s31 = scalar_select %p28, %s29, %s30
      %p34 = pneg %p28
      %p35 = scmp.eq.s32.totalorder %s19, 1
      %p36 = por %p34, %p35
      %p37 = scmp.ne.s32.totalorder %s29, %s32
      %p38 = scmp.eq.s32.totalorder %s19, 0
      %p39 = por %p37, %p38
      %p40 = scmp.ne.s32.totalorder %s29, %s32
      %p41 = scmp.eq.s32.totalorder %s24, 1
      %p42 = por %p40, %p41
      %p43 = scmp.ne.s32.totalorder %s32, %s33
      %p44 = scmp.eq.s32.totalorder %s24, 0
      %p45 = por %p43, %p44
      %p46 = scmp.ne.s32.totalorder %s32, %s33
      %p47 = scmp.eq.s32.totalorder %s25, 1
      %p48 = por %p46, %p47
      %p50 = scmp.ne.s32.totalorder %s33, %s49
      %p51 = scmp.eq.s32.totalorder %s25, 0
      %p52 = por %p50, %p51
      %s54 = sadd.s32 %s53, 1
      %p57 = scmp.eq.s32.totalorder %s19, 1
      %p58 = scmp.ne.s32.totalorder %s53, %s55
      %p59 = scmp.eq.s32.totalorder %s19, 0
      %p60 = por %p58, %p59
      %p61 = scmp.ne.s32.totalorder %s53, %s55
      %p62 = scmp.eq.s32.totalorder %s24, 1
      %p63 = por %p61, %p62
      %p64 = scmp.ne.s32.totalorder %s55, %s56
      %p65 = scmp.eq.s32.totalorder %s24, 0
      %p66 = por %p64, %p65
      %p67 = scmp.ne.s32.totalorder %s55, %s56
      %p68 = scmp.eq.s32.totalorder %s25, 1
      %p69 = por %p67, %p68
      %p71 = scmp.ne.s32.totalorder %s56, %s70
      %p72 = scmp.eq.s32.totalorder %s25, 0
      %p73 = por %p71, %p72
      %s75 = sadd.s32 %s74, 1
      %p78 = scmp.eq.s32.totalorder %s19, 1
      %p79 = scmp.ne.s32.totalorder %s74, %s76
      %p80 = scmp.eq.s32.totalorder %s19, 0
      %p81 = por %p79, %p80
      %p82 = scmp.ne.s32.totalorder %s74, %s76
      %p83 = scmp.eq.s32.totalorder %s24, 1
      %p84 = por %p82, %p83
      %p85 = scmp.ne.s32.totalorder %s76, %s77
      %p86 = scmp.eq.s32.totalorder %s24, 0
      %p87 = por %p85, %p86
      %p88 = scmp.ne.s32.totalorder %s76, %s77
      %p89 = scmp.eq.s32.totalorder %s25, 1
      %p90 = por %p88, %p89
      %p92 = scmp.ne.s32.totalorder %s77, %s91
      %p93 = scmp.eq.s32.totalorder %s25, 0
      %p94 = por %p92, %p93
      %s96 = sadd.s32 %s95, 1
      %p99 = scmp.eq.s32.totalorder %s19, 1
      %p100 = scmp.ne.s32.totalorder %s95, %s97
      %p101 = scmp.eq.s32.totalorder %s19, 0
      %p102 = por %p100, %p101
      %p103 = scmp.ne.s32.totalorder %s95, %s97
      %p104 = scmp.eq.s32.totalorder %s24, 1
      %p105 = por %p103, %p104
      %p106 = scmp.ne.s32.totalorder %s97, %s98
      %p107 = scmp.eq.s32.totalorder %s24, 0
      %p108 = por %p106, %p107
      %p109 = scmp.ne.s32.totalorder %s97, %s98
      %p110 = scmp.eq.s32.totalorder %s25, 1
      %p111 = por %p109, %p110
      %p113 = scmp.ne.s32.totalorder %s98, %s112
      %p114 = scmp.eq.s32.totalorder %s25, 0
      %p115 = por %p113, %p114
      %s117 = sadd.s32 %s116, 1
      %p120 = scmp.eq.s32.totalorder %s19, 1
      %p121 = scmp.ne.s32.totalorder %s116, %s118
      %p122 = scmp.eq.s32.totalorder %s19, 0
      %p123 = por %p121, %p122
      %p124 = scmp.ne.s32.totalorder %s116, %s118
      %p125 = scmp.eq.s32.totalorder %s24, 1
      %p126 = por %p124, %p125
      %p127 = scmp.ne.s32.totalorder %s118, %s119
      %p128 = scmp.eq.s32.totalorder %s24, 0
      %p129 = por %p127, %p128
      %p130 = scmp.ne.s32.totalorder %s118, %s119
      %p131 = scmp.eq.s32.totalorder %s25, 1
      %p132 = por %p130, %p131
      %p134 = scmp.ne.s32.totalorder %s119, %s133
      %p135 = scmp.eq.s32.totalorder %s25, 0
      %p136 = por %p134, %p135
      %s138 = sadd.s32 %s137, 1
      %p141 = scmp.eq.s32.totalorder %s19, 1
      %p142 = scmp.ne.s32.totalorder %s137, %s139
      %p143 = scmp.eq.s32.totalorder %s19, 0
      %p144 = por %p142, %p143
      %p145 = scmp.ne.s32.totalorder %s137, %s139
      %p146 = scmp.eq.s32.totalorder %s24, 1
      %p147 = por %p145, %p146
      %p148 = scmp.ne.s32.totalorder %s139, %s140
      %p149 = scmp.eq.s32.totalorder %s24, 0
      %p150 = por %p148, %p149
      %p151 = scmp.ne.s32.totalorder %s139, %s140
      %p152 = scmp.eq.s32.totalorder %s25, 1
      %p153 = por %p151, %p152
      %p155 = scmp.ne.s32.totalorder %s140, %s154
      %p156 = scmp.eq.s32.totalorder %s25, 0
      %p157 = por %p155, %p156
      %s159 = sadd.s32 %s158, 1
      %p162 = scmp.eq.s32.totalorder %s19, 1
      %p163 = scmp.ne.s32.totalorder %s158, %s160
      %p164 = scmp.eq.s32.totalorder %s19, 0
      %p165 = por %p163, %p164
      %p166 = scmp.ne.s32.totalorder %s158, %s160
      %p167 = scmp.eq.s32.totalorder %s24, 1
      %p168 = por %p166, %p167
      %p169 = scmp.ne.s32.totalorder %s160, %s161
      %p170 = scmp.eq.s32.totalorder %s24, 0
      %p171 = por %p169, %p170
      %p172 = scmp.ne.s32.totalorder %s160, %s161
      %p173 = scmp.eq.s32.totalorder %s25, 1
      %p174 = por %p172, %p173
      %p176 = scmp.ne.s32.totalorder %s161, %s175
      %p177 = scmp.eq.s32.totalorder %s25, 0
      %p178 = por %p176, %p177
      %s180 = sadd.s32 %s179, 1
      %p183 = scmp.eq.s32.totalorder %s19, 1
      %p184 = scmp.ne.s32.totalorder %s179, %s181
      %p185 = scmp.eq.s32.totalorder %s19, 0
      %p186 = por %p184, %p185
      %p187 = scmp.ne.s32.totalorder %s179, %s181
      %p188 = scmp.eq.s32.totalorder %s24, 1
      %p189 = por %p187, %p188
      %p190 = scmp.ne.s32.totalorder %s181, %s182
      %p191 = scmp.eq.s32.totalorder %s24, 0
      %p192 = por %p190, %p191
      %p193 = scmp.ne.s32.totalorder %s181, %s182
      %p194 = scmp.eq.s32.totalorder %s25, 1
      %p195 = por %p193, %p194
      %p197 = scmp.ne.s32.totalorder %s182, %s196
      %p198 = scmp.eq.s32.totalorder %s25, 0
      %p199 = por %p197, %p198
      %s201 = sadd.s32 %s200, 1
      %p204 = scmp.eq.s32.totalorder %s19, 1
      %p205 = scmp.ne.s32.totalorder %s200, %s202
      %p206 = scmp.eq.s32.totalorder %s19, 0
      %p207 = por %p205, %p206
      %p208 = scmp.ne.s32.totalorder %s200, %s202
      %p209 = scmp.eq.s32.totalorder %s24, 1
      %p210 = por %p208, %p209
      %p211 = scmp.ne.s32.totalorder %s202, %s203
      %p212 = scmp.eq.s32.totalorder %s24, 0
      %p213 = por %p211, %p212
      %p214 = scmp.ne.s32.totalorder %s202, %s203
      %p215 = scmp.eq.s32.totalorder %s25, 1
      %p216 = por %p214, %p215
      %p218 = scmp.ne.s32.totalorder %s203, %s217
      %p219 = scmp.eq.s32.totalorder %s25, 0
      %p220 = por %p218, %p219
      %s222 = sadd.s32 %s221, 1
      %p225 = scmp.eq.s32.totalorder %s19, 1
      %p226 = scmp.ne.s32.totalorder %s221, %s223
      %p227 = scmp.eq.s32.totalorder %s19, 0
      %p228 = por %p226, %p227
      %p229 = scmp.ne.s32.totalorder %s221, %s223
      %p230 = scmp.eq.s32.totalorder %s24, 1
      %p231 = por %p229, %p230
      %p232 = scmp.ne.s32.totalorder %s223, %s224
      %p233 = scmp.eq.s32.totalorder %s24, 0
      %p234 = por %p232, %p233
      %p235 = scmp.ne.s32.totalorder %s223, %s224
      %p236 = scmp.eq.s32.totalorder %s25, 1
      %p237 = por %p235, %p236
      %p239 = scmp.ne.s32.totalorder %s224, %s238
      %p240 = scmp.eq.s32.totalorder %s25, 0
      %p241 = por %p239, %p240
      %s242 = ssub.s32 %s19, %s26
      %p243 = scmp.eq.s32.totalorder %s242, 0
      %s245 = sadd.s32 %s244, 1
      %s246 = scalar_select %p243, %s244, %s245
      %p249 = pneg %p243
      %p250 = scmp.eq.s32.totalorder %s19, 1
      %p251 = por %p249, %p250
      %p252 = scmp.ne.s32.totalorder %s244, %s247
      %p253 = scmp.eq.s32.totalorder %s19, 0
      %p254 = por %p252, %p253
      %p255 = scmp.ne.s32.totalorder %s244, %s247
      %p256 = scmp.eq.s32.totalorder %s24, 1
      %p257 = por %p255, %p256
      %p258 = scmp.ne.s32.totalorder %s247, %s248
      %p259 = scmp.eq.s32.totalorder %s24, 0
      %p260 = por %p258, %p259
      %p261 = scmp.ne.s32.totalorder %s247, %s248
      %p262 = scmp.eq.s32.totalorder %s25, 1
      %p263 = por %p261, %p262
      %p265 = scmp.ne.s32.totalorder %s248, %s264
      %p266 = scmp.eq.s32.totalorder %s25, 0
      %p267 = por %p265, %p266
      %p268 = scmp.le.s32.totalorder 1, %s19
      %p269 = scmp.lt.s32.totalorder %s19, 3
      %p270 = pnand %p268, %p269
      %p271 = pneg %p270
      // Predicated region
      $region9: #{tpu_custom_call.1} parent=5 // pred_check
        _
      $region10: #{tpu_custom_call.1} parent=5 // pred_check_branch
        %273 = sbr.rel (%p270) target = $region12
      $region11: #{tpu_custom_call.1} parent=5 // pred_region
        %s274 = ssub.s32 %s19, 1
        // Predicated region
        $region13: #{tpu_custom_call.1} parent=11 // pred_check
          %p275 = pneg %p66
        $region14: #{tpu_custom_call.1} parent=11 // pred_check_branch
          %277 = sbr.rel (%p275) target = $region16
        $region15: #{tpu_custom_call.1} parent=11 // pred_region
          _
        $region16: #{tpu_custom_call.1} parent=11 // pred_fallthru
          _
        // Predicated region
        $region17: #{tpu_custom_call.1} parent=11 // pred_check
          %p278 = pneg %p87
        $region18: #{tpu_custom_call.1} parent=11 // pred_check_branch
          %280 = sbr.rel (%p278) target = $region20
        $region19: #{tpu_custom_call.1} parent=11 // pred_region
          _
        $region20: #{tpu_custom_call.1} parent=11 // pred_fallthru
          _
        // Predicated region
        $region21: #{tpu_custom_call.1} parent=11 // pred_check
          %p281 = pneg %p108
        $region22: #{tpu_custom_call.1} parent=11 // pred_check_branch
          %283 = sbr.rel (%p281) target = $region24
        $region23: #{tpu_custom_call.1} parent=11 // pred_region
          _
        $region24: #{tpu_custom_call.1} parent=11 // pred_fallthru
          _
        // Predicated region
        $region25: #{tpu_custom_call.1} parent=11 // pred_check
          %p284 = pneg %p129
        $region26: #{tpu_custom_call.1} parent=11 // pred_check_branch
          %286 = sbr.rel (%p284) target = $region28
        $region27: #{tpu_custom_call.1} parent=11 // pred_region
          _
        $region28: #{tpu_custom_call.1} parent=11 // pred_fallthru
          _
        // Predicated region
        $region29: #{tpu_custom_call.1} parent=11 // pred_check
          %p287 = pneg %p150
        $region30: #{tpu_custom_call.1} parent=11 // pred_check_branch
          %289 = sbr.rel (%p287) target = $region32
        $region31: #{tpu_custom_call.1} parent=11 // pred_region
          _
        $region32: #{tpu_custom_call.1} parent=11 // pred_fallthru
          _
        // Predicated region
        $region33: #{tpu_custom_call.1} parent=11 // pred_check
          %p290 = pneg %p171
        $region34: #{tpu_custom_call.1} parent=11 // pred_check_branch
          %292 = sbr.rel (%p290) target = $region36
        $region35: #{tpu_custom_call.1} parent=11 // pred_region
          _
        $region36: #{tpu_custom_call.1} parent=11 // pred_fallthru
          _
        // Predicated region
        $region37: #{tpu_custom_call.1} parent=11 // pred_check
          %p293 = pneg %p192
        $region38: #{tpu_custom_call.1} parent=11 // pred_check_branch
          %295 = sbr.rel (%p293) target = $region40
        $region39: #{tpu_custom_call.1} parent=11 // pred_region
          _
        $region40: #{tpu_custom_call.1} parent=11 // pred_fallthru
          _
        // Predicated region
        $region41: #{tpu_custom_call.1} parent=11 // pred_check
          %p296 = pneg %p213
        $region42: #{tpu_custom_call.1} parent=11 // pred_check_branch
          %298 = sbr.rel (%p296) target = $region44
        $region43: #{tpu_custom_call.1} parent=11 // pred_region
          _
        $region44: #{tpu_custom_call.1} parent=11 // pred_fallthru
          _
        // Predicated region
        $region45: #{tpu_custom_call.1} parent=11 // pred_check
          %p299 = pneg %p234
        $region46: #{tpu_custom_call.1} parent=11 // pred_check_branch
          %301 = sbr.rel (%p299) target = $region48
        $region47: #{tpu_custom_call.1} parent=11 // pred_region
          _
        $region48: #{tpu_custom_call.1} parent=11 // pred_fallthru
          _
      $region12: #{tpu_custom_call.1} parent=5 // pred_fallthru
        _
      %p302 = scmp.lt.s32.totalorder %s19, 2
      // Predicated region
      $region49: #{tpu_custom_call.1} parent=5 // pred_check
        %p303 = pneg %p302
      $region50: #{tpu_custom_call.1} parent=5 // pred_check_branch
        %305 = sbr.rel (%p303) target = $region52
      $region51: #{tpu_custom_call.1} parent=5 // pred_region
        // Predicated region
        $region53: #{tpu_custom_call.1} parent=51 // pred_check
          %p306 = pneg %p39
        $region54: #{tpu_custom_call.1} parent=51 // pred_check_branch
          %308 = sbr.rel (%p306) target = $region56
        $region55: #{tpu_custom_call.1} parent=51 // pred_region
          %p309 = scmp.lt.s32.totalorder %s19, 1
          %s310 = scalar_select %p309, %s19, 1
          %s311 = smul.addr %s310, 32
          %s312 = smul.addr %s311, 8
          %s313 = scalar_lea.vmem %s0, %s312
        $region56: #{tpu_custom_call.1} parent=51 // pred_fallthru
          _
      $region52: #{tpu_custom_call.1} parent=5 // pred_fallthru
        _
      %p314 = scmp.le.s32.totalorder 1, %s19
      %p315 = scmp.lt.s32.totalorder %s19, 3
      %p316 = pnand %p314, %p315
      %p317 = pneg %p316
      // Predicated region
      $region57: #{tpu_custom_call.1} parent=5 // pred_check
        _
      $region58: #{tpu_custom_call.1} parent=5 // pred_check_branch
        %319 = sbr.rel (%p316) target = $region60
      $region59: #{tpu_custom_call.1} parent=5 // pred_region
        %s320 = ssub.s32 %s19, 1
        %p321 = scmp.lt.s32.totalorder %s24, 1
        %s322 = scalar_select %p321, %s24, 1
        %s323 = smul.addr %s322, 32
        %s324 = smul.addr %s323, 8
        %s325 = scalar_lea.vmem %s0, %s324
        %p326 = pneg %p45
        %p327 = pneg %p42
        %p328 = pneg %p66
        %p329 = pneg %p63
        %p330 = pneg %p87
        %p331 = pneg %p84
        %p332 = pneg %p108
        %p333 = pneg %p105
        %p334 = pneg %p129
        %p335 = pneg %p126
        %p336 = pneg %p150
        %p337 = pneg %p147
        %p338 = pneg %p171
        %p339 = pneg %p168
        %p340 = pneg %p192
        %p341 = pneg %p189
        %p342 = pneg %p213
        %p343 = pneg %p210
        %p344 = pneg %p234
        %p345 = pneg %p231
        %p346 = pneg %p260
        %p347 = pneg %p257
        %s348 = sand.u32 %s247, 1
        %s349 = scalar_lea.sflag [#allocation5], %s348
        %s350 = sand.u32 %s247, 1
        %s351 = smul.addr %s350, 256
        %s352 = scalar_lea.vmem [#allocation4], %s351
        %p353 = scmp.lt.s32.totalorder %s24, 1
        %s354 = scalar_select %p353, %s24, 1
        %s355 = smul.addr %s354, 32
        %s356 = smul.addr %s355, 8
        %s357 = scalar_lea.vmem %s0, %s356
        %vm359 = vcmask 93184
        %360 = vst.msk [vmem:[#allocation2] sm:$0xf] %vm359, 0
        %361 = vst.msk [vmem:[#allocation2 + $0x4] sm:$0xf] %vm359, 0
        %vm362 = vcmask 90112
        %363 = vst.msk [vmem:[#allocation2 + $0x8] sm:$0x1] %vm362, 0
        %s364 = scalar_lea.vmem [#allocation2], 204
        %365 = vst.msk [vmem:[%s364] sm:$0xf] %vm359, 0
        %366 = vst.msk [vmem:[%s364 + $0x4] sm:$0xf] %vm359, 0
        %367 = vst.msk [vmem:[%s364 + $0x8] sm:$0x1] %vm362, 0
        %vm368 = vcmask 90112
        %vm369 = vsmask.f32 256
        %vm370 = vmand %vm368, %vm369
        %v371 = vld [vmem:[#allocation2] sm:$0x1]
        %v372 = vsel %vm370, 0, %v371
        %373 = vst [vmem:[#allocation2] sm:$0x1] %v372
        %v374 = vld [vmem:[#allocation2 + $0xc] sm:$0x1]
        %v375 = vsel %vm370, 0, %v374
        %376 = vst [vmem:[#allocation2 + $0xc] sm:$0x1] %v375
        %v377 = vld [vmem:[#allocation2 + $0x18] sm:$0x1]
        %v378 = vsel %vm370, 0, %v377
        %379 = vst [vmem:[#allocation2 + $0x18] sm:$0x1] %v378
        %v380 = vld [vmem:[#allocation2 + $0x24] sm:$0x1]
        %v381 = vsel %vm370, 0, %v380
        %382 = vst [vmem:[#allocation2 + $0x24] sm:$0x1] %v381
        %v383 = vld [vmem:[#allocation2 + $0x30] sm:$0x1]
        %v384 = vsel %vm370, 0, %v383
        %385 = vst [vmem:[#allocation2 + $0x30] sm:$0x1] %v384
        %v386 = vld [vmem:[#allocation2 + $0x3c] sm:$0x1]
        %v387 = vsel %vm370, 0, %v386
        %388 = vst [vmem:[#allocation2 + $0x3c] sm:$0x1] %v387
        %v389 = vld [vmem:[#allocation2 + $0x48] sm:$0x1]
        %v390 = vsel %vm370, 0, %v389
        %391 = vst [vmem:[#allocation2 + $0x48] sm:$0x1] %v390
        %v392 = vld [vmem:[#allocation2 + $0x54] sm:$0x1]
        %v393 = vsel %vm370, 0, %v392
        %394 = vst [vmem:[#allocation2 + $0x54] sm:$0x1] %v393
        %v395 = vld [vmem:[#allocation2 + $0x60] sm:$0x1]
        %v396 = vsel %vm370, 0, %v395
        %397 = vst [vmem:[#allocation2 + $0x60] sm:$0x1] %v396
        %v398 = vld [vmem:[#allocation2 + $0x6c] sm:$0x1]
        %v399 = vsel %vm370, 0, %v398
        %400 = vst [vmem:[#allocation2 + $0x6c] sm:$0x1] %v399
        %v401 = vld [vmem:[#allocation2 + $0x78] sm:$0x1]
        %v402 = vsel %vm370, 0, %v401
        %403 = vst [vmem:[#allocation2 + $0x78] sm:$0x1] %v402
        %v404 = vld [vmem:[#allocation2 + $0x84] sm:$0x1]
        %v405 = vsel %vm370, 0, %v404
        %406 = vst [vmem:[#allocation2 + $0x84] sm:$0x1] %v405
        %v407 = vld [vmem:[#allocation2 + $0x90] sm:$0x1]
        %v408 = vsel %vm370, 0, %v407
        %409 = vst [vmem:[#allocation2 + $0x90] sm:$0x1] %v408
        %v410 = vld [vmem:[#allocation2 + $0x9c] sm:$0x1]
        %v411 = vsel %vm370, 0, %v410
        %412 = vst [vmem:[#allocation2 + $0x9c] sm:$0x1] %v411
        %v413 = vld [vmem:[#allocation2 + $0xa8] sm:$0x1]
        %v414 = vsel %vm370, 0, %v413
        %415 = vst [vmem:[#allocation2 + $0xa8] sm:$0x1] %v414
        %v416 = vld [vmem:[#allocation2 + $0xb4] sm:$0x1]
        %v417 = vsel %vm370, 0, %v416
        %418 = vst [vmem:[#allocation2 + $0xb4] sm:$0x1] %v417
        %v419 = vld [vmem:[#allocation2 + $0xc0] sm:$0x1]
        %v420 = vsel %vm370, 0, %v419
        %421 = vst [vmem:[#allocation2 + $0xc0] sm:$0x1] %v420
        %v422 = vld [vmem:[#allocation2 + $0xcc] sm:$0x1]
        %v423 = vsel %vm370, 0, %v422
        %424 = vst [vmem:[#allocation2 + $0xcc] sm:$0x1] %v423
        %vm425 = vsmask.f32 7938
        %vm426 = vmand %vm368, %vm425
        %v427 = vld [vmem:[#allocation2 + $0x8] sm:$0x1]
        %v428 = vsel %vm426, 0, %v427
        %429 = vst [vmem:[#allocation2 + $0x8] sm:$0x1] %v428
        %v430 = vld [vmem:[#allocation2 + $0x14] sm:$0x1]
        %v431 = vsel %vm426, 0, %v430
        %432 = vst [vmem:[#allocation2 + $0x14] sm:$0x1] %v431
        %v433 = vld [vmem:[#allocation2 + $0x20] sm:$0x1]
        %v434 = vsel %vm426, 0, %v433
        %435 = vst [vmem:[#allocation2 + $0x20] sm:$0x1] %v434
        %v436 = vld [vmem:[#allocation2 + $0x2c] sm:$0x1]
        %v437 = vsel %vm426, 0, %v436
        %438 = vst [vmem:[#allocation2 + $0x2c] sm:$0x1] %v437
        %v439 = vld [vmem:[#allocation2 + $0x38] sm:$0x1]
        %v440 = vsel %vm426, 0, %v439
        %441 = vst [vmem:[#allocation2 + $0x38] sm:$0x1] %v440
        %v442 = vld [vmem:[#allocation2 + $0x44] sm:$0x1]
        %v443 = vsel %vm426, 0, %v442
        %444 = vst [vmem:[#allocation2 + $0x44] sm:$0x1] %v443
        %v445 = vld [vmem:[#allocation2 + $0x50] sm:$0x1]
        %v446 = vsel %vm426, 0, %v445
        %447 = vst [vmem:[#allocation2 + $0x50] sm:$0x1] %v446
        %v448 = vld [vmem:[#allocation2 + $0x5c] sm:$0x1]
        %v449 = vsel %vm426, 0, %v448
        %450 = vst [vmem:[#allocation2 + $0x5c] sm:$0x1] %v449
        %v451 = vld [vmem:[#allocation2 + $0x68] sm:$0x1]
        %v452 = vsel %vm426, 0, %v451
        %453 = vst [vmem:[#allocation2 + $0x68] sm:$0x1] %v452
        %v454 = vld [vmem:[#allocation2 + $0x74] sm:$0x1]
        %v455 = vsel %vm426, 0, %v454
        %456 = vst [vmem:[#allocation2 + $0x74] sm:$0x1] %v455
        %v457 = vld [vmem:[#allocation2 + $0x80] sm:$0x1]
        %v458 = vsel %vm426, 0, %v457
        %459 = vst [vmem:[#allocation2 + $0x80] sm:$0x1] %v458
        %v460 = vld [vmem:[#allocation2 + $0x8c] sm:$0x1]
        %v461 = vsel %vm426, 0, %v460
        %462 = vst [vmem:[#allocation2 + $0x8c] sm:$0x1] %v461
        %v463 = vld [vmem:[#allocation2 + $0x98] sm:$0x1]
        %v464 = vsel %vm426, 0, %v463
        %465 = vst [vmem:[#allocation2 + $0x98] sm:$0x1] %v464
        %v466 = vld [vmem:[#allocation2 + $0xa4] sm:$0x1]
        %v467 = vsel %vm426, 0, %v466
        %468 = vst [vmem:[#allocation2 + $0xa4] sm:$0x1] %v467
        %v469 = vld [vmem:[#allocation2 + $0xb0] sm:$0x1]
        %v470 = vsel %vm426, 0, %v469
        %471 = vst [vmem:[#allocation2 + $0xb0] sm:$0x1] %v470
        %v472 = vld [vmem:[#allocation2 + $0xbc] sm:$0x1]
        %v473 = vsel %vm426, 0, %v472
        %474 = vst [vmem:[#allocation2 + $0xbc] sm:$0x1] %v473
        %v475 = vld [vmem:[#allocation2 + $0xc8] sm:$0x1]
        %v476 = vsel %vm426, 0, %v475
        %477 = vst [vmem:[#allocation2 + $0xc8] sm:$0x1] %v476
        %v478 = vld [vmem:[#allocation2 + $0xd4] sm:$0x1]
        %v479 = vsel %vm426, 0, %v478
        %480 = vst [vmem:[#allocation2 + $0xd4] sm:$0x1] %v479
        %v481 = vld [vmem:[%s357] sm:$0xff]
        %v482 = vld [vmem:[%s357 + $0x8] sm:$0xff]
        %v483 = vld [vmem:[%s357 + $0x10] sm:$0xff]
        %v484 = vld [vmem:[%s357 + $0x18] sm:$0xff]
        %v485 = vld [vmem:[%s357 + $0x20] sm:$0xff]
        %v486 = vld [vmem:[%s357 + $0x28] sm:$0xff]
        %v487 = vld [vmem:[%s357 + $0x30] sm:$0xff]
        %v488 = vld [vmem:[%s357 + $0x38] sm:$0xff]
        %v489 = vld [vmem:[%s357 + $0x40] sm:$0xff]
        %v490 = vld [vmem:[%s357 + $0x48] sm:$0xff]
        %v491 = vld [vmem:[%s357 + $0x50] sm:$0xff]
        %v492 = vld [vmem:[%s357 + $0x58] sm:$0xff]
        %v493 = vld [vmem:[%s357 + $0x60] sm:$0xff]
        %v494 = vld [vmem:[%s357 + $0x68] sm:$0xff]
        %v495 = vld [vmem:[%s357 + $0x70] sm:$0xff]
        %v496 = vld [vmem:[%s357 + $0x78] sm:$0xff]
        %v497 = vld [vmem:[%s357 + $0x80] sm:$0xff]
        %v498 = vld [vmem:[%s357 + $0x88] sm:$0xff]
        %v499 = vld [vmem:[%s357 + $0x90] sm:$0xff]
        %v500 = vld [vmem:[%s357 + $0x98] sm:$0xff]
        %v501 = vld [vmem:[%s357 + $0xa0] sm:$0xff]
        %v502 = vld [vmem:[%s357 + $0xa8] sm:$0xff]
        %v503 = vld [vmem:[%s357 + $0xb0] sm:$0xff]
        %v504 = vld [vmem:[%s357 + $0xb8] sm:$0xff]
        %v505 = vld [vmem:[%s357 + $0xc0] sm:$0xff]
        %v506 = vld [vmem:[%s357 + $0xc8] sm:$0xff]
        %v507 = vld [vmem:[%s357 + $0xd0] sm:$0xff]
        %v508 = vld [vmem:[%s357 + $0xd8] sm:$0xff]
        %v509 = vld [vmem:[%s357 + $0xe0] sm:$0xff]
        %v510 = vld [vmem:[%s357 + $0xe8] sm:$0xff]
        %v511 = vld [vmem:[%s357 + $0xf0] sm:$0xff]
        %v512 = vld [vmem:[%s357 + $0xf8] sm:$0xff]
        %vm513 = vcmask 31744
        %514 = vst.msk [vmem:[%s352] sm:$0xff] %vm513, %v481
        %515 = vst.msk [vmem:[%s352 + $0x8] sm:$0xff] %vm513, %v482
        %516 = vst.msk [vmem:[%s352 + $0x10] sm:$0xff] %vm513, %v483
        %517 = vst.msk [vmem:[%s352 + $0x18] sm:$0xff] %vm513, %v484
        %518 = vst.msk [vmem:[%s352 + $0x20] sm:$0xff] %vm513, %v485
        %519 = vst.msk [vmem:[%s352 + $0x28] sm:$0xff] %vm513, %v486
        %520 = vst.msk [vmem:[%s352 + $0x30] sm:$0xff] %vm513, %v487
        %521 = vst.msk [vmem:[%s352 + $0x38] sm:$0xff] %vm513, %v488
        %522 = vst.msk [vmem:[%s352 + $0x40] sm:$0xff] %vm513, %v489
        %523 = vst.msk [vmem:[%s352 + $0x48] sm:$0xff] %vm513, %v490
        %524 = vst.msk [vmem:[%s352 + $0x50] sm:$0xff] %vm513, %v491
        %525 = vst.msk [vmem:[%s352 + $0x58] sm:$0xff] %vm513, %v492
        %526 = vst.msk [vmem:[%s352 + $0x60] sm:$0xff] %vm513, %v493
        %527 = vst.msk [vmem:[%s352 + $0x68] sm:$0xff] %vm513, %v494
        %528 = vst.msk [vmem:[%s352 + $0x70] sm:$0xff] %vm513, %v495
        %529 = vst.msk [vmem:[%s352 + $0x78] sm:$0xff] %vm513, %v496
        %530 = vst.msk [vmem:[%s352 + $0x80] sm:$0xff] %vm513, %v497
        %531 = vst.msk [vmem:[%s352 + $0x88] sm:$0xff] %vm513, %v498
        %532 = vst.msk [vmem:[%s352 + $0x90] sm:$0xff] %vm513, %v499
        %533 = vst.msk [vmem:[%s352 + $0x98] sm:$0xff] %vm513, %v500
        %534 = vst.msk [vmem:[%s352 + $0xa0] sm:$0xff] %vm513, %v501
        %535 = vst.msk [vmem:[%s352 + $0xa8] sm:$0xff] %vm513, %v502
        %536 = vst.msk [vmem:[%s352 + $0xb0] sm:$0xff] %vm513, %v503
        %537 = vst.msk [vmem:[%s352 + $0xb8] sm:$0xff] %vm513, %v504
        %538 = vst.msk [vmem:[%s352 + $0xc0] sm:$0xff] %vm513, %v505
        %539 = vst.msk [vmem:[%s352 + $0xc8] sm:$0xff] %vm513, %v506
        %540 = vst.msk [vmem:[%s352 + $0xd0] sm:$0xff] %vm513, %v507
        %541 = vst.msk [vmem:[%s352 + $0xd8] sm:$0xff] %vm513, %v508
        %542 = vst.msk [vmem:[%s352 + $0xe0] sm:$0xff] %vm513, %v509
        %543 = vst.msk [vmem:[%s352 + $0xe8] sm:$0xff] %vm513, %v510
        %544 = vst.msk [vmem:[%s352 + $0xf0] sm:$0xff] %vm513, %v511
        %545 = vst.msk [vmem:[%s352 + $0xf8] sm:$0xff] %vm513, %v512
        %v546 = vld [vmem:[%s352] sm:$0xff]
        %v547 = vld [vmem:[%s352 + $0x8] sm:$0xff]
        %v548 = vld [vmem:[%s352 + $0x10] sm:$0xff]
        %v549 = vld [vmem:[%s352 + $0x18] sm:$0xff]
        %v550 = vld [vmem:[%s352 + $0x20] sm:$0xff]
        %v551 = vld [vmem:[%s352 + $0x28] sm:$0xff]
        %v552 = vld [vmem:[%s352 + $0x30] sm:$0xff]
        %v553 = vld [vmem:[%s352 + $0x38] sm:$0xff]
        %v554 = vld [vmem:[%s352 + $0x40] sm:$0xff]
        %v555 = vld [vmem:[%s352 + $0x48] sm:$0xff]
        %v556 = vld [vmem:[%s352 + $0x50] sm:$0xff]
        %v557 = vld [vmem:[%s352 + $0x58] sm:$0xff]
        %v558 = vld [vmem:[%s352 + $0x60] sm:$0xff]
        %v559 = vld [vmem:[%s352 + $0x68] sm:$0xff]
        %v560 = vld [vmem:[%s352 + $0x70] sm:$0xff]
        %v561 = vld [vmem:[%s352 + $0x78] sm:$0xff]
        %v562 = vld [vmem:[%s352 + $0x80] sm:$0xff]
        %v563 = vld [vmem:[%s352 + $0x88] sm:$0xff]
        %v564 = vld [vmem:[%s352 + $0x90] sm:$0xff]
        %v565 = vld [vmem:[%s352 + $0x98] sm:$0xff]
        %v566 = vld [vmem:[%s352 + $0xa0] sm:$0xff]
        %v567 = vld [vmem:[%s352 + $0xa8] sm:$0xff]
        %v568 = vld [vmem:[%s352 + $0xb0] sm:$0xff]
        %v569 = vld [vmem:[%s352 + $0xb8] sm:$0xff]
        %v570 = vld [vmem:[%s352 + $0xc0] sm:$0xff]
        %v571 = vld [vmem:[%s352 + $0xc8] sm:$0xff]
        %v572 = vld [vmem:[%s352 + $0xd0] sm:$0xff]
        %v573 = vld [vmem:[%s352 + $0xd8] sm:$0xff]
        %v574 = vld [vmem:[%s352 + $0xe0] sm:$0xff]
        %v575 = vld [vmem:[%s352 + $0xe8] sm:$0xff]
        %v576 = vld [vmem:[%s352 + $0xf0] sm:$0xff]
        %v577 = vld [vmem:[%s352 + $0xf8] sm:$0xff]
        %v578 = vld [vmem:[%s1] sm:$0x1]
        %v580 = vlaneseq
        %v581 = vshrl.u32 %v580, 7
        %v582 = vsub.s32 0, %v581
        %v583 = vrot.slane %v578, %v582
        %v585 = vmul.f32 %v546, %v583
        %v586 = vmul.f32 %v547, %v583
        %v587 = vmul.f32 %v548, %v583
        %v588 = vmul.f32 %v549, %v583
        %v589 = vmul.f32 %v550, %v583
        %v590 = vmul.f32 %v551, %v583
        %v591 = vmul.f32 %v552, %v583
        %v592 = vmul.f32 %v553, %v583
        %v593 = vmul.f32 %v554, %v583
        %v594 = vmul.f32 %v555, %v583
        %v595 = vmul.f32 %v556, %v583
        %v596 = vmul.f32 %v557, %v583
        %v597 = vmul.f32 %v558, %v583
        %v598 = vmul.f32 %v559, %v583
        %v599 = vmul.f32 %v560, %v583
        %v600 = vmul.f32 %v561, %v583
        %v601 = vmul.f32 %v562, %v583
        %v602 = vmul.f32 %v563, %v583
        %v603 = vmul.f32 %v564, %v583
        %v604 = vmul.f32 %v565, %v583
        %v605 = vmul.f32 %v566, %v583
        %v606 = vmul.f32 %v567, %v583
        %v607 = vmul.f32 %v568, %v583
        %v608 = vmul.f32 %v569, %v583
        %v609 = vmul.f32 %v570, %v583
        %v610 = vmul.f32 %v571, %v583
        %v611 = vmul.f32 %v572, %v583
        %v612 = vmul.f32 %v573, %v583
        %v613 = vmul.f32 %v574, %v583
        %v614 = vmul.f32 %v575, %v583
        %v615 = vmul.f32 %v576, %v583
        %v616 = vmul.f32 %v577, %v583
        %v617 = vld [vmem:[%s2] sm:$0x1]
        %v619 = vlaneseq
        %v620 = vshrl.u32 %v619, 7
        %v621 = vsub.s32 0, %v620
        %v622 = vrot.slane %v617, %v621
        %v624 = vadd.f32 %v585, %v622
        %v625 = vadd.f32 %v586, %v622
        %v626 = vadd.f32 %v587, %v622
        %v627 = vadd.f32 %v588, %v622
        %v628 = vadd.f32 %v589, %v622
        %v629 = vadd.f32 %v590, %v622
        %v630 = vadd.f32 %v591, %v622
        %v631 = vadd.f32 %v592, %v622
        %v632 = vadd.f32 %v593, %v622
        %v633 = vadd.f32 %v594, %v622
        %v634 = vadd.f32 %v595, %v622
        %v635 = vadd.f32 %v596, %v622
        %v636 = vadd.f32 %v597, %v622
        %v637 = vadd.f32 %v598, %v622
        %v638 = vadd.f32 %v599, %v622
        %v639 = vadd.f32 %v600, %v622
        %v640 = vadd.f32 %v601, %v622
        %v641 = vadd.f32 %v602, %v622
        %v642 = vadd.f32 %v603, %v622
        %v643 = vadd.f32 %v604, %v622
        %v644 = vadd.f32 %v605, %v622
        %v645 = vadd.f32 %v606, %v622
        %v646 = vadd.f32 %v607, %v622
        %v647 = vadd.f32 %v608, %v622
        %v648 = vadd.f32 %v609, %v622
        %v649 = vadd.f32 %v610, %v622
        %v650 = vadd.f32 %v611, %v622
        %v651 = vadd.f32 %v612, %v622
        %v652 = vadd.f32 %v613, %v622
        %v653 = vadd.f32 %v614, %v622
        %v654 = vadd.f32 %v615, %v622
        %v655 = vadd.f32 %v616, %v622
        %v656 = vmax.f32 %v624, 0.0
        %v657 = vmax.f32 %v625, 0.0
        %v658 = vmax.f32 %v626, 0.0
        %v659 = vmax.f32 %v627, 0.0
        %v660 = vmax.f32 %v628, 0.0
        %v661 = vmax.f32 %v629, 0.0
        %v662 = vmax.f32 %v630, 0.0
        %v663 = vmax.f32 %v631, 0.0
        %v664 = vmax.f32 %v632, 0.0
        %v665 = vmax.f32 %v633, 0.0
        %v666 = vmax.f32 %v634, 0.0
        %v667 = vmax.f32 %v635, 0.0
        %v668 = vmax.f32 %v636, 0.0
        %v669 = vmax.f32 %v637, 0.0
        %v670 = vmax.f32 %v638, 0.0
        %v671 = vmax.f32 %v639, 0.0
        %v672 = vmax.f32 %v640, 0.0
        %v673 = vmax.f32 %v641, 0.0
        %v674 = vmax.f32 %v642, 0.0
        %v675 = vmax.f32 %v643, 0.0
        %v676 = vmax.f32 %v644, 0.0
        %v677 = vmax.f32 %v645, 0.0
        %v678 = vmax.f32 %v646, 0.0
        %v679 = vmax.f32 %v647, 0.0
        %v680 = vmax.f32 %v648, 0.0
        %v681 = vmax.f32 %v649, 0.0
        %v682 = vmax.f32 %v650, 0.0
        %v683 = vmax.f32 %v651, 0.0
        %v684 = vmax.f32 %v652, 0.0
        %v685 = vmax.f32 %v653, 0.0
        %v686 = vmax.f32 %v654, 0.0
        %v687 = vmax.f32 %v655, 0.0
        %v688 = vpack.c.bf16 %v657, %v656
        %v689 = vpack.c.bf16 %v659, %v658
        %v690 = vpack.c.bf16 %v661, %v660
        %v691 = vpack.c.bf16 %v663, %v662
        %v692 = vpack.c.bf16 %v665, %v664
        %v693 = vpack.c.bf16 %v667, %v666
        %v694 = vpack.c.bf16 %v669, %v668
        %v695 = vpack.c.bf16 %v671, %v670
        %v696 = vpack.c.bf16 %v673, %v672
        %v697 = vpack.c.bf16 %v675, %v674
        %v698 = vpack.c.bf16 %v677, %v676
        %v699 = vpack.c.bf16 %v679, %v678
        %v700 = vpack.c.bf16 %v681, %v680
        %v701 = vpack.c.bf16 %v683, %v682
        %v702 = vpack.c.bf16 %v685, %v684
        %v703 = vpack.c.bf16 %v687, %v686
        %v720 = vunpack.c.l.b16 %v688
        %v721 = vunpack.c.h.b16 %v688
        %v722 = vunpack.c.l.b16 %v689
        %v723 = vunpack.c.h.b16 %v689
        %v724 = vunpack.c.l.b16 %v690
        %v725 = vunpack.c.h.b16 %v690
        %v726 = vunpack.c.l.b16 %v691
        %v727 = vunpack.c.h.b16 %v691
        %v728 = vunpack.c.l.b16 %v692
        %v729 = vunpack.c.h.b16 %v692
        %v730 = vunpack.c.l.b16 %v693
        %v731 = vunpack.c.h.b16 %v693
        %v732 = vunpack.c.l.b16 %v694
        %v733 = vunpack.c.h.b16 %v694
        %v734 = vunpack.c.l.b16 %v695
        %v735 = vunpack.c.h.b16 %v695
        %v736 = vunpack.c.l.b16 %v696
        %v737 = vunpack.c.h.b16 %v696
        %v738 = vunpack.c.l.b16 %v697
        %v739 = vunpack.c.h.b16 %v697
        %v740 = vunpack.c.l.b16 %v698
        %v741 = vunpack.c.h.b16 %v698
        %v742 = vunpack.c.l.b16 %v699
        %v743 = vunpack.c.h.b16 %v699
        %v744 = vunpack.c.l.b16 %v700
        %v745 = vunpack.c.h.b16 %v700
        %v746 = vunpack.c.l.b16 %v701
        %v747 = vunpack.c.h.b16 %v701
        %v748 = vunpack.c.l.b16 %v702
        %v749 = vunpack.c.h.b16 %v702
        %v750 = vunpack.c.l.b16 %v703
        %v751 = vunpack.c.h.b16 %v703
        %v752 = vpack.c.b16 %v720, %v720
        %v753 = vpack.c.b16 %v721, %v721
        %v754 = vpack.c.b16 %v722, %v722
        %v755 = vpack.c.b16 %v723, %v723
        %v756 = vpack.c.b16 %v724, %v724
        %v757 = vpack.c.b16 %v725, %v725
        %v758 = vpack.c.b16 %v726, %v726
        %v759 = vpack.c.b16 %v727, %v727
        %v760 = vpack.c.b16 %v728, %v728
        %v761 = vpack.c.b16 %v729, %v729
        %v762 = vpack.c.b16 %v730, %v730
        %v763 = vpack.c.b16 %v731, %v731
        %v764 = vpack.c.b16 %v732, %v732
        %v765 = vpack.c.b16 %v733, %v733
        %v766 = vpack.c.b16 %v734, %v734
        %v767 = vpack.c.b16 %v735, %v735
        %v768 = vpack.c.b16 %v736, %v736
        %v769 = vpack.c.b16 %v737, %v737
        %v770 = vpack.c.b16 %v738, %v738
        %v771 = vpack.c.b16 %v739, %v739
        %v772 = vpack.c.b16 %v740, %v740
        %v773 = vpack.c.b16 %v741, %v741
        %v774 = vpack.c.b16 %v742, %v742
        %v775 = vpack.c.b16 %v743, %v743
        %v776 = vpack.c.b16 %v744, %v744
        %v777 = vpack.c.b16 %v745, %v745
        %v778 = vpack.c.b16 %v746, %v746
        %v779 = vpack.c.b16 %v747, %v747
        %v780 = vpack.c.b16 %v748, %v748
        %v781 = vpack.c.b16 %v749, %v749
        %v782 = vpack.c.b16 %v750, %v750
        %v783 = vpack.c.b16 %v751, %v751
        %vm784 = vsmask.f32 4368
        %vm785 = vmor %vm369, %vm784
        %v787 = vshrl.u32 %v752, 16
        %v789 = vrot.slane %v787, 7
        %v790 = vshll.u32 %v752, 16
        %v792 = vor.u32 %v789, %v790
        %v793 = vrot.slane %v789, 4
        %v795 = vshrl.u32 %v753, 16
        %v797 = vrot.slane %v795, 7
        %v798 = vshll.u32 %v753, 16
        %v800 = vor.u32 %v797, %v798
        %v801 = vsel %vm785, %v793, %v800
        %v802 = vrot.slane %v797, 4
        %v804 = vshrl.u32 %v754, 16
        %v806 = vrot.slane %v804, 7
        %v807 = vshll.u32 %v754, 16
        %v809 = vor.u32 %v806, %v807
        %v810 = vrot.slane %v806, 4
        %v812 = vshrl.u32 %v755, 16
        %v814 = vrot.slane %v812, 7
        %v815 = vshll.u32 %v755, 16
        %v817 = vor.u32 %v814, %v815
        %v818 = vsel %vm785, %v810, %v817
        %v819 = vrot.slane %v814, 4
        %v821 = vshrl.u32 %v756, 16
        %v823 = vrot.slane %v821, 7
        %v824 = vshll.u32 %v756, 16
        %v826 = vor.u32 %v823, %v824
        %v827 = vrot.slane %v823, 4
        %v829 = vshrl.u32 %v757, 16
        %v831 = vrot.slane %v829, 7
        %v832 = vshll.u32 %v757, 16
        %v834 = vor.u32 %v831, %v832
        %v835 = vsel %vm785, %v827, %v834
        %v836 = vrot.slane %v831, 4
        %v838 = vshrl.u32 %v758, 16
        %v840 = vrot.slane %v838, 7
        %v841 = vshll.u32 %v758, 16
        %v843 = vor.u32 %v840, %v841
        %v844 = vrot.slane %v840, 4
        %v846 = vshrl.u32 %v759, 16
        %v848 = vrot.slane %v846, 7
        %v849 = vshll.u32 %v759, 16
        %v851 = vor.u32 %v848, %v849
        %v852 = vsel %vm785, %v844, %v851
        %v853 = vrot.slane %v848, 4
        %v855 = vshrl.u32 %v760, 16
        %v857 = vrot.slane %v855, 7
        %v858 = vshll.u32 %v760, 16
        %v860 = vor.u32 %v857, %v858
        %v861 = vrot.slane %v857, 4
        %v863 = vshrl.u32 %v761, 16
        %v865 = vrot.slane %v863, 7
        %v866 = vshll.u32 %v761, 16
        %v868 = vor.u32 %v865, %v866
        %v869 = vsel %vm785, %v861, %v868
        %v870 = vrot.slane %v865, 4
        %v872 = vshrl.u32 %v762, 16
        %v874 = vrot.slane %v872, 7
        %v875 = vshll.u32 %v762, 16
        %v877 = vor.u32 %v874, %v875
        %v878 = vrot.slane %v874, 4
        %v880 = vshrl.u32 %v763, 16
        %v882 = vrot.slane %v880, 7
        %v883 = vshll.u32 %v763, 16
        %v885 = vor.u32 %v882, %v883
        %v886 = vsel %vm785, %v878, %v885
        %v887 = vrot.slane %v882, 4
        %v889 = vshrl.u32 %v764, 16
        %v891 = vrot.slane %v889, 7
        %v892 = vshll.u32 %v764, 16
        %v894 = vor.u32 %v891, %v892
        %v895 = vrot.slane %v891, 4
        %v897 = vshrl.u32 %v765, 16
        %v899 = vrot.slane %v897, 7
        %v900 = vshll.u32 %v765, 16
        %v902 = vor.u32 %v899, %v900
        %v903 = vsel %vm785, %v895, %v902
        %v904 = vrot.slane %v899, 4
        %v906 = vshrl.u32 %v766, 16
        %v908 = vrot.slane %v906, 7
        %v909 = vshll.u32 %v766, 16
        %v911 = vor.u32 %v908, %v909
        %v912 = vrot.slane %v908, 4
        %v914 = vshrl.u32 %v767, 16
        %v916 = vrot.slane %v914, 7
        %v917 = vshll.u32 %v767, 16
        %v919 = vor.u32 %v916, %v917
        %v920 = vsel %vm785, %v912, %v919
        %v921 = vrot.slane %v916, 4
        %v923 = vshrl.u32 %v768, 16
        %v925 = vrot.slane %v923, 7
        %v926 = vshll.u32 %v768, 16
        %v928 = vor.u32 %v925, %v926
        %v929 = vrot.slane %v925, 4
        %v931 = vshrl.u32 %v769, 16
        %v933 = vrot.slane %v931, 7
        %v934 = vshll.u32 %v769, 16
        %v936 = vor.u32 %v933, %v934
        %v937 = vsel %vm785, %v929, %v936
        %v938 = vrot.slane %v933, 4
        %v940 = vshrl.u32 %v770, 16
        %v942 = vrot.slane %v940, 7
        %v943 = vshll.u32 %v770, 16
        %v945 = vor.u32 %v942, %v943
        %v946 = vrot.slane %v942, 4
        %v948 = vshrl.u32 %v771, 16
        %v950 = vrot.slane %v948, 7
        %v951 = vshll.u32 %v771, 16
        %v953 = vor.u32 %v950, %v951
        %v954 = vsel %vm785, %v946, %v953
        %v955 = vrot.slane %v950, 4
        %v957 = vshrl.u32 %v772, 16
        %v959 = vrot.slane %v957, 7
        %v960 = vshll.u32 %v772, 16
        %v962 = vor.u32 %v959, %v960
        %v963 = vrot.slane %v959, 4
        %v965 = vshrl.u32 %v773, 16
        %v967 = vrot.slane %v965, 7
        %v968 = vshll.u32 %v773, 16
        %v970 = vor.u32 %v967, %v968
        %v971 = vsel %vm785, %v963, %v970
        %v972 = vrot.slane %v967, 4
        %v974 = vshrl.u32 %v774, 16
        %v976 = vrot.slane %v974, 7
        %v977 = vshll.u32 %v774, 16
        %v979 = vor.u32 %v976, %v977
        %v980 = vrot.slane %v976, 4
        %v982 = vshrl.u32 %v775, 16
        %v984 = vrot.slane %v982, 7
        %v985 = vshll.u32 %v775, 16
        %v987 = vor.u32 %v984, %v985
        %v988 = vsel %vm785, %v980, %v987
        %v989 = vrot.slane %v984, 4
        %v991 = vshrl.u32 %v776, 16
        %v993 = vrot.slane %v991, 7
        %v994 = vshll.u32 %v776, 16
        %v996 = vor.u32 %v993, %v994
        %v997 = vrot.slane %v993, 4
        %v999 = vshrl.u32 %v777, 16
        %v1001 = vrot.slane %v999, 7
        %v1002 = vshll.u32 %v777, 16
        %v1004 = vor.u32 %v1001, %v1002
        %v1005 = vsel %vm785, %v997, %v1004
        %v1006 = vrot.slane %v1001, 4
        %v1008 = vshrl.u32 %v778, 16
        %v1010 = vrot.slane %v1008, 7
        %v1011 = vshll.u32 %v778, 16
        %v1013 = vor.u32 %v1010, %v1011
        %v1014 = vrot.slane %v1010, 4
        %v1016 = vshrl.u32 %v779, 16
        %v1018 = vrot.slane %v1016, 7
        %v1019 = vshll.u32 %v779, 16
        %v1021 = vor.u32 %v1018, %v1019
        %v1022 = vsel %vm785, %v1014, %v1021
        %v1023 = vrot.slane %v1018, 4
        %v1025 = vshrl.u32 %v780, 16
        %v1027 = vrot.slane %v1025, 7
        %v1028 = vshll.u32 %v780, 16
        %v1030 = vor.u32 %v1027, %v1028
        %v1031 = vrot.slane %v1027, 4
        %v1033 = vshrl.u32 %v781, 16
        %v1035 = vrot.slane %v1033, 7
        %v1036 = vshll.u32 %v781, 16
        %v1038 = vor.u32 %v1035, %v1036
        %v1039 = vsel %vm785, %v1031, %v1038
        %v1040 = vrot.slane %v1035, 4
        %v1042 = vshrl.u32 %v782, 16
        %v1044 = vrot.slane %v1042, 7
        %v1045 = vshll.u32 %v782, 16
        %v1047 = vor.u32 %v1044, %v1045
        %v1048 = vrot.slane %v1044, 4
        %v1050 = vshrl.u32 %v783, 16
        %v1052 = vrot.slane %v1050, 7
        %v1053 = vshll.u32 %v783, 16
        %v1055 = vor.u32 %v1052, %v1053
        %v1056 = vsel %vm785, %v1048, %v1055
        %v1057 = vrot.slane %v1052, 4
        %s1106 = scalar_lea.vmem [#allocation2], 12
        %vm1107 = vcmask 27648
        %vm1108 = vmand %vm1107, %vm425
        %v1109 = vld [vmem:[%s1106] sm:$0xf]
        %v1110 = vsel %vm1108, %v792, %v1109
        %1111 = vst [vmem:[%s1106] sm:$0xf] %v1110
        %vm1112 = vcmask 27648
        %1113 = vst.msk [vmem:[%s1106 + $0x4] sm:$0xf] %vm1112, %v801
        %vm1114 = vcmask 24576
        %vm1115 = vmand %vm1114, %vm369
        %v1116 = vld [vmem:[%s1106 + $0x8] sm:$0x1]
        %v1117 = vsel %vm1115, %v802, %v1116
        %1118 = vst [vmem:[%s1106 + $0x8] sm:$0x1] %v1117
        %v1119 = vld [vmem:[%s1106 + $0xc] sm:$0xf]
        %v1120 = vsel %vm1108, %v809, %v1119
        %1121 = vst [vmem:[%s1106 + $0xc] sm:$0xf] %v1120
        %1122 = vst.msk [vmem:[%s1106 + $0x10] sm:$0xf] %vm1112, %v818
        %v1123 = vld [vmem:[%s1106 + $0x14] sm:$0x1]
        %v1124 = vsel %vm1115, %v819, %v1123
        %1125 = vst [vmem:[%s1106 + $0x14] sm:$0x1] %v1124
        %v1126 = vld [vmem:[%s1106 + $0x18] sm:$0xf]
        %v1127 = vsel %vm1108, %v826, %v1126
        %1128 = vst [vmem:[%s1106 + $0x18] sm:$0xf] %v1127
        %1129 = vst.msk [vmem:[%s1106 + $0x1c] sm:$0xf] %vm1112, %v835
        %v1130 = vld [vmem:[%s1106 + $0x20] sm:$0x1]
        %v1131 = vsel %vm1115, %v836, %v1130
        %1132 = vst [vmem:[%s1106 + $0x20] sm:$0x1] %v1131
        %v1133 = vld [vmem:[%s1106 + $0x24] sm:$0xf]
        %v1134 = vsel %vm1108, %v843, %v1133
        %1135 = vst [vmem:[%s1106 + $0x24] sm:$0xf] %v1134
        %1136 = vst.msk [vmem:[%s1106 + $0x28] sm:$0xf] %vm1112, %v852
        %v1137 = vld [vmem:[%s1106 + $0x2c] sm:$0x1]
        %v1138 = vsel %vm1115, %v853, %v1137
        %1139 = vst [vmem:[%s1106 + $0x2c] sm:$0x1] %v1138
        %v1140 = vld [vmem:[%s1106 + $0x30] sm:$0xf]
        %v1141 = vsel %vm1108, %v860, %v1140
        %1142 = vst [vmem:[%s1106 + $0x30] sm:$0xf] %v1141
        %1143 = vst.msk [vmem:[%s1106 + $0x34] sm:$0xf] %vm1112, %v869
        %v1144 = vld [vmem:[%s1106 + $0x38] sm:$0x1]
        %v1145 = vsel %vm1115, %v870, %v1144
        %1146 = vst [vmem:[%s1106 + $0x38] sm:$0x1] %v1145
        %v1147 = vld [vmem:[%s1106 + $0x3c] sm:$0xf]
        %v1148 = vsel %vm1108, %v877, %v1147
        %1149 = vst [vmem:[%s1106 + $0x3c] sm:$0xf] %v1148
        %1150 = vst.msk [vmem:[%s1106 + $0x40] sm:$0xf] %vm1112, %v886
        %v1151 = vld [vmem:[%s1106 + $0x44] sm:$0x1]
        %v1152 = vsel %vm1115, %v887, %v1151
        %1153 = vst [vmem:[%s1106 + $0x44] sm:$0x1] %v1152
        %v1154 = vld [vmem:[%s1106 + $0x48] sm:$0xf]
        %v1155 = vsel %vm1108, %v894, %v1154
        %1156 = vst [vmem:[%s1106 + $0x48] sm:$0xf] %v1155
        %1157 = vst.msk [vmem:[%s1106 + $0x4c] sm:$0xf] %vm1112, %v903
        %v1158 = vld [vmem:[%s1106 + $0x50] sm:$0x1]
        %v1159 = vsel %vm1115, %v904, %v1158
        %1160 = vst [vmem:[%s1106 + $0x50] sm:$0x1] %v1159
        %v1161 = vld [vmem:[%s1106 + $0x54] sm:$0xf]
        %v1162 = vsel %vm1108, %v911, %v1161
        %1163 = vst [vmem:[%s1106 + $0x54] sm:$0xf] %v1162
        %1164 = vst.msk [vmem:[%s1106 + $0x58] sm:$0xf] %vm1112, %v920
        %v1165 = vld [vmem:[%s1106 + $0x5c] sm:$0x1]
        %v1166 = vsel %vm1115, %v921, %v1165
        %1167 = vst [vmem:[%s1106 + $0x5c] sm:$0x1] %v1166
        %v1168 = vld [vmem:[%s1106 + $0x60] sm:$0xf]
        %v1169 = vsel %vm1108, %v928, %v1168
        %1170 = vst [vmem:[%s1106 + $0x60] sm:$0xf] %v1169
        %1171 = vst.msk [vmem:[%s1106 + $0x64] sm:$0xf] %vm1112, %v937
        %v1172 = vld [vmem:[%s1106 + $0x68] sm:$0x1]
        %v1173 = vsel %vm1115, %v938, %v1172
        %1174 = vst [vmem:[%s1106 + $0x68] sm:$0x1] %v1173
        %v1175 = vld [vmem:[%s1106 + $0x6c] sm:$0xf]
        %v1176 = vsel %vm1108, %v945, %v1175
        %1177 = vst [vmem:[%s1106 + $0x6c] sm:$0xf] %v1176
        %1178 = vst.msk [vmem:[%s1106 + $0x70] sm:$0xf] %vm1112, %v954
        %v1179 = vld [vmem:[%s1106 + $0x74] sm:$0x1]
        %v1180 = vsel %vm1115, %v955, %v1179
        %1181 = vst [vmem:[%s1106 + $0x74] sm:$0x1] %v1180
        %v1182 = vld [vmem:[%s1106 + $0x78] sm:$0xf]
        %v1183 = vsel %vm1108, %v962, %v1182
        %1184 = vst [vmem:[%s1106 + $0x78] sm:$0xf] %v1183
        %1185 = vst.msk [vmem:[%s1106 + $0x7c] sm:$0xf] %vm1112, %v971
        %v1186 = vld [vmem:[%s1106 + $0x80] sm:$0x1]
        %v1187 = vsel %vm1115, %v972, %v1186
        %1188 = vst [vmem:[%s1106 + $0x80] sm:$0x1] %v1187
        %v1189 = vld [vmem:[%s1106 + $0x84] sm:$0xf]
        %v1190 = vsel %vm1108, %v979, %v1189
        %1191 = vst [vmem:[%s1106 + $0x84] sm:$0xf] %v1190
        %1192 = vst.msk [vmem:[%s1106 + $0x88] sm:$0xf] %vm1112, %v988
        %v1193 = vld [vmem:[%s1106 + $0x8c] sm:$0x1]
        %v1194 = vsel %vm1115, %v989, %v1193
        %1195 = vst [vmem:[%s1106 + $0x8c] sm:$0x1] %v1194
        %v1196 = vld [vmem:[%s1106 + $0x90] sm:$0xf]
        %v1197 = vsel %vm1108, %v996, %v1196
        %1198 = vst [vmem:[%s1106 + $0x90] sm:$0xf] %v1197
        %1199 = vst.msk [vmem:[%s1106 + $0x94] sm:$0xf] %vm1112, %v1005
        %v1200 = vld [vmem:[%s1106 + $0x98] sm:$0x1]
        %v1201 = vsel %vm1115, %v1006, %v1200
        %1202 = vst [vmem:[%s1106 + $0x98] sm:$0x1] %v1201
        %v1203 = vld [vmem:[%s1106 + $0x9c] sm:$0xf]
        %v1204 = vsel %vm1108, %v1013, %v1203
        %1205 = vst [vmem:[%s1106 + $0x9c] sm:$0xf] %v1204
        %1206 = vst.msk [vmem:[%s1106 + $0xa0] sm:$0xf] %vm1112, %v1022
        %v1207 = vld [vmem:[%s1106 + $0xa4] sm:$0x1]
        %v1208 = vsel %vm1115, %v1023, %v1207
        %1209 = vst [vmem:[%s1106 + $0xa4] sm:$0x1] %v1208
        %v1210 = vld [vmem:[%s1106 + $0xa8] sm:$0xf]
        %v1211 = vsel %vm1108, %v1030, %v1210
        %1212 = vst [vmem:[%s1106 + $0xa8] sm:$0xf] %v1211
        %1213 = vst.msk [vmem:[%s1106 + $0xac] sm:$0xf] %vm1112, %v1039
        %v1214 = vld [vmem:[%s1106 + $0xb0] sm:$0x1]
        %v1215 = vsel %vm1115, %v1040, %v1214
        %1216 = vst [vmem:[%s1106 + $0xb0] sm:$0x1] %v1215
        %v1217 = vld [vmem:[%s1106 + $0xb4] sm:$0xf]
        %v1218 = vsel %vm1108, %v1047, %v1217
        %1219 = vst [vmem:[%s1106 + $0xb4] sm:$0xf] %v1218
        %1220 = vst.msk [vmem:[%s1106 + $0xb8] sm:$0xf] %vm1112, %v1056
        %v1221 = vld [vmem:[%s1106 + $0xbc] sm:$0x1]
        %v1222 = vsel %vm1115, %v1057, %v1221
        %1223 = vst [vmem:[%s1106 + $0xbc] sm:$0x1] %v1222
        %v1224 = vld [vmem:[#allocation2] sm:$0xf]
        %v1225 = vld [vmem:[#allocation2 + $0x4] sm:$0xf]
        %v1226 = vld [vmem:[#allocation2 + $0xc] sm:$0xf]
        %v1227 = vld [vmem:[#allocation2 + $0x10] sm:$0xf]
        %v1228 = vld [vmem:[#allocation2 + $0x18] sm:$0xf]
        %v1229 = vld [vmem:[#allocation2 + $0x1c] sm:$0xf]
        %v1230 = vld [vmem:[#allocation2 + $0x24] sm:$0xf]
        %v1231 = vld [vmem:[#allocation2 + $0x28] sm:$0xf]
        %v1232 = vld [vmem:[#allocation2 + $0x30] sm:$0xf]
        %v1233 = vld [vmem:[#allocation2 + $0x34] sm:$0xf]
        %v1234 = vld [vmem:[#allocation2 + $0x3c] sm:$0xf]
        %v1235 = vld [vmem:[#allocation2 + $0x40] sm:$0xf]
        %v1236 = vld [vmem:[#allocation2 + $0x48] sm:$0xf]
        %v1237 = vld [vmem:[#allocation2 + $0x4c] sm:$0xf]
        %v1238 = vld [vmem:[#allocation2 + $0x54] sm:$0xf]
        %v1239 = vld [vmem:[#allocation2 + $0x58] sm:$0xf]
        %v1240 = vld [vmem:[#allocation2 + $0x60] sm:$0xf]
        %v1241 = vld [vmem:[#allocation2 + $0x64] sm:$0xf]
        %v1242 = vld [vmem:[#allocation2 + $0x6c] sm:$0xf]
        %v1243 = vld [vmem:[#allocation2 + $0x70] sm:$0xf]
        %v1244 = vld [vmem:[#allocation2 + $0x78] sm:$0xf]
        %v1245 = vld [vmem:[#allocation2 + $0x7c] sm:$0xf]
        %v1246 = vld [vmem:[#allocation2 + $0x84] sm:$0xf]
        %v1247 = vld [vmem:[#allocation2 + $0x88] sm:$0xf]
        %v1248 = vld [vmem:[#allocation2 + $0x90] sm:$0xf]
        %v1249 = vld [vmem:[#allocation2 + $0x94] sm:$0xf]
        %v1250 = vld [vmem:[#allocation2 + $0x9c] sm:$0xf]
        %v1251 = vld [vmem:[#allocation2 + $0xa0] sm:$0xf]
        %v1252 = vld [vmem:[#allocation2 + $0xa8] sm:$0xf]
        %v1253 = vld [vmem:[#allocation2 + $0xac] sm:$0xf]
        %v1254 = vld [vmem:[#allocation2 + $0xb4] sm:$0xf]
        %v1255 = vld [vmem:[#allocation2 + $0xb8] sm:$0xf]
        %v1288 = vunpack.c.l.b16 %v1224
        %v1289 = vunpack.c.l.b16 %v1225
        %v1290 = vunpack.c.l.b16 %v1226
        %v1291 = vunpack.c.l.b16 %v1227
        %v1292 = vunpack.c.l.b16 %v1228
        %v1293 = vunpack.c.l.b16 %v1229
        %v1294 = vunpack.c.l.b16 %v1230
        %v1295 = vunpack.c.l.b16 %v1231
        %v1296 = vunpack.c.l.b16 %v1232
        %v1297 = vunpack.c.l.b16 %v1233
        %v1298 = vunpack.c.l.b16 %v1234
        %v1299 = vunpack.c.l.b16 %v1235
        %v1300 = vunpack.c.l.b16 %v1236
        %v1301 = vunpack.c.l.b16 %v1237
        %v1302 = vunpack.c.l.b16 %v1238
        %v1303 = vunpack.c.l.b16 %v1239
        %v1304 = vunpack.c.l.b16 %v1240
        %v1305 = vunpack.c.l.b16 %v1241
        %v1306 = vunpack.c.l.b16 %v1242
        %v1307 = vunpack.c.l.b16 %v1243
        %v1308 = vunpack.c.l.b16 %v1244
        %v1309 = vunpack.c.l.b16 %v1245
        %v1310 = vunpack.c.l.b16 %v1246
        %v1311 = vunpack.c.l.b16 %v1247
        %v1312 = vunpack.c.l.b16 %v1248
        %v1313 = vunpack.c.l.b16 %v1249
        %v1314 = vunpack.c.l.b16 %v1250
        %v1315 = vunpack.c.l.b16 %v1251
        %v1316 = vunpack.c.l.b16 %v1252
        %v1317 = vunpack.c.l.b16 %v1253
        %v1318 = vunpack.c.l.b16 %v1254
        %v1319 = vunpack.c.l.b16 %v1255
        %v1320 = vpack.c.b16 %v1289, %v1288
        %v1321 = vpack.c.b16 %v1291, %v1290
        %v1322 = vpack.c.b16 %v1293, %v1292
        %v1323 = vpack.c.b16 %v1295, %v1294
        %v1324 = vpack.c.b16 %v1297, %v1296
        %v1325 = vpack.c.b16 %v1299, %v1298
        %v1326 = vpack.c.b16 %v1301, %v1300
        %v1327 = vpack.c.b16 %v1303, %v1302
        %v1328 = vpack.c.b16 %v1305, %v1304
        %v1329 = vpack.c.b16 %v1307, %v1306
        %v1330 = vpack.c.b16 %v1309, %v1308
        %v1331 = vpack.c.b16 %v1311, %v1310
        %v1332 = vpack.c.b16 %v1313, %v1312
        %v1333 = vpack.c.b16 %v1315, %v1314
        %v1334 = vpack.c.b16 %v1317, %v1316
        %v1335 = vpack.c.b16 %v1319, %v1318
        %1352 = vst.msk [vmem:[#allocation3] sm:$0xff] %vm513, %v1320
        %1353 = vst.msk [vmem:[#allocation3 + $0x8] sm:$0xff] %vm513, %v1321
        %1354 = vst.msk [vmem:[#allocation3 + $0x10] sm:$0xff] %vm513, %v1322
        %1355 = vst.msk [vmem:[#allocation3 + $0x18] sm:$0xff] %vm513, %v1323
        %1356 = vst.msk [vmem:[#allocation3 + $0x20] sm:$0xff] %vm513, %v1324
        %1357 = vst.msk [vmem:[#allocation3 + $0x28] sm:$0xff] %vm513, %v1325
        %1358 = vst.msk [vmem:[#allocation3 + $0x30] sm:$0xff] %vm513, %v1326
        %1359 = vst.msk [vmem:[#allocation3 + $0x38] sm:$0xff] %vm513, %v1327
        %1360 = vst.msk [vmem:[#allocation3 + $0x40] sm:$0xff] %vm513, %v1328
        %1361 = vst.msk [vmem:[#allocation3 + $0x48] sm:$0xff] %vm513, %v1329
        %1362 = vst.msk [vmem:[#allocation3 + $0x50] sm:$0xff] %vm513, %v1330
        %1363 = vst.msk [vmem:[#allocation3 + $0x58] sm:$0xff] %vm513, %v1331
        %1364 = vst.msk [vmem:[#allocation3 + $0x60] sm:$0xff] %vm513, %v1332
        %1365 = vst.msk [vmem:[#allocation3 + $0x68] sm:$0xff] %vm513, %v1333
        %1366 = vst.msk [vmem:[#allocation3 + $0x70] sm:$0xff] %vm513, %v1334
        %1367 = vst.msk [vmem:[#allocation3 + $0x78] sm:$0xff] %vm513, %v1335
        %v1368 = vld [vmem:[#allocation2] sm:$0xf]
        %v1369 = vld [vmem:[#allocation2 + $0x4] sm:$0xf]
        %v1370 = vld [vmem:[#allocation2 + $0x8] sm:$0x1]
        %v1371 = vld [vmem:[#allocation2 + $0xc] sm:$0xf]
        %v1372 = vld [vmem:[#allocation2 + $0x10] sm:$0xf]
        %v1373 = vld [vmem:[#allocation2 + $0x14] sm:$0x1]
        %v1374 = vld [vmem:[#allocation2 + $0x18] sm:$0xf]
        %v1375 = vld [vmem:[#allocation2 + $0x1c] sm:$0xf]
        %v1376 = vld [vmem:[#allocation2 + $0x20] sm:$0x1]
        %v1377 = vld [vmem:[#allocation2 + $0x24] sm:$0xf]
        %v1378 = vld [vmem:[#allocation2 + $0x28] sm:$0xf]
        %v1379 = vld [vmem:[#allocation2 + $0x2c] sm:$0x1]
        %v1380 = vld [vmem:[#allocation2 + $0x30] sm:$0xf]
        %v1381 = vld [vmem:[#allocation2 + $0x34] sm:$0xf]
        %v1382 = vld [vmem:[#allocation2 + $0x38] sm:$0x1]
        %v1383 = vld [vmem:[#allocation2 + $0x3c] sm:$0xf]
        %v1384 = vld [vmem:[#allocation2 + $0x40] sm:$0xf]
        %v1385 = vld [vmem:[#allocation2 + $0x44] sm:$0x1]
        %v1386 = vld [vmem:[#allocation2 + $0x48] sm:$0xf]
        %v1387 = vld [vmem:[#allocation2 + $0x4c] sm:$0xf]
        %v1388 = vld [vmem:[#allocation2 + $0x50] sm:$0x1]
        %v1389 = vld [vmem:[#allocation2 + $0x54] sm:$0xf]
        %v1390 = vld [vmem:[#allocation2 + $0x58] sm:$0xf]
        %v1391 = vld [vmem:[#allocation2 + $0x5c] sm:$0x1]
        %v1392 = vld [vmem:[#allocation2 + $0x60] sm:$0xf]
        %v1393 = vld [vmem:[#allocation2 + $0x64] sm:$0xf]
        %v1394 = vld [vmem:[#allocation2 + $0x68] sm:$0x1]
        %v1395 = vld [vmem:[#allocation2 + $0x6c] sm:$0xf]
        %v1396 = vld [vmem:[#allocation2 + $0x70] sm:$0xf]
        %v1397 = vld [vmem:[#allocation2 + $0x74] sm:$0x1]
        %v1398 = vld [vmem:[#allocation2 + $0x78] sm:$0xf]
        %v1399 = vld [vmem:[#allocation2 + $0x7c] sm:$0xf]
        %v1400 = vld [vmem:[#allocation2 + $0x80] sm:$0x1]
        %v1401 = vld [vmem:[#allocation2 + $0x84] sm:$0xf]
        %v1402 = vld [vmem:[#allocation2 + $0x88] sm:$0xf]
        %v1403 = vld [vmem:[#allocation2 + $0x8c] sm:$0x1]
        %v1404 = vld [vmem:[#allocation2 + $0x90] sm:$0xf]
        %v1405 = vld [vmem:[#allocation2 + $0x94] sm:$0xf]
        %v1406 = vld [vmem:[#allocation2 + $0x98] sm:$0x1]
        %v1407 = vld [vmem:[#allocation2 + $0x9c] sm:$0xf]
        %v1408 = vld [vmem:[#allocation2 + $0xa0] sm:$0xf]
        %v1409 = vld [vmem:[#allocation2 + $0xa4] sm:$0x1]
        %v1410 = vld [vmem:[#allocation2 + $0xa8] sm:$0xf]
        %v1411 = vld [vmem:[#allocation2 + $0xac] sm:$0xf]
        %v1412 = vld [vmem:[#allocation2 + $0xb0] sm:$0x1]
        %v1413 = vld [vmem:[#allocation2 + $0xb4] sm:$0xf]
        %v1414 = vld [vmem:[#allocation2 + $0xb8] sm:$0xf]
        %v1415 = vld [vmem:[#allocation2 + $0xbc] sm:$0x1]
        %v1464 = vunpack.c.l.b16 %v1368
        %v1465 = vunpack.c.l.b16 %v1369
        %v1466 = vunpack.c.l.b16 %v1370
        %v1467 = vunpack.c.l.b16 %v1371
        %v1468 = vunpack.c.l.b16 %v1372
        %v1469 = vunpack.c.l.b16 %v1373
        %v1470 = vunpack.c.l.b16 %v1374
        %v1471 = vunpack.c.l.b16 %v1375
        %v1472 = vunpack.c.l.b16 %v1376
        %v1473 = vunpack.c.l.b16 %v1377
        %v1474 = vunpack.c.l.b16 %v1378
        %v1475 = vunpack.c.l.b16 %v1379
        %v1476 = vunpack.c.l.b16 %v1380
        %v1477 = vunpack.c.l.b16 %v1381
        %v1478 = vunpack.c.l.b16 %v1382
        %v1479 = vunpack.c.l.b16 %v1383
        %v1480 = vunpack.c.l.b16 %v1384
        %v1481 = vunpack.c.l.b16 %v1385
        %v1482 = vunpack.c.l.b16 %v1386
        %v1483 = vunpack.c.l.b16 %v1387
        %v1484 = vunpack.c.l.b16 %v1388
        %v1485 = vunpack.c.l.b16 %v1389
        %v1486 = vunpack.c.l.b16 %v1390
        %v1487 = vunpack.c.l.b16 %v1391
        %v1488 = vunpack.c.l.b16 %v1392
        %v1489 = vunpack.c.l.b16 %v1393
        %v1490 = vunpack.c.l.b16 %v1394
        %v1491 = vunpack.c.l.b16 %v1395
        %v1492 = vunpack.c.l.b16 %v1396
        %v1493 = vunpack.c.l.b16 %v1397
        %v1494 = vunpack.c.l.b16 %v1398
        %v1495 = vunpack.c.l.b16 %v1399
        %v1496 = vunpack.c.l.b16 %v1400
        %v1497 = vunpack.c.l.b16 %v1401
        %v1498 = vunpack.c.l.b16 %v1402
        %v1499 = vunpack.c.l.b16 %v1403
        %v1500 = vunpack.c.l.b16 %v1404
        %v1501 = vunpack.c.l.b16 %v1405
        %v1502 = vunpack.c.l.b16 %v1406
        %v1503 = vunpack.c.l.b16 %v1407
        %v1504 = vunpack.c.l.b16 %v1408
        %v1505 = vunpack.c.l.b16 %v1409
        %v1506 = vunpack.c.l.b16 %v1410
        %v1507 = vunpack.c.l.b16 %v1411
        %v1508 = vunpack.c.l.b16 %v1412
        %v1509 = vunpack.c.l.b16 %v1413
        %v1510 = vunpack.c.l.b16 %v1414
        %v1511 = vunpack.c.l.b16 %v1415
        %v1512 = vpack.c.b16 %v1465, %v1464
        %v1513 = vpack.c.b16 %v1466, %v1466
        %v1514 = vpack.c.b16 %v1468, %v1467
        %v1515 = vpack.c.b16 %v1469, %v1469
        %v1516 = vpack.c.b16 %v1471, %v1470
        %v1517 = vpack.c.b16 %v1472, %v1472
        %v1518 = vpack.c.b16 %v1474, %v1473
        %v1519 = vpack.c.b16 %v1475, %v1475
        %v1520 = vpack.c.b16 %v1477, %v1476
        %v1521 = vpack.c.b16 %v1478, %v1478
        %v1522 = vpack.c.b16 %v1480, %v1479
        %v1523 = vpack.c.b16 %v1481, %v1481
        %v1524 = vpack.c.b16 %v1483, %v1482
        %v1525 = vpack.c.b16 %v1484, %v1484
        %v1526 = vpack.c.b16 %v1486, %v1485
        %v1527 = vpack.c.b16 %v1487, %v1487
        %v1528 = vpack.c.b16 %v1489, %v1488
        %v1529 = vpack.c.b16 %v1490, %v1490
        %v1530 = vpack.c.b16 %v1492, %v1491
        %v1531 = vpack.c.b16 %v1493, %v1493
        %v1532 = vpack.c.b16 %v1495, %v1494
        %v1533 = vpack.c.b16 %v1496, %v1496
        %v1534 = vpack.c.b16 %v1498, %v1497
        %v1535 = vpack.c.b16 %v1499, %v1499
        %v1536 = vpack.c.b16 %v1501, %v1500
        %v1537 = vpack.c.b16 %v1502, %v1502
        %v1538 = vpack.c.b16 %v1504, %v1503
        %v1539 = vpack.c.b16 %v1505, %v1505
        %v1540 = vpack.c.b16 %v1507, %v1506
        %v1541 = vpack.c.b16 %v1508, %v1508
        %v1542 = vpack.c.b16 %v1510, %v1509
        %v1543 = vpack.c.b16 %v1511, %v1511
        %vm1544 = vsmask.f32 7424
        %v1546 = vshrl.u32 %v1512, 16
        %v1548 = vshll.u32 %v1512, 16
        %v1550 = vrot.slane %v1548, 1
        %v1551 = vor.u32 %v1546, %v1550
        %v1553 = vshll.u32 %v1513, 16
        %v1555 = vrot.slane %v1553, 1
        %v1556 = vsel %vm1544, %v1551, %v1555
        %v1558 = vshrl.u32 %v1514, 16
        %v1560 = vshll.u32 %v1514, 16
        %v1562 = vrot.slane %v1560, 1
        %v1563 = vor.u32 %v1558, %v1562
        %v1565 = vshll.u32 %v1515, 16
        %v1567 = vrot.slane %v1565, 1
        %v1568 = vsel %vm1544, %v1563, %v1567
        %v1570 = vshrl.u32 %v1516, 16
        %v1572 = vshll.u32 %v1516, 16
        %v1574 = vrot.slane %v1572, 1
        %v1575 = vor.u32 %v1570, %v1574
        %v1577 = vshll.u32 %v1517, 16
        %v1579 = vrot.slane %v1577, 1
        %v1580 = vsel %vm1544, %v1575, %v1579
        %v1582 = vshrl.u32 %v1518, 16
        %v1584 = vshll.u32 %v1518, 16
        %v1586 = vrot.slane %v1584, 1
        %v1587 = vor.u32 %v1582, %v1586
        %v1589 = vshll.u32 %v1519, 16
        %v1591 = vrot.slane %v1589, 1
        %v1592 = vsel %vm1544, %v1587, %v1591
        %v1594 = vshrl.u32 %v1520, 16
        %v1596 = vshll.u32 %v1520, 16
        %v1598 = vrot.slane %v1596, 1
        %v1599 = vor.u32 %v1594, %v1598
        %v1601 = vshll.u32 %v1521, 16
        %v1603 = vrot.slane %v1601, 1
        %v1604 = vsel %vm1544, %v1599, %v1603
        %v1606 = vshrl.u32 %v1522, 16
        %v1608 = vshll.u32 %v1522, 16
        %v1610 = vrot.slane %v1608, 1
        %v1611 = vor.u32 %v1606, %v1610
        %v1613 = vshll.u32 %v1523, 16
        %v1615 = vrot.slane %v1613, 1
        %v1616 = vsel %vm1544, %v1611, %v1615
        %v1618 = vshrl.u32 %v1524, 16
        %v1620 = vshll.u32 %v1524, 16
        %v1622 = vrot.slane %v1620, 1
        %v1623 = vor.u32 %v1618, %v1622
        %v1625 = vshll.u32 %v1525, 16
        %v1627 = vrot.slane %v1625, 1
        %v1628 = vsel %vm1544, %v1623, %v1627
        %v1630 = vshrl.u32 %v1526, 16
        %v1632 = vshll.u32 %v1526, 16
        %v1634 = vrot.slane %v1632, 1
        %v1635 = vor.u32 %v1630, %v1634
        %v1637 = vshll.u32 %v1527, 16
        %v1639 = vrot.slane %v1637, 1
        %v1640 = vsel %vm1544, %v1635, %v1639
        %v1642 = vshrl.u32 %v1528, 16
        %v1644 = vshll.u32 %v1528, 16
        %v1646 = vrot.slane %v1644, 1
        %v1647 = vor.u32 %v1642, %v1646
        %v1649 = vshll.u32 %v1529, 16
        %v1651 = vrot.slane %v1649, 1
        %v1652 = vsel %vm1544, %v1647, %v1651
        %v1654 = vshrl.u32 %v1530, 16
        %v1656 = vshll.u32 %v1530, 16
        %v1658 = vrot.slane %v1656, 1
        %v1659 = vor.u32 %v1654, %v1658
        %v1661 = vshll.u32 %v1531, 16
        %v1663 = vrot.slane %v1661, 1
        %v1664 = vsel %vm1544, %v1659, %v1663
        %v1666 = vshrl.u32 %v1532, 16
        %v1668 = vshll.u32 %v1532, 16
        %v1670 = vrot.slane %v1668, 1
        %v1671 = vor.u32 %v1666, %v1670
        %v1673 = vshll.u32 %v1533, 16
        %v1675 = vrot.slane %v1673, 1
        %v1676 = vsel %vm1544, %v1671, %v1675
        %v1678 = vshrl.u32 %v1534, 16
        %v1680 = vshll.u32 %v1534, 16
        %v1682 = vrot.slane %v1680, 1
        %v1683 = vor.u32 %v1678, %v1682
        %v1685 = vshll.u32 %v1535, 16
        %v1687 = vrot.slane %v1685, 1
        %v1688 = vsel %vm1544, %v1683, %v1687
        %v1690 = vshrl.u32 %v1536, 16
        %v1692 = vshll.u32 %v1536, 16
        %v1694 = vrot.slane %v1692, 1
        %v1695 = vor.u32 %v1690, %v1694
        %v1697 = vshll.u32 %v1537, 16
        %v1699 = vrot.slane %v1697, 1
        %v1700 = vsel %vm1544, %v1695, %v1699
        %v1702 = vshrl.u32 %v1538, 16
        %v1704 = vshll.u32 %v1538, 16
        %v1706 = vrot.slane %v1704, 1
        %v1707 = vor.u32 %v1702, %v1706
        %v1709 = vshll.u32 %v1539, 16
        %v1711 = vrot.slane %v1709, 1
        %v1712 = vsel %vm1544, %v1707, %v1711
        %v1714 = vshrl.u32 %v1540, 16
        %v1716 = vshll.u32 %v1540, 16
        %v1718 = vrot.slane %v1716, 1
        %v1719 = vor.u32 %v1714, %v1718
        %v1721 = vshll.u32 %v1541, 16
        %v1723 = vrot.slane %v1721, 1
        %v1724 = vsel %vm1544, %v1719, %v1723
        %v1726 = vshrl.u32 %v1542, 16
        %v1728 = vshll.u32 %v1542, 16
        %v1730 = vrot.slane %v1728, 1
        %v1731 = vor.u32 %v1726, %v1730
        %v1733 = vshll.u32 %v1543, 16
        %v1735 = vrot.slane %v1733, 1
        %v1736 = vsel %vm1544, %v1731, %v1735
        %1737 = vrot.lane.b32.xlu0 %v1556, 4
        %v1738 = vpop.permute.xlu0 %1737
        %1739 = vrot.lane.b32.xlu0 %v1568, 4
        %v1740 = vpop.permute.xlu0 %1739
        %1741 = vrot.lane.b32.xlu0 %v1580, 4
        %v1742 = vpop.permute.xlu0 %1741
        %1743 = vrot.lane.b32.xlu0 %v1592, 4
        %v1744 = vpop.permute.xlu0 %1743
        %1745 = vrot.lane.b32.xlu0 %v1604, 4
        %v1746 = vpop.permute.xlu0 %1745
        %1747 = vrot.lane.b32.xlu0 %v1616, 4
        %v1748 = vpop.permute.xlu0 %1747
        %1749 = vrot.lane.b32.xlu0 %v1628, 4
        %v1750 = vpop.permute.xlu0 %1749
        %1751 = vrot.lane.b32.xlu0 %v1640, 4
        %v1752 = vpop.permute.xlu0 %1751
        %1753 = vrot.lane.b32.xlu0 %v1652, 4
        %v1754 = vpop.permute.xlu0 %1753
        %1755 = vrot.lane.b32.xlu0 %v1664, 4
        %v1756 = vpop.permute.xlu0 %1755
        %1757 = vrot.lane.b32.xlu0 %v1676, 4
        %v1758 = vpop.permute.xlu0 %1757
        %1759 = vrot.lane.b32.xlu0 %v1688, 4
        %v1760 = vpop.permute.xlu0 %1759
        %1761 = vrot.lane.b32.xlu0 %v1700, 4
        %v1762 = vpop.permute.xlu0 %1761
        %1763 = vrot.lane.b32.xlu0 %v1712, 4
        %v1764 = vpop.permute.xlu0 %1763
        %1765 = vrot.lane.b32.xlu0 %v1724, 4
        %v1766 = vpop.permute.xlu0 %1765
        %1767 = vrot.lane.b32.xlu0 %v1736, 4
        %v1768 = vpop.permute.xlu0 %1767
        %vm1785 = vcmask 64544
        %1786 = vst.msk [vmem:[#allocation3] sm:$0xff] %vm1785, %v1738
        %1787 = vst.msk [vmem:[#allocation3 + $0x8] sm:$0xff] %vm1785, %v1740
        %1788 = vst.msk [vmem:[#allocation3 + $0x10] sm:$0xff] %vm1785, %v1742
        %1789 = vst.msk [vmem:[#allocation3 + $0x18] sm:$0xff] %vm1785, %v1744
        %1790 = vst.msk [vmem:[#allocation3 + $0x20] sm:$0xff] %vm1785, %v1746
        %1791 = vst.msk [vmem:[#allocation3 + $0x28] sm:$0xff] %vm1785, %v1748
        %1792 = vst.msk [vmem:[#allocation3 + $0x30] sm:$0xff] %vm1785, %v1750
        %1793 = vst.msk [vmem:[#allocation3 + $0x38] sm:$0xff] %vm1785, %v1752
        %1794 = vst.msk [vmem:[#allocation3 + $0x40] sm:$0xff] %vm1785, %v1754
        %1795 = vst.msk [vmem:[#allocation3 + $0x48] sm:$0xff] %vm1785, %v1756
        %1796 = vst.msk [vmem:[#allocation3 + $0x50] sm:$0xff] %vm1785, %v1758
        %1797 = vst.msk [vmem:[#allocation3 + $0x58] sm:$0xff] %vm1785, %v1760
        %1798 = vst.msk [vmem:[#allocation3 + $0x60] sm:$0xff] %vm1785, %v1762
        %1799 = vst.msk [vmem:[#allocation3 + $0x68] sm:$0xff] %vm1785, %v1764
        %1800 = vst.msk [vmem:[#allocation3 + $0x70] sm:$0xff] %vm1785, %v1766
        %1801 = vst.msk [vmem:[#allocation3 + $0x78] sm:$0xff] %vm1785, %v1768
        %v1802 = vld [vmem:[#allocation2] sm:$0xe]
        %v1803 = vld [vmem:[#allocation2 + $0x4] sm:$0xf]
        %v1804 = vld [vmem:[#allocation2 + $0x8] sm:$0x1]
        %v1805 = vld [vmem:[#allocation2 + $0xc] sm:$0xe]
        %v1806 = vld [vmem:[#allocation2 + $0x10] sm:$0xf]
        %v1807 = vld [vmem:[#allocation2 + $0x14] sm:$0x1]
        %v1808 = vld [vmem:[#allocation2 + $0x18] sm:$0xe]
        %v1809 = vld [vmem:[#allocation2 + $0x1c] sm:$0xf]
        %v1810 = vld [vmem:[#allocation2 + $0x20] sm:$0x1]
        %v1811 = vld [vmem:[#allocation2 + $0x24] sm:$0xe]
        %v1812 = vld [vmem:[#allocation2 + $0x28] sm:$0xf]
        %v1813 = vld [vmem:[#allocation2 + $0x2c] sm:$0x1]
        %v1814 = vld [vmem:[#allocation2 + $0x30] sm:$0xe]
        %v1815 = vld [vmem:[#allocation2 + $0x34] sm:$0xf]
        %v1816 = vld [vmem:[#allocation2 + $0x38] sm:$0x1]
        %v1817 = vld [vmem:[#allocation2 + $0x3c] sm:$0xe]
        %v1818 = vld [vmem:[#allocation2 + $0x40] sm:$0xf]
        %v1819 = vld [vmem:[#allocation2 + $0x44] sm:$0x1]
        %v1820 = vld [vmem:[#allocation2 + $0x48] sm:$0xe]
        %v1821 = vld [vmem:[#allocation2 + $0x4c] sm:$0xf]
        %v1822 = vld [vmem:[#allocation2 + $0x50] sm:$0x1]
        %v1823 = vld [vmem:[#allocation2 + $0x54] sm:$0xe]
        %v1824 = vld [vmem:[#allocation2 + $0x58] sm:$0xf]
        %v1825 = vld [vmem:[#allocation2 + $0x5c] sm:$0x1]
        %v1826 = vld [vmem:[#allocation2 + $0x60] sm:$0xe]
        %v1827 = vld [vmem:[#allocation2 + $0x64] sm:$0xf]
        %v1828 = vld [vmem:[#allocation2 + $0x68] sm:$0x1]
        %v1829 = vld [vmem:[#allocation2 + $0x6c] sm:$0xe]
        %v1830 = vld [vmem:[#allocation2 + $0x70] sm:$0xf]
        %v1831 = vld [vmem:[#allocation2 + $0x74] sm:$0x1]
        %v1832 = vld [vmem:[#allocation2 + $0x78] sm:$0xe]
        %v1833 = vld [vmem:[#allocation2 + $0x7c] sm:$0xf]
        %v1834 = vld [vmem:[#allocation2 + $0x80] sm:$0x1]
        %v1835 = vld [vmem:[#allocation2 + $0x84] sm:$0xe]
        %v1836 = vld [vmem:[#allocation2 + $0x88] sm:$0xf]
        %v1837 = vld [vmem:[#allocation2 + $0x8c] sm:$0x1]
        %v1838 = vld [vmem:[#allocation2 + $0x90] sm:$0xe]
        %v1839 = vld [vmem:[#allocation2 + $0x94] sm:$0xf]
        %v1840 = vld [vmem:[#allocation2 + $0x98] sm:$0x1]
        %v1841 = vld [vmem:[#allocation2 + $0x9c] sm:$0xe]
        %v1842 = vld [vmem:[#allocation2 + $0xa0] sm:$0xf]
        %v1843 = vld [vmem:[#allocation2 + $0xa4] sm:$0x1]
        %v1844 = vld [vmem:[#allocation2 + $0xa8] sm:$0xe]
        %v1845 = vld [vmem:[#allocation2 + $0xac] sm:$0xf]
        %v1846 = vld [vmem:[#allocation2 + $0xb0] sm:$0x1]
        %v1847 = vld [vmem:[#allocation2 + $0xb4] sm:$0xe]
        %v1848 = vld [vmem:[#allocation2 + $0xb8] sm:$0xf]
        %v1849 = vld [vmem:[#allocation2 + $0xbc] sm:$0x1]
        %v1898 = vunpack.c.l.b16 %v1802
        %v1899 = vunpack.c.l.b16 %v1803
        %v1900 = vunpack.c.l.b16 %v1804
        %v1901 = vunpack.c.l.b16 %v1805
        %v1902 = vunpack.c.l.b16 %v1806
        %v1903 = vunpack.c.l.b16 %v1807
        %v1904 = vunpack.c.l.b16 %v1808
        %v1905 = vunpack.c.l.b16 %v1809
        %v1906 = vunpack.c.l.b16 %v1810
        %v1907 = vunpack.c.l.b16 %v1811
        %v1908 = vunpack.c.l.b16 %v1812
        %v1909 = vunpack.c.l.b16 %v1813
        %v1910 = vunpack.c.l.b16 %v1814
        %v1911 = vunpack.c.l.b16 %v1815
        %v1912 = vunpack.c.l.b16 %v1816
        %v1913 = vunpack.c.l.b16 %v1817
        %v1914 = vunpack.c.l.b16 %v1818
        %v1915 = vunpack.c.l.b16 %v1819
        %v1916 = vunpack.c.l.b16 %v1820
        %v1917 = vunpack.c.l.b16 %v1821
        %v1918 = vunpack.c.l.b16 %v1822
        %v1919 = vunpack.c.l.b16 %v1823
        %v1920 = vunpack.c.l.b16 %v1824
        %v1921 = vunpack.c.l.b16 %v1825
        %v1922 = vunpack.c.l.b16 %v1826
        %v1923 = vunpack.c.l.b16 %v1827
        %v1924 = vunpack.c.l.b16 %v1828
        %v1925 = vunpack.c.l.b16 %v1829
        %v1926 = vunpack.c.l.b16 %v1830
        %v1927 = vunpack.c.l.b16 %v1831
        %v1928 = vunpack.c.l.b16 %v1832
        %v1929 = vunpack.c.l.b16 %v1833
        %v1930 = vunpack.c.l.b16 %v1834
        %v1931 = vunpack.c.l.b16 %v1835
        %v1932 = vunpack.c.l.b16 %v1836
        %v1933 = vunpack.c.l.b16 %v1837
        %v1934 = vunpack.c.l.b16 %v1838
        %v1935 = vunpack.c.l.b16 %v1839
        %v1936 = vunpack.c.l.b16 %v1840
        %v1937 = vunpack.c.l.b16 %v1841
        %v1938 = vunpack.c.l.b16 %v1842
        %v1939 = vunpack.c.l.b16 %v1843
        %v1940 = vunpack.c.l.b16 %v1844
        %v1941 = vunpack.c.l.b16 %v1845
        %v1942 = vunpack.c.l.b16 %v1846
        %v1943 = vunpack.c.l.b16 %v1847
        %v1944 = vunpack.c.l.b16 %v1848
        %v1945 = vunpack.c.l.b16 %v1849
        %v1946 = vpack.c.b16 %v1899, %v1898
        %v1947 = vpack.c.b16 %v1900, %v1900
        %v1948 = vpack.c.b16 %v1902, %v1901
        %v1949 = vpack.c.b16 %v1903, %v1903
        %v1950 = vpack.c.b16 %v1905, %v1904
        %v1951 = vpack.c.b16 %v1906, %v1906
        %v1952 = vpack.c.b16 %v1908, %v1907
        %v1953 = vpack.c.b16 %v1909, %v1909
        %v1954 = vpack.c.b16 %v1911, %v1910
        %v1955 = vpack.c.b16 %v1912, %v1912
        %v1956 = vpack.c.b16 %v1914, %v1913
        %v1957 = vpack.c.b16 %v1915, %v1915
        %v1958 = vpack.c.b16 %v1917, %v1916
        %v1959 = vpack.c.b16 %v1918, %v1918
        %v1960 = vpack.c.b16 %v1920, %v1919
        %v1961 = vpack.c.b16 %v1921, %v1921
        %v1962 = vpack.c.b16 %v1923, %v1922
        %v1963 = vpack.c.b16 %v1924, %v1924
        %v1964 = vpack.c.b16 %v1926, %v1925
        %v1965 = vpack.c.b16 %v1927, %v1927
        %v1966 = vpack.c.b16 %v1929, %v1928
        %v1967 = vpack.c.b16 %v1930, %v1930
        %v1968 = vpack.c.b16 %v1932, %v1931
        %v1969 = vpack.c.b16 %v1933, %v1933
        %v1970 = vpack.c.b16 %v1935, %v1934
        %v1971 = vpack.c.b16 %v1936, %v1936
        %v1972 = vpack.c.b16 %v1938, %v1937
        %v1973 = vpack.c.b16 %v1939, %v1939
        %v1974 = vpack.c.b16 %v1941, %v1940
        %v1975 = vpack.c.b16 %v1942, %v1942
        %v1976 = vpack.c.b16 %v1944, %v1943
        %v1977 = vpack.c.b16 %v1945, %v1945
        %vm1978 = vcmask 1046528
        %v1979 = vrot.slane %v1946, 1
        %v1980 = vrot.slane %v1947, 1
        %v1981 = vsel %vm1978, %v1979, %v1980
        %v1982 = vrot.slane %v1948, 1
        %v1983 = vrot.slane %v1949, 1
        %v1984 = vsel %vm1978, %v1982, %v1983
        %v1985 = vrot.slane %v1950, 1
        %v1986 = vrot.slane %v1951, 1
        %v1987 = vsel %vm1978, %v1985, %v1986
        %v1988 = vrot.slane %v1952, 1
        %v1989 = vrot.slane %v1953, 1
        %v1990 = vsel %vm1978, %v1988, %v1989
        %v1991 = vrot.slane %v1954, 1
        %v1992 = vrot.slane %v1955, 1
        %v1993 = vsel %vm1978, %v1991, %v1992
        %v1994 = vrot.slane %v1956, 1
        %v1995 = vrot.slane %v1957, 1
        %v1996 = vsel %vm1978, %v1994, %v1995
        %v1997 = vrot.slane %v1958, 1
        %v1998 = vrot.slane %v1959, 1
        %v1999 = vsel %vm1978, %v1997, %v1998
        %v2000 = vrot.slane %v1960, 1
        %v2001 = vrot.slane %v1961, 1
        %v2002 = vsel %vm1978, %v2000, %v2001
        %v2003 = vrot.slane %v1962, 1
        %v2004 = vrot.slane %v1963, 1
        %v2005 = vsel %vm1978, %v2003, %v2004
        %v2006 = vrot.slane %v1964, 1
        %v2007 = vrot.slane %v1965, 1
        %v2008 = vsel %vm1978, %v2006, %v2007
        %v2009 = vrot.slane %v1966, 1
        %v2010 = vrot.slane %v1967, 1
        %v2011 = vsel %vm1978, %v2009, %v2010
        %v2012 = vrot.slane %v1968, 1
        %v2013 = vrot.slane %v1969, 1
        %v2014 = vsel %vm1978, %v2012, %v2013
        %v2015 = vrot.slane %v1970, 1
        %v2016 = vrot.slane %v1971, 1
        %v2017 = vsel %vm1978, %v2015, %v2016
        %v2018 = vrot.slane %v1972, 1
        %v2019 = vrot.slane %v1973, 1
        %v2020 = vsel %vm1978, %v2018, %v2019
        %v2021 = vrot.slane %v1974, 1
        %v2022 = vrot.slane %v1975, 1
        %v2023 = vsel %vm1978, %v2021, %v2022
        %v2024 = vrot.slane %v1976, 1
        %v2025 = vrot.slane %v1977, 1
        %v2026 = vsel %vm1978, %v2024, %v2025
        %2027 = vrot.lane.b32.xlu0 %v1981, 8
        %v2028 = vpop.permute.xlu0 %2027
        %2029 = vrot.lane.b32.xlu0 %v1984, 8
        %v2030 = vpop.permute.xlu0 %2029
        %2031 = vrot.lane.b32.xlu0 %v1987, 8
        %v2032 = vpop.permute.xlu0 %2031
        %2033 = vrot.lane.b32.xlu0 %v1990, 8
        %v2034 = vpop.permute.xlu0 %2033
        %2035 = vrot.lane.b32.xlu0 %v1993, 8
        %v2036 = vpop.permute.xlu0 %2035
        %2037 = vrot.lane.b32.xlu0 %v1996, 8
        %v2038 = vpop.permute.xlu0 %2037
        %2039 = vrot.lane.b32.xlu0 %v1999, 8
        %v2040 = vpop.permute.xlu0 %2039
        %2041 = vrot.lane.b32.xlu0 %v2002, 8
        %v2042 = vpop.permute.xlu0 %2041
        %2043 = vrot.lane.b32.xlu0 %v2005, 8
        %v2044 = vpop.permute.xlu0 %2043
        %2045 = vrot.lane.b32.xlu0 %v2008, 8
        %v2046 = vpop.permute.xlu0 %2045
        %2047 = vrot.lane.b32.xlu0 %v2011, 8
        %v2048 = vpop.permute.xlu0 %2047
        %2049 = vrot.lane.b32.xlu0 %v2014, 8
        %v2050 = vpop.permute.xlu0 %2049
        %2051 = vrot.lane.b32.xlu0 %v2017, 8
        %v2052 = vpop.permute.xlu0 %2051
        %2053 = vrot.lane.b32.xlu0 %v2020, 8
        %v2054 = vpop.permute.xlu0 %2053
        %2055 = vrot.lane.b32.xlu0 %v2023, 8
        %v2056 = vpop.permute.xlu0 %2055
        %2057 = vrot.lane.b32.xlu0 %v2026, 8
        %v2058 = vpop.permute.xlu0 %2057
        %vm2075 = vcmask 97344
        %2076 = vst.msk [vmem:[#allocation3] sm:$0xff] %vm2075, %v2028
        %2077 = vst.msk [vmem:[#allocation3 + $0x8] sm:$0xff] %vm2075, %v2030
        %2078 = vst.msk [vmem:[#allocation3 + $0x10] sm:$0xff] %vm2075, %v2032
        %2079 = vst.msk [vmem:[#allocation3 + $0x18] sm:$0xff] %vm2075, %v2034
        %2080 = vst.msk [vmem:[#allocation3 + $0x20] sm:$0xff] %vm2075, %v2036
        %2081 = vst.msk [vmem:[#allocation3 + $0x28] sm:$0xff] %vm2075, %v2038
        %2082 = vst.msk [vmem:[#allocation3 + $0x30] sm:$0xff] %vm2075, %v2040
        %2083 = vst.msk [vmem:[#allocation3 + $0x38] sm:$0xff] %vm2075, %v2042
        %2084 = vst.msk [vmem:[#allocation3 + $0x40] sm:$0xff] %vm2075, %v2044
        %2085 = vst.msk [vmem:[#allocation3 + $0x48] sm:$0xff] %vm2075, %v2046
        %2086 = vst.msk [vmem:[#allocation3 + $0x50] sm:$0xff] %vm2075, %v2048
        %2087 = vst.msk [vmem:[#allocation3 + $0x58] sm:$0xff] %vm2075, %v2050
        %2088 = vst.msk [vmem:[#allocation3 + $0x60] sm:$0xff] %vm2075, %v2052
        %2089 = vst.msk [vmem:[#allocation3 + $0x68] sm:$0xff] %vm2075, %v2054
        %2090 = vst.msk [vmem:[#allocation3 + $0x70] sm:$0xff] %vm2075, %v2056
        %2091 = vst.msk [vmem:[#allocation3 + $0x78] sm:$0xff] %vm2075, %v2058
        %v2092 = vld [vmem:[%s1106] sm:$0xf]
        %v2093 = vld [vmem:[%s1106 + $0x4] sm:$0xf]
        %v2094 = vld [vmem:[%s1106 + $0xc] sm:$0xf]
        %v2095 = vld [vmem:[%s1106 + $0x10] sm:$0xf]
        %v2096 = vld [vmem:[%s1106 + $0x18] sm:$0xf]
        %v2097 = vld [vmem:[%s1106 + $0x1c] sm:$0xf]
        %v2098 = vld [vmem:[%s1106 + $0x24] sm:$0xf]
        %v2099 = vld [vmem:[%s1106 + $0x28] sm:$0xf]
        %v2100 = vld [vmem:[%s1106 + $0x30] sm:$0xf]
        %v2101 = vld [vmem:[%s1106 + $0x34] sm:$0xf]
        %v2102 = vld [vmem:[%s1106 + $0x3c] sm:$0xf]
        %v2103 = vld [vmem:[%s1106 + $0x40] sm:$0xf]
        %v2104 = vld [vmem:[%s1106 + $0x48] sm:$0xf]
        %v2105 = vld [vmem:[%s1106 + $0x4c] sm:$0xf]
        %v2106 = vld [vmem:[%s1106 + $0x54] sm:$0xf]
        %v2107 = vld [vmem:[%s1106 + $0x58] sm:$0xf]
        %v2108 = vld [vmem:[%s1106 + $0x60] sm:$0xf]
        %v2109 = vld [vmem:[%s1106 + $0x64] sm:$0xf]
        %v2110 = vld [vmem:[%s1106 + $0x6c] sm:$0xf]
        %v2111 = vld [vmem:[%s1106 + $0x70] sm:$0xf]
        %v2112 = vld [vmem:[%s1106 + $0x78] sm:$0xf]
        %v2113 = vld [vmem:[%s1106 + $0x7c] sm:$0xf]
        %v2114 = vld [vmem:[%s1106 + $0x84] sm:$0xf]
        %v2115 = vld [vmem:[%s1106 + $0x88] sm:$0xf]
        %v2116 = vld [vmem:[%s1106 + $0x90] sm:$0xf]
        %v2117 = vld [vmem:[%s1106 + $0x94] sm:$0xf]
        %v2118 = vld [vmem:[%s1106 + $0x9c] sm:$0xf]
        %v2119 = vld [vmem:[%s1106 + $0xa0] sm:$0xf]
        %v2120 = vld [vmem:[%s1106 + $0xa8] sm:$0xf]
        %v2121 = vld [vmem:[%s1106 + $0xac] sm:$0xf]
        %v2122 = vld [vmem:[%s1106 + $0xb4] sm:$0xf]
        %v2123 = vld [vmem:[%s1106 + $0xb8] sm:$0xf]
        %v2156 = vunpack.c.l.b16 %v2092
        %v2157 = vunpack.c.l.b16 %v2093
        %v2158 = vunpack.c.l.b16 %v2094
        %v2159 = vunpack.c.l.b16 %v2095
        %v2160 = vunpack.c.l.b16 %v2096
        %v2161 = vunpack.c.l.b16 %v2097
        %v2162 = vunpack.c.l.b16 %v2098
        %v2163 = vunpack.c.l.b16 %v2099
        %v2164 = vunpack.c.l.b16 %v2100
        %v2165 = vunpack.c.l.b16 %v2101
        %v2166 = vunpack.c.l.b16 %v2102
        %v2167 = vunpack.c.l.b16 %v2103
        %v2168 = vunpack.c.l.b16 %v2104
        %v2169 = vunpack.c.l.b16 %v2105
        %v2170 = vunpack.c.l.b16 %v2106
        %v2171 = vunpack.c.l.b16 %v2107
        %v2172 = vunpack.c.l.b16 %v2108
        %v2173 = vunpack.c.l.b16 %v2109
        %v2174 = vunpack.c.l.b16 %v2110
        %v2175 = vunpack.c.l.b16 %v2111
        %v2176 = vunpack.c.l.b16 %v2112
        %v2177 = vunpack.c.l.b16 %v2113
        %v2178 = vunpack.c.l.b16 %v2114
        %v2179 = vunpack.c.l.b16 %v2115
        %v2180 = vunpack.c.l.b16 %v2116
        %v2181 = vunpack.c.l.b16 %v2117
        %v2182 = vunpack.c.l.b16 %v2118
        %v2183 = vunpack.c.l.b16 %v2119
        %v2184 = vunpack.c.l.b16 %v2120
        %v2185 = vunpack.c.l.b16 %v2121
        %v2186 = vunpack.c.l.b16 %v2122
        %v2187 = vunpack.c.l.b16 %v2123
        %v2188 = vpack.c.b16 %v2157, %v2156
        %v2189 = vpack.c.b16 %v2159, %v2158
        %v2190 = vpack.c.b16 %v2161, %v2160
        %v2191 = vpack.c.b16 %v2163, %v2162
        %v2192 = vpack.c.b16 %v2165, %v2164
        %v2193 = vpack.c.b16 %v2167, %v2166
        %v2194 = vpack.c.b16 %v2169, %v2168
        %v2195 = vpack.c.b16 %v2171, %v2170
        %v2196 = vpack.c.b16 %v2173, %v2172
        %v2197 = vpack.c.b16 %v2175, %v2174
        %v2198 = vpack.c.b16 %v2177, %v2176
        %v2199 = vpack.c.b16 %v2179, %v2178
        %v2200 = vpack.c.b16 %v2181, %v2180
        %v2201 = vpack.c.b16 %v2183, %v2182
        %v2202 = vpack.c.b16 %v2185, %v2184
        %v2203 = vpack.c.b16 %v2187, %v2186
        %2204 = vrot.lane.b32.xlu0 %v2188, 12
        %v2205 = vpop.permute.xlu0 %2204
        %2206 = vrot.lane.b32.xlu0 %v2189, 12
        %v2207 = vpop.permute.xlu0 %2206
        %2208 = vrot.lane.b32.xlu0 %v2190, 12
        %v2209 = vpop.permute.xlu0 %2208
        %2210 = vrot.lane.b32.xlu0 %v2191, 12
        %v2211 = vpop.permute.xlu0 %2210
        %2212 = vrot.lane.b32.xlu0 %v2192, 12
        %v2213 = vpop.permute.xlu0 %2212
        %2214 = vrot.lane.b32.xlu0 %v2193, 12
        %v2215 = vpop.permute.xlu0 %2214
        %2216 = vrot.lane.b32.xlu0 %v2194, 12
        %v2217 = vpop.permute.xlu0 %2216
        %2218 = vrot.lane.b32.xlu0 %v2195, 12
        %v2219 = vpop.permute.xlu0 %2218
        %2220 = vrot.lane.b32.xlu0 %v2196, 12
        %v2221 = vpop.permute.xlu0 %2220
        %2222 = vrot.lane.b32.xlu0 %v2197, 12
        %v2223 = vpop.permute.xlu0 %2222
        %2224 = vrot.lane.b32.xlu0 %v2198, 12
        %v2225 = vpop.permute.xlu0 %2224
        %2226 = vrot.lane.b32.xlu0 %v2199, 12
        %v2227 = vpop.permute.xlu0 %2226
        %2228 = vrot.lane.b32.xlu0 %v2200, 12
        %v2229 = vpop.permute.xlu0 %2228
        %2230 = vrot.lane.b32.xlu0 %v2201, 12
        %v2231 = vpop.permute.xlu0 %2230
        %2232 = vrot.lane.b32.xlu0 %v2202, 12
        %v2233 = vpop.permute.xlu0 %2232
        %2234 = vrot.lane.b32.xlu0 %v2203, 12
        %v2235 = vpop.permute.xlu0 %2234
        %vm2252 = vcmask 130144
        %2253 = vst.msk [vmem:[#allocation3] sm:$0xff] %vm2252, %v2205
        %2254 = vst.msk [vmem:[#allocation3 + $0x8] sm:$0xff] %vm2252, %v2207
        %2255 = vst.msk [vmem:[#allocation3 + $0x10] sm:$0xff] %vm2252, %v2209
        %2256 = vst.msk [vmem:[#allocation3 + $0x18] sm:$0xff] %vm2252, %v2211
        %2257 = vst.msk [vmem:[#allocation3 + $0x20] sm:$0xff] %vm2252, %v2213
        %2258 = vst.msk [vmem:[#allocation3 + $0x28] sm:$0xff] %vm2252, %v2215
        %2259 = vst.msk [vmem:[#allocation3 + $0x30] sm:$0xff] %vm2252, %v2217
        %2260 = vst.msk [vmem:[#allocation3 + $0x38] sm:$0xff] %vm2252, %v2219
        %2261 = vst.msk [vmem:[#allocation3 + $0x40] sm:$0xff] %vm2252, %v2221
        %2262 = vst.msk [vmem:[#allocation3 + $0x48] sm:$0xff] %vm2252, %v2223
        %2263 = vst.msk [vmem:[#allocation3 + $0x50] sm:$0xff] %vm2252, %v2225
        %2264 = vst.msk [vmem:[#allocation3 + $0x58] sm:$0xff] %vm2252, %v2227
        %2265 = vst.msk [vmem:[#allocation3 + $0x60] sm:$0xff] %vm2252, %v2229
        %2266 = vst.msk [vmem:[#allocation3 + $0x68] sm:$0xff] %vm2252, %v2231
        %2267 = vst.msk [vmem:[#allocation3 + $0x70] sm:$0xff] %vm2252, %v2233
        %2268 = vst.msk [vmem:[#allocation3 + $0x78] sm:$0xff] %vm2252, %v2235
        %v2269 = vld [vmem:[%s1106] sm:$0xf]
        %v2270 = vld [vmem:[%s1106 + $0x4] sm:$0xf]
        %v2271 = vld [vmem:[%s1106 + $0x8] sm:$0x1]
        %v2272 = vld [vmem:[%s1106 + $0xc] sm:$0xf]
        %v2273 = vld [vmem:[%s1106 + $0x10] sm:$0xf]
        %v2274 = vld [vmem:[%s1106 + $0x14] sm:$0x1]
        %v2275 = vld [vmem:[%s1106 + $0x18] sm:$0xf]
        %v2276 = vld [vmem:[%s1106 + $0x1c] sm:$0xf]
        %v2277 = vld [vmem:[%s1106 + $0x20] sm:$0x1]
        %v2278 = vld [vmem:[%s1106 + $0x24] sm:$0xf]
        %v2279 = vld [vmem:[%s1106 + $0x28] sm:$0xf]
        %v2280 = vld [vmem:[%s1106 + $0x2c] sm:$0x1]
        %v2281 = vld [vmem:[%s1106 + $0x30] sm:$0xf]
        %v2282 = vld [vmem:[%s1106 + $0x34] sm:$0xf]
        %v2283 = vld [vmem:[%s1106 + $0x38] sm:$0x1]
        %v2284 = vld [vmem:[%s1106 + $0x3c] sm:$0xf]
        %v2285 = vld [vmem:[%s1106 + $0x40] sm:$0xf]
        %v2286 = vld [vmem:[%s1106 + $0x44] sm:$0x1]
        %v2287 = vld [vmem:[%s1106 + $0x48] sm:$0xf]
        %v2288 = vld [vmem:[%s1106 + $0x4c] sm:$0xf]
        %v2289 = vld [vmem:[%s1106 + $0x50] sm:$0x1]
        %v2290 = vld [vmem:[%s1106 + $0x54] sm:$0xf]
        %v2291 = vld [vmem:[%s1106 + $0x58] sm:$0xf]
        %v2292 = vld [vmem:[%s1106 + $0x5c] sm:$0x1]
        %v2293 = vld [vmem:[%s1106 + $0x60] sm:$0xf]
        %v2294 = vld [vmem:[%s1106 + $0x64] sm:$0xf]
        %v2295 = vld [vmem:[%s1106 + $0x68] sm:$0x1]
        %v2296 = vld [vmem:[%s1106 + $0x6c] sm:$0xf]
        %v2297 = vld [vmem:[%s1106 + $0x70] sm:$0xf]
        %v2298 = vld [vmem:[%s1106 + $0x74] sm:$0x1]
        %v2299 = vld [vmem:[%s1106 + $0x78] sm:$0xf]
        %v2300 = vld [vmem:[%s1106 + $0x7c] sm:$0xf]
        %v2301 = vld [vmem:[%s1106 + $0x80] sm:$0x1]
        %v2302 = vld [vmem:[%s1106 + $0x84] sm:$0xf]
        %v2303 = vld [vmem:[%s1106 + $0x88] sm:$0xf]
        %v2304 = vld [vmem:[%s1106 + $0x8c] sm:$0x1]
        %v2305 = vld [vmem:[%s1106 + $0x90] sm:$0xf]
        %v2306 = vld [vmem:[%s1106 + $0x94] sm:$0xf]
        %v2307 = vld [vmem:[%s1106 + $0x98] sm:$0x1]
        %v2308 = vld [vmem:[%s1106 + $0x9c] sm:$0xf]
        %v2309 = vld [vmem:[%s1106 + $0xa0] sm:$0xf]
        %v2310 = vld [vmem:[%s1106 + $0xa4] sm:$0x1]
        %v2311 = vld [vmem:[%s1106 + $0xa8] sm:$0xf]
        %v2312 = vld [vmem:[%s1106 + $0xac] sm:$0xf]
        %v2313 = vld [vmem:[%s1106 + $0xb0] sm:$0x1]
        %v2314 = vld [vmem:[%s1106 + $0xb4] sm:$0xf]
        %v2315 = vld [vmem:[%s1106 + $0xb8] sm:$0xf]
        %v2316 = vld [vmem:[%s1106 + $0xbc] sm:$0x1]
        %v2365 = vunpack.c.l.b16 %v2269
        %v2366 = vunpack.c.l.b16 %v2270
        %v2367 = vunpack.c.l.b16 %v2271
        %v2368 = vunpack.c.l.b16 %v2272
        %v2369 = vunpack.c.l.b16 %v2273
        %v2370 = vunpack.c.l.b16 %v2274
        %v2371 = vunpack.c.l.b16 %v2275
        %v2372 = vunpack.c.l.b16 %v2276
        %v2373 = vunpack.c.l.b16 %v2277
        %v2374 = vunpack.c.l.b16 %v2278
        %v2375 = vunpack.c.l.b16 %v2279
        %v2376 = vunpack.c.l.b16 %v2280
        %v2377 = vunpack.c.l.b16 %v2281
        %v2378 = vunpack.c.l.b16 %v2282
        %v2379 = vunpack.c.l.b16 %v2283
        %v2380 = vunpack.c.l.b16 %v2284
        %v2381 = vunpack.c.l.b16 %v2285
        %v2382 = vunpack.c.l.b16 %v2286
        %v2383 = vunpack.c.l.b16 %v2287
        %v2384 = vunpack.c.l.b16 %v2288
        %v2385 = vunpack.c.l.b16 %v2289
        %v2386 = vunpack.c.l.b16 %v2290
        %v2387 = vunpack.c.l.b16 %v2291
        %v2388 = vunpack.c.l.b16 %v2292
        %v2389 = vunpack.c.l.b16 %v2293
        %v2390 = vunpack.c.l.b16 %v2294
        %v2391 = vunpack.c.l.b16 %v2295
        %v2392 = vunpack.c.l.b16 %v2296
        %v2393 = vunpack.c.l.b16 %v2297
        %v2394 = vunpack.c.l.b16 %v2298
        %v2395 = vunpack.c.l.b16 %v2299
        %v2396 = vunpack.c.l.b16 %v2300
        %v2397 = vunpack.c.l.b16 %v2301
        %v2398 = vunpack.c.l.b16 %v2302
        %v2399 = vunpack.c.l.b16 %v2303
        %v2400 = vunpack.c.l.b16 %v2304
        %v2401 = vunpack.c.l.b16 %v2305
        %v2402 = vunpack.c.l.b16 %v2306
        %v2403 = vunpack.c.l.b16 %v2307
        %v2404 = vunpack.c.l.b16 %v2308
        %v2405 = vunpack.c.l.b16 %v2309
        %v2406 = vunpack.c.l.b16 %v2310
        %v2407 = vunpack.c.l.b16 %v2311
        %v2408 = vunpack.c.l.b16 %v2312
        %v2409 = vunpack.c.l.b16 %v2313
        %v2410 = vunpack.c.l.b16 %v2314
        %v2411 = vunpack.c.l.b16 %v2315
        %v2412 = vunpack.c.l.b16 %v2316
        %v2413 = vpack.c.b16 %v2366, %v2365
        %v2414 = vpack.c.b16 %v2367, %v2367
        %v2415 = vpack.c.b16 %v2369, %v2368
        %v2416 = vpack.c.b16 %v2370, %v2370
        %v2417 = vpack.c.b16 %v2372, %v2371
        %v2418 = vpack.c.b16 %v2373, %v2373
        %v2419 = vpack.c.b16 %v2375, %v2374
        %v2420 = vpack.c.b16 %v2376, %v2376
        %v2421 = vpack.c.b16 %v2378, %v2377
        %v2422 = vpack.c.b16 %v2379, %v2379
        %v2423 = vpack.c.b16 %v2381, %v2380
        %v2424 = vpack.c.b16 %v2382, %v2382
        %v2425 = vpack.c.b16 %v2384, %v2383
        %v2426 = vpack.c.b16 %v2385, %v2385
        %v2427 = vpack.c.b16 %v2387, %v2386
        %v2428 = vpack.c.b16 %v2388, %v2388
        %v2429 = vpack.c.b16 %v2390, %v2389
        %v2430 = vpack.c.b16 %v2391, %v2391
        %v2431 = vpack.c.b16 %v2393, %v2392
        %v2432 = vpack.c.b16 %v2394, %v2394
        %v2433 = vpack.c.b16 %v2396, %v2395
        %v2434 = vpack.c.b16 %v2397, %v2397
        %v2435 = vpack.c.b16 %v2399, %v2398
        %v2436 = vpack.c.b16 %v2400, %v2400
        %v2437 = vpack.c.b16 %v2402, %v2401
        %v2438 = vpack.c.b16 %v2403, %v2403
        %v2439 = vpack.c.b16 %v2405, %v2404
        %v2440 = vpack.c.b16 %v2406, %v2406
        %v2441 = vpack.c.b16 %v2408, %v2407
        %v2442 = vpack.c.b16 %v2409, %v2409
        %v2443 = vpack.c.b16 %v2411, %v2410
        %v2444 = vpack.c.b16 %v2412, %v2412
        %v2446 = vshrl.u32 %v2413, 16
        %v2448 = vshll.u32 %v2413, 16
        %v2450 = vrot.slane %v2448, 1
        %v2451 = vor.u32 %v2446, %v2450
        %v2453 = vshll.u32 %v2414, 16
        %v2455 = vrot.slane %v2453, 1
        %v2456 = vsel %vm1544, %v2451, %v2455
        %v2458 = vshrl.u32 %v2415, 16
        %v2460 = vshll.u32 %v2415, 16
        %v2462 = vrot.slane %v2460, 1
        %v2463 = vor.u32 %v2458, %v2462
        %v2465 = vshll.u32 %v2416, 16
        %v2467 = vrot.slane %v2465, 1
        %v2468 = vsel %vm1544, %v2463, %v2467
        %v2470 = vshrl.u32 %v2417, 16
        %v2472 = vshll.u32 %v2417, 16
        %v2474 = vrot.slane %v2472, 1
        %v2475 = vor.u32 %v2470, %v2474
        %v2477 = vshll.u32 %v2418, 16
        %v2479 = vrot.slane %v2477, 1
        %v2480 = vsel %vm1544, %v2475, %v2479
        %v2482 = vshrl.u32 %v2419, 16
        %v2484 = vshll.u32 %v2419, 16
        %v2486 = vrot.slane %v2484, 1
        %v2487 = vor.u32 %v2482, %v2486
        %v2489 = vshll.u32 %v2420, 16
        %v2491 = vrot.slane %v2489, 1
        %v2492 = vsel %vm1544, %v2487, %v2491
        %v2494 = vshrl.u32 %v2421, 16
        %v2496 = vshll.u32 %v2421, 16
        %v2498 = vrot.slane %v2496, 1
        %v2499 = vor.u32 %v2494, %v2498
        %v2501 = vshll.u32 %v2422, 16
        %v2503 = vrot.slane %v2501, 1
        %v2504 = vsel %vm1544, %v2499, %v2503
        %v2506 = vshrl.u32 %v2423, 16
        %v2508 = vshll.u32 %v2423, 16
        %v2510 = vrot.slane %v2508, 1
        %v2511 = vor.u32 %v2506, %v2510
        %v2513 = vshll.u32 %v2424, 16
        %v2515 = vrot.slane %v2513, 1
        %v2516 = vsel %vm1544, %v2511, %v2515
        %v2518 = vshrl.u32 %v2425, 16
        %v2520 = vshll.u32 %v2425, 16
        %v2522 = vrot.slane %v2520, 1
        %v2523 = vor.u32 %v2518, %v2522
        %v2525 = vshll.u32 %v2426, 16
        %v2527 = vrot.slane %v2525, 1
        %v2528 = vsel %vm1544, %v2523, %v2527
        %v2530 = vshrl.u32 %v2427, 16
        %v2532 = vshll.u32 %v2427, 16
        %v2534 = vrot.slane %v2532, 1
        %v2535 = vor.u32 %v2530, %v2534
        %v2537 = vshll.u32 %v2428, 16
        %v2539 = vrot.slane %v2537, 1
        %v2540 = vsel %vm1544, %v2535, %v2539
        %v2542 = vshrl.u32 %v2429, 16
        %v2544 = vshll.u32 %v2429, 16
        %v2546 = vrot.slane %v2544, 1
        %v2547 = vor.u32 %v2542, %v2546
        %v2549 = vshll.u32 %v2430, 16
        %v2551 = vrot.slane %v2549, 1
        %v2552 = vsel %vm1544, %v2547, %v2551
        %v2554 = vshrl.u32 %v2431, 16
        %v2556 = vshll.u32 %v2431, 16
        %v2558 = vrot.slane %v2556, 1
        %v2559 = vor.u32 %v2554, %v2558
        %v2561 = vshll.u32 %v2432, 16
        %v2563 = vrot.slane %v2561, 1
        %v2564 = vsel %vm1544, %v2559, %v2563
        %v2566 = vshrl.u32 %v2433, 16
        %v2568 = vshll.u32 %v2433, 16
        %v2570 = vrot.slane %v2568, 1
        %v2571 = vor.u32 %v2566, %v2570
        %v2573 = vshll.u32 %v2434, 16
        %v2575 = vrot.slane %v2573, 1
        %v2576 = vsel %vm1544, %v2571, %v2575
        %v2578 = vshrl.u32 %v2435, 16
        %v2580 = vshll.u32 %v2435, 16
        %v2582 = vrot.slane %v2580, 1
        %v2583 = vor.u32 %v2578, %v2582
        %v2585 = vshll.u32 %v2436, 16
        %v2587 = vrot.slane %v2585, 1
        %v2588 = vsel %vm1544, %v2583, %v2587
        %v2590 = vshrl.u32 %v2437, 16
        %v2592 = vshll.u32 %v2437, 16
        %v2594 = vrot.slane %v2592, 1
        %v2595 = vor.u32 %v2590, %v2594
        %v2597 = vshll.u32 %v2438, 16
        %v2599 = vrot.slane %v2597, 1
        %v2600 = vsel %vm1544, %v2595, %v2599
        %v2602 = vshrl.u32 %v2439, 16
        %v2604 = vshll.u32 %v2439, 16
        %v2606 = vrot.slane %v2604, 1
        %v2607 = vor.u32 %v2602, %v2606
        %v2609 = vshll.u32 %v2440, 16
        %v2611 = vrot.slane %v2609, 1
        %v2612 = vsel %vm1544, %v2607, %v2611
        %v2614 = vshrl.u32 %v2441, 16
        %v2616 = vshll.u32 %v2441, 16
        %v2618 = vrot.slane %v2616, 1
        %v2619 = vor.u32 %v2614, %v2618
        %v2621 = vshll.u32 %v2442, 16
        %v2623 = vrot.slane %v2621, 1
        %v2624 = vsel %vm1544, %v2619, %v2623
        %v2626 = vshrl.u32 %v2443, 16
        %v2628 = vshll.u32 %v2443, 16
        %v2630 = vrot.slane %v2628, 1
        %v2631 = vor.u32 %v2626, %v2630
        %v2633 = vshll.u32 %v2444, 16
        %v2635 = vrot.slane %v2633, 1
        %v2636 = vsel %vm1544, %v2631, %v2635
        %2637 = vrot.lane.b32.xlu0 %v2456, 16
        %v2638 = vpop.permute.xlu0 %2637
        %2639 = vrot.lane.b32.xlu0 %v2468, 16
        %v2640 = vpop.permute.xlu0 %2639
        %2641 = vrot.lane.b32.xlu0 %v2480, 16
        %v2642 = vpop.permute.xlu0 %2641
        %2643 = vrot.lane.b32.xlu0 %v2492, 16
        %v2644 = vpop.permute.xlu0 %2643
        %2645 = vrot.lane.b32.xlu0 %v2504, 16
        %v2646 = vpop.permute.xlu0 %2645
        %2647 = vrot.lane.b32.xlu0 %v2516, 16
        %v2648 = vpop.permute.xlu0 %2647
        %2649 = vrot.lane.b32.xlu0 %v2528, 16
        %v2650 = vpop.permute.xlu0 %2649
        %2651 = vrot.lane.b32.xlu0 %v2540, 16
        %v2652 = vpop.permute.xlu0 %2651
        %2653 = vrot.lane.b32.xlu0 %v2552, 16
        %v2654 = vpop.permute.xlu0 %2653
        %2655 = vrot.lane.b32.xlu0 %v2564, 16
        %v2656 = vpop.permute.xlu0 %2655
        %2657 = vrot.lane.b32.xlu0 %v2576, 16
        %v2658 = vpop.permute.xlu0 %2657
        %2659 = vrot.lane.b32.xlu0 %v2588, 16
        %v2660 = vpop.permute.xlu0 %2659
        %2661 = vrot.lane.b32.xlu0 %v2600, 16
        %v2662 = vpop.permute.xlu0 %2661
        %2663 = vrot.lane.b32.xlu0 %v2612, 16
        %v2664 = vpop.permute.xlu0 %2663
        %2665 = vrot.lane.b32.xlu0 %v2624, 16
        %v2666 = vpop.permute.xlu0 %2665
        %2667 = vrot.lane.b32.xlu0 %v2636, 16
        %v2668 = vpop.permute.xlu0 %2667
        %vm2685 = vcmask 162944
        %2686 = vst.msk [vmem:[#allocation3] sm:$0xff] %vm2685, %v2638
        %2687 = vst.msk [vmem:[#allocation3 + $0x8] sm:$0xff] %vm2685, %v2640
        %2688 = vst.msk [vmem:[#allocation3 + $0x10] sm:$0xff] %vm2685, %v2642
        %2689 = vst.msk [vmem:[#allocation3 + $0x18] sm:$0xff] %vm2685, %v2644
        %2690 = vst.msk [vmem:[#allocation3 + $0x20] sm:$0xff] %vm2685, %v2646
        %2691 = vst.msk [vmem:[#allocation3 + $0x28] sm:$0xff] %vm2685, %v2648
        %2692 = vst.msk [vmem:[#allocation3 + $0x30] sm:$0xff] %vm2685, %v2650
        %2693 = vst.msk [vmem:[#allocation3 + $0x38] sm:$0xff] %vm2685, %v2652
        %2694 = vst.msk [vmem:[#allocation3 + $0x40] sm:$0xff] %vm2685, %v2654
        %2695 = vst.msk [vmem:[#allocation3 + $0x48] sm:$0xff] %vm2685, %v2656
        %2696 = vst.msk [vmem:[#allocation3 + $0x50] sm:$0xff] %vm2685, %v2658
        %2697 = vst.msk [vmem:[#allocation3 + $0x58] sm:$0xff] %vm2685, %v2660
        %2698 = vst.msk [vmem:[#allocation3 + $0x60] sm:$0xff] %vm2685, %v2662
        %2699 = vst.msk [vmem:[#allocation3 + $0x68] sm:$0xff] %vm2685, %v2664
        %2700 = vst.msk [vmem:[#allocation3 + $0x70] sm:$0xff] %vm2685, %v2666
        %2701 = vst.msk [vmem:[#allocation3 + $0x78] sm:$0xff] %vm2685, %v2668
        %v2702 = vld [vmem:[%s1106] sm:$0xe]
        %v2703 = vld [vmem:[%s1106 + $0x4] sm:$0xf]
        %v2704 = vld [vmem:[%s1106 + $0x8] sm:$0x1]
        %v2705 = vld [vmem:[%s1106 + $0xc] sm:$0xe]
        %v2706 = vld [vmem:[%s1106 + $0x10] sm:$0xf]
        %v2707 = vld [vmem:[%s1106 + $0x14] sm:$0x1]
        %v2708 = vld [vmem:[%s1106 + $0x18] sm:$0xe]
        %v2709 = vld [vmem:[%s1106 + $0x1c] sm:$0xf]
        %v2710 = vld [vmem:[%s1106 + $0x20] sm:$0x1]
        %v2711 = vld [vmem:[%s1106 + $0x24] sm:$0xe]
        %v2712 = vld [vmem:[%s1106 + $0x28] sm:$0xf]
        %v2713 = vld [vmem:[%s1106 + $0x2c] sm:$0x1]
        %v2714 = vld [vmem:[%s1106 + $0x30] sm:$0xe]
        %v2715 = vld [vmem:[%s1106 + $0x34] sm:$0xf]
        %v2716 = vld [vmem:[%s1106 + $0x38] sm:$0x1]
        %v2717 = vld [vmem:[%s1106 + $0x3c] sm:$0xe]
        %v2718 = vld [vmem:[%s1106 + $0x40] sm:$0xf]
        %v2719 = vld [vmem:[%s1106 + $0x44] sm:$0x1]
        %v2720 = vld [vmem:[%s1106 + $0x48] sm:$0xe]
        %v2721 = vld [vmem:[%s1106 + $0x4c] sm:$0xf]
        %v2722 = vld [vmem:[%s1106 + $0x50] sm:$0x1]
        %v2723 = vld [vmem:[%s1106 + $0x54] sm:$0xe]
        %v2724 = vld [vmem:[%s1106 + $0x58] sm:$0xf]
        %v2725 = vld [vmem:[%s1106 + $0x5c] sm:$0x1]
        %v2726 = vld [vmem:[%s1106 + $0x60] sm:$0xe]
        %v2727 = vld [vmem:[%s1106 + $0x64] sm:$0xf]
        %v2728 = vld [vmem:[%s1106 + $0x68] sm:$0x1]
        %v2729 = vld [vmem:[%s1106 + $0x6c] sm:$0xe]
        %v2730 = vld [vmem:[%s1106 + $0x70] sm:$0xf]
        %v2731 = vld [vmem:[%s1106 + $0x74] sm:$0x1]
        %v2732 = vld [vmem:[%s1106 + $0x78] sm:$0xe]
        %v2733 = vld [vmem:[%s1106 + $0x7c] sm:$0xf]
        %v2734 = vld [vmem:[%s1106 + $0x80] sm:$0x1]
        %v2735 = vld [vmem:[%s1106 + $0x84] sm:$0xe]
        %v2736 = vld [vmem:[%s1106 + $0x88] sm:$0xf]
        %v2737 = vld [vmem:[%s1106 + $0x8c] sm:$0x1]
        %v2738 = vld [vmem:[%s1106 + $0x90] sm:$0xe]
        %v2739 = vld [vmem:[%s1106 + $0x94] sm:$0xf]
        %v2740 = vld [vmem:[%s1106 + $0x98] sm:$0x1]
        %v2741 = vld [vmem:[%s1106 + $0x9c] sm:$0xe]
        %v2742 = vld [vmem:[%s1106 + $0xa0] sm:$0xf]
        %v2743 = vld [vmem:[%s1106 + $0xa4] sm:$0x1]
        %v2744 = vld [vmem:[%s1106 + $0xa8] sm:$0xe]
        %v2745 = vld [vmem:[%s1106 + $0xac] sm:$0xf]
        %v2746 = vld [vmem:[%s1106 + $0xb0] sm:$0x1]
        %v2747 = vld [vmem:[%s1106 + $0xb4] sm:$0xe]
        %v2748 = vld [vmem:[%s1106 + $0xb8] sm:$0xf]
        %v2749 = vld [vmem:[%s1106 + $0xbc] sm:$0x1]
        %v2798 = vunpack.c.l.b16 %v2702
        %v2799 = vunpack.c.l.b16 %v2703
        %v2800 = vunpack.c.l.b16 %v2704
        %v2801 = vunpack.c.l.b16 %v2705
        %v2802 = vunpack.c.l.b16 %v2706
        %v2803 = vunpack.c.l.b16 %v2707
        %v2804 = vunpack.c.l.b16 %v2708
        %v2805 = vunpack.c.l.b16 %v2709
        %v2806 = vunpack.c.l.b16 %v2710
        %v2807 = vunpack.c.l.b16 %v2711
        %v2808 = vunpack.c.l.b16 %v2712
        %v2809 = vunpack.c.l.b16 %v2713
        %v2810 = vunpack.c.l.b16 %v2714
        %v2811 = vunpack.c.l.b16 %v2715
        %v2812 = vunpack.c.l.b16 %v2716
        %v2813 = vunpack.c.l.b16 %v2717
        %v2814 = vunpack.c.l.b16 %v2718
        %v2815 = vunpack.c.l.b16 %v2719
        %v2816 = vunpack.c.l.b16 %v2720
        %v2817 = vunpack.c.l.b16 %v2721
        %v2818 = vunpack.c.l.b16 %v2722
        %v2819 = vunpack.c.l.b16 %v2723
        %v2820 = vunpack.c.l.b16 %v2724
        %v2821 = vunpack.c.l.b16 %v2725
        %v2822 = vunpack.c.l.b16 %v2726
        %v2823 = vunpack.c.l.b16 %v2727
        %v2824 = vunpack.c.l.b16 %v2728
        %v2825 = vunpack.c.l.b16 %v2729
        %v2826 = vunpack.c.l.b16 %v2730
        %v2827 = vunpack.c.l.b16 %v2731
        %v2828 = vunpack.c.l.b16 %v2732
        %v2829 = vunpack.c.l.b16 %v2733
        %v2830 = vunpack.c.l.b16 %v2734
        %v2831 = vunpack.c.l.b16 %v2735
        %v2832 = vunpack.c.l.b16 %v2736
        %v2833 = vunpack.c.l.b16 %v2737
        %v2834 = vunpack.c.l.b16 %v2738
        %v2835 = vunpack.c.l.b16 %v2739
        %v2836 = vunpack.c.l.b16 %v2740
        %v2837 = vunpack.c.l.b16 %v2741
        %v2838 = vunpack.c.l.b16 %v2742
        %v2839 = vunpack.c.l.b16 %v2743
        %v2840 = vunpack.c.l.b16 %v2744
        %v2841 = vunpack.c.l.b16 %v2745
        %v2842 = vunpack.c.l.b16 %v2746
        %v2843 = vunpack.c.l.b16 %v2747
        %v2844 = vunpack.c.l.b16 %v2748
        %v2845 = vunpack.c.l.b16 %v2749
        %v2846 = vpack.c.b16 %v2799, %v2798
        %v2847 = vpack.c.b16 %v2800, %v2800
        %v2848 = vpack.c.b16 %v2802, %v2801
        %v2849 = vpack.c.b16 %v2803, %v2803
        %v2850 = vpack.c.b16 %v2805, %v2804
        %v2851 = vpack.c.b16 %v2806, %v2806
        %v2852 = vpack.c.b16 %v2808, %v2807
        %v2853 = vpack.c.b16 %v2809, %v2809
        %v2854 = vpack.c.b16 %v2811, %v2810
        %v2855 = vpack.c.b16 %v2812, %v2812
        %v2856 = vpack.c.b16 %v2814, %v2813
        %v2857 = vpack.c.b16 %v2815, %v2815
        %v2858 = vpack.c.b16 %v2817, %v2816
        %v2859 = vpack.c.b16 %v2818, %v2818
        %v2860 = vpack.c.b16 %v2820, %v2819
        %v2861 = vpack.c.b16 %v2821, %v2821
        %v2862 = vpack.c.b16 %v2823, %v2822
        %v2863 = vpack.c.b16 %v2824, %v2824
        %v2864 = vpack.c.b16 %v2826, %v2825
        %v2865 = vpack.c.b16 %v2827, %v2827
        %v2866 = vpack.c.b16 %v2829, %v2828
        %v2867 = vpack.c.b16 %v2830, %v2830
        %v2868 = vpack.c.b16 %v2832, %v2831
        %v2869 = vpack.c.b16 %v2833, %v2833
        %v2870 = vpack.c.b16 %v2835, %v2834
        %v2871 = vpack.c.b16 %v2836, %v2836
        %v2872 = vpack.c.b16 %v2838, %v2837
        %v2873 = vpack.c.b16 %v2839, %v2839
        %v2874 = vpack.c.b16 %v2841, %v2840
        %v2875 = vpack.c.b16 %v2842, %v2842
        %v2876 = vpack.c.b16 %v2844, %v2843
        %v2877 = vpack.c.b16 %v2845, %v2845
        %v2878 = vrot.slane %v2846, 1
        %v2879 = vrot.slane %v2847, 1
        %v2880 = vsel %vm1978, %v2878, %v2879
        %v2881 = vrot.slane %v2848, 1
        %v2882 = vrot.slane %v2849, 1
        %v2883 = vsel %vm1978, %v2881, %v2882
        %v2884 = vrot.slane %v2850, 1
        %v2885 = vrot.slane %v2851, 1
        %v2886 = vsel %vm1978, %v2884, %v2885
        %v2887 = vrot.slane %v2852, 1
        %v2888 = vrot.slane %v2853, 1
        %v2889 = vsel %vm1978, %v2887, %v2888
        %v2890 = vrot.slane %v2854, 1
        %v2891 = vrot.slane %v2855, 1
        %v2892 = vsel %vm1978, %v2890, %v2891
        %v2893 = vrot.slane %v2856, 1
        %v2894 = vrot.slane %v2857, 1
        %v2895 = vsel %vm1978, %v2893, %v2894
        %v2896 = vrot.slane %v2858, 1
        %v2897 = vrot.slane %v2859, 1
        %v2898 = vsel %vm1978, %v2896, %v2897
        %v2899 = vrot.slane %v2860, 1
        %v2900 = vrot.slane %v2861, 1
        %v2901 = vsel %vm1978, %v2899, %v2900
        %v2902 = vrot.slane %v2862, 1
        %v2903 = vrot.slane %v2863, 1
        %v2904 = vsel %vm1978, %v2902, %v2903
        %v2905 = vrot.slane %v2864, 1
        %v2906 = vrot.slane %v2865, 1
        %v2907 = vsel %vm1978, %v2905, %v2906
        %v2908 = vrot.slane %v2866, 1
        %v2909 = vrot.slane %v2867, 1
        %v2910 = vsel %vm1978, %v2908, %v2909
        %v2911 = vrot.slane %v2868, 1
        %v2912 = vrot.slane %v2869, 1
        %v2913 = vsel %vm1978, %v2911, %v2912
        %v2914 = vrot.slane %v2870, 1
        %v2915 = vrot.slane %v2871, 1
        %v2916 = vsel %vm1978, %v2914, %v2915
        %v2917 = vrot.slane %v2872, 1
        %v2918 = vrot.slane %v2873, 1
        %v2919 = vsel %vm1978, %v2917, %v2918
        %v2920 = vrot.slane %v2874, 1
        %v2921 = vrot.slane %v2875, 1
        %v2922 = vsel %vm1978, %v2920, %v2921
        %v2923 = vrot.slane %v2876, 1
        %v2924 = vrot.slane %v2877, 1
        %v2925 = vsel %vm1978, %v2923, %v2924
        %2926 = vrot.lane.b32.xlu0 %v2880, 20
        %v2927 = vpop.permute.xlu0 %2926
        %2928 = vrot.lane.b32.xlu0 %v2883, 20
        %v2929 = vpop.permute.xlu0 %2928
        %2930 = vrot.lane.b32.xlu0 %v2886, 20
        %v2931 = vpop.permute.xlu0 %2930
        %2932 = vrot.lane.b32.xlu0 %v2889, 20
        %v2933 = vpop.permute.xlu0 %2932
        %2934 = vrot.lane.b32.xlu0 %v2892, 20
        %v2935 = vpop.permute.xlu0 %2934
        %2936 = vrot.lane.b32.xlu0 %v2895, 20
        %v2937 = vpop.permute.xlu0 %2936
        %2938 = vrot.lane.b32.xlu0 %v2898, 20
        %v2939 = vpop.permute.xlu0 %2938
        %2940 = vrot.lane.b32.xlu0 %v2901, 20
        %v2941 = vpop.permute.xlu0 %2940
        %2942 = vrot.lane.b32.xlu0 %v2904, 20
        %v2943 = vpop.permute.xlu0 %2942
        %2944 = vrot.lane.b32.xlu0 %v2907, 20
        %v2945 = vpop.permute.xlu0 %2944
        %2946 = vrot.lane.b32.xlu0 %v2910, 20
        %v2947 = vpop.permute.xlu0 %2946
        %2948 = vrot.lane.b32.xlu0 %v2913, 20
        %v2949 = vpop.permute.xlu0 %2948
        %2950 = vrot.lane.b32.xlu0 %v2916, 20
        %v2951 = vpop.permute.xlu0 %2950
        %2952 = vrot.lane.b32.xlu0 %v2919, 20
        %v2953 = vpop.permute.xlu0 %2952
        %2954 = vrot.lane.b32.xlu0 %v2922, 20
        %v2955 = vpop.permute.xlu0 %2954
        %2956 = vrot.lane.b32.xlu0 %v2925, 20
        %v2957 = vpop.permute.xlu0 %2956
        %vm2974 = vcmask 195744
        %2975 = vst.msk [vmem:[#allocation3] sm:$0xff] %vm2974, %v2927
        %2976 = vst.msk [vmem:[#allocation3 + $0x8] sm:$0xff] %vm2974, %v2929
        %2977 = vst.msk [vmem:[#allocation3 + $0x10] sm:$0xff] %vm2974, %v2931
        %2978 = vst.msk [vmem:[#allocation3 + $0x18] sm:$0xff] %vm2974, %v2933
        %2979 = vst.msk [vmem:[#allocation3 + $0x20] sm:$0xff] %vm2974, %v2935
        %2980 = vst.msk [vmem:[#allocation3 + $0x28] sm:$0xff] %vm2974, %v2937
        %2981 = vst.msk [vmem:[#allocation3 + $0x30] sm:$0xff] %vm2974, %v2939
        %2982 = vst.msk [vmem:[#allocation3 + $0x38] sm:$0xff] %vm2974, %v2941
        %2983 = vst.msk [vmem:[#allocation3 + $0x40] sm:$0xff] %vm2974, %v2943
        %2984 = vst.msk [vmem:[#allocation3 + $0x48] sm:$0xff] %vm2974, %v2945
        %2985 = vst.msk [vmem:[#allocation3 + $0x50] sm:$0xff] %vm2974, %v2947
        %2986 = vst.msk [vmem:[#allocation3 + $0x58] sm:$0xff] %vm2974, %v2949
        %2987 = vst.msk [vmem:[#allocation3 + $0x60] sm:$0xff] %vm2974, %v2951
        %2988 = vst.msk [vmem:[#allocation3 + $0x68] sm:$0xff] %vm2974, %v2953
        %2989 = vst.msk [vmem:[#allocation3 + $0x70] sm:$0xff] %vm2974, %v2955
        %2990 = vst.msk [vmem:[#allocation3 + $0x78] sm:$0xff] %vm2974, %v2957
        %s2991 = scalar_lea.vmem [#allocation2], 24
        %v2992 = vld [vmem:[%s2991] sm:$0xf]
        %v2993 = vld [vmem:[%s2991 + $0x4] sm:$0xf]
        %v2994 = vld [vmem:[%s2991 + $0xc] sm:$0xf]
        %v2995 = vld [vmem:[%s2991 + $0x10] sm:$0xf]
        %v2996 = vld [vmem:[%s2991 + $0x18] sm:$0xf]
        %v2997 = vld [vmem:[%s2991 + $0x1c] sm:$0xf]
        %v2998 = vld [vmem:[%s2991 + $0x24] sm:$0xf]
        %v2999 = vld [vmem:[%s2991 + $0x28] sm:$0xf]
        %v3000 = vld [vmem:[%s2991 + $0x30] sm:$0xf]
        %v3001 = vld [vmem:[%s2991 + $0x34] sm:$0xf]
        %v3002 = vld [vmem:[%s2991 + $0x3c] sm:$0xf]
        %v3003 = vld [vmem:[%s2991 + $0x40] sm:$0xf]
        %v3004 = vld [vmem:[%s2991 + $0x48] sm:$0xf]
        %v3005 = vld [vmem:[%s2991 + $0x4c] sm:$0xf]
        %v3006 = vld [vmem:[%s2991 + $0x54] sm:$0xf]
        %v3007 = vld [vmem:[%s2991 + $0x58] sm:$0xf]
        %v3008 = vld [vmem:[%s2991 + $0x60] sm:$0xf]
        %v3009 = vld [vmem:[%s2991 + $0x64] sm:$0xf]
        %v3010 = vld [vmem:[%s2991 + $0x6c] sm:$0xf]
        %v3011 = vld [vmem:[%s2991 + $0x70] sm:$0xf]
        %v3012 = vld [vmem:[%s2991 + $0x78] sm:$0xf]
        %v3013 = vld [vmem:[%s2991 + $0x7c] sm:$0xf]
        %v3014 = vld [vmem:[%s2991 + $0x84] sm:$0xf]
        %v3015 = vld [vmem:[%s2991 + $0x88] sm:$0xf]
        %v3016 = vld [vmem:[%s2991 + $0x90] sm:$0xf]
        %v3017 = vld [vmem:[%s2991 + $0x94] sm:$0xf]
        %v3018 = vld [vmem:[%s2991 + $0x9c] sm:$0xf]
        %v3019 = vld [vmem:[%s2991 + $0xa0] sm:$0xf]
        %v3020 = vld [vmem:[%s2991 + $0xa8] sm:$0xf]
        %v3021 = vld [vmem:[%s2991 + $0xac] sm:$0xf]
        %v3022 = vld [vmem:[%s2991 + $0xb4] sm:$0xf]
        %v3023 = vld [vmem:[%s2991 + $0xb8] sm:$0xf]
        %v3056 = vunpack.c.l.b16 %v2992
        %v3057 = vunpack.c.l.b16 %v2993
        %v3058 = vunpack.c.l.b16 %v2994
        %v3059 = vunpack.c.l.b16 %v2995
        %v3060 = vunpack.c.l.b16 %v2996
        %v3061 = vunpack.c.l.b16 %v2997
        %v3062 = vunpack.c.l.b16 %v2998
        %v3063 = vunpack.c.l.b16 %v2999
        %v3064 = vunpack.c.l.b16 %v3000
        %v3065 = vunpack.c.l.b16 %v3001
        %v3066 = vunpack.c.l.b16 %v3002
        %v3067 = vunpack.c.l.b16 %v3003
        %v3068 = vunpack.c.l.b16 %v3004
        %v3069 = vunpack.c.l.b16 %v3005
        %v3070 = vunpack.c.l.b16 %v3006
        %v3071 = vunpack.c.l.b16 %v3007
        %v3072 = vunpack.c.l.b16 %v3008
        %v3073 = vunpack.c.l.b16 %v3009
        %v3074 = vunpack.c.l.b16 %v3010
        %v3075 = vunpack.c.l.b16 %v3011
        %v3076 = vunpack.c.l.b16 %v3012
        %v3077 = vunpack.c.l.b16 %v3013
        %v3078 = vunpack.c.l.b16 %v3014
        %v3079 = vunpack.c.l.b16 %v3015
        %v3080 = vunpack.c.l.b16 %v3016
        %v3081 = vunpack.c.l.b16 %v3017
        %v3082 = vunpack.c.l.b16 %v3018
        %v3083 = vunpack.c.l.b16 %v3019
        %v3084 = vunpack.c.l.b16 %v3020
        %v3085 = vunpack.c.l.b16 %v3021
        %v3086 = vunpack.c.l.b16 %v3022
        %v3087 = vunpack.c.l.b16 %v3023
        %v3088 = vpack.c.b16 %v3057, %v3056
        %v3089 = vpack.c.b16 %v3059, %v3058
        %v3090 = vpack.c.b16 %v3061, %v3060
        %v3091 = vpack.c.b16 %v3063, %v3062
        %v3092 = vpack.c.b16 %v3065, %v3064
        %v3093 = vpack.c.b16 %v3067, %v3066
        %v3094 = vpack.c.b16 %v3069, %v3068
        %v3095 = vpack.c.b16 %v3071, %v3070
        %v3096 = vpack.c.b16 %v3073, %v3072
        %v3097 = vpack.c.b16 %v3075, %v3074
        %v3098 = vpack.c.b16 %v3077, %v3076
        %v3099 = vpack.c.b16 %v3079, %v3078
        %v3100 = vpack.c.b16 %v3081, %v3080
        %v3101 = vpack.c.b16 %v3083, %v3082
        %v3102 = vpack.c.b16 %v3085, %v3084
        %v3103 = vpack.c.b16 %v3087, %v3086
        %3104 = vrot.lane.b32.xlu0 %v3088, 24
        %v3105 = vpop.permute.xlu0 %3104
        %3106 = vrot.lane.b32.xlu0 %v3089, 24
        %v3107 = vpop.permute.xlu0 %3106
        %3108 = vrot.lane.b32.xlu0 %v3090, 24
        %v3109 = vpop.permute.xlu0 %3108
        %3110 = vrot.lane.b32.xlu0 %v3091, 24
        %v3111 = vpop.permute.xlu0 %3110
        %3112 = vrot.lane.b32.xlu0 %v3092, 24
        %v3113 = vpop.permute.xlu0 %3112
        %3114 = vrot.lane.b32.xlu0 %v3093, 24
        %v3115 = vpop.permute.xlu0 %3114
        %3116 = vrot.lane.b32.xlu0 %v3094, 24
        %v3117 = vpop.permute.xlu0 %3116
        %3118 = vrot.lane.b32.xlu0 %v3095, 24
        %v3119 = vpop.permute.xlu0 %3118
        %3120 = vrot.lane.b32.xlu0 %v3096, 24
        %v3121 = vpop.permute.xlu0 %3120
        %3122 = vrot.lane.b32.xlu0 %v3097, 24
        %v3123 = vpop.permute.xlu0 %3122
        %3124 = vrot.lane.b32.xlu0 %v3098, 24
        %v3125 = vpop.permute.xlu0 %3124
        %3126 = vrot.lane.b32.xlu0 %v3099, 24
        %v3127 = vpop.permute.xlu0 %3126
        %3128 = vrot.lane.b32.xlu0 %v3100, 24
        %v3129 = vpop.permute.xlu0 %3128
        %3130 = vrot.lane.b32.xlu0 %v3101, 24
        %v3131 = vpop.permute.xlu0 %3130
        %3132 = vrot.lane.b32.xlu0 %v3102, 24
        %v3133 = vpop.permute.xlu0 %3132
        %3134 = vrot.lane.b32.xlu0 %v3103, 24
        %v3135 = vpop.permute.xlu0 %3134
        %vm3152 = vcmask 228544
        %3153 = vst.msk [vmem:[#allocation3] sm:$0xff] %vm3152, %v3105
        %3154 = vst.msk [vmem:[#allocation3 + $0x8] sm:$0xff] %vm3152, %v3107
        %3155 = vst.msk [vmem:[#allocation3 + $0x10] sm:$0xff] %vm3152, %v3109
        %3156 = vst.msk [vmem:[#allocation3 + $0x18] sm:$0xff] %vm3152, %v3111
        %3157 = vst.msk [vmem:[#allocation3 + $0x20] sm:$0xff] %vm3152, %v3113
        %3158 = vst.msk [vmem:[#allocation3 + $0x28] sm:$0xff] %vm3152, %v3115
        %3159 = vst.msk [vmem:[#allocation3 + $0x30] sm:$0xff] %vm3152, %v3117
        %3160 = vst.msk [vmem:[#allocation3 + $0x38] sm:$0xff] %vm3152, %v3119
        %3161 = vst.msk [vmem:[#allocation3 + $0x40] sm:$0xff] %vm3152, %v3121
        %3162 = vst.msk [vmem:[#allocation3 + $0x48] sm:$0xff] %vm3152, %v3123
        %3163 = vst.msk [vmem:[#allocation3 + $0x50] sm:$0xff] %vm3152, %v3125
        %3164 = vst.msk [vmem:[#allocation3 + $0x58] sm:$0xff] %vm3152, %v3127
        %3165 = vst.msk [vmem:[#allocation3 + $0x60] sm:$0xff] %vm3152, %v3129
        %3166 = vst.msk [vmem:[#allocation3 + $0x68] sm:$0xff] %vm3152, %v3131
        %3167 = vst.msk [vmem:[#allocation3 + $0x70] sm:$0xff] %vm3152, %v3133
        %3168 = vst.msk [vmem:[#allocation3 + $0x78] sm:$0xff] %vm3152, %v3135
        %v3169 = vld [vmem:[%s2991] sm:$0xf]
        %v3170 = vld [vmem:[%s2991 + $0x4] sm:$0xf]
        %v3171 = vld [vmem:[%s2991 + $0x8] sm:$0x1]
        %v3172 = vld [vmem:[%s2991 + $0xc] sm:$0xf]
        %v3173 = vld [vmem:[%s2991 + $0x10] sm:$0xf]
        %v3174 = vld [vmem:[%s2991 + $0x14] sm:$0x1]
        %v3175 = vld [vmem:[%s2991 + $0x18] sm:$0xf]
        %v3176 = vld [vmem:[%s2991 + $0x1c] sm:$0xf]
        %v3177 = vld [vmem:[%s2991 + $0x20] sm:$0x1]
        %v3178 = vld [vmem:[%s2991 + $0x24] sm:$0xf]
        %v3179 = vld [vmem:[%s2991 + $0x28] sm:$0xf]
        %v3180 = vld [vmem:[%s2991 + $0x2c] sm:$0x1]
        %v3181 = vld [vmem:[%s2991 + $0x30] sm:$0xf]
        %v3182 = vld [vmem:[%s2991 + $0x34] sm:$0xf]
        %v3183 = vld [vmem:[%s2991 + $0x38] sm:$0x1]
        %v3184 = vld [vmem:[%s2991 + $0x3c] sm:$0xf]
        %v3185 = vld [vmem:[%s2991 + $0x40] sm:$0xf]
        %v3186 = vld [vmem:[%s2991 + $0x44] sm:$0x1]
        %v3187 = vld [vmem:[%s2991 + $0x48] sm:$0xf]
        %v3188 = vld [vmem:[%s2991 + $0x4c] sm:$0xf]
        %v3189 = vld [vmem:[%s2991 + $0x50] sm:$0x1]
        %v3190 = vld [vmem:[%s2991 + $0x54] sm:$0xf]
        %v3191 = vld [vmem:[%s2991 + $0x58] sm:$0xf]
        %v3192 = vld [vmem:[%s2991 + $0x5c] sm:$0x1]
        %v3193 = vld [vmem:[%s2991 + $0x60] sm:$0xf]
        %v3194 = vld [vmem:[%s2991 + $0x64] sm:$0xf]
        %v3195 = vld [vmem:[%s2991 + $0x68] sm:$0x1]
        %v3196 = vld [vmem:[%s2991 + $0x6c] sm:$0xf]
        %v3197 = vld [vmem:[%s2991 + $0x70] sm:$0xf]
        %v3198 = vld [vmem:[%s2991 + $0x74] sm:$0x1]
        %v3199 = vld [vmem:[%s2991 + $0x78] sm:$0xf]
        %v3200 = vld [vmem:[%s2991 + $0x7c] sm:$0xf]
        %v3201 = vld [vmem:[%s2991 + $0x80] sm:$0x1]
        %v3202 = vld [vmem:[%s2991 + $0x84] sm:$0xf]
        %v3203 = vld [vmem:[%s2991 + $0x88] sm:$0xf]
        %v3204 = vld [vmem:[%s2991 + $0x8c] sm:$0x1]
        %v3205 = vld [vmem:[%s2991 + $0x90] sm:$0xf]
        %v3206 = vld [vmem:[%s2991 + $0x94] sm:$0xf]
        %v3207 = vld [vmem:[%s2991 + $0x98] sm:$0x1]
        %v3208 = vld [vmem:[%s2991 + $0x9c] sm:$0xf]
        %v3209 = vld [vmem:[%s2991 + $0xa0] sm:$0xf]
        %v3210 = vld [vmem:[%s2991 + $0xa4] sm:$0x1]
        %v3211 = vld [vmem:[%s2991 + $0xa8] sm:$0xf]
        %v3212 = vld [vmem:[%s2991 + $0xac] sm:$0xf]
        %v3213 = vld [vmem:[%s2991 + $0xb0] sm:$0x1]
        %v3214 = vld [vmem:[%s2991 + $0xb4] sm:$0xf]
        %v3215 = vld [vmem:[%s2991 + $0xb8] sm:$0xf]
        %v3216 = vld [vmem:[%s2991 + $0xbc] sm:$0x1]
        %v3265 = vunpack.c.l.b16 %v3169
        %v3266 = vunpack.c.l.b16 %v3170
        %v3267 = vunpack.c.l.b16 %v3171
        %v3268 = vunpack.c.l.b16 %v3172
        %v3269 = vunpack.c.l.b16 %v3173
        %v3270 = vunpack.c.l.b16 %v3174
        %v3271 = vunpack.c.l.b16 %v3175
        %v3272 = vunpack.c.l.b16 %v3176
        %v3273 = vunpack.c.l.b16 %v3177
        %v3274 = vunpack.c.l.b16 %v3178
        %v3275 = vunpack.c.l.b16 %v3179
        %v3276 = vunpack.c.l.b16 %v3180
        %v3277 = vunpack.c.l.b16 %v3181
        %v3278 = vunpack.c.l.b16 %v3182
        %v3279 = vunpack.c.l.b16 %v3183
        %v3280 = vunpack.c.l.b16 %v3184
        %v3281 = vunpack.c.l.b16 %v3185
        %v3282 = vunpack.c.l.b16 %v3186
        %v3283 = vunpack.c.l.b16 %v3187
        %v3284 = vunpack.c.l.b16 %v3188
        %v3285 = vunpack.c.l.b16 %v3189
        %v3286 = vunpack.c.l.b16 %v3190
        %v3287 = vunpack.c.l.b16 %v3191
        %v3288 = vunpack.c.l.b16 %v3192
        %v3289 = vunpack.c.l.b16 %v3193
        %v3290 = vunpack.c.l.b16 %v3194
        %v3291 = vunpack.c.l.b16 %v3195
        %v3292 = vunpack.c.l.b16 %v3196
        %v3293 = vunpack.c.l.b16 %v3197
        %v3294 = vunpack.c.l.b16 %v3198
        %v3295 = vunpack.c.l.b16 %v3199
        %v3296 = vunpack.c.l.b16 %v3200
        %v3297 = vunpack.c.l.b16 %v3201
        %v3298 = vunpack.c.l.b16 %v3202
        %v3299 = vunpack.c.l.b16 %v3203
        %v3300 = vunpack.c.l.b16 %v3204
        %v3301 = vunpack.c.l.b16 %v3205
        %v3302 = vunpack.c.l.b16 %v3206
        %v3303 = vunpack.c.l.b16 %v3207
        %v3304 = vunpack.c.l.b16 %v3208
        %v3305 = vunpack.c.l.b16 %v3209
        %v3306 = vunpack.c.l.b16 %v3210
        %v3307 = vunpack.c.l.b16 %v3211
        %v3308 = vunpack.c.l.b16 %v3212
        %v3309 = vunpack.c.l.b16 %v3213
        %v3310 = vunpack.c.l.b16 %v3214
        %v3311 = vunpack.c.l.b16 %v3215
        %v3312 = vunpack.c.l.b16 %v3216
        %v3313 = vpack.c.b16 %v3266, %v3265
        %v3314 = vpack.c.b16 %v3267, %v3267
        %v3315 = vpack.c.b16 %v3269, %v3268
        %v3316 = vpack.c.b16 %v3270, %v3270
        %v3317 = vpack.c.b16 %v3272, %v3271
        %v3318 = vpack.c.b16 %v3273, %v3273
        %v3319 = vpack.c.b16 %v3275, %v3274
        %v3320 = vpack.c.b16 %v3276, %v3276
        %v3321 = vpack.c.b16 %v3278, %v3277
        %v3322 = vpack.c.b16 %v3279, %v3279
        %v3323 = vpack.c.b16 %v3281, %v3280
        %v3324 = vpack.c.b16 %v3282, %v3282
        %v3325 = vpack.c.b16 %v3284, %v3283
        %v3326 = vpack.c.b16 %v3285, %v3285
        %v3327 = vpack.c.b16 %v3287, %v3286
        %v3328 = vpack.c.b16 %v3288, %v3288
        %v3329 = vpack.c.b16 %v3290, %v3289
        %v3330 = vpack.c.b16 %v3291, %v3291
        %v3331 = vpack.c.b16 %v3293, %v3292
        %v3332 = vpack.c.b16 %v3294, %v3294
        %v3333 = vpack.c.b16 %v3296, %v3295
        %v3334 = vpack.c.b16 %v3297, %v3297
        %v3335 = vpack.c.b16 %v3299, %v3298
        %v3336 = vpack.c.b16 %v3300, %v3300
        %v3337 = vpack.c.b16 %v3302, %v3301
        %v3338 = vpack.c.b16 %v3303, %v3303
        %v3339 = vpack.c.b16 %v3305, %v3304
        %v3340 = vpack.c.b16 %v3306, %v3306
        %v3341 = vpack.c.b16 %v3308, %v3307
        %v3342 = vpack.c.b16 %v3309, %v3309
        %v3343 = vpack.c.b16 %v3311, %v3310
        %v3344 = vpack.c.b16 %v3312, %v3312
        %v3346 = vshrl.u32 %v3313, 16
        %v3348 = vshll.u32 %v3313, 16
        %v3350 = vrot.slane %v3348, 1
        %v3351 = vor.u32 %v3346, %v3350
        %v3353 = vshll.u32 %v3314, 16
        %v3355 = vrot.slane %v3353, 1
        %v3356 = vsel %vm1544, %v3351, %v3355
        %v3358 = vshrl.u32 %v3315, 16
        %v3360 = vshll.u32 %v3315, 16
        %v3362 = vrot.slane %v3360, 1
        %v3363 = vor.u32 %v3358, %v3362
        %v3365 = vshll.u32 %v3316, 16
        %v3367 = vrot.slane %v3365, 1
        %v3368 = vsel %vm1544, %v3363, %v3367
        %v3370 = vshrl.u32 %v3317, 16
        %v3372 = vshll.u32 %v3317, 16
        %v3374 = vrot.slane %v3372, 1
        %v3375 = vor.u32 %v3370, %v3374
        %v3377 = vshll.u32 %v3318, 16
        %v3379 = vrot.slane %v3377, 1
        %v3380 = vsel %vm1544, %v3375, %v3379
        %v3382 = vshrl.u32 %v3319, 16
        %v3384 = vshll.u32 %v3319, 16
        %v3386 = vrot.slane %v3384, 1
        %v3387 = vor.u32 %v3382, %v3386
        %v3389 = vshll.u32 %v3320, 16
        %v3391 = vrot.slane %v3389, 1
        %v3392 = vsel %vm1544, %v3387, %v3391
        %v3394 = vshrl.u32 %v3321, 16
        %v3396 = vshll.u32 %v3321, 16
        %v3398 = vrot.slane %v3396, 1
        %v3399 = vor.u32 %v3394, %v3398
        %v3401 = vshll.u32 %v3322, 16
        %v3403 = vrot.slane %v3401, 1
        %v3404 = vsel %vm1544, %v3399, %v3403
        %v3406 = vshrl.u32 %v3323, 16
        %v3408 = vshll.u32 %v3323, 16
        %v3410 = vrot.slane %v3408, 1
        %v3411 = vor.u32 %v3406, %v3410
        %v3413 = vshll.u32 %v3324, 16
        %v3415 = vrot.slane %v3413, 1
        %v3416 = vsel %vm1544, %v3411, %v3415
        %v3418 = vshrl.u32 %v3325, 16
        %v3420 = vshll.u32 %v3325, 16
        %v3422 = vrot.slane %v3420, 1
        %v3423 = vor.u32 %v3418, %v3422
        %v3425 = vshll.u32 %v3326, 16
        %v3427 = vrot.slane %v3425, 1
        %v3428 = vsel %vm1544, %v3423, %v3427
        %v3430 = vshrl.u32 %v3327, 16
        %v3432 = vshll.u32 %v3327, 16
        %v3434 = vrot.slane %v3432, 1
        %v3435 = vor.u32 %v3430, %v3434
        %v3437 = vshll.u32 %v3328, 16
        %v3439 = vrot.slane %v3437, 1
        %v3440 = vsel %vm1544, %v3435, %v3439
        %v3442 = vshrl.u32 %v3329, 16
        %v3444 = vshll.u32 %v3329, 16
        %v3446 = vrot.slane %v3444, 1
        %v3447 = vor.u32 %v3442, %v3446
        %v3449 = vshll.u32 %v3330, 16
        %v3451 = vrot.slane %v3449, 1
        %v3452 = vsel %vm1544, %v3447, %v3451
        %v3454 = vshrl.u32 %v3331, 16
        %v3456 = vshll.u32 %v3331, 16
        %v3458 = vrot.slane %v3456, 1
        %v3459 = vor.u32 %v3454, %v3458
        %v3461 = vshll.u32 %v3332, 16
        %v3463 = vrot.slane %v3461, 1
        %v3464 = vsel %vm1544, %v3459, %v3463
        %v3466 = vshrl.u32 %v3333, 16
        %v3468 = vshll.u32 %v3333, 16
        %v3470 = vrot.slane %v3468, 1
        %v3471 = vor.u32 %v3466, %v3470
        %v3473 = vshll.u32 %v3334, 16
        %v3475 = vrot.slane %v3473, 1
        %v3476 = vsel %vm1544, %v3471, %v3475
        %v3478 = vshrl.u32 %v3335, 16
        %v3480 = vshll.u32 %v3335, 16
        %v3482 = vrot.slane %v3480, 1
        %v3483 = vor.u32 %v3478, %v3482
        %v3485 = vshll.u32 %v3336, 16
        %v3487 = vrot.slane %v3485, 1
        %v3488 = vsel %vm1544, %v3483, %v3487
        %v3490 = vshrl.u32 %v3337, 16
        %v3492 = vshll.u32 %v3337, 16
        %v3494 = vrot.slane %v3492, 1
        %v3495 = vor.u32 %v3490, %v3494
        %v3497 = vshll.u32 %v3338, 16
        %v3499 = vrot.slane %v3497, 1
        %v3500 = vsel %vm1544, %v3495, %v3499
        %v3502 = vshrl.u32 %v3339, 16
        %v3504 = vshll.u32 %v3339, 16
        %v3506 = vrot.slane %v3504, 1
        %v3507 = vor.u32 %v3502, %v3506
        %v3509 = vshll.u32 %v3340, 16
        %v3511 = vrot.slane %v3509, 1
        %v3512 = vsel %vm1544, %v3507, %v3511
        %v3514 = vshrl.u32 %v3341, 16
        %v3516 = vshll.u32 %v3341, 16
        %v3518 = vrot.slane %v3516, 1
        %v3519 = vor.u32 %v3514, %v3518
        %v3521 = vshll.u32 %v3342, 16
        %v3523 = vrot.slane %v3521, 1
        %v3524 = vsel %vm1544, %v3519, %v3523
        %v3526 = vshrl.u32 %v3343, 16
        %v3528 = vshll.u32 %v3343, 16
        %v3530 = vrot.slane %v3528, 1
        %v3531 = vor.u32 %v3526, %v3530
        %v3533 = vshll.u32 %v3344, 16
        %v3535 = vrot.slane %v3533, 1
        %v3536 = vsel %vm1544, %v3531, %v3535
        %3537 = vrot.lane.b32.xlu0 %v3356, 28
        %v3538 = vpop.permute.xlu0 %3537
        %3539 = vrot.lane.b32.xlu0 %v3368, 28
        %v3540 = vpop.permute.xlu0 %3539
        %3541 = vrot.lane.b32.xlu0 %v3380, 28
        %v3542 = vpop.permute.xlu0 %3541
        %3543 = vrot.lane.b32.xlu0 %v3392, 28
        %v3544 = vpop.permute.xlu0 %3543
        %3545 = vrot.lane.b32.xlu0 %v3404, 28
        %v3546 = vpop.permute.xlu0 %3545
        %3547 = vrot.lane.b32.xlu0 %v3416, 28
        %v3548 = vpop.permute.xlu0 %3547
        %3549 = vrot.lane.b32.xlu0 %v3428, 28
        %v3550 = vpop.permute.xlu0 %3549
        %3551 = vrot.lane.b32.xlu0 %v3440, 28
        %v3552 = vpop.permute.xlu0 %3551
        %3553 = vrot.lane.b32.xlu0 %v3452, 28
        %v3554 = vpop.permute.xlu0 %3553
        %3555 = vrot.lane.b32.xlu0 %v3464, 28
        %v3556 = vpop.permute.xlu0 %3555
        %3557 = vrot.lane.b32.xlu0 %v3476, 28
        %v3558 = vpop.permute.xlu0 %3557
        %3559 = vrot.lane.b32.xlu0 %v3488, 28
        %v3560 = vpop.permute.xlu0 %3559
        %3561 = vrot.lane.b32.xlu0 %v3500, 28
        %v3562 = vpop.permute.xlu0 %3561
        %3563 = vrot.lane.b32.xlu0 %v3512, 28
        %v3564 = vpop.permute.xlu0 %3563
        %3565 = vrot.lane.b32.xlu0 %v3524, 28
        %v3566 = vpop.permute.xlu0 %3565
        %3567 = vrot.lane.b32.xlu0 %v3536, 28
        %v3568 = vpop.permute.xlu0 %3567
        %vm3585 = vcmask 261344
        %3586 = vst.msk [vmem:[#allocation3] sm:$0xff] %vm3585, %v3538
        %3587 = vst.msk [vmem:[#allocation3 + $0x8] sm:$0xff] %vm3585, %v3540
        %3588 = vst.msk [vmem:[#allocation3 + $0x10] sm:$0xff] %vm3585, %v3542
        %3589 = vst.msk [vmem:[#allocation3 + $0x18] sm:$0xff] %vm3585, %v3544
        %3590 = vst.msk [vmem:[#allocation3 + $0x20] sm:$0xff] %vm3585, %v3546
        %3591 = vst.msk [vmem:[#allocation3 + $0x28] sm:$0xff] %vm3585, %v3548
        %3592 = vst.msk [vmem:[#allocation3 + $0x30] sm:$0xff] %vm3585, %v3550
        %3593 = vst.msk [vmem:[#allocation3 + $0x38] sm:$0xff] %vm3585, %v3552
        %3594 = vst.msk [vmem:[#allocation3 + $0x40] sm:$0xff] %vm3585, %v3554
        %3595 = vst.msk [vmem:[#allocation3 + $0x48] sm:$0xff] %vm3585, %v3556
        %3596 = vst.msk [vmem:[#allocation3 + $0x50] sm:$0xff] %vm3585, %v3558
        %3597 = vst.msk [vmem:[#allocation3 + $0x58] sm:$0xff] %vm3585, %v3560
        %3598 = vst.msk [vmem:[#allocation3 + $0x60] sm:$0xff] %vm3585, %v3562
        %3599 = vst.msk [vmem:[#allocation3 + $0x68] sm:$0xff] %vm3585, %v3564
        %3600 = vst.msk [vmem:[#allocation3 + $0x70] sm:$0xff] %vm3585, %v3566
        %3601 = vst.msk [vmem:[#allocation3 + $0x78] sm:$0xff] %vm3585, %v3568
        %v3602 = vld [vmem:[%s2991] sm:$0xe]
        %v3603 = vld [vmem:[%s2991 + $0x4] sm:$0xf]
        %v3604 = vld [vmem:[%s2991 + $0x8] sm:$0x1]
        %v3605 = vld [vmem:[%s2991 + $0xc] sm:$0xe]
        %v3606 = vld [vmem:[%s2991 + $0x10] sm:$0xf]
        %v3607 = vld [vmem:[%s2991 + $0x14] sm:$0x1]
        %v3608 = vld [vmem:[%s2991 + $0x18] sm:$0xe]
        %v3609 = vld [vmem:[%s2991 + $0x1c] sm:$0xf]
        %v3610 = vld [vmem:[%s2991 + $0x20] sm:$0x1]
        %v3611 = vld [vmem:[%s2991 + $0x24] sm:$0xe]
        %v3612 = vld [vmem:[%s2991 + $0x28] sm:$0xf]
        %v3613 = vld [vmem:[%s2991 + $0x2c] sm:$0x1]
        %v3614 = vld [vmem:[%s2991 + $0x30] sm:$0xe]
        %v3615 = vld [vmem:[%s2991 + $0x34] sm:$0xf]
        %v3616 = vld [vmem:[%s2991 + $0x38] sm:$0x1]
        %v3617 = vld [vmem:[%s2991 + $0x3c] sm:$0xe]
        %v3618 = vld [vmem:[%s2991 + $0x40] sm:$0xf]
        %v3619 = vld [vmem:[%s2991 + $0x44] sm:$0x1]
        %v3620 = vld [vmem:[%s2991 + $0x48] sm:$0xe]
        %v3621 = vld [vmem:[%s2991 + $0x4c] sm:$0xf]
        %v3622 = vld [vmem:[%s2991 + $0x50] sm:$0x1]
        %v3623 = vld [vmem:[%s2991 + $0x54] sm:$0xe]
        %v3624 = vld [vmem:[%s2991 + $0x58] sm:$0xf]
        %v3625 = vld [vmem:[%s2991 + $0x5c] sm:$0x1]
        %v3626 = vld [vmem:[%s2991 + $0x60] sm:$0xe]
        %v3627 = vld [vmem:[%s2991 + $0x64] sm:$0xf]
        %v3628 = vld [vmem:[%s2991 + $0x68] sm:$0x1]
        %v3629 = vld [vmem:[%s2991 + $0x6c] sm:$0xe]
        %v3630 = vld [vmem:[%s2991 + $0x70] sm:$0xf]
        %v3631 = vld [vmem:[%s2991 + $0x74] sm:$0x1]
        %v3632 = vld [vmem:[%s2991 + $0x78] sm:$0xe]
        %v3633 = vld [vmem:[%s2991 + $0x7c] sm:$0xf]
        %v3634 = vld [vmem:[%s2991 + $0x80] sm:$0x1]
        %v3635 = vld [vmem:[%s2991 + $0x84] sm:$0xe]
        %v3636 = vld [vmem:[%s2991 + $0x88] sm:$0xf]
        %v3637 = vld [vmem:[%s2991 + $0x8c] sm:$0x1]
        %v3638 = vld [vmem:[%s2991 + $0x90] sm:$0xe]
        %v3639 = vld [vmem:[%s2991 + $0x94] sm:$0xf]
        %v3640 = vld [vmem:[%s2991 + $0x98] sm:$0x1]
        %v3641 = vld [vmem:[%s2991 + $0x9c] sm:$0xe]
        %v3642 = vld [vmem:[%s2991 + $0xa0] sm:$0xf]
        %v3643 = vld [vmem:[%s2991 + $0xa4] sm:$0x1]
        %v3644 = vld [vmem:[%s2991 + $0xa8] sm:$0xe]
        %v3645 = vld [vmem:[%s2991 + $0xac] sm:$0xf]
        %v3646 = vld [vmem:[%s2991 + $0xb0] sm:$0x1]
        %v3647 = vld [vmem:[%s2991 + $0xb4] sm:$0xe]
        %v3648 = vld [vmem:[%s2991 + $0xb8] sm:$0xf]
        %v3649 = vld [vmem:[%s2991 + $0xbc] sm:$0x1]
        %v3698 = vunpack.c.l.b16 %v3602
        %v3699 = vunpack.c.l.b16 %v3603
        %v3700 = vunpack.c.l.b16 %v3604
        %v3701 = vunpack.c.l.b16 %v3605
        %v3702 = vunpack.c.l.b16 %v3606
        %v3703 = vunpack.c.l.b16 %v3607
        %v3704 = vunpack.c.l.b16 %v3608
        %v3705 = vunpack.c.l.b16 %v3609
        %v3706 = vunpack.c.l.b16 %v3610
        %v3707 = vunpack.c.l.b16 %v3611
        %v3708 = vunpack.c.l.b16 %v3612
        %v3709 = vunpack.c.l.b16 %v3613
        %v3710 = vunpack.c.l.b16 %v3614
        %v3711 = vunpack.c.l.b16 %v3615
        %v3712 = vunpack.c.l.b16 %v3616
        %v3713 = vunpack.c.l.b16 %v3617
        %v3714 = vunpack.c.l.b16 %v3618
        %v3715 = vunpack.c.l.b16 %v3619
        %v3716 = vunpack.c.l.b16 %v3620
        %v3717 = vunpack.c.l.b16 %v3621
        %v3718 = vunpack.c.l.b16 %v3622
        %v3719 = vunpack.c.l.b16 %v3623
        %v3720 = vunpack.c.l.b16 %v3624
        %v3721 = vunpack.c.l.b16 %v3625
        %v3722 = vunpack.c.l.b16 %v3626
        %v3723 = vunpack.c.l.b16 %v3627
        %v3724 = vunpack.c.l.b16 %v3628
        %v3725 = vunpack.c.l.b16 %v3629
        %v3726 = vunpack.c.l.b16 %v3630
        %v3727 = vunpack.c.l.b16 %v3631
        %v3728 = vunpack.c.l.b16 %v3632
        %v3729 = vunpack.c.l.b16 %v3633
        %v3730 = vunpack.c.l.b16 %v3634
        %v3731 = vunpack.c.l.b16 %v3635
        %v3732 = vunpack.c.l.b16 %v3636
        %v3733 = vunpack.c.l.b16 %v3637
        %v3734 = vunpack.c.l.b16 %v3638
        %v3735 = vunpack.c.l.b16 %v3639
        %v3736 = vunpack.c.l.b16 %v3640
        %v3737 = vunpack.c.l.b16 %v3641
        %v3738 = vunpack.c.l.b16 %v3642
        %v3739 = vunpack.c.l.b16 %v3643
        %v3740 = vunpack.c.l.b16 %v3644
        %v3741 = vunpack.c.l.b16 %v3645
        %v3742 = vunpack.c.l.b16 %v3646
        %v3743 = vunpack.c.l.b16 %v3647
        %v3744 = vunpack.c.l.b16 %v3648
        %v3745 = vunpack.c.l.b16 %v3649
        %v3746 = vpack.c.b16 %v3699, %v3698
        %v3747 = vpack.c.b16 %v3700, %v3700
        %v3748 = vpack.c.b16 %v3702, %v3701
        %v3749 = vpack.c.b16 %v3703, %v3703
        %v3750 = vpack.c.b16 %v3705, %v3704
        %v3751 = vpack.c.b16 %v3706, %v3706
        %v3752 = vpack.c.b16 %v3708, %v3707
        %v3753 = vpack.c.b16 %v3709, %v3709
        %v3754 = vpack.c.b16 %v3711, %v3710
        %v3755 = vpack.c.b16 %v3712, %v3712
        %v3756 = vpack.c.b16 %v3714, %v3713
        %v3757 = vpack.c.b16 %v3715, %v3715
        %v3758 = vpack.c.b16 %v3717, %v3716
        %v3759 = vpack.c.b16 %v3718, %v3718
        %v3760 = vpack.c.b16 %v3720, %v3719
        %v3761 = vpack.c.b16 %v3721, %v3721
        %v3762 = vpack.c.b16 %v3723, %v3722
        %v3763 = vpack.c.b16 %v3724, %v3724
        %v3764 = vpack.c.b16 %v3726, %v3725
        %v3765 = vpack.c.b16 %v3727, %v3727
        %v3766 = vpack.c.b16 %v3729, %v3728
        %v3767 = vpack.c.b16 %v3730, %v3730
        %v3768 = vpack.c.b16 %v3732, %v3731
        %v3769 = vpack.c.b16 %v3733, %v3733
        %v3770 = vpack.c.b16 %v3735, %v3734
        %v3771 = vpack.c.b16 %v3736, %v3736
        %v3772 = vpack.c.b16 %v3738, %v3737
        %v3773 = vpack.c.b16 %v3739, %v3739
        %v3774 = vpack.c.b16 %v3741, %v3740
        %v3775 = vpack.c.b16 %v3742, %v3742
        %v3776 = vpack.c.b16 %v3744, %v3743
        %v3777 = vpack.c.b16 %v3745, %v3745
        %v3778 = vrot.slane %v3746, 1
        %v3779 = vrot.slane %v3747, 1
        %v3780 = vsel %vm1978, %v3778, %v3779
        %v3781 = vrot.slane %v3748, 1
        %v3782 = vrot.slane %v3749, 1
        %v3783 = vsel %vm1978, %v3781, %v3782
        %v3784 = vrot.slane %v3750, 1
        %v3785 = vrot.slane %v3751, 1
        %v3786 = vsel %vm1978, %v3784, %v3785
        %v3787 = vrot.slane %v3752, 1
        %v3788 = vrot.slane %v3753, 1
        %v3789 = vsel %vm1978, %v3787, %v3788
        %v3790 = vrot.slane %v3754, 1
        %v3791 = vrot.slane %v3755, 1
        %v3792 = vsel %vm1978, %v3790, %v3791
        %v3793 = vrot.slane %v3756, 1
        %v3794 = vrot.slane %v3757, 1
        %v3795 = vsel %vm1978, %v3793, %v3794
        %v3796 = vrot.slane %v3758, 1
        %v3797 = vrot.slane %v3759, 1
        %v3798 = vsel %vm1978, %v3796, %v3797
        %v3799 = vrot.slane %v3760, 1
        %v3800 = vrot.slane %v3761, 1
        %v3801 = vsel %vm1978, %v3799, %v3800
        %v3802 = vrot.slane %v3762, 1
        %v3803 = vrot.slane %v3763, 1
        %v3804 = vsel %vm1978, %v3802, %v3803
        %v3805 = vrot.slane %v3764, 1
        %v3806 = vrot.slane %v3765, 1
        %v3807 = vsel %vm1978, %v3805, %v3806
        %v3808 = vrot.slane %v3766, 1
        %v3809 = vrot.slane %v3767, 1
        %v3810 = vsel %vm1978, %v3808, %v3809
        %v3811 = vrot.slane %v3768, 1
        %v3812 = vrot.slane %v3769, 1
        %v3813 = vsel %vm1978, %v3811, %v3812
        %v3814 = vrot.slane %v3770, 1
        %v3815 = vrot.slane %v3771, 1
        %v3816 = vsel %vm1978, %v3814, %v3815
        %v3817 = vrot.slane %v3772, 1
        %v3818 = vrot.slane %v3773, 1
        %v3819 = vsel %vm1978, %v3817, %v3818
        %v3820 = vrot.slane %v3774, 1
        %v3821 = vrot.slane %v3775, 1
        %v3822 = vsel %vm1978, %v3820, %v3821
        %v3823 = vrot.slane %v3776, 1
        %v3824 = vrot.slane %v3777, 1
        %v3825 = vsel %vm1978, %v3823, %v3824
        %3826 = vrot.lane.b32.xlu0 %v3780, 32
        %v3827 = vpop.permute.xlu0 %3826
        %3828 = vrot.lane.b32.xlu0 %v3783, 32
        %v3829 = vpop.permute.xlu0 %3828
        %3830 = vrot.lane.b32.xlu0 %v3786, 32
        %v3831 = vpop.permute.xlu0 %3830
        %3832 = vrot.lane.b32.xlu0 %v3789, 32
        %v3833 = vpop.permute.xlu0 %3832
        %3834 = vrot.lane.b32.xlu0 %v3792, 32
        %v3835 = vpop.permute.xlu0 %3834
        %3836 = vrot.lane.b32.xlu0 %v3795, 32
        %v3837 = vpop.permute.xlu0 %3836
        %3838 = vrot.lane.b32.xlu0 %v3798, 32
        %v3839 = vpop.permute.xlu0 %3838
        %3840 = vrot.lane.b32.xlu0 %v3801, 32
        %v3841 = vpop.permute.xlu0 %3840
        %3842 = vrot.lane.b32.xlu0 %v3804, 32
        %v3843 = vpop.permute.xlu0 %3842
        %3844 = vrot.lane.b32.xlu0 %v3807, 32
        %v3845 = vpop.permute.xlu0 %3844
        %3846 = vrot.lane.b32.xlu0 %v3810, 32
        %v3847 = vpop.permute.xlu0 %3846
        %3848 = vrot.lane.b32.xlu0 %v3813, 32
        %v3849 = vpop.permute.xlu0 %3848
        %3850 = vrot.lane.b32.xlu0 %v3816, 32
        %v3851 = vpop.permute.xlu0 %3850
        %3852 = vrot.lane.b32.xlu0 %v3819, 32
        %v3853 = vpop.permute.xlu0 %3852
        %3854 = vrot.lane.b32.xlu0 %v3822, 32
        %v3855 = vpop.permute.xlu0 %3854
        %3856 = vrot.lane.b32.xlu0 %v3825, 32
        %v3857 = vpop.permute.xlu0 %3856
        %vm3874 = vcmask 294144
        %3875 = vst.msk [vmem:[#allocation3] sm:$0xff] %vm3874, %v3827
        %3876 = vst.msk [vmem:[#allocation3 + $0x8] sm:$0xff] %vm3874, %v3829
        %3877 = vst.msk [vmem:[#allocation3 + $0x10] sm:$0xff] %vm3874, %v3831
        %3878 = vst.msk [vmem:[#allocation3 + $0x18] sm:$0xff] %vm3874, %v3833
        %3879 = vst.msk [vmem:[#allocation3 + $0x20] sm:$0xff] %vm3874, %v3835
        %3880 = vst.msk [vmem:[#allocation3 + $0x28] sm:$0xff] %vm3874, %v3837
        %3881 = vst.msk [vmem:[#allocation3 + $0x30] sm:$0xff] %vm3874, %v3839
        %3882 = vst.msk [vmem:[#allocation3 + $0x38] sm:$0xff] %vm3874, %v3841
        %3883 = vst.msk [vmem:[#allocation3 + $0x40] sm:$0xff] %vm3874, %v3843
        %3884 = vst.msk [vmem:[#allocation3 + $0x48] sm:$0xff] %vm3874, %v3845
        %3885 = vst.msk [vmem:[#allocation3 + $0x50] sm:$0xff] %vm3874, %v3847
        %3886 = vst.msk [vmem:[#allocation3 + $0x58] sm:$0xff] %vm3874, %v3849
        %3887 = vst.msk [vmem:[#allocation3 + $0x60] sm:$0xff] %vm3874, %v3851
        %3888 = vst.msk [vmem:[#allocation3 + $0x68] sm:$0xff] %vm3874, %v3853
        %3889 = vst.msk [vmem:[#allocation3 + $0x70] sm:$0xff] %vm3874, %v3855
        %3890 = vst.msk [vmem:[#allocation3 + $0x78] sm:$0xff] %vm3874, %v3857
        %v3891 = vld [vmem:[#allocation3] sm:$0xff]
        %v3892 = vld [vmem:[#allocation3 + $0x8] sm:$0xff]
        %v3893 = vld [vmem:[#allocation3 + $0x10] sm:$0xff]
        %v3894 = vld [vmem:[#allocation3 + $0x18] sm:$0xff]
        %v3895 = vld [vmem:[#allocation3 + $0x20] sm:$0xff]
        %v3896 = vld [vmem:[#allocation3 + $0x28] sm:$0xff]
        %v3897 = vld [vmem:[#allocation3 + $0x30] sm:$0xff]
        %v3898 = vld [vmem:[#allocation3 + $0x38] sm:$0xff]
        %v3899 = vld [vmem:[#allocation3 + $0x40] sm:$0xff]
        %v3900 = vld [vmem:[#allocation3 + $0x48] sm:$0xff]
        %v3901 = vld [vmem:[#allocation3 + $0x50] sm:$0xff]
        %v3902 = vld [vmem:[#allocation3 + $0x58] sm:$0xff]
        %v3903 = vld [vmem:[#allocation3 + $0x60] sm:$0xff]
        %v3904 = vld [vmem:[#allocation3 + $0x68] sm:$0xff]
        %v3905 = vld [vmem:[#allocation3 + $0x70] sm:$0xff]
        %v3906 = vld [vmem:[#allocation3 + $0x78] sm:$0xff]
        %v3907 = vld [vmem:[%s3] sm:$0xf]
        %v3908 = vld [vmem:[%s3 + $0x4] sm:$0xf]
        %v3909 = vld [vmem:[%s3 + $0x8] sm:$0xf]
        %v3910 = vld [vmem:[%s3 + $0xc] sm:$0xf]
        %v3911 = vld [vmem:[%s3 + $0x10] sm:$0x3]
        %v3917 = vunpack.c.l.b16 %v3907
        %v3918 = vunpack.c.l.b16 %v3908
        %v3919 = vunpack.c.l.b16 %v3909
        %v3920 = vunpack.c.l.b16 %v3910
        %v3921 = vunpack.c.l.b16 %v3911
        %v3922 = vpack.c.b16 %v3918, %v3917
        %v3923 = vpack.c.b16 %v3920, %v3919
        %v3924 = vpack.c.b16 %v3921, %v3921
        %vm3927 = vcmask 293888
        %v3929 = vsel %vm3927, %v3891, 0
        %v3932 = vsel %vm3927, %v3892, 0
        %v3935 = vsel %vm3927, %v3893, 0
        %v3938 = vsel %vm3927, %v3894, 0
        %v3941 = vsel %vm3927, %v3895, 0
        %v3944 = vsel %vm3927, %v3896, 0
        %v3947 = vsel %vm3927, %v3897, 0
        %v3950 = vsel %vm3927, %v3898, 0
        %v3953 = vsel %vm3927, %v3899, 0
        %v3956 = vsel %vm3927, %v3900, 0
        %v3959 = vsel %vm3927, %v3901, 0
        %v3962 = vsel %vm3927, %v3902, 0
        %v3965 = vsel %vm3927, %v3903, 0
        %v3968 = vsel %vm3927, %v3904, 0
        %v3971 = vsel %vm3927, %v3905, 0
        %v3974 = vsel %vm3927, %v3906, 0
        %vm3976 = vcmask 1041408
        %v3978 = vsel %vm3976, %v3924, 0
        %3980 = vmatprep.subr.bf16.mxu0 0
        %3981 = vmatpush1.bf16.msra.mxu0 %v3922
        %3982 = vmatprep.subr.bf16.mxu0 0
        %3983 = vmatpush1.bf16.msra.mxu0 %v3923
        %3984 = vmatprep.subr.bf16.mxu0 0
        %3985 = vmatpush1.bf16.msra.mxu0 %v3978
        %3986 = vmatprep.subr.bf16.mxu0 0
        %3987 = vmatpush1.bf16.msra.mxu0 0
        %3988 = vmatprep.subr.bf16.mxu0 0
        %3989 = vmatpush1.bf16.msra.mxu0 0
        %3990 = vmatprep.subr.bf16.mxu0 0
        %3991 = vmatpush1.bf16.msra.mxu0 0
        %3992 = vmatprep.subr.bf16.mxu0 0
        %3993 = vmatpush1.bf16.msra.mxu0 0
        %3994 = vmatprep.subr.bf16.mxu0 0
        %3995 = vmatpush1.bf16.msra.mxu0 0
        %3996 = vmatprep.subr.bf16.mxu0 0
        %3997 = vmatpush1.bf16.msra.mxu0 0
        %3998 = vmatprep.subr.bf16.mxu0 0
        %3999 = vmatpush1.bf16.msra.mxu0 0
        %4000 = vmatprep.subr.bf16.mxu0 0
        %4001 = vmatpush1.bf16.msra.mxu0 0
        %4002 = vmatprep.subr.bf16.mxu0 0
        %4003 = vmatpush1.bf16.msra.mxu0 0
        %4004 = vmatprep.subr.bf16.mxu0 0
        %4005 = vmatpush1.bf16.msra.mxu0 0
        %4006 = vmatprep.subr.bf16.mxu0 0
        %4007 = vmatpush1.bf16.msra.mxu0 0
        %4008 = vmatprep.subr.bf16.mxu0 0
        %4009 = vmatpush1.bf16.msra.mxu0 0
        %4010 = vmatprep.subr.bf16.mxu0 0
        %4011 = vmatpush1.bf16.msra.mxu0 0
        %4012 = vmatprep.mubr.bf16.mxu0 0
        %4013 = vmatmul.mubr.bf16.gmra.mrb[0].mxu0 %v3929
        %v4014 = vpop.f32.mrb[0].mxu0
        %v4015 = vadd.f32 0.0, %v4014
        %v4016 = vpop.f32.mrb[0].mxu0
        %v4017 = vpop.f32.mrb[0].mxu0
        %v4018 = vadd.f32 0.0, %v4017
        %v4019 = vpop.f32.mrb[0].mxu0
        %4020 = vmatprep.mubr.bf16.mxu0 0
        %4021 = vmatmul.mubr.bf16.gmra.mrb[0].mxu0 %v3932
        %v4022 = vpop.f32.mrb[0].mxu0
        %v4023 = vadd.f32 0.0, %v4022
        %v4024 = vpop.f32.mrb[0].mxu0
        %v4025 = vpop.f32.mrb[0].mxu0
        %v4026 = vadd.f32 0.0, %v4025
        %v4027 = vpop.f32.mrb[0].mxu0
        %4028 = vmatprep.mubr.bf16.mxu0 0
        %4029 = vmatmul.mubr.bf16.gmra.mrb[0].mxu0 %v3935
        %v4030 = vpop.f32.mrb[0].mxu0
        %v4031 = vadd.f32 0.0, %v4030
        %v4032 = vpop.f32.mrb[0].mxu0
        %v4033 = vpop.f32.mrb[0].mxu0
        %v4034 = vadd.f32 0.0, %v4033
        %v4035 = vpop.f32.mrb[0].mxu0
        %4036 = vmatprep.mubr.bf16.mxu0 0
        %4037 = vmatmul.mubr.bf16.gmra.mrb[0].mxu0 %v3938
        %v4038 = vpop.f32.mrb[0].mxu0
        %v4039 = vadd.f32 0.0, %v4038
        %v4040 = vpop.f32.mrb[0].mxu0
        %v4041 = vpop.f32.mrb[0].mxu0
        %v4042 = vadd.f32 0.0, %v4041
        %v4043 = vpop.f32.mrb[0].mxu0
        %4044 = vmatprep.mubr.bf16.mxu0 0
        %4045 = vmatmul.mubr.bf16.gmra.mrb[0].mxu0 %v3941
        %v4046 = vpop.f32.mrb[0].mxu0
        %v4047 = vadd.f32 0.0, %v4046
        %v4048 = vpop.f32.mrb[0].mxu0
        %v4049 = vpop.f32.mrb[0].mxu0
        %v4050 = vadd.f32 0.0, %v4049
        %v4051 = vpop.f32.mrb[0].mxu0
        %4052 = vmatprep.mubr.bf16.mxu0 0
        %4053 = vmatmul.mubr.bf16.gmra.mrb[0].mxu0 %v3944
        %v4054 = vpop.f32.mrb[0].mxu0
        %v4055 = vadd.f32 0.0, %v4054
        %v4056 = vpop.f32.mrb[0].mxu0
        %v4057 = vpop.f32.mrb[0].mxu0
        %v4058 = vadd.f32 0.0, %v4057
        %v4059 = vpop.f32.mrb[0].mxu0
        %4060 = vmatprep.mubr.bf16.mxu0 0
        %4061 = vmatmul.mubr.bf16.gmra.mrb[0].mxu0 %v3947
        %v4062 = vpop.f32.mrb[0].mxu0
        %v4063 = vadd.f32 0.0, %v4062
        %v4064 = vpop.f32.mrb[0].mxu0
        %v4065 = vpop.f32.mrb[0].mxu0
        %v4066 = vadd.f32 0.0, %v4065
        %v4067 = vpop.f32.mrb[0].mxu0
        %4068 = vmatprep.mubr.bf16.mxu0 0
        %4069 = vmatmul.mubr.bf16.gmra.mrb[0].mxu0 %v3950
        %v4070 = vpop.f32.mrb[0].mxu0
        %v4071 = vadd.f32 0.0, %v4070
        %v4072 = vpop.f32.mrb[0].mxu0
        %v4073 = vpop.f32.mrb[0].mxu0
        %v4074 = vadd.f32 0.0, %v4073
        %v4075 = vpop.f32.mrb[0].mxu0
        %4076 = vmatprep.mubr.bf16.mxu0 0
        %4077 = vmatmul.mubr.bf16.gmra.mrb[0].mxu0 %v3953
        %v4078 = vpop.f32.mrb[0].mxu0
        %v4079 = vadd.f32 0.0, %v4078
        %v4080 = vpop.f32.mrb[0].mxu0
        %v4081 = vpop.f32.mrb[0].mxu0
        %v4082 = vadd.f32 0.0, %v4081
        %v4083 = vpop.f32.mrb[0].mxu0
        %4084 = vmatprep.mubr.bf16.mxu0 0
        %4085 = vmatmul.mubr.bf16.gmra.mrb[0].mxu0 %v3956
        %v4086 = vpop.f32.mrb[0].mxu0
        %v4087 = vadd.f32 0.0, %v4086
        %v4088 = vpop.f32.mrb[0].mxu0
        %v4089 = vpop.f32.mrb[0].mxu0
        %v4090 = vadd.f32 0.0, %v4089
        %v4091 = vpop.f32.mrb[0].mxu0
        %4092 = vmatprep.mubr.bf16.mxu0 0
        %4093 = vmatmul.mubr.bf16.gmra.mrb[0].mxu0 %v3959
        %v4094 = vpop.f32.mrb[0].mxu0
        %v4095 = vadd.f32 0.0, %v4094
        %v4096 = vpop.f32.mrb[0].mxu0
        %v4097 = vpop.f32.mrb[0].mxu0
        %v4098 = vadd.f32 0.0, %v4097
        %v4099 = vpop.f32.mrb[0].mxu0
        %4100 = vmatprep.mubr.bf16.mxu0 0
        %4101 = vmatmul.mubr.bf16.gmra.mrb[0].mxu0 %v3962
        %v4102 = vpop.f32.mrb[0].mxu0
        %v4103 = vadd.f32 0.0, %v4102
        %v4104 = vpop.f32.mrb[0].mxu0
        %v4105 = vpop.f32.mrb[0].mxu0
        %v4106 = vadd.f32 0.0, %v4105
        %v4107 = vpop.f32.mrb[0].mxu0
        %4108 = vmatprep.mubr.bf16.mxu0 0
        %4109 = vmatmul.mubr.bf16.gmra.mrb[0].mxu0 %v3965
        %v4110 = vpop.f32.mrb[0].mxu0
        %v4111 = vadd.f32 0.0, %v4110
        %v4112 = vpop.f32.mrb[0].mxu0
        %v4113 = vpop.f32.mrb[0].mxu0
        %v4114 = vadd.f32 0.0, %v4113
        %v4115 = vpop.f32.mrb[0].mxu0
        %4116 = vmatprep.mubr.bf16.mxu0 0
        %4117 = vmatmul.mubr.bf16.gmra.mrb[0].mxu0 %v3968
        %v4118 = vpop.f32.mrb[0].mxu0
        %v4119 = vadd.f32 0.0, %v4118
        %v4120 = vpop.f32.mrb[0].mxu0
        %v4121 = vpop.f32.mrb[0].mxu0
        %v4122 = vadd.f32 0.0, %v4121
        %v4123 = vpop.f32.mrb[0].mxu0
        %4124 = vmatprep.mubr.bf16.mxu0 0
        %4125 = vmatmul.mubr.bf16.gmra.mrb[0].mxu0 %v3971
        %v4126 = vpop.f32.mrb[0].mxu0
        %v4127 = vadd.f32 0.0, %v4126
        %v4128 = vpop.f32.mrb[0].mxu0
        %v4129 = vpop.f32.mrb[0].mxu0
        %v4130 = vadd.f32 0.0, %v4129
        %v4131 = vpop.f32.mrb[0].mxu0
        %4132 = vmatprep.mubr.bf16.mxu0 0
        %4133 = vmatmul.mubr.bf16.gmra.mrb[0].mxu0 %v3974
        %v4134 = vpop.f32.mrb[0].mxu0
        %v4135 = vadd.f32 0.0, %v4134
        %v4136 = vpop.f32.mrb[0].mxu0
        %v4137 = vpop.f32.mrb[0].mxu0
        %v4138 = vadd.f32 0.0, %v4137
        %v4139 = vpop.f32.mrb[0].mxu0
        %4140 = vdwg.mxu0
        %4173 = vrot.lane.b32.xlu0 %v4015, 4
        %v4174 = vpop.permute.xlu0 %4173
        %4175 = vrot.lane.b32.xlu0 %v4018, 4
        %v4176 = vpop.permute.xlu0 %4175
        %4177 = vrot.lane.b32.xlu0 %v4023, 4
        %v4178 = vpop.permute.xlu0 %4177
        %4179 = vrot.lane.b32.xlu0 %v4026, 4
        %v4180 = vpop.permute.xlu0 %4179
        %4181 = vrot.lane.b32.xlu0 %v4031, 4
        %v4182 = vpop.permute.xlu0 %4181
        %4183 = vrot.lane.b32.xlu0 %v4034, 4
        %v4184 = vpop.permute.xlu0 %4183
        %4185 = vrot.lane.b32.xlu0 %v4039, 4
        %v4186 = vpop.permute.xlu0 %4185
        %4187 = vrot.lane.b32.xlu0 %v4042, 4
        %v4188 = vpop.permute.xlu0 %4187
        %4189 = vrot.lane.b32.xlu0 %v4047, 4
        %v4190 = vpop.permute.xlu0 %4189
        %4191 = vrot.lane.b32.xlu0 %v4050, 4
        %v4192 = vpop.permute.xlu0 %4191
        %4193 = vrot.lane.b32.xlu0 %v4055, 4
        %v4194 = vpop.permute.xlu0 %4193
        %4195 = vrot.lane.b32.xlu0 %v4058, 4
        %v4196 = vpop.permute.xlu0 %4195
        %4197 = vrot.lane.b32.xlu0 %v4063, 4
        %v4198 = vpop.permute.xlu0 %4197
        %4199 = vrot.lane.b32.xlu0 %v4066, 4
        %v4200 = vpop.permute.xlu0 %4199
        %4201 = vrot.lane.b32.xlu0 %v4071, 4
        %v4202 = vpop.permute.xlu0 %4201
        %4203 = vrot.lane.b32.xlu0 %v4074, 4
        %v4204 = vpop.permute.xlu0 %4203
        %4205 = vrot.lane.b32.xlu0 %v4079, 4
        %v4206 = vpop.permute.xlu0 %4205
        %4207 = vrot.lane.b32.xlu0 %v4082, 4
        %v4208 = vpop.permute.xlu0 %4207
        %4209 = vrot.lane.b32.xlu0 %v4087, 4
        %v4210 = vpop.permute.xlu0 %4209
        %4211 = vrot.lane.b32.xlu0 %v4090, 4
        %v4212 = vpop.permute.xlu0 %4211
        %4213 = vrot.lane.b32.xlu0 %v4095, 4
        %v4214 = vpop.permute.xlu0 %4213
        %4215 = vrot.lane.b32.xlu0 %v4098, 4
        %v4216 = vpop.permute.xlu0 %4215
        %4217 = vrot.lane.b32.xlu0 %v4103, 4
        %v4218 = vpop.permute.xlu0 %4217
        %4219 = vrot.lane.b32.xlu0 %v4106, 4
        %v4220 = vpop.permute.xlu0 %4219
        %4221 = vrot.lane.b32.xlu0 %v4111, 4
        %v4222 = vpop.permute.xlu0 %4221
        %4223 = vrot.lane.b32.xlu0 %v4114, 4
        %v4224 = vpop.permute.xlu0 %4223
        %4225 = vrot.lane.b32.xlu0 %v4119, 4
        %v4226 = vpop.permute.xlu0 %4225
        %4227 = vrot.lane.b32.xlu0 %v4122, 4
        %v4228 = vpop.permute.xlu0 %4227
        %4229 = vrot.lane.b32.xlu0 %v4127, 4
        %v4230 = vpop.permute.xlu0 %4229
        %4231 = vrot.lane.b32.xlu0 %v4130, 4
        %v4232 = vpop.permute.xlu0 %4231
        %4233 = vrot.lane.b32.xlu0 %v4135, 4
        %v4234 = vpop.permute.xlu0 %4233
        %4235 = vrot.lane.b32.xlu0 %v4138, 4
        %v4236 = vpop.permute.xlu0 %4235
        %4269 = vst.msk [vmem:[%s352] sm:$0xff] %vm1785, %v4174
        %4270 = vst.msk [vmem:[%s352 + $0x8] sm:$0xff] %vm1785, %v4176
        %4271 = vst.msk [vmem:[%s352 + $0x10] sm:$0xff] %vm1785, %v4178
        %4272 = vst.msk [vmem:[%s352 + $0x18] sm:$0xff] %vm1785, %v4180
        %4273 = vst.msk [vmem:[%s352 + $0x20] sm:$0xff] %vm1785, %v4182
        %4274 = vst.msk [vmem:[%s352 + $0x28] sm:$0xff] %vm1785, %v4184
        %4275 = vst.msk [vmem:[%s352 + $0x30] sm:$0xff] %vm1785, %v4186
        %4276 = vst.msk [vmem:[%s352 + $0x38] sm:$0xff] %vm1785, %v4188
        %4277 = vst.msk [vmem:[%s352 + $0x40] sm:$0xff] %vm1785, %v4190
        %4278 = vst.msk [vmem:[%s352 + $0x48] sm:$0xff] %vm1785, %v4192
        %4279 = vst.msk [vmem:[%s352 + $0x50] sm:$0xff] %vm1785, %v4194
        %4280 = vst.msk [vmem:[%s352 + $0x58] sm:$0xff] %vm1785, %v4196
        %4281 = vst.msk [vmem:[%s352 + $0x60] sm:$0xff] %vm1785, %v4198
        %4282 = vst.msk [vmem:[%s352 + $0x68] sm:$0xff] %vm1785, %v4200
        %4283 = vst.msk [vmem:[%s352 + $0x70] sm:$0xff] %vm1785, %v4202
        %4284 = vst.msk [vmem:[%s352 + $0x78] sm:$0xff] %vm1785, %v4204
        %4285 = vst.msk [vmem:[%s352 + $0x80] sm:$0xff] %vm1785, %v4206
        %4286 = vst.msk [vmem:[%s352 + $0x88] sm:$0xff] %vm1785, %v4208
        %4287 = vst.msk [vmem:[%s352 + $0x90] sm:$0xff] %vm1785, %v4210
        %4288 = vst.msk [vmem:[%s352 + $0x98] sm:$0xff] %vm1785, %v4212
        %4289 = vst.msk [vmem:[%s352 + $0xa0] sm:$0xff] %vm1785, %v4214
        %4290 = vst.msk [vmem:[%s352 + $0xa8] sm:$0xff] %vm1785, %v4216
        %4291 = vst.msk [vmem:[%s352 + $0xb0] sm:$0xff] %vm1785, %v4218
        %4292 = vst.msk [vmem:[%s352 + $0xb8] sm:$0xff] %vm1785, %v4220
        %4293 = vst.msk [vmem:[%s352 + $0xc0] sm:$0xff] %vm1785, %v4222
        %4294 = vst.msk [vmem:[%s352 + $0xc8] sm:$0xff] %vm1785, %v4224
        %4295 = vst.msk [vmem:[%s352 + $0xd0] sm:$0xff] %vm1785, %v4226
        %4296 = vst.msk [vmem:[%s352 + $0xd8] sm:$0xff] %vm1785, %v4228
        %4297 = vst.msk [vmem:[%s352 + $0xe0] sm:$0xff] %vm1785, %v4230
        %4298 = vst.msk [vmem:[%s352 + $0xe8] sm:$0xff] %vm1785, %v4232
        %4299 = vst.msk [vmem:[%s352 + $0xf0] sm:$0xff] %vm1785, %v4234
        %4300 = vst.msk [vmem:[%s352 + $0xf8] sm:$0xff] %vm1785, %v4236
        %v4301 = vld [vmem:[%s352] sm:$0xff]
        %v4302 = vld [vmem:[%s352 + $0x8] sm:$0xff]
        %v4303 = vld [vmem:[%s352 + $0x10] sm:$0xff]
        %v4304 = vld [vmem:[%s352 + $0x18] sm:$0xff]
        %v4305 = vld [vmem:[%s352 + $0x20] sm:$0xff]
        %v4306 = vld [vmem:[%s352 + $0x28] sm:$0xff]
        %v4307 = vld [vmem:[%s352 + $0x30] sm:$0xff]
        %v4308 = vld [vmem:[%s352 + $0x38] sm:$0xff]
        %v4309 = vld [vmem:[%s352 + $0x40] sm:$0xff]
        %v4310 = vld [vmem:[%s352 + $0x48] sm:$0xff]
        %v4311 = vld [vmem:[%s352 + $0x50] sm:$0xff]
        %v4312 = vld [vmem:[%s352 + $0x58] sm:$0xff]
        %v4313 = vld [vmem:[%s352 + $0x60] sm:$0xff]
        %v4314 = vld [vmem:[%s352 + $0x68] sm:$0xff]
        %v4315 = vld [vmem:[%s352 + $0x70] sm:$0xff]
        %v4316 = vld [vmem:[%s352 + $0x78] sm:$0xff]
        %v4317 = vld [vmem:[%s352 + $0x80] sm:$0xff]
        %v4318 = vld [vmem:[%s352 + $0x88] sm:$0xff]
        %v4319 = vld [vmem:[%s352 + $0x90] sm:$0xff]
        %v4320 = vld [vmem:[%s352 + $0x98] sm:$0xff]
        %v4321 = vld [vmem:[%s352 + $0xa0] sm:$0xff]
        %v4322 = vld [vmem:[%s352 + $0xa8] sm:$0xff]
        %v4323 = vld [vmem:[%s352 + $0xb0] sm:$0xff]
        %v4324 = vld [vmem:[%s352 + $0xb8] sm:$0xff]
        %v4325 = vld [vmem:[%s352 + $0xc0] sm:$0xff]
        %v4326 = vld [vmem:[%s352 + $0xc8] sm:$0xff]
        %v4327 = vld [vmem:[%s352 + $0xd0] sm:$0xff]
        %v4328 = vld [vmem:[%s352 + $0xd8] sm:$0xff]
        %v4329 = vld [vmem:[%s352 + $0xe0] sm:$0xff]
        %v4330 = vld [vmem:[%s352 + $0xe8] sm:$0xff]
        %v4331 = vld [vmem:[%s352 + $0xf0] sm:$0xff]
        %v4332 = vld [vmem:[%s352 + $0xf8] sm:$0xff]
        %v4333 = vld [vmem:[%s4] sm:$0x1]
        %v4335 = vlaneseq
        %v4336 = vshrl.u32 %v4335, 7
        %v4337 = vsub.s32 0, %v4336
        %v4338 = vrot.slane %v4333, %v4337
        %v4340 = vmul.f32 %v4301, %v4338
        %v4341 = vmul.f32 %v4302, %v4338
        %v4342 = vmul.f32 %v4303, %v4338
        %v4343 = vmul.f32 %v4304, %v4338
        %v4344 = vmul.f32 %v4305, %v4338
        %v4345 = vmul.f32 %v4306, %v4338
        %v4346 = vmul.f32 %v4307, %v4338
        %v4347 = vmul.f32 %v4308, %v4338
        %v4348 = vmul.f32 %v4309, %v4338
        %v4349 = vmul.f32 %v4310, %v4338
        %v4350 = vmul.f32 %v4311, %v4338
        %v4351 = vmul.f32 %v4312, %v4338
        %v4352 = vmul.f32 %v4313, %v4338
        %v4353 = vmul.f32 %v4314, %v4338
        %v4354 = vmul.f32 %v4315, %v4338
        %v4355 = vmul.f32 %v4316, %v4338
        %v4356 = vmul.f32 %v4317, %v4338
        %v4357 = vmul.f32 %v4318, %v4338
        %v4358 = vmul.f32 %v4319, %v4338
        %v4359 = vmul.f32 %v4320, %v4338
        %v4360 = vmul.f32 %v4321, %v4338
        %v4361 = vmul.f32 %v4322, %v4338
        %v4362 = vmul.f32 %v4323, %v4338
        %v4363 = vmul.f32 %v4324, %v4338
        %v4364 = vmul.f32 %v4325, %v4338
        %v4365 = vmul.f32 %v4326, %v4338
        %v4366 = vmul.f32 %v4327, %v4338
        %v4367 = vmul.f32 %v4328, %v4338
        %v4368 = vmul.f32 %v4329, %v4338
        %v4369 = vmul.f32 %v4330, %v4338
        %v4370 = vmul.f32 %v4331, %v4338
        %v4371 = vmul.f32 %v4332, %v4338
        %v4372 = vld [vmem:[%s5] sm:$0x1]
        %v4374 = vlaneseq
        %v4375 = vshrl.u32 %v4374, 7
        %v4376 = vsub.s32 0, %v4375
        %v4377 = vrot.slane %v4372, %v4376
        %v4379 = vadd.f32 %v4340, %v4377
        %v4380 = vadd.f32 %v4341, %v4377
        %v4381 = vadd.f32 %v4342, %v4377
        %v4382 = vadd.f32 %v4343, %v4377
        %v4383 = vadd.f32 %v4344, %v4377
        %v4384 = vadd.f32 %v4345, %v4377
        %v4385 = vadd.f32 %v4346, %v4377
        %v4386 = vadd.f32 %v4347, %v4377
        %v4387 = vadd.f32 %v4348, %v4377
        %v4388 = vadd.f32 %v4349, %v4377
        %v4389 = vadd.f32 %v4350, %v4377
        %v4390 = vadd.f32 %v4351, %v4377
        %v4391 = vadd.f32 %v4352, %v4377
        %v4392 = vadd.f32 %v4353, %v4377
        %v4393 = vadd.f32 %v4354, %v4377
        %v4394 = vadd.f32 %v4355, %v4377
        %v4395 = vadd.f32 %v4356, %v4377
        %v4396 = vadd.f32 %v4357, %v4377
        %v4397 = vadd.f32 %v4358, %v4377
        %v4398 = vadd.f32 %v4359, %v4377
        %v4399 = vadd.f32 %v4360, %v4377
        %v4400 = vadd.f32 %v4361, %v4377
        %v4401 = vadd.f32 %v4362, %v4377
        %v4402 = vadd.f32 %v4363, %v4377
        %v4403 = vadd.f32 %v4364, %v4377
        %v4404 = vadd.f32 %v4365, %v4377
        %v4405 = vadd.f32 %v4366, %v4377
        %v4406 = vadd.f32 %v4367, %v4377
        %v4407 = vadd.f32 %v4368, %v4377
        %v4408 = vadd.f32 %v4369, %v4377
        %v4409 = vadd.f32 %v4370, %v4377
        %v4410 = vadd.f32 %v4371, %v4377
        %v4411 = vmax.f32 %v4379, 0.0
        %v4412 = vmax.f32 %v4380, 0.0
        %v4413 = vmax.f32 %v4381, 0.0
        %v4414 = vmax.f32 %v4382, 0.0
        %v4415 = vmax.f32 %v4383, 0.0
        %v4416 = vmax.f32 %v4384, 0.0
        %v4417 = vmax.f32 %v4385, 0.0
        %v4418 = vmax.f32 %v4386, 0.0
        %v4419 = vmax.f32 %v4387, 0.0
        %v4420 = vmax.f32 %v4388, 0.0
        %v4421 = vmax.f32 %v4389, 0.0
        %v4422 = vmax.f32 %v4390, 0.0
        %v4423 = vmax.f32 %v4391, 0.0
        %v4424 = vmax.f32 %v4392, 0.0
        %v4425 = vmax.f32 %v4393, 0.0
        %v4426 = vmax.f32 %v4394, 0.0
        %v4427 = vmax.f32 %v4395, 0.0
        %v4428 = vmax.f32 %v4396, 0.0
        %v4429 = vmax.f32 %v4397, 0.0
        %v4430 = vmax.f32 %v4398, 0.0
        %v4431 = vmax.f32 %v4399, 0.0
        %v4432 = vmax.f32 %v4400, 0.0
        %v4433 = vmax.f32 %v4401, 0.0
        %v4434 = vmax.f32 %v4402, 0.0
        %v4435 = vmax.f32 %v4403, 0.0
        %v4436 = vmax.f32 %v4404, 0.0
        %v4437 = vmax.f32 %v4405, 0.0
        %v4438 = vmax.f32 %v4406, 0.0
        %v4439 = vmax.f32 %v4407, 0.0
        %v4440 = vmax.f32 %v4408, 0.0
        %v4441 = vmax.f32 %v4409, 0.0
        %v4442 = vmax.f32 %v4410, 0.0
        %v4443 = vpack.c.bf16 %v4412, %v4411
        %v4444 = vpack.c.bf16 %v4414, %v4413
        %v4445 = vpack.c.bf16 %v4416, %v4415
        %v4446 = vpack.c.bf16 %v4418, %v4417
        %v4447 = vpack.c.bf16 %v4420, %v4419
        %v4448 = vpack.c.bf16 %v4422, %v4421
        %v4449 = vpack.c.bf16 %v4424, %v4423
        %v4450 = vpack.c.bf16 %v4426, %v4425
        %v4451 = vpack.c.bf16 %v4428, %v4427
        %v4452 = vpack.c.bf16 %v4430, %v4429
        %v4453 = vpack.c.bf16 %v4432, %v4431
        %v4454 = vpack.c.bf16 %v4434, %v4433
        %v4455 = vpack.c.bf16 %v4436, %v4435
        %v4456 = vpack.c.bf16 %v4438, %v4437
        %v4457 = vpack.c.bf16 %v4440, %v4439
        %v4458 = vpack.c.bf16 %v4442, %v4441
        %v4475 = vunpack.c.l.b16 %v4443
        %v4476 = vunpack.c.h.b16 %v4443
        %v4477 = vunpack.c.l.b16 %v4444
        %v4478 = vunpack.c.h.b16 %v4444
        %v4479 = vunpack.c.l.b16 %v4445
        %v4480 = vunpack.c.h.b16 %v4445
        %v4481 = vunpack.c.l.b16 %v4446
        %v4482 = vunpack.c.h.b16 %v4446
        %v4483 = vunpack.c.l.b16 %v4447
        %v4484 = vunpack.c.h.b16 %v4447
        %v4485 = vunpack.c.l.b16 %v4448
        %v4486 = vunpack.c.h.b16 %v4448
        %v4487 = vunpack.c.l.b16 %v4449
        %v4488 = vunpack.c.h.b16 %v4449
        %v4489 = vunpack.c.l.b16 %v4450
        %v4490 = vunpack.c.h.b16 %v4450
        %v4491 = vunpack.c.l.b16 %v4451
        %v4492 = vunpack.c.h.b16 %v4451
        %v4493 = vunpack.c.l.b16 %v4452
        %v4494 = vunpack.c.h.b16 %v4452
        %v4495 = vunpack.c.l.b16 %v4453
        %v4496 = vunpack.c.h.b16 %v4453
        %v4497 = vunpack.c.l.b16 %v4454
        %v4498 = vunpack.c.h.b16 %v4454
        %v4499 = vunpack.c.l.b16 %v4455
        %v4500 = vunpack.c.h.b16 %v4455
        %v4501 = vunpack.c.l.b16 %v4456
        %v4502 = vunpack.c.h.b16 %v4456
        %v4503 = vunpack.c.l.b16 %v4457
        %v4504 = vunpack.c.h.b16 %v4457
        %v4505 = vunpack.c.l.b16 %v4458
        %v4506 = vunpack.c.h.b16 %v4458
        %v4507 = vpack.c.b16 %v4475, %v4475
        %v4508 = vpack.c.b16 %v4476, %v4476
        %v4509 = vpack.c.b16 %v4477, %v4477
        %v4510 = vpack.c.b16 %v4478, %v4478
        %v4511 = vpack.c.b16 %v4479, %v4479
        %v4512 = vpack.c.b16 %v4480, %v4480
        %v4513 = vpack.c.b16 %v4481, %v4481
        %v4514 = vpack.c.b16 %v4482, %v4482
        %v4515 = vpack.c.b16 %v4483, %v4483
        %v4516 = vpack.c.b16 %v4484, %v4484
        %v4517 = vpack.c.b16 %v4485, %v4485
        %v4518 = vpack.c.b16 %v4486, %v4486
        %v4519 = vpack.c.b16 %v4487, %v4487
        %v4520 = vpack.c.b16 %v4488, %v4488
        %v4521 = vpack.c.b16 %v4489, %v4489
        %v4522 = vpack.c.b16 %v4490, %v4490
        %v4523 = vpack.c.b16 %v4491, %v4491
        %v4524 = vpack.c.b16 %v4492, %v4492
        %v4525 = vpack.c.b16 %v4493, %v4493
        %v4526 = vpack.c.b16 %v4494, %v4494
        %v4527 = vpack.c.b16 %v4495, %v4495
        %v4528 = vpack.c.b16 %v4496, %v4496
        %v4529 = vpack.c.b16 %v4497, %v4497
        %v4530 = vpack.c.b16 %v4498, %v4498
        %v4531 = vpack.c.b16 %v4499, %v4499
        %v4532 = vpack.c.b16 %v4500, %v4500
        %v4533 = vpack.c.b16 %v4501, %v4501
        %v4534 = vpack.c.b16 %v4502, %v4502
        %v4535 = vpack.c.b16 %v4503, %v4503
        %v4536 = vpack.c.b16 %v4504, %v4504
        %v4537 = vpack.c.b16 %v4505, %v4505
        %v4538 = vpack.c.b16 %v4506, %v4506
        %v4540 = vshrl.u32 %v4507, 16
        %v4542 = vrot.slane %v4540, 7
        %v4543 = vshll.u32 %v4507, 16
        %v4545 = vor.u32 %v4542, %v4543
        %v4546 = vrot.slane %v4542, 4
        %v4548 = vshrl.u32 %v4508, 16
        %v4550 = vrot.slane %v4548, 7
        %v4551 = vshll.u32 %v4508, 16
        %v4553 = vor.u32 %v4550, %v4551
        %v4554 = vsel %vm785, %v4546, %v4553
        %v4555 = vrot.slane %v4550, 4
        %v4557 = vshrl.u32 %v4509, 16
        %v4559 = vrot.slane %v4557, 7
        %v4560 = vshll.u32 %v4509, 16
        %v4562 = vor.u32 %v4559, %v4560
        %v4563 = vrot.slane %v4559, 4
        %v4565 = vshrl.u32 %v4510, 16
        %v4567 = vrot.slane %v4565, 7
        %v4568 = vshll.u32 %v4510, 16
        %v4570 = vor.u32 %v4567, %v4568
        %v4571 = vsel %vm785, %v4563, %v4570
        %v4572 = vrot.slane %v4567, 4
        %v4574 = vshrl.u32 %v4511, 16
        %v4576 = vrot.slane %v4574, 7
        %v4577 = vshll.u32 %v4511, 16
        %v4579 = vor.u32 %v4576, %v4577
        %v4580 = vrot.slane %v4576, 4
        %v4582 = vshrl.u32 %v4512, 16
        %v4584 = vrot.slane %v4582, 7
        %v4585 = vshll.u32 %v4512, 16
        %v4587 = vor.u32 %v4584, %v4585
        %v4588 = vsel %vm785, %v4580, %v4587
        %v4589 = vrot.slane %v4584, 4
        %v4591 = vshrl.u32 %v4513, 16
        %v4593 = vrot.slane %v4591, 7
        %v4594 = vshll.u32 %v4513, 16
        %v4596 = vor.u32 %v4593, %v4594
        %v4597 = vrot.slane %v4593, 4
        %v4599 = vshrl.u32 %v4514, 16
        %v4601 = vrot.slane %v4599, 7
        %v4602 = vshll.u32 %v4514, 16
        %v4604 = vor.u32 %v4601, %v4602
        %v4605 = vsel %vm785, %v4597, %v4604
        %v4606 = vrot.slane %v4601, 4
        %v4608 = vshrl.u32 %v4515, 16
        %v4610 = vrot.slane %v4608, 7
        %v4611 = vshll.u32 %v4515, 16
        %v4613 = vor.u32 %v4610, %v4611
        %v4614 = vrot.slane %v4610, 4
        %v4616 = vshrl.u32 %v4516, 16
        %v4618 = vrot.slane %v4616, 7
        %v4619 = vshll.u32 %v4516, 16
        %v4621 = vor.u32 %v4618, %v4619
        %v4622 = vsel %vm785, %v4614, %v4621
        %v4623 = vrot.slane %v4618, 4
        %v4625 = vshrl.u32 %v4517, 16
        %v4627 = vrot.slane %v4625, 7
        %v4628 = vshll.u32 %v4517, 16
        %v4630 = vor.u32 %v4627, %v4628
        %v4631 = vrot.slane %v4627, 4
        %v4633 = vshrl.u32 %v4518, 16
        %v4635 = vrot.slane %v4633, 7
        %v4636 = vshll.u32 %v4518, 16
        %v4638 = vor.u32 %v4635, %v4636
        %v4639 = vsel %vm785, %v4631, %v4638
        %v4640 = vrot.slane %v4635, 4
        %v4642 = vshrl.u32 %v4519, 16
        %v4644 = vrot.slane %v4642, 7
        %v4645 = vshll.u32 %v4519, 16
        %v4647 = vor.u32 %v4644, %v4645
        %v4648 = vrot.slane %v4644, 4
        %v4650 = vshrl.u32 %v4520, 16
        %v4652 = vrot.slane %v4650, 7
        %v4653 = vshll.u32 %v4520, 16
        %v4655 = vor.u32 %v4652, %v4653
        %v4656 = vsel %vm785, %v4648, %v4655
        %v4657 = vrot.slane %v4652, 4
        %v4659 = vshrl.u32 %v4521, 16
        %v4661 = vrot.slane %v4659, 7
        %v4662 = vshll.u32 %v4521, 16
        %v4664 = vor.u32 %v4661, %v4662
        %v4665 = vrot.slane %v4661, 4
        %v4667 = vshrl.u32 %v4522, 16
        %v4669 = vrot.slane %v4667, 7
        %v4670 = vshll.u32 %v4522, 16
        %v4672 = vor.u32 %v4669, %v4670
        %v4673 = vsel %vm785, %v4665, %v4672
        %v4674 = vrot.slane %v4669, 4
        %v4676 = vshrl.u32 %v4523, 16
        %v4678 = vrot.slane %v4676, 7
        %v4679 = vshll.u32 %v4523, 16
        %v4681 = vor.u32 %v4678, %v4679
        %v4682 = vrot.slane %v4678, 4
        %v4684 = vshrl.u32 %v4524, 16
        %v4686 = vrot.slane %v4684, 7
        %v4687 = vshll.u32 %v4524, 16
        %v4689 = vor.u32 %v4686, %v4687
        %v4690 = vsel %vm785, %v4682, %v4689
        %v4691 = vrot.slane %v4686, 4
        %v4693 = vshrl.u32 %v4525, 16
        %v4695 = vrot.slane %v4693, 7
        %v4696 = vshll.u32 %v4525, 16
        %v4698 = vor.u32 %v4695, %v4696
        %v4699 = vrot.slane %v4695, 4
        %v4701 = vshrl.u32 %v4526, 16
        %v4703 = vrot.slane %v4701, 7
        %v4704 = vshll.u32 %v4526, 16
        %v4706 = vor.u32 %v4703, %v4704
        %v4707 = vsel %vm785, %v4699, %v4706
        %v4708 = vrot.slane %v4703, 4
        %v4710 = vshrl.u32 %v4527, 16
        %v4712 = vrot.slane %v4710, 7
        %v4713 = vshll.u32 %v4527, 16
        %v4715 = vor.u32 %v4712, %v4713
        %v4716 = vrot.slane %v4712, 4
        %v4718 = vshrl.u32 %v4528, 16
        %v4720 = vrot.slane %v4718, 7
        %v4721 = vshll.u32 %v4528, 16
        %v4723 = vor.u32 %v4720, %v4721
        %v4724 = vsel %vm785, %v4716, %v4723
        %v4725 = vrot.slane %v4720, 4
        %v4727 = vshrl.u32 %v4529, 16
        %v4729 = vrot.slane %v4727, 7
        %v4730 = vshll.u32 %v4529, 16
        %v4732 = vor.u32 %v4729, %v4730
        %v4733 = vrot.slane %v4729, 4
        %v4735 = vshrl.u32 %v4530, 16
        %v4737 = vrot.slane %v4735, 7
        %v4738 = vshll.u32 %v4530, 16
        %v4740 = vor.u32 %v4737, %v4738
        %v4741 = vsel %vm785, %v4733, %v4740
        %v4742 = vrot.slane %v4737, 4
        %v4744 = vshrl.u32 %v4531, 16
        %v4746 = vrot.slane %v4744, 7
        %v4747 = vshll.u32 %v4531, 16
        %v4749 = vor.u32 %v4746, %v4747
        %v4750 = vrot.slane %v4746, 4
        %v4752 = vshrl.u32 %v4532, 16
        %v4754 = vrot.slane %v4752, 7
        %v4755 = vshll.u32 %v4532, 16
        %v4757 = vor.u32 %v4754, %v4755
        %v4758 = vsel %vm785, %v4750, %v4757
        %v4759 = vrot.slane %v4754, 4
        %v4761 = vshrl.u32 %v4533, 16
        %v4763 = vrot.slane %v4761, 7
        %v4764 = vshll.u32 %v4533, 16
        %v4766 = vor.u32 %v4763, %v4764
        %v4767 = vrot.slane %v4763, 4
        %v4769 = vshrl.u32 %v4534, 16
        %v4771 = vrot.slane %v4769, 7
        %v4772 = vshll.u32 %v4534, 16
        %v4774 = vor.u32 %v4771, %v4772
        %v4775 = vsel %vm785, %v4767, %v4774
        %v4776 = vrot.slane %v4771, 4
        %v4778 = vshrl.u32 %v4535, 16
        %v4780 = vrot.slane %v4778, 7
        %v4781 = vshll.u32 %v4535, 16
        %v4783 = vor.u32 %v4780, %v4781
        %v4784 = vrot.slane %v4780, 4
        %v4786 = vshrl.u32 %v4536, 16
        %v4788 = vrot.slane %v4786, 7
        %v4789 = vshll.u32 %v4536, 16
        %v4791 = vor.u32 %v4788, %v4789
        %v4792 = vsel %vm785, %v4784, %v4791
        %v4793 = vrot.slane %v4788, 4
        %v4795 = vshrl.u32 %v4537, 16
        %v4797 = vrot.slane %v4795, 7
        %v4798 = vshll.u32 %v4537, 16
        %v4800 = vor.u32 %v4797, %v4798
        %v4801 = vrot.slane %v4797, 4
        %v4803 = vshrl.u32 %v4538, 16
        %v4805 = vrot.slane %v4803, 7
        %v4806 = vshll.u32 %v4538, 16
        %v4808 = vor.u32 %v4805, %v4806
        %v4809 = vsel %vm785, %v4801, %v4808
        %v4810 = vrot.slane %v4805, 4
        %vm4859 = vcmask 60416
        %vm4860 = vmand %vm4859, %vm425
        %v4861 = vld [vmem:[%s1106] sm:$0xf]
        %v4862 = vsel %vm4860, %v4545, %v4861
        %4863 = vst [vmem:[%s1106] sm:$0xf] %v4862
        %vm4864 = vcmask 60416
        %4865 = vst.msk [vmem:[%s1106 + $0x4] sm:$0xf] %vm4864, %v4554
        %vm4866 = vcmask 57344
        %vm4867 = vmand %vm4866, %vm369
        %v4868 = vld [vmem:[%s1106 + $0x8] sm:$0x1]
        %v4869 = vsel %vm4867, %v4555, %v4868
        %4870 = vst [vmem:[%s1106 + $0x8] sm:$0x1] %v4869
        %v4871 = vld [vmem:[%s1106 + $0xc] sm:$0xf]
        %v4872 = vsel %vm4860, %v4562, %v4871
        %4873 = vst [vmem:[%s1106 + $0xc] sm:$0xf] %v4872
        %4874 = vst.msk [vmem:[%s1106 + $0x10] sm:$0xf] %vm4864, %v4571
        %v4875 = vld [vmem:[%s1106 + $0x14] sm:$0x1]
        %v4876 = vsel %vm4867, %v4572, %v4875
        %4877 = vst [vmem:[%s1106 + $0x14] sm:$0x1] %v4876
        %v4878 = vld [vmem:[%s1106 + $0x18] sm:$0xf]
        %v4879 = vsel %vm4860, %v4579, %v4878
        %4880 = vst [vmem:[%s1106 + $0x18] sm:$0xf] %v4879
        %4881 = vst.msk [vmem:[%s1106 + $0x1c] sm:$0xf] %vm4864, %v4588
        %v4882 = vld [vmem:[%s1106 + $0x20] sm:$0x1]
        %v4883 = vsel %vm4867, %v4589, %v4882
        %4884 = vst [vmem:[%s1106 + $0x20] sm:$0x1] %v4883
        %v4885 = vld [vmem:[%s1106 + $0x24] sm:$0xf]
        %v4886 = vsel %vm4860, %v4596, %v4885
        %4887 = vst [vmem:[%s1106 + $0x24] sm:$0xf] %v4886
        %4888 = vst.msk [vmem:[%s1106 + $0x28] sm:$0xf] %vm4864, %v4605
        %v4889 = vld [vmem:[%s1106 + $0x2c] sm:$0x1]
        %v4890 = vsel %vm4867, %v4606, %v4889
        %4891 = vst [vmem:[%s1106 + $0x2c] sm:$0x1] %v4890
        %v4892 = vld [vmem:[%s1106 + $0x30] sm:$0xf]
        %v4893 = vsel %vm4860, %v4613, %v4892
        %4894 = vst [vmem:[%s1106 + $0x30] sm:$0xf] %v4893
        %4895 = vst.msk [vmem:[%s1106 + $0x34] sm:$0xf] %vm4864, %v4622
        %v4896 = vld [vmem:[%s1106 + $0x38] sm:$0x1]
        %v4897 = vsel %vm4867, %v4623, %v4896
        %4898 = vst [vmem:[%s1106 + $0x38] sm:$0x1] %v4897
        %v4899 = vld [vmem:[%s1106 + $0x3c] sm:$0xf]
        %v4900 = vsel %vm4860, %v4630, %v4899
        %4901 = vst [vmem:[%s1106 + $0x3c] sm:$0xf] %v4900
        %4902 = vst.msk [vmem:[%s1106 + $0x40] sm:$0xf] %vm4864, %v4639
        %v4903 = vld [vmem:[%s1106 + $0x44] sm:$0x1]
        %v4904 = vsel %vm4867, %v4640, %v4903
        %4905 = vst [vmem:[%s1106 + $0x44] sm:$0x1] %v4904
        %v4906 = vld [vmem:[%s1106 + $0x48] sm:$0xf]
        %v4907 = vsel %vm4860, %v4647, %v4906
        %4908 = vst [vmem:[%s1106 + $0x48] sm:$0xf] %v4907
        %4909 = vst.msk [vmem:[%s1106 + $0x4c] sm:$0xf] %vm4864, %v4656
        %v4910 = vld [vmem:[%s1106 + $0x50] sm:$0x1]
        %v4911 = vsel %vm4867, %v4657, %v4910
        %4912 = vst [vmem:[%s1106 + $0x50] sm:$0x1] %v4911
        %v4913 = vld [vmem:[%s1106 + $0x54] sm:$0xf]
        %v4914 = vsel %vm4860, %v4664, %v4913
        %4915 = vst [vmem:[%s1106 + $0x54] sm:$0xf] %v4914
        %4916 = vst.msk [vmem:[%s1106 + $0x58] sm:$0xf] %vm4864, %v4673
        %v4917 = vld [vmem:[%s1106 + $0x5c] sm:$0x1]
        %v4918 = vsel %vm4867, %v4674, %v4917
        %4919 = vst [vmem:[%s1106 + $0x5c] sm:$0x1] %v4918
        %v4920 = vld [vmem:[%s1106 + $0x60] sm:$0xf]
        %v4921 = vsel %vm4860, %v4681, %v4920
        %4922 = vst [vmem:[%s1106 + $0x60] sm:$0xf] %v4921
        %4923 = vst.msk [vmem:[%s1106 + $0x64] sm:$0xf] %vm4864, %v4690
        %v4924 = vld [vmem:[%s1106 + $0x68] sm:$0x1]
        %v4925 = vsel %vm4867, %v4691, %v4924
        %4926 = vst [vmem:[%s1106 + $0x68] sm:$0x1] %v4925
        %v4927 = vld [vmem:[%s1106 + $0x6c] sm:$0xf]
        %v4928 = vsel %vm4860, %v4698, %v4927
        %4929 = vst [vmem:[%s1106 + $0x6c] sm:$0xf] %v4928
        %4930 = vst.msk [vmem:[%s1106 + $0x70] sm:$0xf] %vm4864, %v4707
        %v4931 = vld [vmem:[%s1106 + $0x74] sm:$0x1]
        %v4932 = vsel %vm4867, %v4708, %v4931
        %4933 = vst [vmem:[%s1106 + $0x74] sm:$0x1] %v4932
        %v4934 = vld [vmem:[%s1106 + $0x78] sm:$0xf]
        %v4935 = vsel %vm4860, %v4715, %v4934
        %4936 = vst [vmem:[%s1106 + $0x78] sm:$0xf] %v4935
        %4937 = vst.msk [vmem:[%s1106 + $0x7c] sm:$0xf] %vm4864, %v4724
        %v4938 = vld [vmem:[%s1106 + $0x80] sm:$0x1]
        %v4939 = vsel %vm4867, %v4725, %v4938
        %4940 = vst [vmem:[%s1106 + $0x80] sm:$0x1] %v4939
        %v4941 = vld [vmem:[%s1106 + $0x84] sm:$0xf]
        %v4942 = vsel %vm4860, %v4732, %v4941
        %4943 = vst [vmem:[%s1106 + $0x84] sm:$0xf] %v4942
        %4944 = vst.msk [vmem:[%s1106 + $0x88] sm:$0xf] %vm4864, %v4741
        %v4945 = vld [vmem:[%s1106 + $0x8c] sm:$0x1]
        %v4946 = vsel %vm4867, %v4742, %v4945
        %4947 = vst [vmem:[%s1106 + $0x8c] sm:$0x1] %v4946
        %v4948 = vld [vmem:[%s1106 + $0x90] sm:$0xf]
        %v4949 = vsel %vm4860, %v4749, %v4948
        %4950 = vst [vmem:[%s1106 + $0x90] sm:$0xf] %v4949
        %4951 = vst.msk [vmem:[%s1106 + $0x94] sm:$0xf] %vm4864, %v4758
        %v4952 = vld [vmem:[%s1106 + $0x98] sm:$0x1]
        %v4953 = vsel %vm4867, %v4759, %v4952
        %4954 = vst [vmem:[%s1106 + $0x98] sm:$0x1] %v4953
        %v4955 = vld [vmem:[%s1106 + $0x9c] sm:$0xf]
        %v4956 = vsel %vm4860, %v4766, %v4955
        %4957 = vst [vmem:[%s1106 + $0x9c] sm:$0xf] %v4956
        %4958 = vst.msk [vmem:[%s1106 + $0xa0] sm:$0xf] %vm4864, %v4775
        %v4959 = vld [vmem:[%s1106 + $0xa4] sm:$0x1]
        %v4960 = vsel %vm4867, %v4776, %v4959
        %4961 = vst [vmem:[%s1106 + $0xa4] sm:$0x1] %v4960
        %v4962 = vld [vmem:[%s1106 + $0xa8] sm:$0xf]
        %v4963 = vsel %vm4860, %v4783, %v4962
        %4964 = vst [vmem:[%s1106 + $0xa8] sm:$0xf] %v4963
        %4965 = vst.msk [vmem:[%s1106 + $0xac] sm:$0xf] %vm4864, %v4792
        %v4966 = vld [vmem:[%s1106 + $0xb0] sm:$0x1]
        %v4967 = vsel %vm4867, %v4793, %v4966
        %4968 = vst [vmem:[%s1106 + $0xb0] sm:$0x1] %v4967
        %v4969 = vld [vmem:[%s1106 + $0xb4] sm:$0xf]
        %v4970 = vsel %vm4860, %v4800, %v4969
        %4971 = vst [vmem:[%s1106 + $0xb4] sm:$0xf] %v4970
        %4972 = vst.msk [vmem:[%s1106 + $0xb8] sm:$0xf] %vm4864, %v4809
        %v4973 = vld [vmem:[%s1106 + $0xbc] sm:$0x1]
        %v4974 = vsel %vm4867, %v4810, %v4973
        %4975 = vst [vmem:[%s1106 + $0xbc] sm:$0x1] %v4974
        %v4976 = vld [vmem:[#allocation2] sm:$0xf]
        %v4977 = vld [vmem:[#allocation2 + $0x4] sm:$0xf]
        %v4978 = vld [vmem:[#allocation2 + $0xc] sm:$0xf]
        %v4979 = vld [vmem:[#allocation2 + $0x10] sm:$0xf]
        %v4980 = vld [vmem:[#allocation2 + $0x18] sm:$0xf]
        %v4981 = vld [vmem:[#allocation2 + $0x1c] sm:$0xf]
        %v4982 = vld [vmem:[#allocation2 + $0x24] sm:$0xf]
        %v4983 = vld [vmem:[#allocation2 + $0x28] sm:$0xf]
        %v4984 = vld [vmem:[#allocation2 + $0x30] sm:$0xf]
        %v4985 = vld [vmem:[#allocation2 + $0x34] sm:$0xf]
        %v4986 = vld [vmem:[#allocation2 + $0x3c] sm:$0xf]
        %v4987 = vld [vmem:[#allocation2 + $0x40] sm:$0xf]
        %v4988 = vld [vmem:[#allocation2 + $0x48] sm:$0xf]
        %v4989 = vld [vmem:[#allocation2 + $0x4c] sm:$0xf]
        %v4990 = vld [vmem:[#allocation2 + $0x54] sm:$0xf]
        %v4991 = vld [vmem:[#allocation2 + $0x58] sm:$0xf]
        %v4992 = vld [vmem:[#allocation2 + $0x60] sm:$0xf]
        %v4993 = vld [vmem:[#allocation2 + $0x64] sm:$0xf]
        %v4994 = vld [vmem:[#allocation2 + $0x6c] sm:$0xf]
        %v4995 = vld [vmem:[#allocation2 + $0x70] sm:$0xf]
        %v4996 = vld [vmem:[#allocation2 + $0x78] sm:$0xf]
        %v4997 = vld [vmem:[#allocation2 + $0x7c] sm:$0xf]
        %v4998 = vld [vmem:[#allocation2 + $0x84] sm:$0xf]
        %v4999 = vld [vmem:[#allocation2 + $0x88] sm:$0xf]
        %v5000 = vld [vmem:[#allocation2 + $0x90] sm:$0xf]
        %v5001 = vld [vmem:[#allocation2 + $0x94] sm:$0xf]
        %v5002 = vld [vmem:[#allocation2 + $0x9c] sm:$0xf]
        %v5003 = vld [vmem:[#allocation2 + $0xa0] sm:$0xf]
        %v5004 = vld [vmem:[#allocation2 + $0xa8] sm:$0xf]
        %v5005 = vld [vmem:[#allocation2 + $0xac] sm:$0xf]
        %v5006 = vld [vmem:[#allocation2 + $0xb4] sm:$0xf]
        %v5007 = vld [vmem:[#allocation2 + $0xb8] sm:$0xf]
        %v5040 = vunpack.c.l.b16 %v4976
        %v5041 = vunpack.c.l.b16 %v4977
        %v5042 = vunpack.c.l.b16 %v4978
        %v5043 = vunpack.c.l.b16 %v4979
        %v5044 = vunpack.c.l.b16 %v4980
        %v5045 = vunpack.c.l.b16 %v4981
        %v5046 = vunpack.c.l.b16 %v4982
        %v5047 = vunpack.c.l.b16 %v4983
        %v5048 = vunpack.c.l.b16 %v4984
        %v5049 = vunpack.c.l.b16 %v4985
        %v5050 = vunpack.c.l.b16 %v4986
        %v5051 = vunpack.c.l.b16 %v4987
        %v5052 = vunpack.c.l.b16 %v4988
        %v5053 = vunpack.c.l.b16 %v4989
        %v5054 = vunpack.c.l.b16 %v4990
        %v5055 = vunpack.c.l.b16 %v4991
        %v5056 = vunpack.c.l.b16 %v4992
        %v5057 = vunpack.c.l.b16 %v4993
        %v5058 = vunpack.c.l.b16 %v4994
        %v5059 = vunpack.c.l.b16 %v4995
        %v5060 = vunpack.c.l.b16 %v4996
        %v5061 = vunpack.c.l.b16 %v4997
        %v5062 = vunpack.c.l.b16 %v4998
        %v5063 = vunpack.c.l.b16 %v4999
        %v5064 = vunpack.c.l.b16 %v5000
        %v5065 = vunpack.c.l.b16 %v5001
        %v5066 = vunpack.c.l.b16 %v5002
        %v5067 = vunpack.c.l.b16 %v5003
        %v5068 = vunpack.c.l.b16 %v5004
        %v5069 = vunpack.c.l.b16 %v5005
        %v5070 = vunpack.c.l.b16 %v5006
        %v5071 = vunpack.c.l.b16 %v5007
        %v5072 = vpack.c.b16 %v5041, %v5040
        %v5073 = vpack.c.b16 %v5043, %v5042
        %v5074 = vpack.c.b16 %v5045, %v5044
        %v5075 = vpack.c.b16 %v5047, %v5046
        %v5076 = vpack.c.b16 %v5049, %v5048
        %v5077 = vpack.c.b16 %v5051, %v5050
        %v5078 = vpack.c.b16 %v5053, %v5052
        %v5079 = vpack.c.b16 %v5055, %v5054
        %v5080 = vpack.c.b16 %v5057, %v5056
        %v5081 = vpack.c.b16 %v5059, %v5058
        %v5082 = vpack.c.b16 %v5061, %v5060
        %v5083 = vpack.c.b16 %v5063, %v5062
        %v5084 = vpack.c.b16 %v5065, %v5064
        %v5085 = vpack.c.b16 %v5067, %v5066
        %v5086 = vpack.c.b16 %v5069, %v5068
        %v5087 = vpack.c.b16 %v5071, %v5070
        %vm5104 = vcmask 64512
        %5105 = vst.msk [vmem:[#allocation3] sm:$0xff] %vm5104, %v5072
        %5106 = vst.msk [vmem:[#allocation3 + $0x8] sm:$0xff] %vm5104, %v5073
        %5107 = vst.msk [vmem:[#allocation3 + $0x10] sm:$0xff] %vm5104, %v5074
        %5108 = vst.msk [vmem:[#allocation3 + $0x18] sm:$0xff] %vm5104, %v5075
        %5109 = vst.msk [vmem:[#allocation3 + $0x20] sm:$0xff] %vm5104, %v5076
        %5110 = vst.msk [vmem:[#allocation3 + $0x28] sm:$0xff] %vm5104, %v5077
        %5111 = vst.msk [vmem:[#allocation3 + $0x30] sm:$0xff] %vm5104, %v5078
        %5112 = vst.msk [vmem:[#allocation3 + $0x38] sm:$0xff] %vm5104, %v5079
        %5113 = vst.msk [vmem:[#allocation3 + $0x40] sm:$0xff] %vm5104, %v5080
        %5114 = vst.msk [vmem:[#allocation3 + $0x48] sm:$0xff] %vm5104, %v5081
        %5115 = vst.msk [vmem:[#allocation3 + $0x50] sm:$0xff] %vm5104, %v5082
        %5116 = vst.msk [vmem:[#allocation3 + $0x58] sm:$0xff] %vm5104, %v5083
        %5117 = vst.msk [vmem:[#allocation3 + $0x60] sm:$0xff] %vm5104, %v5084
        %5118 = vst.msk [vmem:[#allocation3 + $0x68] sm:$0xff] %vm5104, %v5085
        %5119 = vst.msk [vmem:[#allocation3 + $0x70] sm:$0xff] %vm5104, %v5086
        %5120 = vst.msk [vmem:[#allocation3 + $0x78] sm:$0xff] %vm5104, %v5087
        %v5121 = vld [vmem:[#allocation2] sm:$0xf]
        %v5122 = vld [vmem:[#allocation2 + $0x4] sm:$0xf]
        %v5123 = vld [vmem:[#allocation2 + $0x8] sm:$0x1]
        %v5124 = vld [vmem:[#allocation2 + $0xc] sm:$0xf]
        %v5125 = vld [vmem:[#allocation2 + $0x10] sm:$0xf]
        %v5126 = vld [vmem:[#allocation2 + $0x14] sm:$0x1]
        %v5127 = vld [vmem:[#allocation2 + $0x18] sm:$0xf]
        %v5128 = vld [vmem:[#allocation2 + $0x1c] sm:$0xf]
        %v5129 = vld [vmem:[#allocation2 + $0x20] sm:$0x1]
        %v5130 = vld [vmem:[#allocation2 + $0x24] sm:$0xf]
        %v5131 = vld [vmem:[#allocation2 + $0x28] sm:$0xf]
        %v5132 = vld [vmem:[#allocation2 + $0x2c] sm:$0x1]
        %v5133 = vld [vmem:[#allocation2 + $0x30] sm:$0xf]
        %v5134 = vld [vmem:[#allocation2 + $0x34] sm:$0xf]
        %v5135 = vld [vmem:[#allocation2 + $0x38] sm:$0x1]
        %v5136 = vld [vmem:[#allocation2 + $0x3c] sm:$0xf]
        %v5137 = vld [vmem:[#allocation2 + $0x40] sm:$0xf]
        %v5138 = vld [vmem:[#allocation2 + $0x44] sm:$0x1]
        %v5139 = vld [vmem:[#allocation2 + $0x48] sm:$0xf]
        %v5140 = vld [vmem:[#allocation2 + $0x4c] sm:$0xf]
        %v5141 = vld [vmem:[#allocation2 + $0x50] sm:$0x1]
        %v5142 = vld [vmem:[#allocation2 + $0x54] sm:$0xf]
        %v5143 = vld [vmem:[#allocation2 + $0x58] sm:$0xf]
        %v5144 = vld [vmem:[#allocation2 + $0x5c] sm:$0x1]
        %v5145 = vld [vmem:[#allocation2 + $0x60] sm:$0xf]
        %v5146 = vld [vmem:[#allocation2 + $0x64] sm:$0xf]
        %v5147 = vld [vmem:[#allocation2 + $0x68] sm:$0x1]
        %v5148 = vld [vmem:[#allocation2 + $0x6c] sm:$0xf]
        %v5149 = vld [vmem:[#allocation2 + $0x70] sm:$0xf]
        %v5150 = vld [vmem:[#allocation2 + $0x74] sm:$0x1]
        %v5151 = vld [vmem:[#allocation2 + $0x78] sm:$0xf]
        %v5152 = vld [vmem:[#allocation2 + $0x7c] sm:$0xf]
        %v5153 = vld [vmem:[#allocation2 + $0x80] sm:$0x1]
        %v5154 = vld [vmem:[#allocation2 + $0x84] sm:$0xf]
        %v5155 = vld [vmem:[#allocation2 + $0x88] sm:$0xf]
        %v5156 = vld [vmem:[#allocation2 + $0x8c] sm:$0x1]
        %v5157 = vld [vmem:[#allocation2 + $0x90] sm:$0xf]
        %v5158 = vld [vmem:[#allocation2 + $0x94] sm:$0xf]
        %v5159 = vld [vmem:[#allocation2 + $0x98] sm:$0x1]
        %v5160 = vld [vmem:[#allocation2 + $0x9c] sm:$0xf]
        %v5161 = vld [vmem:[#allocation2 + $0xa0] sm:$0xf]
        %v5162 = vld [vmem:[#allocation2 + $0xa4] sm:$0x1]
        %v5163 = vld [vmem:[#allocation2 + $0xa8] sm:$0xf]
        %v5164 = vld [vmem:[#allocation2 + $0xac] sm:$0xf]
        %v5165 = vld [vmem:[#allocation2 + $0xb0] sm:$0x1]
        %v5166 = vld [vmem:[#allocation2 + $0xb4] sm:$0xf]
        %v5167 = vld [vmem:[#allocation2 + $0xb8] sm:$0xf]
        %v5168 = vld [vmem:[#allocation2 + $0xbc] sm:$0x1]
        %v5217 = vunpack.c.l.b16 %v5121
        %v5218 = vunpack.c.l.b16 %v5122
        %v5219 = vunpack.c.l.b16 %v5123
        %v5220 = vunpack.c.l.b16 %v5124
        %v5221 = vunpack.c.l.b16 %v5125
        %v5222 = vunpack.c.l.b16 %v5126
        %v5223 = vunpack.c.l.b16 %v5127
        %v5224 = vunpack.c.l.b16 %v5128
        %v5225 = vunpack.c.l.b16 %v5129
        %v5226 = vunpack.c.l.b16 %v5130
        %v5227 = vunpack.c.l.b16 %v5131
        %v5228 = vunpack.c.l.b16 %v5132
        %v5229 = vunpack.c.l.b16 %v5133
        %v5230 = vunpack.c.l.b16 %v5134
        %v5231 = vunpack.c.l.b16 %v5135
        %v5232 = vunpack.c.l.b16 %v5136
        %v5233 = vunpack.c.l.b16 %v5137
        %v5234 = vunpack.c.l.b16 %v5138
        %v5235 = vunpack.c.l.b16 %v5139
        %v5236 = vunpack.c.l.b16 %v5140
        %v5237 = vunpack.c.l.b16 %v5141
        %v5238 = vunpack.c.l.b16 %v5142
        %v5239 = vunpack.c.l.b16 %v5143
        %v5240 = vunpack.c.l.b16 %v5144
        %v5241 = vunpack.c.l.b16 %v5145
        %v5242 = vunpack.c.l.b16 %v5146
        %v5243 = vunpack.c.l.b16 %v5147
        %v5244 = vunpack.c.l.b16 %v5148
        %v5245 = vunpack.c.l.b16 %v5149
        %v5246 = vunpack.c.l.b16 %v5150
        %v5247 = vunpack.c.l.b16 %v5151
        %v5248 = vunpack.c.l.b16 %v5152
        %v5249 = vunpack.c.l.b16 %v5153
        %v5250 = vunpack.c.l.b16 %v5154
        %v5251 = vunpack.c.l.b16 %v5155
        %v5252 = vunpack.c.l.b16 %v5156
        %v5253 = vunpack.c.l.b16 %v5157
        %v5254 = vunpack.c.l.b16 %v5158
        %v5255 = vunpack.c.l.b16 %v5159
        %v5256 = vunpack.c.l.b16 %v5160
        %v5257 = vunpack.c.l.b16 %v5161
        %v5258 = vunpack.c.l.b16 %v5162
        %v5259 = vunpack.c.l.b16 %v5163
        %v5260 = vunpack.c.l.b16 %v5164
        %v5261 = vunpack.c.l.b16 %v5165
        %v5262 = vunpack.c.l.b16 %v5166
        %v5263 = vunpack.c.l.b16 %v5167
        %v5264 = vunpack.c.l.b16 %v5168
        %v5265 = vpack.c.b16 %v5218, %v5217
        %v5266 = vpack.c.b16 %v5219, %v5219
        %v5267 = vpack.c.b16 %v5221, %v5220
        %v5268 = vpack.c.b16 %v5222, %v5222
        %v5269 = vpack.c.b16 %v5224, %v5223
        %v5270 = vpack.c.b16 %v5225, %v5225
        %v5271 = vpack.c.b16 %v5227, %v5226
        %v5272 = vpack.c.b16 %v5228, %v5228
        %v5273 = vpack.c.b16 %v5230, %v5229
        %v5274 = vpack.c.b16 %v5231, %v5231
        %v5275 = vpack.c.b16 %v5233, %v5232
        %v5276 = vpack.c.b16 %v5234, %v5234
        %v5277 = vpack.c.b16 %v5236, %v5235
        %v5278 = vpack.c.b16 %v5237, %v5237
        %v5279 = vpack.c.b16 %v5239, %v5238
        %v5280 = vpack.c.b16 %v5240, %v5240
        %v5281 = vpack.c.b16 %v5242, %v5241
        %v5282 = vpack.c.b16 %v5243, %v5243
        %v5283 = vpack.c.b16 %v5245, %v5244
        %v5284 = vpack.c.b16 %v5246, %v5246
        %v5285 = vpack.c.b16 %v5248, %v5247
        %v5286 = vpack.c.b16 %v5249, %v5249
        %v5287 = vpack.c.b16 %v5251, %v5250
        %v5288 = vpack.c.b16 %v5252, %v5252
        %v5289 = vpack.c.b16 %v5254, %v5253
        %v5290 = vpack.c.b16 %v5255, %v5255
        %v5291 = vpack.c.b16 %v5257, %v5256
        %v5292 = vpack.c.b16 %v5258, %v5258
        %v5293 = vpack.c.b16 %v5260, %v5259
        %v5294 = vpack.c.b16 %v5261, %v5261
        %v5295 = vpack.c.b16 %v5263, %v5262
        %v5296 = vpack.c.b16 %v5264, %v5264
        %v5298 = vshrl.u32 %v5265, 16
        %v5300 = vshll.u32 %v5265, 16
        %v5302 = vrot.slane %v5300, 1
        %v5303 = vor.u32 %v5298, %v5302
        %v5305 = vshll.u32 %v5266, 16
        %v5307 = vrot.slane %v5305, 1
        %v5308 = vsel %vm1544, %v5303, %v5307
        %v5310 = vshrl.u32 %v5267, 16
        %v5312 = vshll.u32 %v5267, 16
        %v5314 = vrot.slane %v5312, 1
        %v5315 = vor.u32 %v5310, %v5314
        %v5317 = vshll.u32 %v5268, 16
        %v5319 = vrot.slane %v5317, 1
        %v5320 = vsel %vm1544, %v5315, %v5319
        %v5322 = vshrl.u32 %v5269, 16
        %v5324 = vshll.u32 %v5269, 16
        %v5326 = vrot.slane %v5324, 1
        %v5327 = vor.u32 %v5322, %v5326
        %v5329 = vshll.u32 %v5270, 16
        %v5331 = vrot.slane %v5329, 1
        %v5332 = vsel %vm1544, %v5327, %v5331
        %v5334 = vshrl.u32 %v5271, 16
        %v5336 = vshll.u32 %v5271, 16
        %v5338 = vrot.slane %v5336, 1
        %v5339 = vor.u32 %v5334, %v5338
        %v5341 = vshll.u32 %v5272, 16
        %v5343 = vrot.slane %v5341, 1
        %v5344 = vsel %vm1544, %v5339, %v5343
        %v5346 = vshrl.u32 %v5273, 16
        %v5348 = vshll.u32 %v5273, 16
        %v5350 = vrot.slane %v5348, 1
        %v5351 = vor.u32 %v5346, %v5350
        %v5353 = vshll.u32 %v5274, 16
        %v5355 = vrot.slane %v5353, 1
        %v5356 = vsel %vm1544, %v5351, %v5355
        %v5358 = vshrl.u32 %v5275, 16
        %v5360 = vshll.u32 %v5275, 16
        %v5362 = vrot.slane %v5360, 1
        %v5363 = vor.u32 %v5358, %v5362
        %v5365 = vshll.u32 %v5276, 16
        %v5367 = vrot.slane %v5365, 1
        %v5368 = vsel %vm1544, %v5363, %v5367
        %v5370 = vshrl.u32 %v5277, 16
        %v5372 = vshll.u32 %v5277, 16
        %v5374 = vrot.slane %v5372, 1
        %v5375 = vor.u32 %v5370, %v5374
        %v5377 = vshll.u32 %v5278, 16
        %v5379 = vrot.slane %v5377, 1
        %v5380 = vsel %vm1544, %v5375, %v5379
        %v5382 = vshrl.u32 %v5279, 16
        %v5384 = vshll.u32 %v5279, 16
        %v5386 = vrot.slane %v5384, 1
        %v5387 = vor.u32 %v5382, %v5386
        %v5389 = vshll.u32 %v5280, 16
        %v5391 = vrot.slane %v5389, 1
        %v5392 = vsel %vm1544, %v5387, %v5391
        %v5394 = vshrl.u32 %v5281, 16
        %v5396 = vshll.u32 %v5281, 16
        %v5398 = vrot.slane %v5396, 1
        %v5399 = vor.u32 %v5394, %v5398
        %v5401 = vshll.u32 %v5282, 16
        %v5403 = vrot.slane %v5401, 1
        %v5404 = vsel %vm1544, %v5399, %v5403
        %v5406 = vshrl.u32 %v5283, 16
        %v5408 = vshll.u32 %v5283, 16
        %v5410 = vrot.slane %v5408, 1
        %v5411 = vor.u32 %v5406, %v5410
        %v5413 = vshll.u32 %v5284, 16
        %v5415 = vrot.slane %v5413, 1
        %v5416 = vsel %vm1544, %v5411, %v5415
        %v5418 = vshrl.u32 %v5285, 16
        %v5420 = vshll.u32 %v5285, 16
        %v5422 = vrot.slane %v5420, 1
        %v5423 = vor.u32 %v5418, %v5422
        %v5425 = vshll.u32 %v5286, 16
        %v5427 = vrot.slane %v5425, 1
        %v5428 = vsel %vm1544, %v5423, %v5427
        %v5430 = vshrl.u32 %v5287, 16
        %v5432 = vshll.u32 %v5287, 16
        %v5434 = vrot.slane %v5432, 1
        %v5435 = vor.u32 %v5430, %v5434
        %v5437 = vshll.u32 %v5288, 16
        %v5439 = vrot.slane %v5437, 1
        %v5440 = vsel %vm1544, %v5435, %v5439
        %v5442 = vshrl.u32 %v5289, 16
        %v5444 = vshll.u32 %v5289, 16
        %v5446 = vrot.slane %v5444, 1
        %v5447 = vor.u32 %v5442, %v5446
        %v5449 = vshll.u32 %v5290, 16
        %v5451 = vrot.slane %v5449, 1
        %v5452 = vsel %vm1544, %v5447, %v5451
        %v5454 = vshrl.u32 %v5291, 16
        %v5456 = vshll.u32 %v5291, 16
        %v5458 = vrot.slane %v5456, 1
        %v5459 = vor.u32 %v5454, %v5458
        %v5461 = vshll.u32 %v5292, 16
        %v5463 = vrot.slane %v5461, 1
        %v5464 = vsel %vm1544, %v5459, %v5463
        %v5466 = vshrl.u32 %v5293, 16
        %v5468 = vshll.u32 %v5293, 16
        %v5470 = vrot.slane %v5468, 1
        %v5471 = vor.u32 %v5466, %v5470
        %v5473 = vshll.u32 %v5294, 16
        %v5475 = vrot.slane %v5473, 1
        %v5476 = vsel %vm1544, %v5471, %v5475
        %v5478 = vshrl.u32 %v5295, 16
        %v5480 = vshll.u32 %v5295, 16
        %v5482 = vrot.slane %v5480, 1
        %v5483 = vor.u32 %v5478, %v5482
        %v5485 = vshll.u32 %v5296, 16
        %v5487 = vrot.slane %v5485, 1
        %v5488 = vsel %vm1544, %v5483, %v5487
        %5489 = vrot.lane.b32.xlu0 %v5308, 8
        %v5490 = vpop.permute.xlu0 %5489
        %5491 = vrot.lane.b32.xlu0 %v5320, 8
        %v5492 = vpop.permute.xlu0 %5491
        %5493 = vrot.lane.b32.xlu0 %v5332, 8
        %v5494 = vpop.permute.xlu0 %5493
        %5495 = vrot.lane.b32.xlu0 %v5344, 8
        %v5496 = vpop.permute.xlu0 %5495
        %5497 = vrot.lane.b32.xlu0 %v5356, 8
        %v5498 = vpop.permute.xlu0 %5497
        %5499 = vrot.lane.b32.xlu0 %v5368, 8
        %v5500 = vpop.permute.xlu0 %5499
        %5501 = vrot.lane.b32.xlu0 %v5380, 8
        %v5502 = vpop.permute.xlu0 %5501
        %5503 = vrot.lane.b32.xlu0 %v5392, 8
        %v5504 = vpop.permute.xlu0 %5503
        %5505 = vrot.lane.b32.xlu0 %v5404, 8
        %v5506 = vpop.permute.xlu0 %5505
        %5507 = vrot.lane.b32.xlu0 %v5416, 8
        %v5508 = vpop.permute.xlu0 %5507
        %5509 = vrot.lane.b32.xlu0 %v5428, 8
        %v5510 = vpop.permute.xlu0 %5509
        %5511 = vrot.lane.b32.xlu0 %v5440, 8
        %v5512 = vpop.permute.xlu0 %5511
        %5513 = vrot.lane.b32.xlu0 %v5452, 8
        %v5514 = vpop.permute.xlu0 %5513
        %5515 = vrot.lane.b32.xlu0 %v5464, 8
        %v5516 = vpop.permute.xlu0 %5515
        %5517 = vrot.lane.b32.xlu0 %v5476, 8
        %v5518 = vpop.permute.xlu0 %5517
        %5519 = vrot.lane.b32.xlu0 %v5488, 8
        %v5520 = vpop.permute.xlu0 %5519
        %vm5537 = vcmask 130112
        %5538 = vst.msk [vmem:[#allocation3] sm:$0xff] %vm5537, %v5490
        %5539 = vst.msk [vmem:[#allocation3 + $0x8] sm:$0xff] %vm5537, %v5492
        %5540 = vst.msk [vmem:[#allocation3 + $0x10] sm:$0xff] %vm5537, %v5494
        %5541 = vst.msk [vmem:[#allocation3 + $0x18] sm:$0xff] %vm5537, %v5496
        %5542 = vst.msk [vmem:[#allocation3 + $0x20] sm:$0xff] %vm5537, %v5498
        %5543 = vst.msk [vmem:[#allocation3 + $0x28] sm:$0xff] %vm5537, %v5500
        %5544 = vst.msk [vmem:[#allocation3 + $0x30] sm:$0xff] %vm5537, %v5502
        %5545 = vst.msk [vmem:[#allocation3 + $0x38] sm:$0xff] %vm5537, %v5504
        %5546 = vst.msk [vmem:[#allocation3 + $0x40] sm:$0xff] %vm5537, %v5506
        %5547 = vst.msk [vmem:[#allocation3 + $0x48] sm:$0xff] %vm5537, %v5508
        %5548 = vst.msk [vmem:[#allocation3 + $0x50] sm:$0xff] %vm5537, %v5510
        %5549 = vst.msk [vmem:[#allocation3 + $0x58] sm:$0xff] %vm5537, %v5512
        %5550 = vst.msk [vmem:[#allocation3 + $0x60] sm:$0xff] %vm5537, %v5514
        %5551 = vst.msk [vmem:[#allocation3 + $0x68] sm:$0xff] %vm5537, %v5516
        %5552 = vst.msk [vmem:[#allocation3 + $0x70] sm:$0xff] %vm5537, %v5518
        %5553 = vst.msk [vmem:[#allocation3 + $0x78] sm:$0xff] %vm5537, %v5520
        %v5554 = vld [vmem:[#allocation2] sm:$0xe]
        %v5555 = vld [vmem:[#allocation2 + $0x4] sm:$0xf]
        %v5556 = vld [vmem:[#allocation2 + $0x8] sm:$0x1]
        %v5557 = vld [vmem:[#allocation2 + $0xc] sm:$0xe]
        %v5558 = vld [vmem:[#allocation2 + $0x10] sm:$0xf]
        %v5559 = vld [vmem:[#allocation2 + $0x14] sm:$0x1]
        %v5560 = vld [vmem:[#allocation2 + $0x18] sm:$0xe]
        %v5561 = vld [vmem:[#allocation2 + $0x1c] sm:$0xf]
        %v5562 = vld [vmem:[#allocation2 + $0x20] sm:$0x1]
        %v5563 = vld [vmem:[#allocation2 + $0x24] sm:$0xe]
        %v5564 = vld [vmem:[#allocation2 + $0x28] sm:$0xf]
        %v5565 = vld [vmem:[#allocation2 + $0x2c] sm:$0x1]
        %v5566 = vld [vmem:[#allocation2 + $0x30] sm:$0xe]
        %v5567 = vld [vmem:[#allocation2 + $0x34] sm:$0xf]
        %v5568 = vld [vmem:[#allocation2 + $0x38] sm:$0x1]
        %v5569 = vld [vmem:[#allocation2 + $0x3c] sm:$0xe]
        %v5570 = vld [vmem:[#allocation2 + $0x40] sm:$0xf]
        %v5571 = vld [vmem:[#allocation2 + $0x44] sm:$0x1]
        %v5572 = vld [vmem:[#allocation2 + $0x48] sm:$0xe]
        %v5573 = vld [vmem:[#allocation2 + $0x4c] sm:$0xf]
        %v5574 = vld [vmem:[#allocation2 + $0x50] sm:$0x1]
        %v5575 = vld [vmem:[#allocation2 + $0x54] sm:$0xe]
        %v5576 = vld [vmem:[#allocation2 + $0x58] sm:$0xf]
        %v5577 = vld [vmem:[#allocation2 + $0x5c] sm:$0x1]
        %v5578 = vld [vmem:[#allocation2 + $0x60] sm:$0xe]
        %v5579 = vld [vmem:[#allocation2 + $0x64] sm:$0xf]
        %v5580 = vld [vmem:[#allocation2 + $0x68] sm:$0x1]
        %v5581 = vld [vmem:[#allocation2 + $0x6c] sm:$0xe]
        %v5582 = vld [vmem:[#allocation2 + $0x70] sm:$0xf]
        %v5583 = vld [vmem:[#allocation2 + $0x74] sm:$0x1]
        %v5584 = vld [vmem:[#allocation2 + $0x78] sm:$0xe]
        %v5585 = vld [vmem:[#allocation2 + $0x7c] sm:$0xf]
        %v5586 = vld [vmem:[#allocation2 + $0x80] sm:$0x1]
        %v5587 = vld [vmem:[#allocation2 + $0x84] sm:$0xe]
        %v5588 = vld [vmem:[#allocation2 + $0x88] sm:$0xf]
        %v5589 = vld [vmem:[#allocation2 + $0x8c] sm:$0x1]
        %v5590 = vld [vmem:[#allocation2 + $0x90] sm:$0xe]
        %v5591 = vld [vmem:[#allocation2 + $0x94] sm:$0xf]
        %v5592 = vld [vmem:[#allocation2 + $0x98] sm:$0x1]
        %v5593 = vld [vmem:[#allocation2 + $0x9c] sm:$0xe]
        %v5594 = vld [vmem:[#allocation2 + $0xa0] sm:$0xf]
        %v5595 = vld [vmem:[#allocation2 + $0xa4] sm:$0x1]
        %v5596 = vld [vmem:[#allocation2 + $0xa8] sm:$0xe]
        %v5597 = vld [vmem:[#allocation2 + $0xac] sm:$0xf]
        %v5598 = vld [vmem:[#allocation2 + $0xb0] sm:$0x1]
        %v5599 = vld [vmem:[#allocation2 + $0xb4] sm:$0xe]
        %v5600 = vld [vmem:[#allocation2 + $0xb8] sm:$0xf]
        %v5601 = vld [vmem:[#allocation2 + $0xbc] sm:$0x1]
        %v5650 = vunpack.c.l.b16 %v5554
        %v5651 = vunpack.c.l.b16 %v5555
        %v5652 = vunpack.c.l.b16 %v5556
        %v5653 = vunpack.c.l.b16 %v5557
        %v5654 = vunpack.c.l.b16 %v5558
        %v5655 = vunpack.c.l.b16 %v5559
        %v5656 = vunpack.c.l.b16 %v5560
        %v5657 = vunpack.c.l.b16 %v5561
        %v5658 = vunpack.c.l.b16 %v5562
        %v5659 = vunpack.c.l.b16 %v5563
        %v5660 = vunpack.c.l.b16 %v5564
        %v5661 = vunpack.c.l.b16 %v5565
        %v5662 = vunpack.c.l.b16 %v5566
        %v5663 = vunpack.c.l.b16 %v5567
        %v5664 = vunpack.c.l.b16 %v5568
        %v5665 = vunpack.c.l.b16 %v5569
        %v5666 = vunpack.c.l.b16 %v5570
        %v5667 = vunpack.c.l.b16 %v5571
        %v5668 = vunpack.c.l.b16 %v5572
        %v5669 = vunpack.c.l.b16 %v5573
        %v5670 = vunpack.c.l.b16 %v5574
        %v5671 = vunpack.c.l.b16 %v5575
        %v5672 = vunpack.c.l.b16 %v5576
        %v5673 = vunpack.c.l.b16 %v5577
        %v5674 = vunpack.c.l.b16 %v5578
        %v5675 = vunpack.c.l.b16 %v5579
        %v5676 = vunpack.c.l.b16 %v5580
        %v5677 = vunpack.c.l.b16 %v5581
        %v5678 = vunpack.c.l.b16 %v5582
        %v5679 = vunpack.c.l.b16 %v5583
        %v5680 = vunpack.c.l.b16 %v5584
        %v5681 = vunpack.c.l.b16 %v5585
        %v5682 = vunpack.c.l.b16 %v5586
        %v5683 = vunpack.c.l.b16 %v5587
        %v5684 = vunpack.c.l.b16 %v5588
        %v5685 = vunpack.c.l.b16 %v5589
        %v5686 = vunpack.c.l.b16 %v5590
        %v5687 = vunpack.c.l.b16 %v5591
        %v5688 = vunpack.c.l.b16 %v5592
        %v5689 = vunpack.c.l.b16 %v5593
        %v5690 = vunpack.c.l.b16 %v5594
        %v5691 = vunpack.c.l.b16 %v5595
        %v5692 = vunpack.c.l.b16 %v5596
        %v5693 = vunpack.c.l.b16 %v5597
        %v5694 = vunpack.c.l.b16 %v5598
        %v5695 = vunpack.c.l.b16 %v5599
        %v5696 = vunpack.c.l.b16 %v5600
        %v5697 = vunpack.c.l.b16 %v5601
        %v5698 = vpack.c.b16 %v5651, %v5650
        %v5699 = vpack.c.b16 %v5652, %v5652
        %v5700 = vpack.c.b16 %v5654, %v5653
        %v5701 = vpack.c.b16 %v5655, %v5655
        %v5702 = vpack.c.b16 %v5657, %v5656
        %v5703 = vpack.c.b16 %v5658, %v5658
        %v5704 = vpack.c.b16 %v5660, %v5659
        %v5705 = vpack.c.b16 %v5661, %v5661
        %v5706 = vpack.c.b16 %v5663, %v5662
        %v5707 = vpack.c.b16 %v5664, %v5664
        %v5708 = vpack.c.b16 %v5666, %v5665
        %v5709 = vpack.c.b16 %v5667, %v5667
        %v5710 = vpack.c.b16 %v5669, %v5668
        %v5711 = vpack.c.b16 %v5670, %v5670
        %v5712 = vpack.c.b16 %v5672, %v5671
        %v5713 = vpack.c.b16 %v5673, %v5673
        %v5714 = vpack.c.b16 %v5675, %v5674
        %v5715 = vpack.c.b16 %v5676, %v5676
        %v5716 = vpack.c.b16 %v5678, %v5677
        %v5717 = vpack.c.b16 %v5679, %v5679
        %v5718 = vpack.c.b16 %v5681, %v5680
        %v5719 = vpack.c.b16 %v5682, %v5682
        %v5720 = vpack.c.b16 %v5684, %v5683
        %v5721 = vpack.c.b16 %v5685, %v5685
        %v5722 = vpack.c.b16 %v5687, %v5686
        %v5723 = vpack.c.b16 %v5688, %v5688
        %v5724 = vpack.c.b16 %v5690, %v5689
        %v5725 = vpack.c.b16 %v5691, %v5691
        %v5726 = vpack.c.b16 %v5693, %v5692
        %v5727 = vpack.c.b16 %v5694, %v5694
        %v5728 = vpack.c.b16 %v5696, %v5695
        %v5729 = vpack.c.b16 %v5697, %v5697
        %v5730 = vrot.slane %v5698, 1
        %v5731 = vrot.slane %v5699, 1
        %v5732 = vsel %vm1978, %v5730, %v5731
        %v5733 = vrot.slane %v5700, 1
        %v5734 = vrot.slane %v5701, 1
        %v5735 = vsel %vm1978, %v5733, %v5734
        %v5736 = vrot.slane %v5702, 1
        %v5737 = vrot.slane %v5703, 1
        %v5738 = vsel %vm1978, %v5736, %v5737
        %v5739 = vrot.slane %v5704, 1
        %v5740 = vrot.slane %v5705, 1
        %v5741 = vsel %vm1978, %v5739, %v5740
        %v5742 = vrot.slane %v5706, 1
        %v5743 = vrot.slane %v5707, 1
        %v5744 = vsel %vm1978, %v5742, %v5743
        %v5745 = vrot.slane %v5708, 1
        %v5746 = vrot.slane %v5709, 1
        %v5747 = vsel %vm1978, %v5745, %v5746
        %v5748 = vrot.slane %v5710, 1
        %v5749 = vrot.slane %v5711, 1
        %v5750 = vsel %vm1978, %v5748, %v5749
        %v5751 = vrot.slane %v5712, 1
        %v5752 = vrot.slane %v5713, 1
        %v5753 = vsel %vm1978, %v5751, %v5752
        %v5754 = vrot.slane %v5714, 1
        %v5755 = vrot.slane %v5715, 1
        %v5756 = vsel %vm1978, %v5754, %v5755
        %v5757 = vrot.slane %v5716, 1
        %v5758 = vrot.slane %v5717, 1
        %v5759 = vsel %vm1978, %v5757, %v5758
        %v5760 = vrot.slane %v5718, 1
        %v5761 = vrot.slane %v5719, 1
        %v5762 = vsel %vm1978, %v5760, %v5761
        %v5763 = vrot.slane %v5720, 1
        %v5764 = vrot.slane %v5721, 1
        %v5765 = vsel %vm1978, %v5763, %v5764
        %v5766 = vrot.slane %v5722, 1
        %v5767 = vrot.slane %v5723, 1
        %v5768 = vsel %vm1978, %v5766, %v5767
        %v5769 = vrot.slane %v5724, 1
        %v5770 = vrot.slane %v5725, 1
        %v5771 = vsel %vm1978, %v5769, %v5770
        %v5772 = vrot.slane %v5726, 1
        %v5773 = vrot.slane %v5727, 1
        %v5774 = vsel %vm1978, %v5772, %v5773
        %v5775 = vrot.slane %v5728, 1
        %v5776 = vrot.slane %v5729, 1
        %v5777 = vsel %vm1978, %v5775, %v5776
        %5778 = vrot.lane.b32.xlu0 %v5732, 16
        %v5779 = vpop.permute.xlu0 %5778
        %5780 = vrot.lane.b32.xlu0 %v5735, 16
        %v5781 = vpop.permute.xlu0 %5780
        %5782 = vrot.lane.b32.xlu0 %v5738, 16
        %v5783 = vpop.permute.xlu0 %5782
        %5784 = vrot.lane.b32.xlu0 %v5741, 16
        %v5785 = vpop.permute.xlu0 %5784
        %5786 = vrot.lane.b32.xlu0 %v5744, 16
        %v5787 = vpop.permute.xlu0 %5786
        %5788 = vrot.lane.b32.xlu0 %v5747, 16
        %v5789 = vpop.permute.xlu0 %5788
        %5790 = vrot.lane.b32.xlu0 %v5750, 16
        %v5791 = vpop.permute.xlu0 %5790
        %5792 = vrot.lane.b32.xlu0 %v5753, 16
        %v5793 = vpop.permute.xlu0 %5792
        %5794 = vrot.lane.b32.xlu0 %v5756, 16
        %v5795 = vpop.permute.xlu0 %5794
        %5796 = vrot.lane.b32.xlu0 %v5759, 16
        %v5797 = vpop.permute.xlu0 %5796
        %5798 = vrot.lane.b32.xlu0 %v5762, 16
        %v5799 = vpop.permute.xlu0 %5798
        %5800 = vrot.lane.b32.xlu0 %v5765, 16
        %v5801 = vpop.permute.xlu0 %5800
        %5802 = vrot.lane.b32.xlu0 %v5768, 16
        %v5803 = vpop.permute.xlu0 %5802
        %5804 = vrot.lane.b32.xlu0 %v5771, 16
        %v5805 = vpop.permute.xlu0 %5804
        %5806 = vrot.lane.b32.xlu0 %v5774, 16
        %v5807 = vpop.permute.xlu0 %5806
        %5808 = vrot.lane.b32.xlu0 %v5777, 16
        %v5809 = vpop.permute.xlu0 %5808
        %vm5826 = vcmask 195712
        %5827 = vst.msk [vmem:[#allocation3] sm:$0xff] %vm5826, %v5779
        %5828 = vst.msk [vmem:[#allocation3 + $0x8] sm:$0xff] %vm5826, %v5781
        %5829 = vst.msk [vmem:[#allocation3 + $0x10] sm:$0xff] %vm5826, %v5783
        %5830 = vst.msk [vmem:[#allocation3 + $0x18] sm:$0xff] %vm5826, %v5785
        %5831 = vst.msk [vmem:[#allocation3 + $0x20] sm:$0xff] %vm5826, %v5787
        %5832 = vst.msk [vmem:[#allocation3 + $0x28] sm:$0xff] %vm5826, %v5789
        %5833 = vst.msk [vmem:[#allocation3 + $0x30] sm:$0xff] %vm5826, %v5791
        %5834 = vst.msk [vmem:[#allocation3 + $0x38] sm:$0xff] %vm5826, %v5793
        %5835 = vst.msk [vmem:[#allocation3 + $0x40] sm:$0xff] %vm5826, %v5795
        %5836 = vst.msk [vmem:[#allocation3 + $0x48] sm:$0xff] %vm5826, %v5797
        %5837 = vst.msk [vmem:[#allocation3 + $0x50] sm:$0xff] %vm5826, %v5799
        %5838 = vst.msk [vmem:[#allocation3 + $0x58] sm:$0xff] %vm5826, %v5801
        %5839 = vst.msk [vmem:[#allocation3 + $0x60] sm:$0xff] %vm5826, %v5803
        %5840 = vst.msk [vmem:[#allocation3 + $0x68] sm:$0xff] %vm5826, %v5805
        %5841 = vst.msk [vmem:[#allocation3 + $0x70] sm:$0xff] %vm5826, %v5807
        %5842 = vst.msk [vmem:[#allocation3 + $0x78] sm:$0xff] %vm5826, %v5809
        %v5843 = vld [vmem:[%s1106] sm:$0xf]
        %v5844 = vld [vmem:[%s1106 + $0x4] sm:$0xf]
        %v5845 = vld [vmem:[%s1106 + $0xc] sm:$0xf]
        %v5846 = vld [vmem:[%s1106 + $0x10] sm:$0xf]
        %v5847 = vld [vmem:[%s1106 + $0x18] sm:$0xf]
        %v5848 = vld [vmem:[%s1106 + $0x1c] sm:$0xf]
        %v5849 = vld [vmem:[%s1106 + $0x24] sm:$0xf]
        %v5850 = vld [vmem:[%s1106 + $0x28] sm:$0xf]
        %v5851 = vld [vmem:[%s1106 + $0x30] sm:$0xf]
        %v5852 = vld [vmem:[%s1106 + $0x34] sm:$0xf]
        %v5853 = vld [vmem:[%s1106 + $0x3c] sm:$0xf]
        %v5854 = vld [vmem:[%s1106 + $0x40] sm:$0xf]
        %v5855 = vld [vmem:[%s1106 + $0x48] sm:$0xf]
        %v5856 = vld [vmem:[%s1106 + $0x4c] sm:$0xf]
        %v5857 = vld [vmem:[%s1106 + $0x54] sm:$0xf]
        %v5858 = vld [vmem:[%s1106 + $0x58] sm:$0xf]
        %v5859 = vld [vmem:[%s1106 + $0x60] sm:$0xf]
        %v5860 = vld [vmem:[%s1106 + $0x64] sm:$0xf]
        %v5861 = vld [vmem:[%s1106 + $0x6c] sm:$0xf]
        %v5862 = vld [vmem:[%s1106 + $0x70] sm:$0xf]
        %v5863 = vld [vmem:[%s1106 + $0x78] sm:$0xf]
        %v5864 = vld [vmem:[%s1106 + $0x7c] sm:$0xf]
        %v5865 = vld [vmem:[%s1106 + $0x84] sm:$0xf]
        %v5866 = vld [vmem:[%s1106 + $0x88] sm:$0xf]
        %v5867 = vld [vmem:[%s1106 + $0x90] sm:$0xf]
        %v5868 = vld [vmem:[%s1106 + $0x94] sm:$0xf]
        %v5869 = vld [vmem:[%s1106 + $0x9c] sm:$0xf]
        %v5870 = vld [vmem:[%s1106 + $0xa0] sm:$0xf]
        %v5871 = vld [vmem:[%s1106 + $0xa8] sm:$0xf]
        %v5872 = vld [vmem:[%s1106 + $0xac] sm:$0xf]
        %v5873 = vld [vmem:[%s1106 + $0xb4] sm:$0xf]
        %v5874 = vld [vmem:[%s1106 + $0xb8] sm:$0xf]
        %v5907 = vunpack.c.l.b16 %v5843
        %v5908 = vunpack.c.l.b16 %v5844
        %v5909 = vunpack.c.l.b16 %v5845
        %v5910 = vunpack.c.l.b16 %v5846
        %v5911 = vunpack.c.l.b16 %v5847
        %v5912 = vunpack.c.l.b16 %v5848
        %v5913 = vunpack.c.l.b16 %v5849
        %v5914 = vunpack.c.l.b16 %v5850
        %v5915 = vunpack.c.l.b16 %v5851
        %v5916 = vunpack.c.l.b16 %v5852
        %v5917 = vunpack.c.l.b16 %v5853
        %v5918 = vunpack.c.l.b16 %v5854
        %v5919 = vunpack.c.l.b16 %v5855
        %v5920 = vunpack.c.l.b16 %v5856
        %v5921 = vunpack.c.l.b16 %v5857
        %v5922 = vunpack.c.l.b16 %v5858
        %v5923 = vunpack.c.l.b16 %v5859
        %v5924 = vunpack.c.l.b16 %v5860
        %v5925 = vunpack.c.l.b16 %v5861
        %v5926 = vunpack.c.l.b16 %v5862
        %v5927 = vunpack.c.l.b16 %v5863
        %v5928 = vunpack.c.l.b16 %v5864
        %v5929 = vunpack.c.l.b16 %v5865
        %v5930 = vunpack.c.l.b16 %v5866
        %v5931 = vunpack.c.l.b16 %v5867
        %v5932 = vunpack.c.l.b16 %v5868
        %v5933 = vunpack.c.l.b16 %v5869
        %v5934 = vunpack.c.l.b16 %v5870
        %v5935 = vunpack.c.l.b16 %v5871
        %v5936 = vunpack.c.l.b16 %v5872
        %v5937 = vunpack.c.l.b16 %v5873
        %v5938 = vunpack.c.l.b16 %v5874
        %v5939 = vpack.c.b16 %v5908, %v5907
        %v5940 = vpack.c.b16 %v5910, %v5909
        %v5941 = vpack.c.b16 %v5912, %v5911
        %v5942 = vpack.c.b16 %v5914, %v5913
        %v5943 = vpack.c.b16 %v5916, %v5915
        %v5944 = vpack.c.b16 %v5918, %v5917
        %v5945 = vpack.c.b16 %v5920, %v5919
        %v5946 = vpack.c.b16 %v5922, %v5921
        %v5947 = vpack.c.b16 %v5924, %v5923
        %v5948 = vpack.c.b16 %v5926, %v5925
        %v5949 = vpack.c.b16 %v5928, %v5927
        %v5950 = vpack.c.b16 %v5930, %v5929
        %v5951 = vpack.c.b16 %v5932, %v5931
        %v5952 = vpack.c.b16 %v5934, %v5933
        %v5953 = vpack.c.b16 %v5936, %v5935
        %v5954 = vpack.c.b16 %v5938, %v5937
        %5955 = vrot.lane.b32.xlu0 %v5939, 24
        %v5956 = vpop.permute.xlu0 %5955
        %5957 = vrot.lane.b32.xlu0 %v5940, 24
        %v5958 = vpop.permute.xlu0 %5957
        %5959 = vrot.lane.b32.xlu0 %v5941, 24
        %v5960 = vpop.permute.xlu0 %5959
        %5961 = vrot.lane.b32.xlu0 %v5942, 24
        %v5962 = vpop.permute.xlu0 %5961
        %5963 = vrot.lane.b32.xlu0 %v5943, 24
        %v5964 = vpop.permute.xlu0 %5963
        %5965 = vrot.lane.b32.xlu0 %v5944, 24
        %v5966 = vpop.permute.xlu0 %5965
        %5967 = vrot.lane.b32.xlu0 %v5945, 24
        %v5968 = vpop.permute.xlu0 %5967
        %5969 = vrot.lane.b32.xlu0 %v5946, 24
        %v5970 = vpop.permute.xlu0 %5969
        %5971 = vrot.lane.b32.xlu0 %v5947, 24
        %v5972 = vpop.permute.xlu0 %5971
        %5973 = vrot.lane.b32.xlu0 %v5948, 24
        %v5974 = vpop.permute.xlu0 %5973
        %5975 = vrot.lane.b32.xlu0 %v5949, 24
        %v5976 = vpop.permute.xlu0 %5975
        %5977 = vrot.lane.b32.xlu0 %v5950, 24
        %v5978 = vpop.permute.xlu0 %5977
        %5979 = vrot.lane.b32.xlu0 %v5951, 24
        %v5980 = vpop.permute.xlu0 %5979
        %5981 = vrot.lane.b32.xlu0 %v5952, 24
        %v5982 = vpop.permute.xlu0 %5981
        %5983 = vrot.lane.b32.xlu0 %v5953, 24
        %v5984 = vpop.permute.xlu0 %5983
        %5985 = vrot.lane.b32.xlu0 %v5954, 24
        %v5986 = vpop.permute.xlu0 %5985
        %vm6003 = vcmask 261312
        %6004 = vst.msk [vmem:[#allocation3] sm:$0xff] %vm6003, %v5956
        %6005 = vst.msk [vmem:[#allocation3 + $0x8] sm:$0xff] %vm6003, %v5958
        %6006 = vst.msk [vmem:[#allocation3 + $0x10] sm:$0xff] %vm6003, %v5960
        %6007 = vst.msk [vmem:[#allocation3 + $0x18] sm:$0xff] %vm6003, %v5962
        %6008 = vst.msk [vmem:[#allocation3 + $0x20] sm:$0xff] %vm6003, %v5964
        %6009 = vst.msk [vmem:[#allocation3 + $0x28] sm:$0xff] %vm6003, %v5966
        %6010 = vst.msk [vmem:[#allocation3 + $0x30] sm:$0xff] %vm6003, %v5968
        %6011 = vst.msk [vmem:[#allocation3 + $0x38] sm:$0xff] %vm6003, %v5970
        %6012 = vst.msk [vmem:[#allocation3 + $0x40] sm:$0xff] %vm6003, %v5972
        %6013 = vst.msk [vmem:[#allocation3 + $0x48] sm:$0xff] %vm6003, %v5974
        %6014 = vst.msk [vmem:[#allocation3 + $0x50] sm:$0xff] %vm6003, %v5976
        %6015 = vst.msk [vmem:[#allocation3 + $0x58] sm:$0xff] %vm6003, %v5978
        %6016 = vst.msk [vmem:[#allocation3 + $0x60] sm:$0xff] %vm6003, %v5980
        %6017 = vst.msk [vmem:[#allocation3 + $0x68] sm:$0xff] %vm6003, %v5982
        %6018 = vst.msk [vmem:[#allocation3 + $0x70] sm:$0xff] %vm6003, %v5984
        %6019 = vst.msk [vmem:[#allocation3 + $0x78] sm:$0xff] %vm6003, %v5986
        %v6020 = vld [vmem:[%s1106] sm:$0xf]
        %v6021 = vld [vmem:[%s1106 + $0x4] sm:$0xf]
        %v6022 = vld [vmem:[%s1106 + $0x8] sm:$0x1]
        %v6023 = vld [vmem:[%s1106 + $0xc] sm:$0xf]
        %v6024 = vld [vmem:[%s1106 + $0x10] sm:$0xf]
        %v6025 = vld [vmem:[%s1106 + $0x14] sm:$0x1]
        %v6026 = vld [vmem:[%s1106 + $0x18] sm:$0xf]
        %v6027 = vld [vmem:[%s1106 + $0x1c] sm:$0xf]
        %v6028 = vld [vmem:[%s1106 + $0x20] sm:$0x1]
        %v6029 = vld [vmem:[%s1106 + $0x24] sm:$0xf]
        %v6030 = vld [vmem:[%s1106 + $0x28] sm:$0xf]
        %v6031 = vld [vmem:[%s1106 + $0x2c] sm:$0x1]
        %v6032 = vld [vmem:[%s1106 + $0x30] sm:$0xf]
        %v6033 = vld [vmem:[%s1106 + $0x34] sm:$0xf]
        %v6034 = vld [vmem:[%s1106 + $0x38] sm:$0x1]
        %v6035 = vld [vmem:[%s1106 + $0x3c] sm:$0xf]
        %v6036 = vld [vmem:[%s1106 + $0x40] sm:$0xf]
        %v6037 = vld [vmem:[%s1106 + $0x44] sm:$0x1]
        %v6038 = vld [vmem:[%s1106 + $0x48] sm:$0xf]
        %v6039 = vld [vmem:[%s1106 + $0x4c] sm:$0xf]
        %v6040 = vld [vmem:[%s1106 + $0x50] sm:$0x1]
        %v6041 = vld [vmem:[%s1106 + $0x54] sm:$0xf]
        %v6042 = vld [vmem:[%s1106 + $0x58] sm:$0xf]
        %v6043 = vld [vmem:[%s1106 + $0x5c] sm:$0x1]
        %v6044 = vld [vmem:[%s1106 + $0x60] sm:$0xf]
        %v6045 = vld [vmem:[%s1106 + $0x64] sm:$0xf]
        %v6046 = vld [vmem:[%s1106 + $0x68] sm:$0x1]
        %v6047 = vld [vmem:[%s1106 + $0x6c] sm:$0xf]
        %v6048 = vld [vmem:[%s1106 + $0x70] sm:$0xf]
        %v6049 = vld [vmem:[%s1106 + $0x74] sm:$0x1]
        %v6050 = vld [vmem:[%s1106 + $0x78] sm:$0xf]
        %v6051 = vld [vmem:[%s1106 + $0x7c] sm:$0xf]
        %v6052 = vld [vmem:[%s1106 + $0x80] sm:$0x1]
        %v6053 = vld [vmem:[%s1106 + $0x84] sm:$0xf]
        %v6054 = vld [vmem:[%s1106 + $0x88] sm:$0xf]
        %v6055 = vld [vmem:[%s1106 + $0x8c] sm:$0x1]
        %v6056 = vld [vmem:[%s1106 + $0x90] sm:$0xf]
        %v6057 = vld [vmem:[%s1106 + $0x94] sm:$0xf]
        %v6058 = vld [vmem:[%s1106 + $0x98] sm:$0x1]
        %v6059 = vld [vmem:[%s1106 + $0x9c] sm:$0xf]
        %v6060 = vld [vmem:[%s1106 + $0xa0] sm:$0xf]
        %v6061 = vld [vmem:[%s1106 + $0xa4] sm:$0x1]
        %v6062 = vld [vmem:[%s1106 + $0xa8] sm:$0xf]
        %v6063 = vld [vmem:[%s1106 + $0xac] sm:$0xf]
        %v6064 = vld [vmem:[%s1106 + $0xb0] sm:$0x1]
        %v6065 = vld [vmem:[%s1106 + $0xb4] sm:$0xf]
        %v6066 = vld [vmem:[%s1106 + $0xb8] sm:$0xf]
        %v6067 = vld [vmem:[%s1106 + $0xbc] sm:$0x1]
        %v6116 = vunpack.c.l.b16 %v6020
        %v6117 = vunpack.c.l.b16 %v6021
        %v6118 = vunpack.c.l.b16 %v6022
        %v6119 = vunpack.c.l.b16 %v6023
        %v6120 = vunpack.c.l.b16 %v6024
        %v6121 = vunpack.c.l.b16 %v6025
        %v6122 = vunpack.c.l.b16 %v6026
        %v6123 = vunpack.c.l.b16 %v6027
        %v6124 = vunpack.c.l.b16 %v6028
        %v6125 = vunpack.c.l.b16 %v6029
        %v6126 = vunpack.c.l.b16 %v6030
        %v6127 = vunpack.c.l.b16 %v6031
        %v6128 = vunpack.c.l.b16 %v6032
        %v6129 = vunpack.c.l.b16 %v6033
        %v6130 = vunpack.c.l.b16 %v6034
        %v6131 = vunpack.c.l.b16 %v6035
        %v6132 = vunpack.c.l.b16 %v6036
        %v6133 = vunpack.c.l.b16 %v6037
        %v6134 = vunpack.c.l.b16 %v6038
        %v6135 = vunpack.c.l.b16 %v6039
        %v6136 = vunpack.c.l.b16 %v6040
        %v6137 = vunpack.c.l.b16 %v6041
        %v6138 = vunpack.c.l.b16 %v6042
        %v6139 = vunpack.c.l.b16 %v6043
        %v6140 = vunpack.c.l.b16 %v6044
        %v6141 = vunpack.c.l.b16 %v6045
        %v6142 = vunpack.c.l.b16 %v6046
        %v6143 = vunpack.c.l.b16 %v6047
        %v6144 = vunpack.c.l.b16 %v6048
        %v6145 = vunpack.c.l.b16 %v6049
        %v6146 = vunpack.c.l.b16 %v6050
        %v6147 = vunpack.c.l.b16 %v6051
        %v6148 = vunpack.c.l.b16 %v6052
        %v6149 = vunpack.c.l.b16 %v6053
        %v6150 = vunpack.c.l.b16 %v6054
        %v6151 = vunpack.c.l.b16 %v6055
        %v6152 = vunpack.c.l.b16 %v6056
        %v6153 = vunpack.c.l.b16 %v6057
        %v6154 = vunpack.c.l.b16 %v6058
        %v6155 = vunpack.c.l.b16 %v6059
        %v6156 = vunpack.c.l.b16 %v6060
        %v6157 = vunpack.c.l.b16 %v6061
        %v6158 = vunpack.c.l.b16 %v6062
        %v6159 = vunpack.c.l.b16 %v6063
        %v6160 = vunpack.c.l.b16 %v6064
        %v6161 = vunpack.c.l.b16 %v6065
        %v6162 = vunpack.c.l.b16 %v6066
        %v6163 = vunpack.c.l.b16 %v6067
        %v6164 = vpack.c.b16 %v6117, %v6116
        %v6165 = vpack.c.b16 %v6118, %v6118
        %v6166 = vpack.c.b16 %v6120, %v6119
        %v6167 = vpack.c.b16 %v6121, %v6121
        %v6168 = vpack.c.b16 %v6123, %v6122
        %v6169 = vpack.c.b16 %v6124, %v6124
        %v6170 = vpack.c.b16 %v6126, %v6125
        %v6171 = vpack.c.b16 %v6127, %v6127
        %v6172 = vpack.c.b16 %v6129, %v6128
        %v6173 = vpack.c.b16 %v6130, %v6130
        %v6174 = vpack.c.b16 %v6132, %v6131
        %v6175 = vpack.c.b16 %v6133, %v6133
        %v6176 = vpack.c.b16 %v6135, %v6134
        %v6177 = vpack.c.b16 %v6136, %v6136
        %v6178 = vpack.c.b16 %v6138, %v6137
        %v6179 = vpack.c.b16 %v6139, %v6139
        %v6180 = vpack.c.b16 %v6141, %v6140
        %v6181 = vpack.c.b16 %v6142, %v6142
        %v6182 = vpack.c.b16 %v6144, %v6143
        %v6183 = vpack.c.b16 %v6145, %v6145
        %v6184 = vpack.c.b16 %v6147, %v6146
        %v6185 = vpack.c.b16 %v6148, %v6148
        %v6186 = vpack.c.b16 %v6150, %v6149
        %v6187 = vpack.c.b16 %v6151, %v6151
        %v6188 = vpack.c.b16 %v6153, %v6152
        %v6189 = vpack.c.b16 %v6154, %v6154
        %v6190 = vpack.c.b16 %v6156, %v6155
        %v6191 = vpack.c.b16 %v6157, %v6157
        %v6192 = vpack.c.b16 %v6159, %v6158
        %v6193 = vpack.c.b16 %v6160, %v6160
        %v6194 = vpack.c.b16 %v6162, %v6161
        %v6195 = vpack.c.b16 %v6163, %v6163
        %v6197 = vshrl.u32 %v6164, 16
        %v6199 = vshll.u32 %v6164, 16
        %v6201 = vrot.slane %v6199, 1
        %v6202 = vor.u32 %v6197, %v6201
        %v6204 = vshll.u32 %v6165, 16
        %v6206 = vrot.slane %v6204, 1
        %v6207 = vsel %vm1544, %v6202, %v6206
        %v6209 = vshrl.u32 %v6166, 16
        %v6211 = vshll.u32 %v6166, 16
        %v6213 = vrot.slane %v6211, 1
        %v6214 = vor.u32 %v6209, %v6213
        %v6216 = vshll.u32 %v6167, 16
        %v6218 = vrot.slane %v6216, 1
        %v6219 = vsel %vm1544, %v6214, %v6218
        %v6221 = vshrl.u32 %v6168, 16
        %v6223 = vshll.u32 %v6168, 16
        %v6225 = vrot.slane %v6223, 1
        %v6226 = vor.u32 %v6221, %v6225
        %v6228 = vshll.u32 %v6169, 16
        %v6230 = vrot.slane %v6228, 1
        %v6231 = vsel %vm1544, %v6226, %v6230
        %v6233 = vshrl.u32 %v6170, 16
        %v6235 = vshll.u32 %v6170, 16
        %v6237 = vrot.slane %v6235, 1
        %v6238 = vor.u32 %v6233, %v6237
        %v6240 = vshll.u32 %v6171, 16
        %v6242 = vrot.slane %v6240, 1
        %v6243 = vsel %vm1544, %v6238, %v6242
        %v6245 = vshrl.u32 %v6172, 16
        %v6247 = vshll.u32 %v6172, 16
        %v6249 = vrot.slane %v6247, 1
        %v6250 = vor.u32 %v6245, %v6249
        %v6252 = vshll.u32 %v6173, 16
        %v6254 = vrot.slane %v6252, 1
        %v6255 = vsel %vm1544, %v6250, %v6254
        %v6257 = vshrl.u32 %v6174, 16
        %v6259 = vshll.u32 %v6174, 16
        %v6261 = vrot.slane %v6259, 1
        %v6262 = vor.u32 %v6257, %v6261
        %v6264 = vshll.u32 %v6175, 16
        %v6266 = vrot.slane %v6264, 1
        %v6267 = vsel %vm1544, %v6262, %v6266
        %v6269 = vshrl.u32 %v6176, 16
        %v6271 = vshll.u32 %v6176, 16
        %v6273 = vrot.slane %v6271, 1
        %v6274 = vor.u32 %v6269, %v6273
        %v6276 = vshll.u32 %v6177, 16
        %v6278 = vrot.slane %v6276, 1
        %v6279 = vsel %vm1544, %v6274, %v6278
        %v6281 = vshrl.u32 %v6178, 16
        %v6283 = vshll.u32 %v6178, 16
        %v6285 = vrot.slane %v6283, 1
        %v6286 = vor.u32 %v6281, %v6285
        %v6288 = vshll.u32 %v6179, 16
        %v6290 = vrot.slane %v6288, 1
        %v6291 = vsel %vm1544, %v6286, %v6290
        %v6293 = vshrl.u32 %v6180, 16
        %v6295 = vshll.u32 %v6180, 16
        %v6297 = vrot.slane %v6295, 1
        %v6298 = vor.u32 %v6293, %v6297
        %v6300 = vshll.u32 %v6181, 16
        %v6302 = vrot.slane %v6300, 1
        %v6303 = vsel %vm1544, %v6298, %v6302
        %v6305 = vshrl.u32 %v6182, 16
        %v6307 = vshll.u32 %v6182, 16
        %v6309 = vrot.slane %v6307, 1
        %v6310 = vor.u32 %v6305, %v6309
        %v6312 = vshll.u32 %v6183, 16
        %v6314 = vrot.slane %v6312, 1
        %v6315 = vsel %vm1544, %v6310, %v6314
        %v6317 = vshrl.u32 %v6184, 16
        %v6319 = vshll.u32 %v6184, 16
        %v6321 = vrot.slane %v6319, 1
        %v6322 = vor.u32 %v6317, %v6321
        %v6324 = vshll.u32 %v6185, 16
        %v6326 = vrot.slane %v6324, 1
        %v6327 = vsel %vm1544, %v6322, %v6326
        %v6329 = vshrl.u32 %v6186, 16
        %v6331 = vshll.u32 %v6186, 16
        %v6333 = vrot.slane %v6331, 1
        %v6334 = vor.u32 %v6329, %v6333
        %v6336 = vshll.u32 %v6187, 16
        %v6338 = vrot.slane %v6336, 1
        %v6339 = vsel %vm1544, %v6334, %v6338
        %v6341 = vshrl.u32 %v6188, 16
        %v6343 = vshll.u32 %v6188, 16
        %v6345 = vrot.slane %v6343, 1
        %v6346 = vor.u32 %v6341, %v6345
        %v6348 = vshll.u32 %v6189, 16
        %v6350 = vrot.slane %v6348, 1
        %v6351 = vsel %vm1544, %v6346, %v6350
        %v6353 = vshrl.u32 %v6190, 16
        %v6355 = vshll.u32 %v6190, 16
        %v6357 = vrot.slane %v6355, 1
        %v6358 = vor.u32 %v6353, %v6357
        %v6360 = vshll.u32 %v6191, 16
        %v6362 = vrot.slane %v6360, 1
        %v6363 = vsel %vm1544, %v6358, %v6362
        %v6365 = vshrl.u32 %v6192, 16
        %v6367 = vshll.u32 %v6192, 16
        %v6369 = vrot.slane %v6367, 1
        %v6370 = vor.u32 %v6365, %v6369
        %v6372 = vshll.u32 %v6193, 16
        %v6374 = vrot.slane %v6372, 1
        %v6375 = vsel %vm1544, %v6370, %v6374
        %v6377 = vshrl.u32 %v6194, 16
        %v6379 = vshll.u32 %v6194, 16
        %v6381 = vrot.slane %v6379, 1
        %v6382 = vor.u32 %v6377, %v6381
        %v6384 = vshll.u32 %v6195, 16
        %v6386 = vrot.slane %v6384, 1
        %v6387 = vsel %vm1544, %v6382, %v6386
        %6388 = vrot.lane.b32.xlu0 %v6207, 32
        %v6389 = vpop.permute.xlu0 %6388
        %6390 = vrot.lane.b32.xlu0 %v6219, 32
        %v6391 = vpop.permute.xlu0 %6390
        %6392 = vrot.lane.b32.xlu0 %v6231, 32
        %v6393 = vpop.permute.xlu0 %6392
        %6394 = vrot.lane.b32.xlu0 %v6243, 32
        %v6395 = vpop.permute.xlu0 %6394
        %6396 = vrot.lane.b32.xlu0 %v6255, 32
        %v6397 = vpop.permute.xlu0 %6396
        %6398 = vrot.lane.b32.xlu0 %v6267, 32
        %v6399 = vpop.permute.xlu0 %6398
        %6400 = vrot.lane.b32.xlu0 %v6279, 32
        %v6401 = vpop.permute.xlu0 %6400
        %6402 = vrot.lane.b32.xlu0 %v6291, 32
        %v6403 = vpop.permute.xlu0 %6402
        %6404 = vrot.lane.b32.xlu0 %v6303, 32
        %v6405 = vpop.permute.xlu0 %6404
        %6406 = vrot.lane.b32.xlu0 %v6315, 32
        %v6407 = vpop.permute.xlu0 %6406
        %6408 = vrot.lane.b32.xlu0 %v6327, 32
        %v6409 = vpop.permute.xlu0 %6408
        %6410 = vrot.lane.b32.xlu0 %v6339, 32
        %v6411 = vpop.permute.xlu0 %6410
        %6412 = vrot.lane.b32.xlu0 %v6351, 32
        %v6413 = vpop.permute.xlu0 %6412
        %6414 = vrot.lane.b32.xlu0 %v6363, 32
        %v6415 = vpop.permute.xlu0 %6414
        %6416 = vrot.lane.b32.xlu0 %v6375, 32
        %v6417 = vpop.permute.xlu0 %6416
        %6418 = vrot.lane.b32.xlu0 %v6387, 32
        %v6419 = vpop.permute.xlu0 %6418
        %vm6436 = vcmask 326912
        %6437 = vst.msk [vmem:[#allocation3] sm:$0xff] %vm6436, %v6389
        %6438 = vst.msk [vmem:[#allocation3 + $0x8] sm:$0xff] %vm6436, %v6391
        %6439 = vst.msk [vmem:[#allocation3 + $0x10] sm:$0xff] %vm6436, %v6393
        %6440 = vst.msk [vmem:[#allocation3 + $0x18] sm:$0xff] %vm6436, %v6395
        %6441 = vst.msk [vmem:[#allocation3 + $0x20] sm:$0xff] %vm6436, %v6397
        %6442 = vst.msk [vmem:[#allocation3 + $0x28] sm:$0xff] %vm6436, %v6399
        %6443 = vst.msk [vmem:[#allocation3 + $0x30] sm:$0xff] %vm6436, %v6401
        %6444 = vst.msk [vmem:[#allocation3 + $0x38] sm:$0xff] %vm6436, %v6403
        %6445 = vst.msk [vmem:[#allocation3 + $0x40] sm:$0xff] %vm6436, %v6405
        %6446 = vst.msk [vmem:[#allocation3 + $0x48] sm:$0xff] %vm6436, %v6407
        %6447 = vst.msk [vmem:[#allocation3 + $0x50] sm:$0xff] %vm6436, %v6409
        %6448 = vst.msk [vmem:[#allocation3 + $0x58] sm:$0xff] %vm6436, %v6411
        %6449 = vst.msk [vmem:[#allocation3 + $0x60] sm:$0xff] %vm6436, %v6413
        %6450 = vst.msk [vmem:[#allocation3 + $0x68] sm:$0xff] %vm6436, %v6415
        %6451 = vst.msk [vmem:[#allocation3 + $0x70] sm:$0xff] %vm6436, %v6417
        %6452 = vst.msk [vmem:[#allocation3 + $0x78] sm:$0xff] %vm6436, %v6419
        %v6453 = vld [vmem:[%s1106] sm:$0xe]
        %v6454 = vld [vmem:[%s1106 + $0x4] sm:$0xf]
        %v6455 = vld [vmem:[%s1106 + $0x8] sm:$0x1]
        %v6456 = vld [vmem:[%s1106 + $0xc] sm:$0xe]
        %v6457 = vld [vmem:[%s1106 + $0x10] sm:$0xf]
        %v6458 = vld [vmem:[%s1106 + $0x14] sm:$0x1]
        %v6459 = vld [vmem:[%s1106 + $0x18] sm:$0xe]
        %v6460 = vld [vmem:[%s1106 + $0x1c] sm:$0xf]
        %v6461 = vld [vmem:[%s1106 + $0x20] sm:$0x1]
        %v6462 = vld [vmem:[%s1106 + $0x24] sm:$0xe]
        %v6463 = vld [vmem:[%s1106 + $0x28] sm:$0xf]
        %v6464 = vld [vmem:[%s1106 + $0x2c] sm:$0x1]
        %v6465 = vld [vmem:[%s1106 + $0x30] sm:$0xe]
        %v6466 = vld [vmem:[%s1106 + $0x34] sm:$0xf]
        %v6467 = vld [vmem:[%s1106 + $0x38] sm:$0x1]
        %v6468 = vld [vmem:[%s1106 + $0x3c] sm:$0xe]
        %v6469 = vld [vmem:[%s1106 + $0x40] sm:$0xf]
        %v6470 = vld [vmem:[%s1106 + $0x44] sm:$0x1]
        %v6471 = vld [vmem:[%s1106 + $0x48] sm:$0xe]
        %v6472 = vld [vmem:[%s1106 + $0x4c] sm:$0xf]
        %v6473 = vld [vmem:[%s1106 + $0x50] sm:$0x1]
        %v6474 = vld [vmem:[%s1106 + $0x54] sm:$0xe]
        %v6475 = vld [vmem:[%s1106 + $0x58] sm:$0xf]
        %v6476 = vld [vmem:[%s1106 + $0x5c] sm:$0x1]
        %v6477 = vld [vmem:[%s1106 + $0x60] sm:$0xe]
        %v6478 = vld [vmem:[%s1106 + $0x64] sm:$0xf]
        %v6479 = vld [vmem:[%s1106 + $0x68] sm:$0x1]
        %v6480 = vld [vmem:[%s1106 + $0x6c] sm:$0xe]
        %v6481 = vld [vmem:[%s1106 + $0x70] sm:$0xf]
        %v6482 = vld [vmem:[%s1106 + $0x74] sm:$0x1]
        %v6483 = vld [vmem:[%s1106 + $0x78] sm:$0xe]
        %v6484 = vld [vmem:[%s1106 + $0x7c] sm:$0xf]
        %v6485 = vld [vmem:[%s1106 + $0x80] sm:$0x1]
        %v6486 = vld [vmem:[%s1106 + $0x84] sm:$0xe]
        %v6487 = vld [vmem:[%s1106 + $0x88] sm:$0xf]
        %v6488 = vld [vmem:[%s1106 + $0x8c] sm:$0x1]
        %v6489 = vld [vmem:[%s1106 + $0x90] sm:$0xe]
        %v6490 = vld [vmem:[%s1106 + $0x94] sm:$0xf]
        %v6491 = vld [vmem:[%s1106 + $0x98] sm:$0x1]
        %v6492 = vld [vmem:[%s1106 + $0x9c] sm:$0xe]
        %v6493 = vld [vmem:[%s1106 + $0xa0] sm:$0xf]
        %v6494 = vld [vmem:[%s1106 + $0xa4] sm:$0x1]
        %v6495 = vld [vmem:[%s1106 + $0xa8] sm:$0xe]
        %v6496 = vld [vmem:[%s1106 + $0xac] sm:$0xf]
        %v6497 = vld [vmem:[%s1106 + $0xb0] sm:$0x1]
        %v6498 = vld [vmem:[%s1106 + $0xb4] sm:$0xe]
        %v6499 = vld [vmem:[%s1106 + $0xb8] sm:$0xf]
        %v6500 = vld [vmem:[%s1106 + $0xbc] sm:$0x1]
        %v6549 = vunpack.c.l.b16 %v6453
        %v6550 = vunpack.c.l.b16 %v6454
        %v6551 = vunpack.c.l.b16 %v6455
        %v6552 = vunpack.c.l.b16 %v6456
        %v6553 = vunpack.c.l.b16 %v6457
        %v6554 = vunpack.c.l.b16 %v6458
        %v6555 = vunpack.c.l.b16 %v6459
        %v6556 = vunpack.c.l.b16 %v6460
        %v6557 = vunpack.c.l.b16 %v6461
        %v6558 = vunpack.c.l.b16 %v6462
        %v6559 = vunpack.c.l.b16 %v6463
        %v6560 = vunpack.c.l.b16 %v6464
        %v6561 = vunpack.c.l.b16 %v6465
        %v6562 = vunpack.c.l.b16 %v6466
        %v6563 = vunpack.c.l.b16 %v6467
        %v6564 = vunpack.c.l.b16 %v6468
        %v6565 = vunpack.c.l.b16 %v6469
        %v6566 = vunpack.c.l.b16 %v6470
        %v6567 = vunpack.c.l.b16 %v6471
        %v6568 = vunpack.c.l.b16 %v6472
        %v6569 = vunpack.c.l.b16 %v6473
        %v6570 = vunpack.c.l.b16 %v6474
        %v6571 = vunpack.c.l.b16 %v6475
        %v6572 = vunpack.c.l.b16 %v6476
        %v6573 = vunpack.c.l.b16 %v6477
        %v6574 = vunpack.c.l.b16 %v6478
        %v6575 = vunpack.c.l.b16 %v6479
        %v6576 = vunpack.c.l.b16 %v6480
        %v6577 = vunpack.c.l.b16 %v6481
        %v6578 = vunpack.c.l.b16 %v6482
        %v6579 = vunpack.c.l.b16 %v6483
        %v6580 = vunpack.c.l.b16 %v6484
        %v6581 = vunpack.c.l.b16 %v6485
        %v6582 = vunpack.c.l.b16 %v6486
        %v6583 = vunpack.c.l.b16 %v6487
        %v6584 = vunpack.c.l.b16 %v6488
        %v6585 = vunpack.c.l.b16 %v6489
        %v6586 = vunpack.c.l.b16 %v6490
        %v6587 = vunpack.c.l.b16 %v6491
        %v6588 = vunpack.c.l.b16 %v6492
        %v6589 = vunpack.c.l.b16 %v6493
        %v6590 = vunpack.c.l.b16 %v6494
        %v6591 = vunpack.c.l.b16 %v6495
        %v6592 = vunpack.c.l.b16 %v6496
        %v6593 = vunpack.c.l.b16 %v6497
        %v6594 = vunpack.c.l.b16 %v6498
        %v6595 = vunpack.c.l.b16 %v6499
        %v6596 = vunpack.c.l.b16 %v6500
        %v6597 = vpack.c.b16 %v6550, %v6549
        %v6598 = vpack.c.b16 %v6551, %v6551
        %v6599 = vpack.c.b16 %v6553, %v6552
        %v6600 = vpack.c.b16 %v6554, %v6554
        %v6601 = vpack.c.b16 %v6556, %v6555
        %v6602 = vpack.c.b16 %v6557, %v6557
        %v6603 = vpack.c.b16 %v6559, %v6558
        %v6604 = vpack.c.b16 %v6560, %v6560
        %v6605 = vpack.c.b16 %v6562, %v6561
        %v6606 = vpack.c.b16 %v6563, %v6563
        %v6607 = vpack.c.b16 %v6565, %v6564
        %v6608 = vpack.c.b16 %v6566, %v6566
        %v6609 = vpack.c.b16 %v6568, %v6567
        %v6610 = vpack.c.b16 %v6569, %v6569
        %v6611 = vpack.c.b16 %v6571, %v6570
        %v6612 = vpack.c.b16 %v6572, %v6572
        %v6613 = vpack.c.b16 %v6574, %v6573
        %v6614 = vpack.c.b16 %v6575, %v6575
        %v6615 = vpack.c.b16 %v6577, %v6576
        %v6616 = vpack.c.b16 %v6578, %v6578
        %v6617 = vpack.c.b16 %v6580, %v6579
        %v6618 = vpack.c.b16 %v6581, %v6581
        %v6619 = vpack.c.b16 %v6583, %v6582
        %v6620 = vpack.c.b16 %v6584, %v6584
        %v6621 = vpack.c.b16 %v6586, %v6585
        %v6622 = vpack.c.b16 %v6587, %v6587
        %v6623 = vpack.c.b16 %v6589, %v6588
        %v6624 = vpack.c.b16 %v6590, %v6590
        %v6625 = vpack.c.b16 %v6592, %v6591
        %v6626 = vpack.c.b16 %v6593, %v6593
        %v6627 = vpack.c.b16 %v6595, %v6594
        %v6628 = vpack.c.b16 %v6596, %v6596
        %v6629 = vrot.slane %v6597, 1
        %v6630 = vrot.slane %v6598, 1
        %v6631 = vsel %vm1978, %v6629, %v6630
        %v6632 = vrot.slane %v6599, 1
        %v6633 = vrot.slane %v6600, 1
        %v6634 = vsel %vm1978, %v6632, %v6633
        %v6635 = vrot.slane %v6601, 1
        %v6636 = vrot.slane %v6602, 1
        %v6637 = vsel %vm1978, %v6635, %v6636
        %v6638 = vrot.slane %v6603, 1
        %v6639 = vrot.slane %v6604, 1
        %v6640 = vsel %vm1978, %v6638, %v6639
        %v6641 = vrot.slane %v6605, 1
        %v6642 = vrot.slane %v6606, 1
        %v6643 = vsel %vm1978, %v6641, %v6642
        %v6644 = vrot.slane %v6607, 1
        %v6645 = vrot.slane %v6608, 1
        %v6646 = vsel %vm1978, %v6644, %v6645
        %v6647 = vrot.slane %v6609, 1
        %v6648 = vrot.slane %v6610, 1
        %v6649 = vsel %vm1978, %v6647, %v6648
        %v6650 = vrot.slane %v6611, 1
        %v6651 = vrot.slane %v6612, 1
        %v6652 = vsel %vm1978, %v6650, %v6651
        %v6653 = vrot.slane %v6613, 1
        %v6654 = vrot.slane %v6614, 1
        %v6655 = vsel %vm1978, %v6653, %v6654
        %v6656 = vrot.slane %v6615, 1
        %v6657 = vrot.slane %v6616, 1
        %v6658 = vsel %vm1978, %v6656, %v6657
        %v6659 = vrot.slane %v6617, 1
        %v6660 = vrot.slane %v6618, 1
        %v6661 = vsel %vm1978, %v6659, %v6660
        %v6662 = vrot.slane %v6619, 1
        %v6663 = vrot.slane %v6620, 1
        %v6664 = vsel %vm1978, %v6662, %v6663
        %v6665 = vrot.slane %v6621, 1
        %v6666 = vrot.slane %v6622, 1
        %v6667 = vsel %vm1978, %v6665, %v6666
        %v6668 = vrot.slane %v6623, 1
        %v6669 = vrot.slane %v6624, 1
        %v6670 = vsel %vm1978, %v6668, %v6669
        %v6671 = vrot.slane %v6625, 1
        %v6672 = vrot.slane %v6626, 1
        %v6673 = vsel %vm1978, %v6671, %v6672
        %v6674 = vrot.slane %v6627, 1
        %v6675 = vrot.slane %v6628, 1
        %v6676 = vsel %vm1978, %v6674, %v6675
        %6677 = vrot.lane.b32.xlu0 %v6631, 40
        %v6678 = vpop.permute.xlu0 %6677
        %6679 = vrot.lane.b32.xlu0 %v6634, 40
        %v6680 = vpop.permute.xlu0 %6679
        %6681 = vrot.lane.b32.xlu0 %v6637, 40
        %v6682 = vpop.permute.xlu0 %6681
        %6683 = vrot.lane.b32.xlu0 %v6640, 40
        %v6684 = vpop.permute.xlu0 %6683
        %6685 = vrot.lane.b32.xlu0 %v6643, 40
        %v6686 = vpop.permute.xlu0 %6685
        %6687 = vrot.lane.b32.xlu0 %v6646, 40
        %v6688 = vpop.permute.xlu0 %6687
        %6689 = vrot.lane.b32.xlu0 %v6649, 40
        %v6690 = vpop.permute.xlu0 %6689
        %6691 = vrot.lane.b32.xlu0 %v6652, 40
        %v6692 = vpop.permute.xlu0 %6691
        %6693 = vrot.lane.b32.xlu0 %v6655, 40
        %v6694 = vpop.permute.xlu0 %6693
        %6695 = vrot.lane.b32.xlu0 %v6658, 40
        %v6696 = vpop.permute.xlu0 %6695
        %6697 = vrot.lane.b32.xlu0 %v6661, 40
        %v6698 = vpop.permute.xlu0 %6697
        %6699 = vrot.lane.b32.xlu0 %v6664, 40
        %v6700 = vpop.permute.xlu0 %6699
        %6701 = vrot.lane.b32.xlu0 %v6667, 40
        %v6702 = vpop.permute.xlu0 %6701
        %6703 = vrot.lane.b32.xlu0 %v6670, 40
        %v6704 = vpop.permute.xlu0 %6703
        %6705 = vrot.lane.b32.xlu0 %v6673, 40
        %v6706 = vpop.permute.xlu0 %6705
        %6707 = vrot.lane.b32.xlu0 %v6676, 40
        %v6708 = vpop.permute.xlu0 %6707
        %vm6725 = vcmask 392512
        %6726 = vst.msk [vmem:[#allocation3] sm:$0xff] %vm6725, %v6678
        %6727 = vst.msk [vmem:[#allocation3 + $0x8] sm:$0xff] %vm6725, %v6680
        %6728 = vst.msk [vmem:[#allocation3 + $0x10] sm:$0xff] %vm6725, %v6682
        %6729 = vst.msk [vmem:[#allocation3 + $0x18] sm:$0xff] %vm6725, %v6684
        %6730 = vst.msk [vmem:[#allocation3 + $0x20] sm:$0xff] %vm6725, %v6686
        %6731 = vst.msk [vmem:[#allocation3 + $0x28] sm:$0xff] %vm6725, %v6688
        %6732 = vst.msk [vmem:[#allocation3 + $0x30] sm:$0xff] %vm6725, %v6690
        %6733 = vst.msk [vmem:[#allocation3 + $0x38] sm:$0xff] %vm6725, %v6692
        %6734 = vst.msk [vmem:[#allocation3 + $0x40] sm:$0xff] %vm6725, %v6694
        %6735 = vst.msk [vmem:[#allocation3 + $0x48] sm:$0xff] %vm6725, %v6696
        %6736 = vst.msk [vmem:[#allocation3 + $0x50] sm:$0xff] %vm6725, %v6698
        %6737 = vst.msk [vmem:[#allocation3 + $0x58] sm:$0xff] %vm6725, %v6700
        %6738 = vst.msk [vmem:[#allocation3 + $0x60] sm:$0xff] %vm6725, %v6702
        %6739 = vst.msk [vmem:[#allocation3 + $0x68] sm:$0xff] %vm6725, %v6704
        %6740 = vst.msk [vmem:[#allocation3 + $0x70] sm:$0xff] %vm6725, %v6706
        %6741 = vst.msk [vmem:[#allocation3 + $0x78] sm:$0xff] %vm6725, %v6708
        %v6742 = vld [vmem:[%s2991] sm:$0xf]
        %v6743 = vld [vmem:[%s2991 + $0x4] sm:$0xf]
        %v6744 = vld [vmem:[%s2991 + $0xc] sm:$0xf]
        %v6745 = vld [vmem:[%s2991 + $0x10] sm:$0xf]
        %v6746 = vld [vmem:[%s2991 + $0x18] sm:$0xf]
        %v6747 = vld [vmem:[%s2991 + $0x1c] sm:$0xf]
        %v6748 = vld [vmem:[%s2991 + $0x24] sm:$0xf]
        %v6749 = vld [vmem:[%s2991 + $0x28] sm:$0xf]
        %v6750 = vld [vmem:[%s2991 + $0x30] sm:$0xf]
        %v6751 = vld [vmem:[%s2991 + $0x34] sm:$0xf]
        %v6752 = vld [vmem:[%s2991 + $0x3c] sm:$0xf]
        %v6753 = vld [vmem:[%s2991 + $0x40] sm:$0xf]
        %v6754 = vld [vmem:[%s2991 + $0x48] sm:$0xf]
        %v6755 = vld [vmem:[%s2991 + $0x4c] sm:$0xf]
        %v6756 = vld [vmem:[%s2991 + $0x54] sm:$0xf]
        %v6757 = vld [vmem:[%s2991 + $0x58] sm:$0xf]
        %v6758 = vld [vmem:[%s2991 + $0x60] sm:$0xf]
        %v6759 = vld [vmem:[%s2991 + $0x64] sm:$0xf]
        %v6760 = vld [vmem:[%s2991 + $0x6c] sm:$0xf]
        %v6761 = vld [vmem:[%s2991 + $0x70] sm:$0xf]
        %v6762 = vld [vmem:[%s2991 + $0x78] sm:$0xf]
        %v6763 = vld [vmem:[%s2991 + $0x7c] sm:$0xf]
        %v6764 = vld [vmem:[%s2991 + $0x84] sm:$0xf]
        %v6765 = vld [vmem:[%s2991 + $0x88] sm:$0xf]
        %v6766 = vld [vmem:[%s2991 + $0x90] sm:$0xf]
        %v6767 = vld [vmem:[%s2991 + $0x94] sm:$0xf]
        %v6768 = vld [vmem:[%s2991 + $0x9c] sm:$0xf]
        %v6769 = vld [vmem:[%s2991 + $0xa0] sm:$0xf]
        %v6770 = vld [vmem:[%s2991 + $0xa8] sm:$0xf]
        %v6771 = vld [vmem:[%s2991 + $0xac] sm:$0xf]
        %v6772 = vld [vmem:[%s2991 + $0xb4] sm:$0xf]
        %v6773 = vld [vmem:[%s2991 + $0xb8] sm:$0xf]
        %v6806 = vunpack.c.l.b16 %v6742
        %v6807 = vunpack.c.l.b16 %v6743
        %v6808 = vunpack.c.l.b16 %v6744
        %v6809 = vunpack.c.l.b16 %v6745
        %v6810 = vunpack.c.l.b16 %v6746
        %v6811 = vunpack.c.l.b16 %v6747
        %v6812 = vunpack.c.l.b16 %v6748
        %v6813 = vunpack.c.l.b16 %v6749
        %v6814 = vunpack.c.l.b16 %v6750
        %v6815 = vunpack.c.l.b16 %v6751
        %v6816 = vunpack.c.l.b16 %v6752
        %v6817 = vunpack.c.l.b16 %v6753
        %v6818 = vunpack.c.l.b16 %v6754
        %v6819 = vunpack.c.l.b16 %v6755
        %v6820 = vunpack.c.l.b16 %v6756
        %v6821 = vunpack.c.l.b16 %v6757
        %v6822 = vunpack.c.l.b16 %v6758
        %v6823 = vunpack.c.l.b16 %v6759
        %v6824 = vunpack.c.l.b16 %v6760
        %v6825 = vunpack.c.l.b16 %v6761
        %v6826 = vunpack.c.l.b16 %v6762
        %v6827 = vunpack.c.l.b16 %v6763
        %v6828 = vunpack.c.l.b16 %v6764
        %v6829 = vunpack.c.l.b16 %v6765
        %v6830 = vunpack.c.l.b16 %v6766
        %v6831 = vunpack.c.l.b16 %v6767
        %v6832 = vunpack.c.l.b16 %v6768
        %v6833 = vunpack.c.l.b16 %v6769
        %v6834 = vunpack.c.l.b16 %v6770
        %v6835 = vunpack.c.l.b16 %v6771
        %v6836 = vunpack.c.l.b16 %v6772
        %v6837 = vunpack.c.l.b16 %v6773
        %v6838 = vpack.c.b16 %v6807, %v6806
        %v6839 = vpack.c.b16 %v6809, %v6808
        %v6840 = vpack.c.b16 %v6811, %v6810
        %v6841 = vpack.c.b16 %v6813, %v6812
        %v6842 = vpack.c.b16 %v6815, %v6814
        %v6843 = vpack.c.b16 %v6817, %v6816
        %v6844 = vpack.c.b16 %v6819, %v6818
        %v6845 = vpack.c.b16 %v6821, %v6820
        %v6846 = vpack.c.b16 %v6823, %v6822
        %v6847 = vpack.c.b16 %v6825, %v6824
        %v6848 = vpack.c.b16 %v6827, %v6826
        %v6849 = vpack.c.b16 %v6829, %v6828
        %v6850 = vpack.c.b16 %v6831, %v6830
        %v6851 = vpack.c.b16 %v6833, %v6832
        %v6852 = vpack.c.b16 %v6835, %v6834
        %v6853 = vpack.c.b16 %v6837, %v6836
        %6854 = vrot.lane.b32.xlu0 %v6838, 48
        %v6855 = vpop.permute.xlu0 %6854
        %6856 = vrot.lane.b32.xlu0 %v6839, 48
        %v6857 = vpop.permute.xlu0 %6856
        %6858 = vrot.lane.b32.xlu0 %v6840, 48
        %v6859 = vpop.permute.xlu0 %6858
        %6860 = vrot.lane.b32.xlu0 %v6841, 48
        %v6861 = vpop.permute.xlu0 %6860
        %6862 = vrot.lane.b32.xlu0 %v6842, 48
        %v6863 = vpop.permute.xlu0 %6862
        %6864 = vrot.lane.b32.xlu0 %v6843, 48
        %v6865 = vpop.permute.xlu0 %6864
        %6866 = vrot.lane.b32.xlu0 %v6844, 48
        %v6867 = vpop.permute.xlu0 %6866
        %6868 = vrot.lane.b32.xlu0 %v6845, 48
        %v6869 = vpop.permute.xlu0 %6868
        %6870 = vrot.lane.b32.xlu0 %v6846, 48
        %v6871 = vpop.permute.xlu0 %6870
        %6872 = vrot.lane.b32.xlu0 %v6847, 48
        %v6873 = vpop.permute.xlu0 %6872
        %6874 = vrot.lane.b32.xlu0 %v6848, 48
        %v6875 = vpop.permute.xlu0 %6874
        %6876 = vrot.lane.b32.xlu0 %v6849, 48
        %v6877 = vpop.permute.xlu0 %6876
        %6878 = vrot.lane.b32.xlu0 %v6850, 48
        %v6879 = vpop.permute.xlu0 %6878
        %6880 = vrot.lane.b32.xlu0 %v6851, 48
        %v6881 = vpop.permute.xlu0 %6880
        %6882 = vrot.lane.b32.xlu0 %v6852, 48
        %v6883 = vpop.permute.xlu0 %6882
        %6884 = vrot.lane.b32.xlu0 %v6853, 48
        %v6885 = vpop.permute.xlu0 %6884
        %vm6902 = vcmask 458112
        %6903 = vst.msk [vmem:[#allocation3] sm:$0xff] %vm6902, %v6855
        %6904 = vst.msk [vmem:[#allocation3 + $0x8] sm:$0xff] %vm6902, %v6857
        %6905 = vst.msk [vmem:[#allocation3 + $0x10] sm:$0xff] %vm6902, %v6859
        %6906 = vst.msk [vmem:[#allocation3 + $0x18] sm:$0xff] %vm6902, %v6861
        %6907 = vst.msk [vmem:[#allocation3 + $0x20] sm:$0xff] %vm6902, %v6863
        %6908 = vst.msk [vmem:[#allocation3 + $0x28] sm:$0xff] %vm6902, %v6865
        %6909 = vst.msk [vmem:[#allocation3 + $0x30] sm:$0xff] %vm6902, %v6867
        %6910 = vst.msk [vmem:[#allocation3 + $0x38] sm:$0xff] %vm6902, %v6869
        %6911 = vst.msk [vmem:[#allocation3 + $0x40] sm:$0xff] %vm6902, %v6871
        %6912 = vst.msk [vmem:[#allocation3 + $0x48] sm:$0xff] %vm6902, %v6873
        %6913 = vst.msk [vmem:[#allocation3 + $0x50] sm:$0xff] %vm6902, %v6875
        %6914 = vst.msk [vmem:[#allocation3 + $0x58] sm:$0xff] %vm6902, %v6877
        %6915 = vst.msk [vmem:[#allocation3 + $0x60] sm:$0xff] %vm6902, %v6879
        %6916 = vst.msk [vmem:[#allocation3 + $0x68] sm:$0xff] %vm6902, %v6881
        %6917 = vst.msk [vmem:[#allocation3 + $0x70] sm:$0xff] %vm6902, %v6883
        %6918 = vst.msk [vmem:[#allocation3 + $0x78] sm:$0xff] %vm6902, %v6885
        %v6919 = vld [vmem:[%s2991] sm:$0xf]
        %v6920 = vld [vmem:[%s2991 + $0x4] sm:$0xf]
        %v6921 = vld [vmem:[%s2991 + $0x8] sm:$0x1]
        %v6922 = vld [vmem:[%s2991 + $0xc] sm:$0xf]
        %v6923 = vld [vmem:[%s2991 + $0x10] sm:$0xf]
        %v6924 = vld [vmem:[%s2991 + $0x14] sm:$0x1]
        %v6925 = vld [vmem:[%s2991 + $0x18] sm:$0xf]
        %v6926 = vld [vmem:[%s2991 + $0x1c] sm:$0xf]
        %v6927 = vld [vmem:[%s2991 + $0x20] sm:$0x1]
        %v6928 = vld [vmem:[%s2991 + $0x24] sm:$0xf]
        %v6929 = vld [vmem:[%s2991 + $0x28] sm:$0xf]
        %v6930 = vld [vmem:[%s2991 + $0x2c] sm:$0x1]
        %v6931 = vld [vmem:[%s2991 + $0x30] sm:$0xf]
        %v6932 = vld [vmem:[%s2991 + $0x34] sm:$0xf]
        %v6933 = vld [vmem:[%s2991 + $0x38] sm:$0x1]
        %v6934 = vld [vmem:[%s2991 + $0x3c] sm:$0xf]
        %v6935 = vld [vmem:[%s2991 + $0x40] sm:$0xf]
        %v6936 = vld [vmem:[%s2991 + $0x44] sm:$0x1]
        %v6937 = vld [vmem:[%s2991 + $0x48] sm:$0xf]
        %v6938 = vld [vmem:[%s2991 + $0x4c] sm:$0xf]
        %v6939 = vld [vmem:[%s2991 + $0x50] sm:$0x1]
        %v6940 = vld [vmem:[%s2991 + $0x54] sm:$0xf]
        %v6941 = vld [vmem:[%s2991 + $0x58] sm:$0xf]
        %v6942 = vld [vmem:[%s2991 + $0x5c] sm:$0x1]
        %v6943 = vld [vmem:[%s2991 + $0x60] sm:$0xf]
        %v6944 = vld [vmem:[%s2991 + $0x64] sm:$0xf]
        %v6945 = vld [vmem:[%s2991 + $0x68] sm:$0x1]
        %v6946 = vld [vmem:[%s2991 + $0x6c] sm:$0xf]
        %v6947 = vld [vmem:[%s2991 + $0x70] sm:$0xf]
        %v6948 = vld [vmem:[%s2991 + $0x74] sm:$0x1]
        %v6949 = vld [vmem:[%s2991 + $0x78] sm:$0xf]
        %v6950 = vld [vmem:[%s2991 + $0x7c] sm:$0xf]
        %v6951 = vld [vmem:[%s2991 + $0x80] sm:$0x1]
        %v6952 = vld [vmem:[%s2991 + $0x84] sm:$0xf]
        %v6953 = vld [vmem:[%s2991 + $0x88] sm:$0xf]
        %v6954 = vld [vmem:[%s2991 + $0x8c] sm:$0x1]
        %v6955 = vld [vmem:[%s2991 + $0x90] sm:$0xf]
        %v6956 = vld [vmem:[%s2991 + $0x94] sm:$0xf]
        %v6957 = vld [vmem:[%s2991 + $0x98] sm:$0x1]
        %v6958 = vld [vmem:[%s2991 + $0x9c] sm:$0xf]
        %v6959 = vld [vmem:[%s2991 + $0xa0] sm:$0xf]
        %v6960 = vld [vmem:[%s2991 + $0xa4] sm:$0x1]
        %v6961 = vld [vmem:[%s2991 + $0xa8] sm:$0xf]
        %v6962 = vld [vmem:[%s2991 + $0xac] sm:$0xf]
        %v6963 = vld [vmem:[%s2991 + $0xb0] sm:$0x1]
        %v6964 = vld [vmem:[%s2991 + $0xb4] sm:$0xf]
        %v6965 = vld [vmem:[%s2991 + $0xb8] sm:$0xf]
        %v6966 = vld [vmem:[%s2991 + $0xbc] sm:$0x1]
        %v7015 = vunpack.c.l.b16 %v6919
        %v7016 = vunpack.c.l.b16 %v6920
        %v7017 = vunpack.c.l.b16 %v6921
        %v7018 = vunpack.c.l.b16 %v6922
        %v7019 = vunpack.c.l.b16 %v6923
        %v7020 = vunpack.c.l.b16 %v6924
        %v7021 = vunpack.c.l.b16 %v6925
        %v7022 = vunpack.c.l.b16 %v6926
        %v7023 = vunpack.c.l.b16 %v6927
        %v7024 = vunpack.c.l.b16 %v6928
        %v7025 = vunpack.c.l.b16 %v6929
        %v7026 = vunpack.c.l.b16 %v6930
        %v7027 = vunpack.c.l.b16 %v6931
        %v7028 = vunpack.c.l.b16 %v6932
        %v7029 = vunpack.c.l.b16 %v6933
        %v7030 = vunpack.c.l.b16 %v6934
        %v7031 = vunpack.c.l.b16 %v6935
        %v7032 = vunpack.c.l.b16 %v6936
        %v7033 = vunpack.c.l.b16 %v6937
        %v7034 = vunpack.c.l.b16 %v6938
        %v7035 = vunpack.c.l.b16 %v6939
        %v7036 = vunpack.c.l.b16 %v6940
        %v7037 = vunpack.c.l.b16 %v6941
        %v7038 = vunpack.c.l.b16 %v6942
        %v7039 = vunpack.c.l.b16 %v6943
        %v7040 = vunpack.c.l.b16 %v6944
        %v7041 = vunpack.c.l.b16 %v6945
        %v7042 = vunpack.c.l.b16 %v6946
        %v7043 = vunpack.c.l.b16 %v6947
        %v7044 = vunpack.c.l.b16 %v6948
        %v7045 = vunpack.c.l.b16 %v6949
        %v7046 = vunpack.c.l.b16 %v6950
        %v7047 = vunpack.c.l.b16 %v6951
        %v7048 = vunpack.c.l.b16 %v6952
        %v7049 = vunpack.c.l.b16 %v6953
        %v7050 = vunpack.c.l.b16 %v6954
        %v7051 = vunpack.c.l.b16 %v6955
        %v7052 = vunpack.c.l.b16 %v6956
        %v7053 = vunpack.c.l.b16 %v6957
        %v7054 = vunpack.c.l.b16 %v6958
        %v7055 = vunpack.c.l.b16 %v6959
        %v7056 = vunpack.c.l.b16 %v6960
        %v7057 = vunpack.c.l.b16 %v6961
        %v7058 = vunpack.c.l.b16 %v6962
        %v7059 = vunpack.c.l.b16 %v6963
        %v7060 = vunpack.c.l.b16 %v6964
        %v7061 = vunpack.c.l.b16 %v6965
        %v7062 = vunpack.c.l.b16 %v6966
        %v7063 = vpack.c.b16 %v7016, %v7015
        %v7064 = vpack.c.b16 %v7017, %v7017
        %v7065 = vpack.c.b16 %v7019, %v7018
        %v7066 = vpack.c.b16 %v7020, %v7020
        %v7067 = vpack.c.b16 %v7022, %v7021
        %v7068 = vpack.c.b16 %v7023, %v7023
        %v7069 = vpack.c.b16 %v7025, %v7024
        %v7070 = vpack.c.b16 %v7026, %v7026
        %v7071 = vpack.c.b16 %v7028, %v7027
        %v7072 = vpack.c.b16 %v7029, %v7029
        %v7073 = vpack.c.b16 %v7031, %v7030
        %v7074 = vpack.c.b16 %v7032, %v7032
        %v7075 = vpack.c.b16 %v7034, %v7033
        %v7076 = vpack.c.b16 %v7035, %v7035
        %v7077 = vpack.c.b16 %v7037, %v7036
        %v7078 = vpack.c.b16 %v7038, %v7038
        %v7079 = vpack.c.b16 %v7040, %v7039
        %v7080 = vpack.c.b16 %v7041, %v7041
        %v7081 = vpack.c.b16 %v7043, %v7042
        %v7082 = vpack.c.b16 %v7044, %v7044
        %v7083 = vpack.c.b16 %v7046, %v7045
        %v7084 = vpack.c.b16 %v7047, %v7047
        %v7085 = vpack.c.b16 %v7049, %v7048
        %v7086 = vpack.c.b16 %v7050, %v7050
        %v7087 = vpack.c.b16 %v7052, %v7051
        %v7088 = vpack.c.b16 %v7053, %v7053
        %v7089 = vpack.c.b16 %v7055, %v7054
        %v7090 = vpack.c.b16 %v7056, %v7056
        %v7091 = vpack.c.b16 %v7058, %v7057
        %v7092 = vpack.c.b16 %v7059, %v7059
        %v7093 = vpack.c.b16 %v7061, %v7060
        %v7094 = vpack.c.b16 %v7062, %v7062
        %v7096 = vshrl.u32 %v7063, 16
        %v7098 = vshll.u32 %v7063, 16
        %v7100 = vrot.slane %v7098, 1
        %v7101 = vor.u32 %v7096, %v7100
        %v7103 = vshll.u32 %v7064, 16
        %v7105 = vrot.slane %v7103, 1
        %v7106 = vsel %vm1544, %v7101, %v7105
        %v7108 = vshrl.u32 %v7065, 16
        %v7110 = vshll.u32 %v7065, 16
        %v7112 = vrot.slane %v7110, 1
        %v7113 = vor.u32 %v7108, %v7112
        %v7115 = vshll.u32 %v7066, 16
        %v7117 = vrot.slane %v7115, 1
        %v7118 = vsel %vm1544, %v7113, %v7117
        %v7120 = vshrl.u32 %v7067, 16
        %v7122 = vshll.u32 %v7067, 16
        %v7124 = vrot.slane %v7122, 1
        %v7125 = vor.u32 %v7120, %v7124
        %v7127 = vshll.u32 %v7068, 16
        %v7129 = vrot.slane %v7127, 1
        %v7130 = vsel %vm1544, %v7125, %v7129
        %v7132 = vshrl.u32 %v7069, 16
        %v7134 = vshll.u32 %v7069, 16
        %v7136 = vrot.slane %v7134, 1
        %v7137 = vor.u32 %v7132, %v7136
        %v7139 = vshll.u32 %v7070, 16
        %v7141 = vrot.slane %v7139, 1
        %v7142 = vsel %vm1544, %v7137, %v7141
        %v7144 = vshrl.u32 %v7071, 16
        %v7146 = vshll.u32 %v7071, 16
        %v7148 = vrot.slane %v7146, 1
        %v7149 = vor.u32 %v7144, %v7148
        %v7151 = vshll.u32 %v7072, 16
        %v7153 = vrot.slane %v7151, 1
        %v7154 = vsel %vm1544, %v7149, %v7153
        %v7156 = vshrl.u32 %v7073, 16
        %v7158 = vshll.u32 %v7073, 16
        %v7160 = vrot.slane %v7158, 1
        %v7161 = vor.u32 %v7156, %v7160
        %v7163 = vshll.u32 %v7074, 16
        %v7165 = vrot.slane %v7163, 1
        %v7166 = vsel %vm1544, %v7161, %v7165
        %v7168 = vshrl.u32 %v7075, 16
        %v7170 = vshll.u32 %v7075, 16
        %v7172 = vrot.slane %v7170, 1
        %v7173 = vor.u32 %v7168, %v7172
        %v7175 = vshll.u32 %v7076, 16
        %v7177 = vrot.slane %v7175, 1
        %v7178 = vsel %vm1544, %v7173, %v7177
        %v7180 = vshrl.u32 %v7077, 16
        %v7182 = vshll.u32 %v7077, 16
        %v7184 = vrot.slane %v7182, 1
        %v7185 = vor.u32 %v7180, %v7184
        %v7187 = vshll.u32 %v7078, 16
        %v7189 = vrot.slane %v7187, 1
        %v7190 = vsel %vm1544, %v7185, %v7189
        %v7192 = vshrl.u32 %v7079, 16
        %v7194 = vshll.u32 %v7079, 16
        %v7196 = vrot.slane %v7194, 1
        %v7197 = vor.u32 %v7192, %v7196
        %v7199 = vshll.u32 %v7080, 16
        %v7201 = vrot.slane %v7199, 1
        %v7202 = vsel %vm1544, %v7197, %v7201
        %v7204 = vshrl.u32 %v7081, 16
        %v7206 = vshll.u32 %v7081, 16
        %v7208 = vrot.slane %v7206, 1
        %v7209 = vor.u32 %v7204, %v7208
        %v7211 = vshll.u32 %v7082, 16
        %v7213 = vrot.slane %v7211, 1
        %v7214 = vsel %vm1544, %v7209, %v7213
        %v7216 = vshrl.u32 %v7083, 16
        %v7218 = vshll.u32 %v7083, 16
        %v7220 = vrot.slane %v7218, 1
        %v7221 = vor.u32 %v7216, %v7220
        %v7223 = vshll.u32 %v7084, 16
        %v7225 = vrot.slane %v7223, 1
        %v7226 = vsel %vm1544, %v7221, %v7225
        %v7228 = vshrl.u32 %v7085, 16
        %v7230 = vshll.u32 %v7085, 16
        %v7232 = vrot.slane %v7230, 1
        %v7233 = vor.u32 %v7228, %v7232
        %v7235 = vshll.u32 %v7086, 16
        %v7237 = vrot.slane %v7235, 1
        %v7238 = vsel %vm1544, %v7233, %v7237
        %v7240 = vshrl.u32 %v7087, 16
        %v7242 = vshll.u32 %v7087, 16
        %v7244 = vrot.slane %v7242, 1
        %v7245 = vor.u32 %v7240, %v7244
        %v7247 = vshll.u32 %v7088, 16
        %v7249 = vrot.slane %v7247, 1
        %v7250 = vsel %vm1544, %v7245, %v7249
        %v7252 = vshrl.u32 %v7089, 16
        %v7254 = vshll.u32 %v7089, 16
        %v7256 = vrot.slane %v7254, 1
        %v7257 = vor.u32 %v7252, %v7256
        %v7259 = vshll.u32 %v7090, 16
        %v7261 = vrot.slane %v7259, 1
        %v7262 = vsel %vm1544, %v7257, %v7261
        %v7264 = vshrl.u32 %v7091, 16
        %v7266 = vshll.u32 %v7091, 16
        %v7268 = vrot.slane %v7266, 1
        %v7269 = vor.u32 %v7264, %v7268
        %v7271 = vshll.u32 %v7092, 16
        %v7273 = vrot.slane %v7271, 1
        %v7274 = vsel %vm1544, %v7269, %v7273
        %v7276 = vshrl.u32 %v7093, 16
        %v7278 = vshll.u32 %v7093, 16
        %v7280 = vrot.slane %v7278, 1
        %v7281 = vor.u32 %v7276, %v7280
        %v7283 = vshll.u32 %v7094, 16
        %v7285 = vrot.slane %v7283, 1
        %v7286 = vsel %vm1544, %v7281, %v7285
        %7287 = vrot.lane.b32.xlu0 %v7106, 56
        %v7288 = vpop.permute.xlu0 %7287
        %7289 = vrot.lane.b32.xlu0 %v7118, 56
        %v7290 = vpop.permute.xlu0 %7289
        %7291 = vrot.lane.b32.xlu0 %v7130, 56
        %v7292 = vpop.permute.xlu0 %7291
        %7293 = vrot.lane.b32.xlu0 %v7142, 56
        %v7294 = vpop.permute.xlu0 %7293
        %7295 = vrot.lane.b32.xlu0 %v7154, 56
        %v7296 = vpop.permute.xlu0 %7295
        %7297 = vrot.lane.b32.xlu0 %v7166, 56
        %v7298 = vpop.permute.xlu0 %7297
        %7299 = vrot.lane.b32.xlu0 %v7178, 56
        %v7300 = vpop.permute.xlu0 %7299
        %7301 = vrot.lane.b32.xlu0 %v7190, 56
        %v7302 = vpop.permute.xlu0 %7301
        %7303 = vrot.lane.b32.xlu0 %v7202, 56
        %v7304 = vpop.permute.xlu0 %7303
        %7305 = vrot.lane.b32.xlu0 %v7214, 56
        %v7306 = vpop.permute.xlu0 %7305
        %7307 = vrot.lane.b32.xlu0 %v7226, 56
        %v7308 = vpop.permute.xlu0 %7307
        %7309 = vrot.lane.b32.xlu0 %v7238, 56
        %v7310 = vpop.permute.xlu0 %7309
        %7311 = vrot.lane.b32.xlu0 %v7250, 56
        %v7312 = vpop.permute.xlu0 %7311
        %7313 = vrot.lane.b32.xlu0 %v7262, 56
        %v7314 = vpop.permute.xlu0 %7313
        %7315 = vrot.lane.b32.xlu0 %v7274, 56
        %v7316 = vpop.permute.xlu0 %7315
        %7317 = vrot.lane.b32.xlu0 %v7286, 56
        %v7318 = vpop.permute.xlu0 %7317
        %vm7335 = vcmask 523712
        %7336 = vst.msk [vmem:[#allocation3] sm:$0xff] %vm7335, %v7288
        %7337 = vst.msk [vmem:[#allocation3 + $0x8] sm:$0xff] %vm7335, %v7290
        %7338 = vst.msk [vmem:[#allocation3 + $0x10] sm:$0xff] %vm7335, %v7292
        %7339 = vst.msk [vmem:[#allocation3 + $0x18] sm:$0xff] %vm7335, %v7294
        %7340 = vst.msk [vmem:[#allocation3 + $0x20] sm:$0xff] %vm7335, %v7296
        %7341 = vst.msk [vmem:[#allocation3 + $0x28] sm:$0xff] %vm7335, %v7298
        %7342 = vst.msk [vmem:[#allocation3 + $0x30] sm:$0xff] %vm7335, %v7300
        %7343 = vst.msk [vmem:[#allocation3 + $0x38] sm:$0xff] %vm7335, %v7302
        %7344 = vst.msk [vmem:[#allocation3 + $0x40] sm:$0xff] %vm7335, %v7304
        %7345 = vst.msk [vmem:[#allocation3 + $0x48] sm:$0xff] %vm7335, %v7306
        %7346 = vst.msk [vmem:[#allocation3 + $0x50] sm:$0xff] %vm7335, %v7308
        %7347 = vst.msk [vmem:[#allocation3 + $0x58] sm:$0xff] %vm7335, %v7310
        %7348 = vst.msk [vmem:[#allocation3 + $0x60] sm:$0xff] %vm7335, %v7312
        %7349 = vst.msk [vmem:[#allocation3 + $0x68] sm:$0xff] %vm7335, %v7314
        %7350 = vst.msk [vmem:[#allocation3 + $0x70] sm:$0xff] %vm7335, %v7316
        %7351 = vst.msk [vmem:[#allocation3 + $0x78] sm:$0xff] %vm7335, %v7318
        %v7352 = vld [vmem:[%s2991] sm:$0xe]
        %v7353 = vld [vmem:[%s2991 + $0x4] sm:$0xf]
        %v7354 = vld [vmem:[%s2991 + $0x8] sm:$0x1]
        %v7355 = vld [vmem:[%s2991 + $0xc] sm:$0xe]
        %v7356 = vld [vmem:[%s2991 + $0x10] sm:$0xf]
        %v7357 = vld [vmem:[%s2991 + $0x14] sm:$0x1]
        %v7358 = vld [vmem:[%s2991 + $0x18] sm:$0xe]
        %v7359 = vld [vmem:[%s2991 + $0x1c] sm:$0xf]
        %v7360 = vld [vmem:[%s2991 + $0x20] sm:$0x1]
        %v7361 = vld [vmem:[%s2991 + $0x24] sm:$0xe]
        %v7362 = vld [vmem:[%s2991 + $0x28] sm:$0xf]
        %v7363 = vld [vmem:[%s2991 + $0x2c] sm:$0x1]
        %v7364 = vld [vmem:[%s2991 + $0x30] sm:$0xe]
        %v7365 = vld [vmem:[%s2991 + $0x34] sm:$0xf]
        %v7366 = vld [vmem:[%s2991 + $0x38] sm:$0x1]
        %v7367 = vld [vmem:[%s2991 + $0x3c] sm:$0xe]
        %v7368 = vld [vmem:[%s2991 + $0x40] sm:$0xf]
        %v7369 = vld [vmem:[%s2991 + $0x44] sm:$0x1]
        %v7370 = vld [vmem:[%s2991 + $0x48] sm:$0xe]
        %v7371 = vld [vmem:[%s2991 + $0x4c] sm:$0xf]
        %v7372 = vld [vmem:[%s2991 + $0x50] sm:$0x1]
        %v7373 = vld [vmem:[%s2991 + $0x54] sm:$0xe]
        %v7374 = vld [vmem:[%s2991 + $0x58] sm:$0xf]
        %v7375 = vld [vmem:[%s2991 + $0x5c] sm:$0x1]
        %v7376 = vld [vmem:[%s2991 + $0x60] sm:$0xe]
        %v7377 = vld [vmem:[%s2991 + $0x64] sm:$0xf]
        %v7378 = vld [vmem:[%s2991 + $0x68] sm:$0x1]
        %v7379 = vld [vmem:[%s2991 + $0x6c] sm:$0xe]
        %v7380 = vld [vmem:[%s2991 + $0x70] sm:$0xf]
        %v7381 = vld [vmem:[%s2991 + $0x74] sm:$0x1]
        %v7382 = vld [vmem:[%s2991 + $0x78] sm:$0xe]
        %v7383 = vld [vmem:[%s2991 + $0x7c] sm:$0xf]
        %v7384 = vld [vmem:[%s2991 + $0x80] sm:$0x1]
        %v7385 = vld [vmem:[%s2991 + $0x84] sm:$0xe]
        %v7386 = vld [vmem:[%s2991 + $0x88] sm:$0xf]
        %v7387 = vld [vmem:[%s2991 + $0x8c] sm:$0x1]
        %v7388 = vld [vmem:[%s2991 + $0x90] sm:$0xe]
        %v7389 = vld [vmem:[%s2991 + $0x94] sm:$0xf]
        %v7390 = vld [vmem:[%s2991 + $0x98] sm:$0x1]
        %v7391 = vld [vmem:[%s2991 + $0x9c] sm:$0xe]
        %v7392 = vld [vmem:[%s2991 + $0xa0] sm:$0xf]
        %v7393 = vld [vmem:[%s2991 + $0xa4] sm:$0x1]
        %v7394 = vld [vmem:[%s2991 + $0xa8] sm:$0xe]
        %v7395 = vld [vmem:[%s2991 + $0xac] sm:$0xf]
        %v7396 = vld [vmem:[%s2991 + $0xb0] sm:$0x1]
        %v7397 = vld [vmem:[%s2991 + $0xb4] sm:$0xe]
        %v7398 = vld [vmem:[%s2991 + $0xb8] sm:$0xf]
        %v7399 = vld [vmem:[%s2991 + $0xbc] sm:$0x1]
        %v7448 = vunpack.c.l.b16 %v7352
        %v7449 = vunpack.c.l.b16 %v7353
        %v7450 = vunpack.c.l.b16 %v7354
        %v7451 = vunpack.c.l.b16 %v7355
        %v7452 = vunpack.c.l.b16 %v7356
        %v7453 = vunpack.c.l.b16 %v7357
        %v7454 = vunpack.c.l.b16 %v7358
        %v7455 = vunpack.c.l.b16 %v7359
        %v7456 = vunpack.c.l.b16 %v7360
        %v7457 = vunpack.c.l.b16 %v7361
        %v7458 = vunpack.c.l.b16 %v7362
        %v7459 = vunpack.c.l.b16 %v7363
        %v7460 = vunpack.c.l.b16 %v7364
        %v7461 = vunpack.c.l.b16 %v7365
        %v7462 = vunpack.c.l.b16 %v7366
        %v7463 = vunpack.c.l.b16 %v7367
        %v7464 = vunpack.c.l.b16 %v7368
        %v7465 = vunpack.c.l.b16 %v7369
        %v7466 = vunpack.c.l.b16 %v7370
        %v7467 = vunpack.c.l.b16 %v7371
        %v7468 = vunpack.c.l.b16 %v7372
        %v7469 = vunpack.c.l.b16 %v7373
        %v7470 = vunpack.c.l.b16 %v7374
        %v7471 = vunpack.c.l.b16 %v7375
        %v7472 = vunpack.c.l.b16 %v7376
        %v7473 = vunpack.c.l.b16 %v7377
        %v7474 = vunpack.c.l.b16 %v7378
        %v7475 = vunpack.c.l.b16 %v7379
        %v7476 = vunpack.c.l.b16 %v7380
        %v7477 = vunpack.c.l.b16 %v7381
        %v7478 = vunpack.c.l.b16 %v7382
        %v7479 = vunpack.c.l.b16 %v7383
        %v7480 = vunpack.c.l.b16 %v7384
        %v7481 = vunpack.c.l.b16 %v7385
        %v7482 = vunpack.c.l.b16 %v7386
        %v7483 = vunpack.c.l.b16 %v7387
        %v7484 = vunpack.c.l.b16 %v7388
        %v7485 = vunpack.c.l.b16 %v7389
        %v7486 = vunpack.c.l.b16 %v7390
        %v7487 = vunpack.c.l.b16 %v7391
        %v7488 = vunpack.c.l.b16 %v7392
        %v7489 = vunpack.c.l.b16 %v7393
        %v7490 = vunpack.c.l.b16 %v7394
        %v7491 = vunpack.c.l.b16 %v7395
        %v7492 = vunpack.c.l.b16 %v7396
        %v7493 = vunpack.c.l.b16 %v7397
        %v7494 = vunpack.c.l.b16 %v7398
        %v7495 = vunpack.c.l.b16 %v7399
        %v7496 = vpack.c.b16 %v7449, %v7448
        %v7497 = vpack.c.b16 %v7450, %v7450
        %v7498 = vpack.c.b16 %v7452, %v7451
        %v7499 = vpack.c.b16 %v7453, %v7453
        %v7500 = vpack.c.b16 %v7455, %v7454
        %v7501 = vpack.c.b16 %v7456, %v7456
        %v7502 = vpack.c.b16 %v7458, %v7457
        %v7503 = vpack.c.b16 %v7459, %v7459
        %v7504 = vpack.c.b16 %v7461, %v7460
        %v7505 = vpack.c.b16 %v7462, %v7462
        %v7506 = vpack.c.b16 %v7464, %v7463
        %v7507 = vpack.c.b16 %v7465, %v7465
        %v7508 = vpack.c.b16 %v7467, %v7466
        %v7509 = vpack.c.b16 %v7468, %v7468
        %v7510 = vpack.c.b16 %v7470, %v7469
        %v7511 = vpack.c.b16 %v7471, %v7471
        %v7512 = vpack.c.b16 %v7473, %v7472
        %v7513 = vpack.c.b16 %v7474, %v7474
        %v7514 = vpack.c.b16 %v7476, %v7475
        %v7515 = vpack.c.b16 %v7477, %v7477
        %v7516 = vpack.c.b16 %v7479, %v7478
        %v7517 = vpack.c.b16 %v7480, %v7480
        %v7518 = vpack.c.b16 %v7482, %v7481
        %v7519 = vpack.c.b16 %v7483, %v7483
        %v7520 = vpack.c.b16 %v7485, %v7484
        %v7521 = vpack.c.b16 %v7486, %v7486
        %v7522 = vpack.c.b16 %v7488, %v7487
        %v7523 = vpack.c.b16 %v7489, %v7489
        %v7524 = vpack.c.b16 %v7491, %v7490
        %v7525 = vpack.c.b16 %v7492, %v7492
        %v7526 = vpack.c.b16 %v7494, %v7493
        %v7527 = vpack.c.b16 %v7495, %v7495
        %v7528 = vrot.slane %v7496, 1
        %v7529 = vrot.slane %v7497, 1
        %v7530 = vsel %vm1978, %v7528, %v7529
        %v7531 = vrot.slane %v7498, 1
        %v7532 = vrot.slane %v7499, 1
        %v7533 = vsel %vm1978, %v7531, %v7532
        %v7534 = vrot.slane %v7500, 1
        %v7535 = vrot.slane %v7501, 1
        %v7536 = vsel %vm1978, %v7534, %v7535
        %v7537 = vrot.slane %v7502, 1
        %v7538 = vrot.slane %v7503, 1
        %v7539 = vsel %vm1978, %v7537, %v7538
        %v7540 = vrot.slane %v7504, 1
        %v7541 = vrot.slane %v7505, 1
        %v7542 = vsel %vm1978, %v7540, %v7541
        %v7543 = vrot.slane %v7506, 1
        %v7544 = vrot.slane %v7507, 1
        %v7545 = vsel %vm1978, %v7543, %v7544
        %v7546 = vrot.slane %v7508, 1
        %v7547 = vrot.slane %v7509, 1
        %v7548 = vsel %vm1978, %v7546, %v7547
        %v7549 = vrot.slane %v7510, 1
        %v7550 = vrot.slane %v7511, 1
        %v7551 = vsel %vm1978, %v7549, %v7550
        %v7552 = vrot.slane %v7512, 1
        %v7553 = vrot.slane %v7513, 1
        %v7554 = vsel %vm1978, %v7552, %v7553
        %v7555 = vrot.slane %v7514, 1
        %v7556 = vrot.slane %v7515, 1
        %v7557 = vsel %vm1978, %v7555, %v7556
        %v7558 = vrot.slane %v7516, 1
        %v7559 = vrot.slane %v7517, 1
        %v7560 = vsel %vm1978, %v7558, %v7559
        %v7561 = vrot.slane %v7518, 1
        %v7562 = vrot.slane %v7519, 1
        %v7563 = vsel %vm1978, %v7561, %v7562
        %v7564 = vrot.slane %v7520, 1
        %v7565 = vrot.slane %v7521, 1
        %v7566 = vsel %vm1978, %v7564, %v7565
        %v7567 = vrot.slane %v7522, 1
        %v7568 = vrot.slane %v7523, 1
        %v7569 = vsel %vm1978, %v7567, %v7568
        %v7570 = vrot.slane %v7524, 1
        %v7571 = vrot.slane %v7525, 1
        %v7572 = vsel %vm1978, %v7570, %v7571
        %v7573 = vrot.slane %v7526, 1
        %v7574 = vrot.slane %v7527, 1
        %v7575 = vsel %vm1978, %v7573, %v7574
        %7576 = vrot.lane.b32.xlu0 %v7530, 64
        %v7577 = vpop.permute.xlu0 %7576
        %7578 = vrot.lane.b32.xlu0 %v7533, 64
        %v7579 = vpop.permute.xlu0 %7578
        %7580 = vrot.lane.b32.xlu0 %v7536, 64
        %v7581 = vpop.permute.xlu0 %7580
        %7582 = vrot.lane.b32.xlu0 %v7539, 64
        %v7583 = vpop.permute.xlu0 %7582
        %7584 = vrot.lane.b32.xlu0 %v7542, 64
        %v7585 = vpop.permute.xlu0 %7584
        %7586 = vrot.lane.b32.xlu0 %v7545, 64
        %v7587 = vpop.permute.xlu0 %7586
        %7588 = vrot.lane.b32.xlu0 %v7548, 64
        %v7589 = vpop.permute.xlu0 %7588
        %7590 = vrot.lane.b32.xlu0 %v7551, 64
        %v7591 = vpop.permute.xlu0 %7590
        %7592 = vrot.lane.b32.xlu0 %v7554, 64
        %v7593 = vpop.permute.xlu0 %7592
        %7594 = vrot.lane.b32.xlu0 %v7557, 64
        %v7595 = vpop.permute.xlu0 %7594
        %7596 = vrot.lane.b32.xlu0 %v7560, 64
        %v7597 = vpop.permute.xlu0 %7596
        %7598 = vrot.lane.b32.xlu0 %v7563, 64
        %v7599 = vpop.permute.xlu0 %7598
        %7600 = vrot.lane.b32.xlu0 %v7566, 64
        %v7601 = vpop.permute.xlu0 %7600
        %7602 = vrot.lane.b32.xlu0 %v7569, 64
        %v7603 = vpop.permute.xlu0 %7602
        %7604 = vrot.lane.b32.xlu0 %v7572, 64
        %v7605 = vpop.permute.xlu0 %7604
        %7606 = vrot.lane.b32.xlu0 %v7575, 64
        %v7607 = vpop.permute.xlu0 %7606
        %vm7624 = vcmask 589312
        %7625 = vst.msk [vmem:[#allocation3] sm:$0xff] %vm7624, %v7577
        %7626 = vst.msk [vmem:[#allocation3 + $0x8] sm:$0xff] %vm7624, %v7579
        %7627 = vst.msk [vmem:[#allocation3 + $0x10] sm:$0xff] %vm7624, %v7581
        %7628 = vst.msk [vmem:[#allocation3 + $0x18] sm:$0xff] %vm7624, %v7583
        %7629 = vst.msk [vmem:[#allocation3 + $0x20] sm:$0xff] %vm7624, %v7585
        %7630 = vst.msk [vmem:[#allocation3 + $0x28] sm:$0xff] %vm7624, %v7587
        %7631 = vst.msk [vmem:[#allocation3 + $0x30] sm:$0xff] %vm7624, %v7589
        %7632 = vst.msk [vmem:[#allocation3 + $0x38] sm:$0xff] %vm7624, %v7591
        %7633 = vst.msk [vmem:[#allocation3 + $0x40] sm:$0xff] %vm7624, %v7593
        %7634 = vst.msk [vmem:[#allocation3 + $0x48] sm:$0xff] %vm7624, %v7595
        %7635 = vst.msk [vmem:[#allocation3 + $0x50] sm:$0xff] %vm7624, %v7597
        %7636 = vst.msk [vmem:[#allocation3 + $0x58] sm:$0xff] %vm7624, %v7599
        %7637 = vst.msk [vmem:[#allocation3 + $0x60] sm:$0xff] %vm7624, %v7601
        %7638 = vst.msk [vmem:[#allocation3 + $0x68] sm:$0xff] %vm7624, %v7603
        %7639 = vst.msk [vmem:[#allocation3 + $0x70] sm:$0xff] %vm7624, %v7605
        %7640 = vst.msk [vmem:[#allocation3 + $0x78] sm:$0xff] %vm7624, %v7607
        %v7641 = vld [vmem:[#allocation3] sm:$0xff]
        %v7642 = vld [vmem:[#allocation3 + $0x8] sm:$0xff]
        %v7643 = vld [vmem:[#allocation3 + $0x10] sm:$0xff]
        %v7644 = vld [vmem:[#allocation3 + $0x18] sm:$0xff]
        %v7645 = vld [vmem:[#allocation3 + $0x20] sm:$0xff]
        %v7646 = vld [vmem:[#allocation3 + $0x28] sm:$0xff]
        %v7647 = vld [vmem:[#allocation3 + $0x30] sm:$0xff]
        %v7648 = vld [vmem:[#allocation3 + $0x38] sm:$0xff]
        %v7649 = vld [vmem:[#allocation3 + $0x40] sm:$0xff]
        %v7650 = vld [vmem:[#allocation3 + $0x48] sm:$0xff]
        %v7651 = vld [vmem:[#allocation3 + $0x50] sm:$0xff]
        %v7652 = vld [vmem:[#allocation3 + $0x58] sm:$0xff]
        %v7653 = vld [vmem:[#allocation3 + $0x60] sm:$0xff]
        %v7654 = vld [vmem:[#allocation3 + $0x68] sm:$0xff]
        %v7655 = vld [vmem:[#allocation3 + $0x70] sm:$0xff]
        %v7656 = vld [vmem:[#allocation3 + $0x78] sm:$0xff]
        %v7657 = vld [vmem:[%s6] sm:$0xf]
        %v7658 = vld [vmem:[%s6 + $0x4] sm:$0xf]
        %v7659 = vld [vmem:[%s6 + $0x8] sm:$0xf]
        %v7660 = vld [vmem:[%s6 + $0xc] sm:$0xf]
        %v7661 = vld [vmem:[%s6 + $0x10] sm:$0xf]
        %v7662 = vld [vmem:[%s6 + $0x14] sm:$0xf]
        %v7663 = vld [vmem:[%s6 + $0x18] sm:$0xf]
        %v7664 = vld [vmem:[%s6 + $0x1c] sm:$0xf]
        %v7665 = vld [vmem:[%s6 + $0x20] sm:$0xf]
        %v7675 = vunpack.c.l.b16 %v7657
        %v7676 = vunpack.c.l.b16 %v7658
        %v7677 = vunpack.c.l.b16 %v7659
        %v7678 = vunpack.c.l.b16 %v7660
        %v7679 = vunpack.c.l.b16 %v7661
        %v7680 = vunpack.c.l.b16 %v7662
        %v7681 = vunpack.c.l.b16 %v7663
        %v7682 = vunpack.c.l.b16 %v7664
        %v7683 = vunpack.c.l.b16 %v7665
        %v7684 = vpack.c.b16 %v7676, %v7675
        %v7685 = vpack.c.b16 %v7678, %v7677
        %v7686 = vpack.c.b16 %v7680, %v7679
        %v7687 = vpack.c.b16 %v7682, %v7681
        %v7688 = vpack.c.b16 %v7683, %v7683
        %vm7693 = vcmask 588800
        %v7695 = vsel %vm7693, %v7641, 0
        %v7698 = vsel %vm7693, %v7642, 0
        %v7701 = vsel %vm7693, %v7643, 0
        %v7704 = vsel %vm7693, %v7644, 0
        %v7707 = vsel %vm7693, %v7645, 0
        %v7710 = vsel %vm7693, %v7646, 0
        %v7713 = vsel %vm7693, %v7647, 0
        %v7716 = vsel %vm7693, %v7648, 0
        %v7719 = vsel %vm7693, %v7649, 0
        %v7722 = vsel %vm7693, %v7650, 0
        %v7725 = vsel %vm7693, %v7651, 0
        %v7728 = vsel %vm7693, %v7652, 0
        %v7731 = vsel %vm7693, %v7653, 0
        %v7734 = vsel %vm7693, %v7654, 0
        %v7737 = vsel %vm7693, %v7655, 0
        %v7740 = vsel %vm7693, %v7656, 0
        %vm7742 = vcmask 1043456
        %v7744 = vsel %vm7742, %v7688, 0
        %7746 = vmatprep.subr.bf16.mxu0 0
        %7747 = vmatpush1.bf16.msra.mxu0 %v7684
        %7748 = vmatprep.subr.bf16.mxu0 0
        %7749 = vmatpush1.bf16.msra.mxu0 %v7685
        %7750 = vmatprep.subr.bf16.mxu0 0
        %7751 = vmatpush1.bf16.msra.mxu0 %v7686
        %7752 = vmatprep.subr.bf16.mxu0 0
        %7753 = vmatpush1.bf16.msra.mxu0 %v7687
        %7754 = vmatprep.subr.bf16.mxu0 0
        %7755 = vmatpush1.bf16.msra.mxu0 %v7744
        %7756 = vmatprep.subr.bf16.mxu0 0
        %7757 = vmatpush1.bf16.msra.mxu0 0
        %7758 = vmatprep.subr.bf16.mxu0 0
        %7759 = vmatpush1.bf16.msra.mxu0 0
        %7760 = vmatprep.subr.bf16.mxu0 0
        %7761 = vmatpush1.bf16.msra.mxu0 0
        %7762 = vmatprep.subr.bf16.mxu0 0
        %7763 = vmatpush1.bf16.msra.mxu0 0
        %7764 = vmatprep.subr.bf16.mxu0 0
        %7765 = vmatpush1.bf16.msra.mxu0 0
        %7766 = vmatprep.subr.bf16.mxu0 0
        %7767 = vmatpush1.bf16.msra.mxu0 0
        %7768 = vmatprep.subr.bf16.mxu0 0
        %7769 = vmatpush1.bf16.msra.mxu0 0
        %7770 = vmatprep.subr.bf16.mxu0 0
        %7771 = vmatpush1.bf16.msra.mxu0 0
        %7772 = vmatprep.subr.bf16.mxu0 0
        %7773 = vmatpush1.bf16.msra.mxu0 0
        %7774 = vmatprep.subr.bf16.mxu0 0
        %7775 = vmatpush1.bf16.msra.mxu0 0
        %7776 = vmatprep.subr.bf16.mxu0 0
        %7777 = vmatpush1.bf16.msra.mxu0 0
        %7778 = vmatprep.mubr.bf16.mxu0 0
        %7779 = vmatmul.mubr.bf16.gmra.mrb[0].mxu0 %v7695
        %v7780 = vpop.f32.mrb[0].mxu0
        %v7781 = vadd.f32 0.0, %v7780
        %v7782 = vpop.f32.mrb[0].mxu0
        %v7783 = vpop.f32.mrb[0].mxu0
        %v7784 = vadd.f32 0.0, %v7783
        %v7785 = vpop.f32.mrb[0].mxu0
        %7786 = vmatprep.mubr.bf16.mxu0 0
        %7787 = vmatmul.mubr.bf16.gmra.mrb[0].mxu0 %v7698
        %v7788 = vpop.f32.mrb[0].mxu0
        %v7789 = vadd.f32 0.0, %v7788
        %v7790 = vpop.f32.mrb[0].mxu0
        %v7791 = vpop.f32.mrb[0].mxu0
        %v7792 = vadd.f32 0.0, %v7791
        %v7793 = vpop.f32.mrb[0].mxu0
        %7794 = vmatprep.mubr.bf16.mxu0 0
        %7795 = vmatmul.mubr.bf16.gmra.mrb[0].mxu0 %v7701
        %v7796 = vpop.f32.mrb[0].mxu0
        %v7797 = vadd.f32 0.0, %v7796
        %v7798 = vpop.f32.mrb[0].mxu0
        %v7799 = vpop.f32.mrb[0].mxu0
        %v7800 = vadd.f32 0.0, %v7799
        %v7801 = vpop.f32.mrb[0].mxu0
        %7802 = vmatprep.mubr.bf16.mxu0 0
        %7803 = vmatmul.mubr.bf16.gmra.mrb[0].mxu0 %v7704
        %v7804 = vpop.f32.mrb[0].mxu0
        %v7805 = vadd.f32 0.0, %v7804
        %v7806 = vpop.f32.mrb[0].mxu0
        %v7807 = vpop.f32.mrb[0].mxu0
        %v7808 = vadd.f32 0.0, %v7807
        %v7809 = vpop.f32.mrb[0].mxu0
        %7810 = vmatprep.mubr.bf16.mxu0 0
        %7811 = vmatmul.mubr.bf16.gmra.mrb[0].mxu0 %v7707
        %v7812 = vpop.f32.mrb[0].mxu0
        %v7813 = vadd.f32 0.0, %v7812
        %v7814 = vpop.f32.mrb[0].mxu0
        %v7815 = vpop.f32.mrb[0].mxu0
        %v7816 = vadd.f32 0.0, %v7815
        %v7817 = vpop.f32.mrb[0].mxu0
        %7818 = vmatprep.mubr.bf16.mxu0 0
        %7819 = vmatmul.mubr.bf16.gmra.mrb[0].mxu0 %v7710
        %v7820 = vpop.f32.mrb[0].mxu0
        %v7821 = vadd.f32 0.0, %v7820
        %v7822 = vpop.f32.mrb[0].mxu0
        %v7823 = vpop.f32.mrb[0].mxu0
        %v7824 = vadd.f32 0.0, %v7823
        %v7825 = vpop.f32.mrb[0].mxu0
        %7826 = vmatprep.mubr.bf16.mxu0 0
        %7827 = vmatmul.mubr.bf16.gmra.mrb[0].mxu0 %v7713
        %v7828 = vpop.f32.mrb[0].mxu0
        %v7829 = vadd.f32 0.0, %v7828
        %v7830 = vpop.f32.mrb[0].mxu0
        %v7831 = vpop.f32.mrb[0].mxu0
        %v7832 = vadd.f32 0.0, %v7831
        %v7833 = vpop.f32.mrb[0].mxu0
        %7834 = vmatprep.mubr.bf16.mxu0 0
        %7835 = vmatmul.mubr.bf16.gmra.mrb[0].mxu0 %v7716
        %v7836 = vpop.f32.mrb[0].mxu0
        %v7837 = vadd.f32 0.0, %v7836
        %v7838 = vpop.f32.mrb[0].mxu0
        %v7839 = vpop.f32.mrb[0].mxu0
        %v7840 = vadd.f32 0.0, %v7839
        %v7841 = vpop.f32.mrb[0].mxu0
        %7842 = vmatprep.mubr.bf16.mxu0 0
        %7843 = vmatmul.mubr.bf16.gmra.mrb[0].mxu0 %v7719
        %v7844 = vpop.f32.mrb[0].mxu0
        %v7845 = vadd.f32 0.0, %v7844
        %v7846 = vpop.f32.mrb[0].mxu0
        %v7847 = vpop.f32.mrb[0].mxu0
        %v7848 = vadd.f32 0.0, %v7847
        %v7849 = vpop.f32.mrb[0].mxu0
        %7850 = vmatprep.mubr.bf16.mxu0 0
        %7851 = vmatmul.mubr.bf16.gmra.mrb[0].mxu0 %v7722
        %v7852 = vpop.f32.mrb[0].mxu0
        %v7853 = vadd.f32 0.0, %v7852
        %v7854 = vpop.f32.mrb[0].mxu0
        %v7855 = vpop.f32.mrb[0].mxu0
        %v7856 = vadd.f32 0.0, %v7855
        %v7857 = vpop.f32.mrb[0].mxu0
        %7858 = vmatprep.mubr.bf16.mxu0 0
        %7859 = vmatmul.mubr.bf16.gmra.mrb[0].mxu0 %v7725
        %v7860 = vpop.f32.mrb[0].mxu0
        %v7861 = vadd.f32 0.0, %v7860
        %v7862 = vpop.f32.mrb[0].mxu0
        %v7863 = vpop.f32.mrb[0].mxu0
        %v7864 = vadd.f32 0.0, %v7863
        %v7865 = vpop.f32.mrb[0].mxu0
        %7866 = vmatprep.mubr.bf16.mxu0 0
        %7867 = vmatmul.mubr.bf16.gmra.mrb[0].mxu0 %v7728
        %v7868 = vpop.f32.mrb[0].mxu0
        %v7869 = vadd.f32 0.0, %v7868
        %v7870 = vpop.f32.mrb[0].mxu0
        %v7871 = vpop.f32.mrb[0].mxu0
        %v7872 = vadd.f32 0.0, %v7871
        %v7873 = vpop.f32.mrb[0].mxu0
        %7874 = vmatprep.mubr.bf16.mxu0 0
        %7875 = vmatmul.mubr.bf16.gmra.mrb[0].mxu0 %v7731
        %v7876 = vpop.f32.mrb[0].mxu0
        %v7877 = vadd.f32 0.0, %v7876
        %v7878 = vpop.f32.mrb[0].mxu0
        %v7879 = vpop.f32.mrb[0].mxu0
        %v7880 = vadd.f32 0.0, %v7879
        %v7881 = vpop.f32.mrb[0].mxu0
        %7882 = vmatprep.mubr.bf16.mxu0 0
        %7883 = vmatmul.mubr.bf16.gmra.mrb[0].mxu0 %v7734
        %v7884 = vpop.f32.mrb[0].mxu0
        %v7885 = vadd.f32 0.0, %v7884
        %v7886 = vpop.f32.mrb[0].mxu0
        %v7887 = vpop.f32.mrb[0].mxu0
        %v7888 = vadd.f32 0.0, %v7887
        %v7889 = vpop.f32.mrb[0].mxu0
        %7890 = vmatprep.mubr.bf16.mxu0 0
        %7891 = vmatmul.mubr.bf16.gmra.mrb[0].mxu0 %v7737
        %v7892 = vpop.f32.mrb[0].mxu0
        %v7893 = vadd.f32 0.0, %v7892
        %v7894 = vpop.f32.mrb[0].mxu0
        %v7895 = vpop.f32.mrb[0].mxu0
        %v7896 = vadd.f32 0.0, %v7895
        %v7897 = vpop.f32.mrb[0].mxu0
        %7898 = vmatprep.mubr.bf16.mxu0 0
        %7899 = vmatmul.mubr.bf16.gmra.mrb[0].mxu0 %v7740
        %v7900 = vpop.f32.mrb[0].mxu0
        %v7901 = vadd.f32 0.0, %v7900
        %v7902 = vpop.f32.mrb[0].mxu0
        %v7903 = vpop.f32.mrb[0].mxu0
        %v7904 = vadd.f32 0.0, %v7903
        %v7905 = vpop.f32.mrb[0].mxu0
        %7906 = vdwg.mxu0
        %7939 = vrot.lane.b32.xlu0 %v7781, 8
        %v7940 = vpop.permute.xlu0 %7939
        %7941 = vrot.lane.b32.xlu0 %v7784, 8
        %v7942 = vpop.permute.xlu0 %7941
        %7943 = vrot.lane.b32.xlu0 %v7789, 8
        %v7944 = vpop.permute.xlu0 %7943
        %7945 = vrot.lane.b32.xlu0 %v7792, 8
        %v7946 = vpop.permute.xlu0 %7945
        %7947 = vrot.lane.b32.xlu0 %v7797, 8
        %v7948 = vpop.permute.xlu0 %7947
        %7949 = vrot.lane.b32.xlu0 %v7800, 8
        %v7950 = vpop.permute.xlu0 %7949
        %7951 = vrot.lane.b32.xlu0 %v7805, 8
        %v7952 = vpop.permute.xlu0 %7951
        %7953 = vrot.lane.b32.xlu0 %v7808, 8
        %v7954 = vpop.permute.xlu0 %7953
        %7955 = vrot.lane.b32.xlu0 %v7813, 8
        %v7956 = vpop.permute.xlu0 %7955
        %7957 = vrot.lane.b32.xlu0 %v7816, 8
        %v7958 = vpop.permute.xlu0 %7957
        %7959 = vrot.lane.b32.xlu0 %v7821, 8
        %v7960 = vpop.permute.xlu0 %7959
        %7961 = vrot.lane.b32.xlu0 %v7824, 8
        %v7962 = vpop.permute.xlu0 %7961
        %7963 = vrot.lane.b32.xlu0 %v7829, 8
        %v7964 = vpop.permute.xlu0 %7963
        %7965 = vrot.lane.b32.xlu0 %v7832, 8
        %v7966 = vpop.permute.xlu0 %7965
        %7967 = vrot.lane.b32.xlu0 %v7837, 8
        %v7968 = vpop.permute.xlu0 %7967
        %7969 = vrot.lane.b32.xlu0 %v7840, 8
        %v7970 = vpop.permute.xlu0 %7969
        %7971 = vrot.lane.b32.xlu0 %v7845, 8
        %v7972 = vpop.permute.xlu0 %7971
        %7973 = vrot.lane.b32.xlu0 %v7848, 8
        %v7974 = vpop.permute.xlu0 %7973
        %7975 = vrot.lane.b32.xlu0 %v7853, 8
        %v7976 = vpop.permute.xlu0 %7975
        %7977 = vrot.lane.b32.xlu0 %v7856, 8
        %v7978 = vpop.permute.xlu0 %7977
        %7979 = vrot.lane.b32.xlu0 %v7861, 8
        %v7980 = vpop.permute.xlu0 %7979
        %7981 = vrot.lane.b32.xlu0 %v7864, 8
        %v7982 = vpop.permute.xlu0 %7981
        %7983 = vrot.lane.b32.xlu0 %v7869, 8
        %v7984 = vpop.permute.xlu0 %7983
        %7985 = vrot.lane.b32.xlu0 %v7872, 8
        %v7986 = vpop.permute.xlu0 %7985
        %7987 = vrot.lane.b32.xlu0 %v7877, 8
        %v7988 = vpop.permute.xlu0 %7987
        %7989 = vrot.lane.b32.xlu0 %v7880, 8
        %v7990 = vpop.permute.xlu0 %7989
        %7991 = vrot.lane.b32.xlu0 %v7885, 8
        %v7992 = vpop.permute.xlu0 %7991
        %7993 = vrot.lane.b32.xlu0 %v7888, 8
        %v7994 = vpop.permute.xlu0 %7993
        %7995 = vrot.lane.b32.xlu0 %v7893, 8
        %v7996 = vpop.permute.xlu0 %7995
        %7997 = vrot.lane.b32.xlu0 %v7896, 8
        %v7998 = vpop.permute.xlu0 %7997
        %7999 = vrot.lane.b32.xlu0 %v7901, 8
        %v8000 = vpop.permute.xlu0 %7999
        %8001 = vrot.lane.b32.xlu0 %v7904, 8
        %v8002 = vpop.permute.xlu0 %8001
        %8035 = vst.msk [vmem:[%s352] sm:$0xff] %vm2075, %v7940
        %8036 = vst.msk [vmem:[%s352 + $0x8] sm:$0xff] %vm2075, %v7942
        %8037 = vst.msk [vmem:[%s352 + $0x10] sm:$0xff] %vm2075, %v7944
        %8038 = vst.msk [vmem:[%s352 + $0x18] sm:$0xff] %vm2075, %v7946
        %8039 = vst.msk [vmem:[%s352 + $0x20] sm:$0xff] %vm2075, %v7948
        %8040 = vst.msk [vmem:[%s352 + $0x28] sm:$0xff] %vm2075, %v7950
        %8041 = vst.msk [vmem:[%s352 + $0x30] sm:$0xff] %vm2075, %v7952
        %8042 = vst.msk [vmem:[%s352 + $0x38] sm:$0xff] %vm2075, %v7954
        %8043 = vst.msk [vmem:[%s352 + $0x40] sm:$0xff] %vm2075, %v7956
        %8044 = vst.msk [vmem:[%s352 + $0x48] sm:$0xff] %vm2075, %v7958
        %8045 = vst.msk [vmem:[%s352 + $0x50] sm:$0xff] %vm2075, %v7960
        %8046 = vst.msk [vmem:[%s352 + $0x58] sm:$0xff] %vm2075, %v7962
        %8047 = vst.msk [vmem:[%s352 + $0x60] sm:$0xff] %vm2075, %v7964
        %8048 = vst.msk [vmem:[%s352 + $0x68] sm:$0xff] %vm2075, %v7966
        %8049 = vst.msk [vmem:[%s352 + $0x70] sm:$0xff] %vm2075, %v7968
        %8050 = vst.msk [vmem:[%s352 + $0x78] sm:$0xff] %vm2075, %v7970
        %8051 = vst.msk [vmem:[%s352 + $0x80] sm:$0xff] %vm2075, %v7972
        %8052 = vst.msk [vmem:[%s352 + $0x88] sm:$0xff] %vm2075, %v7974
        %8053 = vst.msk [vmem:[%s352 + $0x90] sm:$0xff] %vm2075, %v7976
        %8054 = vst.msk [vmem:[%s352 + $0x98] sm:$0xff] %vm2075, %v7978
        %8055 = vst.msk [vmem:[%s352 + $0xa0] sm:$0xff] %vm2075, %v7980
        %8056 = vst.msk [vmem:[%s352 + $0xa8] sm:$0xff] %vm2075, %v7982
        %8057 = vst.msk [vmem:[%s352 + $0xb0] sm:$0xff] %vm2075, %v7984
        %8058 = vst.msk [vmem:[%s352 + $0xb8] sm:$0xff] %vm2075, %v7986
        %8059 = vst.msk [vmem:[%s352 + $0xc0] sm:$0xff] %vm2075, %v7988
        %8060 = vst.msk [vmem:[%s352 + $0xc8] sm:$0xff] %vm2075, %v7990
        %8061 = vst.msk [vmem:[%s352 + $0xd0] sm:$0xff] %vm2075, %v7992
        %8062 = vst.msk [vmem:[%s352 + $0xd8] sm:$0xff] %vm2075, %v7994
        %8063 = vst.msk [vmem:[%s352 + $0xe0] sm:$0xff] %vm2075, %v7996
        %8064 = vst.msk [vmem:[%s352 + $0xe8] sm:$0xff] %vm2075, %v7998
        %8065 = vst.msk [vmem:[%s352 + $0xf0] sm:$0xff] %vm2075, %v8000
        %8066 = vst.msk [vmem:[%s352 + $0xf8] sm:$0xff] %vm2075, %v8002
        %v8067 = vld [vmem:[%s352] sm:$0xff]
        %v8068 = vld [vmem:[%s352 + $0x8] sm:$0xff]
        %v8069 = vld [vmem:[%s352 + $0x10] sm:$0xff]
        %v8070 = vld [vmem:[%s352 + $0x18] sm:$0xff]
        %v8071 = vld [vmem:[%s352 + $0x20] sm:$0xff]
        %v8072 = vld [vmem:[%s352 + $0x28] sm:$0xff]
        %v8073 = vld [vmem:[%s352 + $0x30] sm:$0xff]
        %v8074 = vld [vmem:[%s352 + $0x38] sm:$0xff]
        %v8075 = vld [vmem:[%s352 + $0x40] sm:$0xff]
        %v8076 = vld [vmem:[%s352 + $0x48] sm:$0xff]
        %v8077 = vld [vmem:[%s352 + $0x50] sm:$0xff]
        %v8078 = vld [vmem:[%s352 + $0x58] sm:$0xff]
        %v8079 = vld [vmem:[%s352 + $0x60] sm:$0xff]
        %v8080 = vld [vmem:[%s352 + $0x68] sm:$0xff]
        %v8081 = vld [vmem:[%s352 + $0x70] sm:$0xff]
        %v8082 = vld [vmem:[%s352 + $0x78] sm:$0xff]
        %v8083 = vld [vmem:[%s352 + $0x80] sm:$0xff]
        %v8084 = vld [vmem:[%s352 + $0x88] sm:$0xff]
        %v8085 = vld [vmem:[%s352 + $0x90] sm:$0xff]
        %v8086 = vld [vmem:[%s352 + $0x98] sm:$0xff]
        %v8087 = vld [vmem:[%s352 + $0xa0] sm:$0xff]
        %v8088 = vld [vmem:[%s352 + $0xa8] sm:$0xff]
        %v8089 = vld [vmem:[%s352 + $0xb0] sm:$0xff]
        %v8090 = vld [vmem:[%s352 + $0xb8] sm:$0xff]
        %v8091 = vld [vmem:[%s352 + $0xc0] sm:$0xff]
        %v8092 = vld [vmem:[%s352 + $0xc8] sm:$0xff]
        %v8093 = vld [vmem:[%s352 + $0xd0] sm:$0xff]
        %v8094 = vld [vmem:[%s352 + $0xd8] sm:$0xff]
        %v8095 = vld [vmem:[%s352 + $0xe0] sm:$0xff]
        %v8096 = vld [vmem:[%s352 + $0xe8] sm:$0xff]
        %v8097 = vld [vmem:[%s352 + $0xf0] sm:$0xff]
        %v8098 = vld [vmem:[%s352 + $0xf8] sm:$0xff]
        %v8099 = vld [vmem:[%s7] sm:$0x1]
        %v8101 = vlaneseq
        %v8102 = vshrl.u32 %v8101, 7
        %v8103 = vsub.s32 0, %v8102
        %v8104 = vrot.slane %v8099, %v8103
        %v8106 = vmul.f32 %v8067, %v8104
        %v8107 = vmul.f32 %v8068, %v8104
        %v8108 = vmul.f32 %v8069, %v8104
        %v8109 = vmul.f32 %v8070, %v8104
        %v8110 = vmul.f32 %v8071, %v8104
        %v8111 = vmul.f32 %v8072, %v8104
        %v8112 = vmul.f32 %v8073, %v8104
        %v8113 = vmul.f32 %v8074, %v8104
        %v8114 = vmul.f32 %v8075, %v8104
        %v8115 = vmul.f32 %v8076, %v8104
        %v8116 = vmul.f32 %v8077, %v8104
        %v8117 = vmul.f32 %v8078, %v8104
        %v8118 = vmul.f32 %v8079, %v8104
        %v8119 = vmul.f32 %v8080, %v8104
        %v8120 = vmul.f32 %v8081, %v8104
        %v8121 = vmul.f32 %v8082, %v8104
        %v8122 = vmul.f32 %v8083, %v8104
        %v8123 = vmul.f32 %v8084, %v8104
        %v8124 = vmul.f32 %v8085, %v8104
        %v8125 = vmul.f32 %v8086, %v8104
        %v8126 = vmul.f32 %v8087, %v8104
        %v8127 = vmul.f32 %v8088, %v8104
        %v8128 = vmul.f32 %v8089, %v8104
        %v8129 = vmul.f32 %v8090, %v8104
        %v8130 = vmul.f32 %v8091, %v8104
        %v8131 = vmul.f32 %v8092, %v8104
        %v8132 = vmul.f32 %v8093, %v8104
        %v8133 = vmul.f32 %v8094, %v8104
        %v8134 = vmul.f32 %v8095, %v8104
        %v8135 = vmul.f32 %v8096, %v8104
        %v8136 = vmul.f32 %v8097, %v8104
        %v8137 = vmul.f32 %v8098, %v8104
        %v8138 = vld [vmem:[%s8] sm:$0x1]
        %v8140 = vlaneseq
        %v8141 = vshrl.u32 %v8140, 7
        %v8142 = vsub.s32 0, %v8141
        %v8143 = vrot.slane %v8138, %v8142
        %v8145 = vadd.f32 %v8106, %v8143
        %v8146 = vadd.f32 %v8107, %v8143
        %v8147 = vadd.f32 %v8108, %v8143
        %v8148 = vadd.f32 %v8109, %v8143
        %v8149 = vadd.f32 %v8110, %v8143
        %v8150 = vadd.f32 %v8111, %v8143
        %v8151 = vadd.f32 %v8112, %v8143
        %v8152 = vadd.f32 %v8113, %v8143
        %v8153 = vadd.f32 %v8114, %v8143
        %v8154 = vadd.f32 %v8115, %v8143
        %v8155 = vadd.f32 %v8116, %v8143
        %v8156 = vadd.f32 %v8117, %v8143
        %v8157 = vadd.f32 %v8118, %v8143
        %v8158 = vadd.f32 %v8119, %v8143
        %v8159 = vadd.f32 %v8120, %v8143
        %v8160 = vadd.f32 %v8121, %v8143
        %v8161 = vadd.f32 %v8122, %v8143
        %v8162 = vadd.f32 %v8123, %v8143
        %v8163 = vadd.f32 %v8124, %v8143
        %v8164 = vadd.f32 %v8125, %v8143
        %v8165 = vadd.f32 %v8126, %v8143
        %v8166 = vadd.f32 %v8127, %v8143
        %v8167 = vadd.f32 %v8128, %v8143
        %v8168 = vadd.f32 %v8129, %v8143
        %v8169 = vadd.f32 %v8130, %v8143
        %v8170 = vadd.f32 %v8131, %v8143
        %v8171 = vadd.f32 %v8132, %v8143
        %v8172 = vadd.f32 %v8133, %v8143
        %v8173 = vadd.f32 %v8134, %v8143
        %v8174 = vadd.f32 %v8135, %v8143
        %v8175 = vadd.f32 %v8136, %v8143
        %v8176 = vadd.f32 %v8137, %v8143
        %v8177 = vmax.f32 %v8145, 0.0
        %v8178 = vmax.f32 %v8146, 0.0
        %v8179 = vmax.f32 %v8147, 0.0
        %v8180 = vmax.f32 %v8148, 0.0
        %v8181 = vmax.f32 %v8149, 0.0
        %v8182 = vmax.f32 %v8150, 0.0
        %v8183 = vmax.f32 %v8151, 0.0
        %v8184 = vmax.f32 %v8152, 0.0
        %v8185 = vmax.f32 %v8153, 0.0
        %v8186 = vmax.f32 %v8154, 0.0
        %v8187 = vmax.f32 %v8155, 0.0
        %v8188 = vmax.f32 %v8156, 0.0
        %v8189 = vmax.f32 %v8157, 0.0
        %v8190 = vmax.f32 %v8158, 0.0
        %v8191 = vmax.f32 %v8159, 0.0
        %v8192 = vmax.f32 %v8160, 0.0
        %v8193 = vmax.f32 %v8161, 0.0
        %v8194 = vmax.f32 %v8162, 0.0
        %v8195 = vmax.f32 %v8163, 0.0
        %v8196 = vmax.f32 %v8164, 0.0
        %v8197 = vmax.f32 %v8165, 0.0
        %v8198 = vmax.f32 %v8166, 0.0
        %v8199 = vmax.f32 %v8167, 0.0
        %v8200 = vmax.f32 %v8168, 0.0
        %v8201 = vmax.f32 %v8169, 0.0
        %v8202 = vmax.f32 %v8170, 0.0
        %v8203 = vmax.f32 %v8171, 0.0
        %v8204 = vmax.f32 %v8172, 0.0
        %v8205 = vmax.f32 %v8173, 0.0
        %v8206 = vmax.f32 %v8174, 0.0
        %v8207 = vmax.f32 %v8175, 0.0
        %v8208 = vmax.f32 %v8176, 0.0
        %v8209 = vpack.c.bf16 %v8178, %v8177
        %v8210 = vpack.c.bf16 %v8180, %v8179
        %v8211 = vpack.c.bf16 %v8182, %v8181
        %v8212 = vpack.c.bf16 %v8184, %v8183
        %v8213 = vpack.c.bf16 %v8186, %v8185
        %v8214 = vpack.c.bf16 %v8188, %v8187
        %v8215 = vpack.c.bf16 %v8190, %v8189
        %v8216 = vpack.c.bf16 %v8192, %v8191
        %v8217 = vpack.c.bf16 %v8194, %v8193
        %v8218 = vpack.c.bf16 %v8196, %v8195
        %v8219 = vpack.c.bf16 %v8198, %v8197
        %v8220 = vpack.c.bf16 %v8200, %v8199
        %v8221 = vpack.c.bf16 %v8202, %v8201
        %v8222 = vpack.c.bf16 %v8204, %v8203
        %v8223 = vpack.c.bf16 %v8206, %v8205
        %v8224 = vpack.c.bf16 %v8208, %v8207
        %v8241 = vunpack.c.l.b16 %v8209
        %v8242 = vunpack.c.h.b16 %v8209
        %v8243 = vunpack.c.l.b16 %v8210
        %v8244 = vunpack.c.h.b16 %v8210
        %v8245 = vunpack.c.l.b16 %v8211
        %v8246 = vunpack.c.h.b16 %v8211
        %v8247 = vunpack.c.l.b16 %v8212
        %v8248 = vunpack.c.h.b16 %v8212
        %v8249 = vunpack.c.l.b16 %v8213
        %v8250 = vunpack.c.h.b16 %v8213
        %v8251 = vunpack.c.l.b16 %v8214
        %v8252 = vunpack.c.h.b16 %v8214
        %v8253 = vunpack.c.l.b16 %v8215
        %v8254 = vunpack.c.h.b16 %v8215
        %v8255 = vunpack.c.l.b16 %v8216
        %v8256 = vunpack.c.h.b16 %v8216
        %v8257 = vunpack.c.l.b16 %v8217
        %v8258 = vunpack.c.h.b16 %v8217
        %v8259 = vunpack.c.l.b16 %v8218
        %v8260 = vunpack.c.h.b16 %v8218
        %v8261 = vunpack.c.l.b16 %v8219
        %v8262 = vunpack.c.h.b16 %v8219
        %v8263 = vunpack.c.l.b16 %v8220
        %v8264 = vunpack.c.h.b16 %v8220
        %v8265 = vunpack.c.l.b16 %v8221
        %v8266 = vunpack.c.h.b16 %v8221
        %v8267 = vunpack.c.l.b16 %v8222
        %v8268 = vunpack.c.h.b16 %v8222
        %v8269 = vunpack.c.l.b16 %v8223
        %v8270 = vunpack.c.h.b16 %v8223
        %v8271 = vunpack.c.l.b16 %v8224
        %v8272 = vunpack.c.h.b16 %v8224
        %v8273 = vpack.c.b16 %v8241, %v8241
        %v8274 = vpack.c.b16 %v8242, %v8242
        %v8275 = vpack.c.b16 %v8243, %v8243
        %v8276 = vpack.c.b16 %v8244, %v8244
        %v8277 = vpack.c.b16 %v8245, %v8245
        %v8278 = vpack.c.b16 %v8246, %v8246
        %v8279 = vpack.c.b16 %v8247, %v8247
        %v8280 = vpack.c.b16 %v8248, %v8248
        %v8281 = vpack.c.b16 %v8249, %v8249
        %v8282 = vpack.c.b16 %v8250, %v8250
        %v8283 = vpack.c.b16 %v8251, %v8251
        %v8284 = vpack.c.b16 %v8252, %v8252
        %v8285 = vpack.c.b16 %v8253, %v8253
        %v8286 = vpack.c.b16 %v8254, %v8254
        %v8287 = vpack.c.b16 %v8255, %v8255
        %v8288 = vpack.c.b16 %v8256, %v8256
        %v8289 = vpack.c.b16 %v8257, %v8257
        %v8290 = vpack.c.b16 %v8258, %v8258
        %v8291 = vpack.c.b16 %v8259, %v8259
        %v8292 = vpack.c.b16 %v8260, %v8260
        %v8293 = vpack.c.b16 %v8261, %v8261
        %v8294 = vpack.c.b16 %v8262, %v8262
        %v8295 = vpack.c.b16 %v8263, %v8263
        %v8296 = vpack.c.b16 %v8264, %v8264
        %v8297 = vpack.c.b16 %v8265, %v8265
        %v8298 = vpack.c.b16 %v8266, %v8266
        %v8299 = vpack.c.b16 %v8267, %v8267
        %v8300 = vpack.c.b16 %v8268, %v8268
        %v8301 = vpack.c.b16 %v8269, %v8269
        %v8302 = vpack.c.b16 %v8270, %v8270
        %v8303 = vpack.c.b16 %v8271, %v8271
        %v8304 = vpack.c.b16 %v8272, %v8272
        %v8306 = vshrl.u32 %v8273, 16
        %v8308 = vrot.slane %v8306, 7
        %v8309 = vshll.u32 %v8273, 16
        %v8311 = vor.u32 %v8308, %v8309
        %v8312 = vrot.slane %v8308, 4
        %v8314 = vshrl.u32 %v8274, 16
        %v8316 = vrot.slane %v8314, 7
        %v8317 = vshll.u32 %v8274, 16
        %v8319 = vor.u32 %v8316, %v8317
        %v8320 = vsel %vm785, %v8312, %v8319
        %v8321 = vrot.slane %v8316, 4
        %v8323 = vshrl.u32 %v8275, 16
        %v8325 = vrot.slane %v8323, 7
        %v8326 = vshll.u32 %v8275, 16
        %v8328 = vor.u32 %v8325, %v8326
        %v8329 = vrot.slane %v8325, 4
        %v8331 = vshrl.u32 %v8276, 16
        %v8333 = vrot.slane %v8331, 7
        %v8334 = vshll.u32 %v8276, 16
        %v8336 = vor.u32 %v8333, %v8334
        %v8337 = vsel %vm785, %v8329, %v8336
        %v8338 = vrot.slane %v8333, 4
        %v8340 = vshrl.u32 %v8277, 16
        %v8342 = vrot.slane %v8340, 7
        %v8343 = vshll.u32 %v8277, 16
        %v8345 = vor.u32 %v8342, %v8343
        %v8346 = vrot.slane %v8342, 4
        %v8348 = vshrl.u32 %v8278, 16
        %v8350 = vrot.slane %v8348, 7
        %v8351 = vshll.u32 %v8278, 16
        %v8353 = vor.u32 %v8350, %v8351
        %v8354 = vsel %vm785, %v8346, %v8353
        %v8355 = vrot.slane %v8350, 4
        %v8357 = vshrl.u32 %v8279, 16
        %v8359 = vrot.slane %v8357, 7
        %v8360 = vshll.u32 %v8279, 16
        %v8362 = vor.u32 %v8359, %v8360
        %v8363 = vrot.slane %v8359, 4
        %v8365 = vshrl.u32 %v8280, 16
        %v8367 = vrot.slane %v8365, 7
        %v8368 = vshll.u32 %v8280, 16
        %v8370 = vor.u32 %v8367, %v8368
        %v8371 = vsel %vm785, %v8363, %v8370
        %v8372 = vrot.slane %v8367, 4
        %v8374 = vshrl.u32 %v8281, 16
        %v8376 = vrot.slane %v8374, 7
        %v8377 = vshll.u32 %v8281, 16
        %v8379 = vor.u32 %v8376, %v8377
        %v8380 = vrot.slane %v8376, 4
        %v8382 = vshrl.u32 %v8282, 16
        %v8384 = vrot.slane %v8382, 7
        %v8385 = vshll.u32 %v8282, 16
        %v8387 = vor.u32 %v8384, %v8385
        %v8388 = vsel %vm785, %v8380, %v8387
        %v8389 = vrot.slane %v8384, 4
        %v8391 = vshrl.u32 %v8283, 16
        %v8393 = vrot.slane %v8391, 7
        %v8394 = vshll.u32 %v8283, 16
        %v8396 = vor.u32 %v8393, %v8394
        %v8397 = vrot.slane %v8393, 4
        %v8399 = vshrl.u32 %v8284, 16
        %v8401 = vrot.slane %v8399, 7
        %v8402 = vshll.u32 %v8284, 16
        %v8404 = vor.u32 %v8401, %v8402
        %v8405 = vsel %vm785, %v8397, %v8404
        %v8406 = vrot.slane %v8401, 4
        %v8408 = vshrl.u32 %v8285, 16
        %v8410 = vrot.slane %v8408, 7
        %v8411 = vshll.u32 %v8285, 16
        %v8413 = vor.u32 %v8410, %v8411
        %v8414 = vrot.slane %v8410, 4
        %v8416 = vshrl.u32 %v8286, 16
        %v8418 = vrot.slane %v8416, 7
        %v8419 = vshll.u32 %v8286, 16
        %v8421 = vor.u32 %v8418, %v8419
        %v8422 = vsel %vm785, %v8414, %v8421
        %v8423 = vrot.slane %v8418, 4
        %v8425 = vshrl.u32 %v8287, 16
        %v8427 = vrot.slane %v8425, 7
        %v8428 = vshll.u32 %v8287, 16
        %v8430 = vor.u32 %v8427, %v8428
        %v8431 = vrot.slane %v8427, 4
        %v8433 = vshrl.u32 %v8288, 16
        %v8435 = vrot.slane %v8433, 7
        %v8436 = vshll.u32 %v8288, 16
        %v8438 = vor.u32 %v8435, %v8436
        %v8439 = vsel %vm785, %v8431, %v8438
        %v8440 = vrot.slane %v8435, 4
        %v8442 = vshrl.u32 %v8289, 16
        %v8444 = vrot.slane %v8442, 7
        %v8445 = vshll.u32 %v8289, 16
        %v8447 = vor.u32 %v8444, %v8445
        %v8448 = vrot.slane %v8444, 4
        %v8450 = vshrl.u32 %v8290, 16
        %v8452 = vrot.slane %v8450, 7
        %v8453 = vshll.u32 %v8290, 16
        %v8455 = vor.u32 %v8452, %v8453
        %v8456 = vsel %vm785, %v8448, %v8455
        %v8457 = vrot.slane %v8452, 4
        %v8459 = vshrl.u32 %v8291, 16
        %v8461 = vrot.slane %v8459, 7
        %v8462 = vshll.u32 %v8291, 16
        %v8464 = vor.u32 %v8461, %v8462
        %v8465 = vrot.slane %v8461, 4
        %v8467 = vshrl.u32 %v8292, 16
        %v8469 = vrot.slane %v8467, 7
        %v8470 = vshll.u32 %v8292, 16
        %v8472 = vor.u32 %v8469, %v8470
        %v8473 = vsel %vm785, %v8465, %v8472
        %v8474 = vrot.slane %v8469, 4
        %v8476 = vshrl.u32 %v8293, 16
        %v8478 = vrot.slane %v8476, 7
        %v8479 = vshll.u32 %v8293, 16
        %v8481 = vor.u32 %v8478, %v8479
        %v8482 = vrot.slane %v8478, 4
        %v8484 = vshrl.u32 %v8294, 16
        %v8486 = vrot.slane %v8484, 7
        %v8487 = vshll.u32 %v8294, 16
        %v8489 = vor.u32 %v8486, %v8487
        %v8490 = vsel %vm785, %v8482, %v8489
        %v8491 = vrot.slane %v8486, 4
        %v8493 = vshrl.u32 %v8295, 16
        %v8495 = vrot.slane %v8493, 7
        %v8496 = vshll.u32 %v8295, 16
        %v8498 = vor.u32 %v8495, %v8496
        %v8499 = vrot.slane %v8495, 4
        %v8501 = vshrl.u32 %v8296, 16
        %v8503 = vrot.slane %v8501, 7
        %v8504 = vshll.u32 %v8296, 16
        %v8506 = vor.u32 %v8503, %v8504
        %v8507 = vsel %vm785, %v8499, %v8506
        %v8508 = vrot.slane %v8503, 4
        %v8510 = vshrl.u32 %v8297, 16
        %v8512 = vrot.slane %v8510, 7
        %v8513 = vshll.u32 %v8297, 16
        %v8515 = vor.u32 %v8512, %v8513
        %v8516 = vrot.slane %v8512, 4
        %v8518 = vshrl.u32 %v8298, 16
        %v8520 = vrot.slane %v8518, 7
        %v8521 = vshll.u32 %v8298, 16
        %v8523 = vor.u32 %v8520, %v8521
        %v8524 = vsel %vm785, %v8516, %v8523
        %v8525 = vrot.slane %v8520, 4
        %v8527 = vshrl.u32 %v8299, 16
        %v8529 = vrot.slane %v8527, 7
        %v8530 = vshll.u32 %v8299, 16
        %v8532 = vor.u32 %v8529, %v8530
        %v8533 = vrot.slane %v8529, 4
        %v8535 = vshrl.u32 %v8300, 16
        %v8537 = vrot.slane %v8535, 7
        %v8538 = vshll.u32 %v8300, 16
        %v8540 = vor.u32 %v8537, %v8538
        %v8541 = vsel %vm785, %v8533, %v8540
        %v8542 = vrot.slane %v8537, 4
        %v8544 = vshrl.u32 %v8301, 16
        %v8546 = vrot.slane %v8544, 7
        %v8547 = vshll.u32 %v8301, 16
        %v8549 = vor.u32 %v8546, %v8547
        %v8550 = vrot.slane %v8546, 4
        %v8552 = vshrl.u32 %v8302, 16
        %v8554 = vrot.slane %v8552, 7
        %v8555 = vshll.u32 %v8302, 16
        %v8557 = vor.u32 %v8554, %v8555
        %v8558 = vsel %vm785, %v8550, %v8557
        %v8559 = vrot.slane %v8554, 4
        %v8561 = vshrl.u32 %v8303, 16
        %v8563 = vrot.slane %v8561, 7
        %v8564 = vshll.u32 %v8303, 16
        %v8566 = vor.u32 %v8563, %v8564
        %v8567 = vrot.slane %v8563, 4
        %v8569 = vshrl.u32 %v8304, 16
        %v8571 = vrot.slane %v8569, 7
        %v8572 = vshll.u32 %v8304, 16
        %v8574 = vor.u32 %v8571, %v8572
        %v8575 = vsel %vm785, %v8567, %v8574
        %v8576 = vrot.slane %v8571, 4
        %vm8625 = vcmask 93184
        %vm8626 = vmand %vm8625, %vm425
        %v8627 = vld [vmem:[%s1106] sm:$0xf]
        %v8628 = vsel %vm8626, %v8311, %v8627
        %8629 = vst [vmem:[%s1106] sm:$0xf] %v8628
        %8630 = vst.msk [vmem:[%s1106 + $0x4] sm:$0xf] %vm359, %v8320
        %v8631 = vld [vmem:[%s1106 + $0x8] sm:$0x1]
        %v8632 = vsel %vm370, %v8321, %v8631
        %8633 = vst [vmem:[%s1106 + $0x8] sm:$0x1] %v8632
        %v8634 = vld [vmem:[%s1106 + $0xc] sm:$0xf]
        %v8635 = vsel %vm8626, %v8328, %v8634
        %8636 = vst [vmem:[%s1106 + $0xc] sm:$0xf] %v8635
        %8637 = vst.msk [vmem:[%s1106 + $0x10] sm:$0xf] %vm359, %v8337
        %v8638 = vld [vmem:[%s1106 + $0x14] sm:$0x1]
        %v8639 = vsel %vm370, %v8338, %v8638
        %8640 = vst [vmem:[%s1106 + $0x14] sm:$0x1] %v8639
        %v8641 = vld [vmem:[%s1106 + $0x18] sm:$0xf]
        %v8642 = vsel %vm8626, %v8345, %v8641
        %8643 = vst [vmem:[%s1106 + $0x18] sm:$0xf] %v8642
        %8644 = vst.msk [vmem:[%s1106 + $0x1c] sm:$0xf] %vm359, %v8354
        %v8645 = vld [vmem:[%s1106 + $0x20] sm:$0x1]
        %v8646 = vsel %vm370, %v8355, %v8645
        %8647 = vst [vmem:[%s1106 + $0x20] sm:$0x1] %v8646
        %v8648 = vld [vmem:[%s1106 + $0x24] sm:$0xf]
        %v8649 = vsel %vm8626, %v8362, %v8648
        %8650 = vst [vmem:[%s1106 + $0x24] sm:$0xf] %v8649
        %8651 = vst.msk [vmem:[%s1106 + $0x28] sm:$0xf] %vm359, %v8371
        %v8652 = vld [vmem:[%s1106 + $0x2c] sm:$0x1]
        %v8653 = vsel %vm370, %v8372, %v8652
        %8654 = vst [vmem:[%s1106 + $0x2c] sm:$0x1] %v8653
        %v8655 = vld [vmem:[%s1106 + $0x30] sm:$0xf]
        %v8656 = vsel %vm8626, %v8379, %v8655
        %8657 = vst [vmem:[%s1106 + $0x30] sm:$0xf] %v8656
        %8658 = vst.msk [vmem:[%s1106 + $0x34] sm:$0xf] %vm359, %v8388
        %v8659 = vld [vmem:[%s1106 + $0x38] sm:$0x1]
        %v8660 = vsel %vm370, %v8389, %v8659
        %8661 = vst [vmem:[%s1106 + $0x38] sm:$0x1] %v8660
        %v8662 = vld [vmem:[%s1106 + $0x3c] sm:$0xf]
        %v8663 = vsel %vm8626, %v8396, %v8662
        %8664 = vst [vmem:[%s1106 + $0x3c] sm:$0xf] %v8663
        %8665 = vst.msk [vmem:[%s1106 + $0x40] sm:$0xf] %vm359, %v8405
        %v8666 = vld [vmem:[%s1106 + $0x44] sm:$0x1]
        %v8667 = vsel %vm370, %v8406, %v8666
        %8668 = vst [vmem:[%s1106 + $0x44] sm:$0x1] %v8667
        %v8669 = vld [vmem:[%s1106 + $0x48] sm:$0xf]
        %v8670 = vsel %vm8626, %v8413, %v8669
        %8671 = vst [vmem:[%s1106 + $0x48] sm:$0xf] %v8670
        %8672 = vst.msk [vmem:[%s1106 + $0x4c] sm:$0xf] %vm359, %v8422
        %v8673 = vld [vmem:[%s1106 + $0x50] sm:$0x1]
        %v8674 = vsel %vm370, %v8423, %v8673
        %8675 = vst [vmem:[%s1106 + $0x50] sm:$0x1] %v8674
        %v8676 = vld [vmem:[%s1106 + $0x54] sm:$0xf]
        %v8677 = vsel %vm8626, %v8430, %v8676
        %8678 = vst [vmem:[%s1106 + $0x54] sm:$0xf] %v8677
        %8679 = vst.msk [vmem:[%s1106 + $0x58] sm:$0xf] %vm359, %v8439
        %v8680 = vld [vmem:[%s1106 + $0x5c] sm:$0x1]
        %v8681 = vsel %vm370, %v8440, %v8680
        %8682 = vst [vmem:[%s1106 + $0x5c] sm:$0x1] %v8681
        %v8683 = vld [vmem:[%s1106 + $0x60] sm:$0xf]
        %v8684 = vsel %vm8626, %v8447, %v8683
        %8685 = vst [vmem:[%s1106 + $0x60] sm:$0xf] %v8684
        %8686 = vst.msk [vmem:[%s1106 + $0x64] sm:$0xf] %vm359, %v8456
        %v8687 = vld [vmem:[%s1106 + $0x68] sm:$0x1]
        %v8688 = vsel %vm370, %v8457, %v8687
        %8689 = vst [vmem:[%s1106 + $0x68] sm:$0x1] %v8688
        %v8690 = vld [vmem:[%s1106 + $0x6c] sm:$0xf]
        %v8691 = vsel %vm8626, %v8464, %v8690
        %8692 = vst [vmem:[%s1106 + $0x6c] sm:$0xf] %v8691
        %8693 = vst.msk [vmem:[%s1106 + $0x70] sm:$0xf] %vm359, %v8473
        %v8694 = vld [vmem:[%s1106 + $0x74] sm:$0x1]
        %v8695 = vsel %vm370, %v8474, %v8694
        %8696 = vst [vmem:[%s1106 + $0x74] sm:$0x1] %v8695
        %v8697 = vld [vmem:[%s1106 + $0x78] sm:$0xf]
        %v8698 = vsel %vm8626, %v8481, %v8697
        %8699 = vst [vmem:[%s1106 + $0x78] sm:$0xf] %v8698
        %8700 = vst.msk [vmem:[%s1106 + $0x7c] sm:$0xf] %vm359, %v8490
        %v8701 = vld [vmem:[%s1106 + $0x80] sm:$0x1]
        %v8702 = vsel %vm370, %v8491, %v8701
        %8703 = vst [vmem:[%s1106 + $0x80] sm:$0x1] %v8702
        %v8704 = vld [vmem:[%s1106 + $0x84] sm:$0xf]
        %v8705 = vsel %vm8626, %v8498, %v8704
        %8706 = vst [vmem:[%s1106 + $0x84] sm:$0xf] %v8705
        %8707 = vst.msk [vmem:[%s1106 + $0x88] sm:$0xf] %vm359, %v8507
        %v8708 = vld [vmem:[%s1106 + $0x8c] sm:$0x1]
        %v8709 = vsel %vm370, %v8508, %v8708
        %8710 = vst [vmem:[%s1106 + $0x8c] sm:$0x1] %v8709
        %v8711 = vld [vmem:[%s1106 + $0x90] sm:$0xf]
        %v8712 = vsel %vm8626, %v8515, %v8711
        %8713 = vst [vmem:[%s1106 + $0x90] sm:$0xf] %v8712
        %8714 = vst.msk [vmem:[%s1106 + $0x94] sm:$0xf] %vm359, %v8524
        %v8715 = vld [vmem:[%s1106 + $0x98] sm:$0x1]
        %v8716 = vsel %vm370, %v8525, %v8715
        %8717 = vst [vmem:[%s1106 + $0x98] sm:$0x1] %v8716
        %v8718 = vld [vmem:[%s1106 + $0x9c] sm:$0xf]
        %v8719 = vsel %vm8626, %v8532, %v8718
        %8720 = vst [vmem:[%s1106 + $0x9c] sm:$0xf] %v8719
        %8721 = vst.msk [vmem:[%s1106 + $0xa0] sm:$0xf] %vm359, %v8541
        %v8722 = vld [vmem:[%s1106 + $0xa4] sm:$0x1]
        %v8723 = vsel %vm370, %v8542, %v8722
        %8724 = vst [vmem:[%s1106 + $0xa4] sm:$0x1] %v8723
        %v8725 = vld [vmem:[%s1106 + $0xa8] sm:$0xf]
        %v8726 = vsel %vm8626, %v8549, %v8725
        %8727 = vst [vmem:[%s1106 + $0xa8] sm:$0xf] %v8726
        %8728 = vst.msk [vmem:[%s1106 + $0xac] sm:$0xf] %vm359, %v8558
        %v8729 = vld [vmem:[%s1106 + $0xb0] sm:$0x1]
        %v8730 = vsel %vm370, %v8559, %v8729
        %8731 = vst [vmem:[%s1106 + $0xb0] sm:$0x1] %v8730
        %v8732 = vld [vmem:[%s1106 + $0xb4] sm:$0xf]
        %v8733 = vsel %vm8626, %v8566, %v8732
        %8734 = vst [vmem:[%s1106 + $0xb4] sm:$0xf] %v8733
        %8735 = vst.msk [vmem:[%s1106 + $0xb8] sm:$0xf] %vm359, %v8575
        %v8736 = vld [vmem:[%s1106 + $0xbc] sm:$0x1]
        %v8737 = vsel %vm370, %v8576, %v8736
        %8738 = vst [vmem:[%s1106 + $0xbc] sm:$0x1] %v8737
        %v8739 = vld [vmem:[#allocation2] sm:$0xf]
        %v8740 = vld [vmem:[#allocation2 + $0x4] sm:$0xf]
        %v8741 = vld [vmem:[#allocation2 + $0xc] sm:$0xf]
        %v8742 = vld [vmem:[#allocation2 + $0x10] sm:$0xf]
        %v8743 = vld [vmem:[#allocation2 + $0x18] sm:$0xf]
        %v8744 = vld [vmem:[#allocation2 + $0x1c] sm:$0xf]
        %v8745 = vld [vmem:[#allocation2 + $0x24] sm:$0xf]
        %v8746 = vld [vmem:[#allocation2 + $0x28] sm:$0xf]
        %v8747 = vld [vmem:[#allocation2 + $0x30] sm:$0xf]
        %v8748 = vld [vmem:[#allocation2 + $0x34] sm:$0xf]
        %v8749 = vld [vmem:[#allocation2 + $0x3c] sm:$0xf]
        %v8750 = vld [vmem:[#allocation2 + $0x40] sm:$0xf]
        %v8751 = vld [vmem:[#allocation2 + $0x48] sm:$0xf]
        %v8752 = vld [vmem:[#allocation2 + $0x4c] sm:$0xf]
        %v8753 = vld [vmem:[#allocation2 + $0x54] sm:$0xf]
        %v8754 = vld [vmem:[#allocation2 + $0x58] sm:$0xf]
        %v8755 = vld [vmem:[#allocation2 + $0x60] sm:$0xf]
        %v8756 = vld [vmem:[#allocation2 + $0x64] sm:$0xf]
        %v8757 = vld [vmem:[#allocation2 + $0x6c] sm:$0xf]
        %v8758 = vld [vmem:[#allocation2 + $0x70] sm:$0xf]
        %v8759 = vld [vmem:[#allocation2 + $0x78] sm:$0xf]
        %v8760 = vld [vmem:[#allocation2 + $0x7c] sm:$0xf]
        %v8761 = vld [vmem:[#allocation2 + $0x84] sm:$0xf]
        %v8762 = vld [vmem:[#allocation2 + $0x88] sm:$0xf]
        %v8763 = vld [vmem:[#allocation2 + $0x90] sm:$0xf]
        %v8764 = vld [vmem:[#allocation2 + $0x94] sm:$0xf]
        %v8765 = vld [vmem:[#allocation2 + $0x9c] sm:$0xf]
        %v8766 = vld [vmem:[#allocation2 + $0xa0] sm:$0xf]
        %v8767 = vld [vmem:[#allocation2 + $0xa8] sm:$0xf]
        %v8768 = vld [vmem:[#allocation2 + $0xac] sm:$0xf]
        %v8769 = vld [vmem:[#allocation2 + $0xb4] sm:$0xf]
        %v8770 = vld [vmem:[#allocation2 + $0xb8] sm:$0xf]
        %v8803 = vunpack.c.l.b16 %v8739
        %v8804 = vunpack.c.l.b16 %v8740
        %v8805 = vunpack.c.l.b16 %v8741
        %v8806 = vunpack.c.l.b16 %v8742
        %v8807 = vunpack.c.l.b16 %v8743
        %v8808 = vunpack.c.l.b16 %v8744
        %v8809 = vunpack.c.l.b16 %v8745
        %v8810 = vunpack.c.l.b16 %v8746
        %v8811 = vunpack.c.l.b16 %v8747
        %v8812 = vunpack.c.l.b16 %v8748
        %v8813 = vunpack.c.l.b16 %v8749
        %v8814 = vunpack.c.l.b16 %v8750
        %v8815 = vunpack.c.l.b16 %v8751
        %v8816 = vunpack.c.l.b16 %v8752
        %v8817 = vunpack.c.l.b16 %v8753
        %v8818 = vunpack.c.l.b16 %v8754
        %v8819 = vunpack.c.l.b16 %v8755
        %v8820 = vunpack.c.l.b16 %v8756
        %v8821 = vunpack.c.l.b16 %v8757
        %v8822 = vunpack.c.l.b16 %v8758
        %v8823 = vunpack.c.l.b16 %v8759
        %v8824 = vunpack.c.l.b16 %v8760
        %v8825 = vunpack.c.l.b16 %v8761
        %v8826 = vunpack.c.l.b16 %v8762
        %v8827 = vunpack.c.l.b16 %v8763
        %v8828 = vunpack.c.l.b16 %v8764
        %v8829 = vunpack.c.l.b16 %v8765
        %v8830 = vunpack.c.l.b16 %v8766
        %v8831 = vunpack.c.l.b16 %v8767
        %v8832 = vunpack.c.l.b16 %v8768
        %v8833 = vunpack.c.l.b16 %v8769
        %v8834 = vunpack.c.l.b16 %v8770
        %v8835 = vpack.c.b16 %v8804, %v8803
        %v8836 = vpack.c.b16 %v8806, %v8805
        %v8837 = vpack.c.b16 %v8808, %v8807
        %v8838 = vpack.c.b16 %v8810, %v8809
        %v8839 = vpack.c.b16 %v8812, %v8811
        %v8840 = vpack.c.b16 %v8814, %v8813
        %v8841 = vpack.c.b16 %v8816, %v8815
        %v8842 = vpack.c.b16 %v8818, %v8817
        %v8843 = vpack.c.b16 %v8820, %v8819
        %v8844 = vpack.c.b16 %v8822, %v8821
        %v8845 = vpack.c.b16 %v8824, %v8823
        %v8846 = vpack.c.b16 %v8826, %v8825
        %v8847 = vpack.c.b16 %v8828, %v8827
        %v8848 = vpack.c.b16 %v8830, %v8829
        %v8849 = vpack.c.b16 %v8832, %v8831
        %v8850 = vpack.c.b16 %v8834, %v8833
        %vm8867 = vcmask 97280
        %8868 = vst.msk [vmem:[#allocation3] sm:$0xff] %vm8867, %v8835
        %8869 = vst.msk [vmem:[#allocation3 + $0x8] sm:$0xff] %vm8867, %v8836
        %8870 = vst.msk [vmem:[#allocation3 + $0x10] sm:$0xff] %vm8867, %v8837
        %8871 = vst.msk [vmem:[#allocation3 + $0x18] sm:$0xff] %vm8867, %v8838
        %8872 = vst.msk [vmem:[#allocation3 + $0x20] sm:$0xff] %vm8867, %v8839
        %8873 = vst.msk [vmem:[#allocation3 + $0x28] sm:$0xff] %vm8867, %v8840
        %8874 = vst.msk [vmem:[#allocation3 + $0x30] sm:$0xff] %vm8867, %v8841
        %8875 = vst.msk [vmem:[#allocation3 + $0x38] sm:$0xff] %vm8867, %v8842
        %8876 = vst.msk [vmem:[#allocation3 + $0x40] sm:$0xff] %vm8867, %v8843
        %8877 = vst.msk [vmem:[#allocation3 + $0x48] sm:$0xff] %vm8867, %v8844
        %8878 = vst.msk [vmem:[#allocation3 + $0x50] sm:$0xff] %vm8867, %v8845
        %8879 = vst.msk [vmem:[#allocation3 + $0x58] sm:$0xff] %vm8867, %v8846
        %8880 = vst.msk [vmem:[#allocation3 + $0x60] sm:$0xff] %vm8867, %v8847
        %8881 = vst.msk [vmem:[#allocation3 + $0x68] sm:$0xff] %vm8867, %v8848
        %8882 = vst.msk [vmem:[#allocation3 + $0x70] sm:$0xff] %vm8867, %v8849
        %8883 = vst.msk [vmem:[#allocation3 + $0x78] sm:$0xff] %vm8867, %v8850
        %v8884 = vld [vmem:[#allocation2] sm:$0xf]
        %v8885 = vld [vmem:[#allocation2 + $0x4] sm:$0xf]
        %v8886 = vld [vmem:[#allocation2 + $0x8] sm:$0x1]
        %v8887 = vld [vmem:[#allocation2 + $0xc] sm:$0xf]
        %v8888 = vld [vmem:[#allocation2 + $0x10] sm:$0xf]
        %v8889 = vld [vmem:[#allocation2 + $0x14] sm:$0x1]
        %v8890 = vld [vmem:[#allocation2 + $0x18] sm:$0xf]
        %v8891 = vld [vmem:[#allocation2 + $0x1c] sm:$0xf]
        %v8892 = vld [vmem:[#allocation2 + $0x20] sm:$0x1]
        %v8893 = vld [vmem:[#allocation2 + $0x24] sm:$0xf]
        %v8894 = vld [vmem:[#allocation2 + $0x28] sm:$0xf]
        %v8895 = vld [vmem:[#allocation2 + $0x2c] sm:$0x1]
        %v8896 = vld [vmem:[#allocation2 + $0x30] sm:$0xf]
        %v8897 = vld [vmem:[#allocation2 + $0x34] sm:$0xf]
        %v8898 = vld [vmem:[#allocation2 + $0x38] sm:$0x1]
        %v8899 = vld [vmem:[#allocation2 + $0x3c] sm:$0xf]
        %v8900 = vld [vmem:[#allocation2 + $0x40] sm:$0xf]
        %v8901 = vld [vmem:[#allocation2 + $0x44] sm:$0x1]
        %v8902 = vld [vmem:[#allocation2 + $0x48] sm:$0xf]
        %v8903 = vld [vmem:[#allocation2 + $0x4c] sm:$0xf]
        %v8904 = vld [vmem:[#allocation2 + $0x50] sm:$0x1]
        %v8905 = vld [vmem:[#allocation2 + $0x54] sm:$0xf]
        %v8906 = vld [vmem:[#allocation2 + $0x58] sm:$0xf]
        %v8907 = vld [vmem:[#allocation2 + $0x5c] sm:$0x1]
        %v8908 = vld [vmem:[#allocation2 + $0x60] sm:$0xf]
        %v8909 = vld [vmem:[#allocation2 + $0x64] sm:$0xf]
        %v8910 = vld [vmem:[#allocation2 + $0x68] sm:$0x1]
        %v8911 = vld [vmem:[#allocation2 + $0x6c] sm:$0xf]
        %v8912 = vld [vmem:[#allocation2 + $0x70] sm:$0xf]
        %v8913 = vld [vmem:[#allocation2 + $0x74] sm:$0x1]
        %v8914 = vld [vmem:[#allocation2 + $0x78] sm:$0xf]
        %v8915 = vld [vmem:[#allocation2 + $0x7c] sm:$0xf]
        %v8916 = vld [vmem:[#allocation2 + $0x80] sm:$0x1]
        %v8917 = vld [vmem:[#allocation2 + $0x84] sm:$0xf]
        %v8918 = vld [vmem:[#allocation2 + $0x88] sm:$0xf]
        %v8919 = vld [vmem:[#allocation2 + $0x8c] sm:$0x1]
        %v8920 = vld [vmem:[#allocation2 + $0x90] sm:$0xf]
        %v8921 = vld [vmem:[#allocation2 + $0x94] sm:$0xf]
        %v8922 = vld [vmem:[#allocation2 + $0x98] sm:$0x1]
        %v8923 = vld [vmem:[#allocation2 + $0x9c] sm:$0xf]
        %v8924 = vld [vmem:[#allocation2 + $0xa0] sm:$0xf]
        %v8925 = vld [vmem:[#allocation2 + $0xa4] sm:$0x1]
        %v8926 = vld [vmem:[#allocation2 + $0xa8] sm:$0xf]
        %v8927 = vld [vmem:[#allocation2 + $0xac] sm:$0xf]
        %v8928 = vld [vmem:[#allocation2 + $0xb0] sm:$0x1]
        %v8929 = vld [vmem:[#allocation2 + $0xb4] sm:$0xf]
        %v8930 = vld [vmem:[#allocation2 + $0xb8] sm:$0xf]
        %v8931 = vld [vmem:[#allocation2 + $0xbc] sm:$0x1]
        %v8980 = vunpack.c.l.b16 %v8884
        %v8981 = vunpack.c.l.b16 %v8885
        %v8982 = vunpack.c.l.b16 %v8886
        %v8983 = vunpack.c.l.b16 %v8887
        %v8984 = vunpack.c.l.b16 %v8888
        %v8985 = vunpack.c.l.b16 %v8889
        %v8986 = vunpack.c.l.b16 %v8890
        %v8987 = vunpack.c.l.b16 %v8891
        %v8988 = vunpack.c.l.b16 %v8892
        %v8989 = vunpack.c.l.b16 %v8893
        %v8990 = vunpack.c.l.b16 %v8894
        %v8991 = vunpack.c.l.b16 %v8895
        %v8992 = vunpack.c.l.b16 %v8896
        %v8993 = vunpack.c.l.b16 %v8897
        %v8994 = vunpack.c.l.b16 %v8898
        %v8995 = vunpack.c.l.b16 %v8899
        %v8996 = vunpack.c.l.b16 %v8900
        %v8997 = vunpack.c.l.b16 %v8901
        %v8998 = vunpack.c.l.b16 %v8902
        %v8999 = vunpack.c.l.b16 %v8903
        %v9000 = vunpack.c.l.b16 %v8904
        %v9001 = vunpack.c.l.b16 %v8905
        %v9002 = vunpack.c.l.b16 %v8906
        %v9003 = vunpack.c.l.b16 %v8907
        %v9004 = vunpack.c.l.b16 %v8908
        %v9005 = vunpack.c.l.b16 %v8909
        %v9006 = vunpack.c.l.b16 %v8910
        %v9007 = vunpack.c.l.b16 %v8911
        %v9008 = vunpack.c.l.b16 %v8912
        %v9009 = vunpack.c.l.b16 %v8913
        %v9010 = vunpack.c.l.b16 %v8914
        %v9011 = vunpack.c.l.b16 %v8915
        %v9012 = vunpack.c.l.b16 %v8916
        %v9013 = vunpack.c.l.b16 %v8917
        %v9014 = vunpack.c.l.b16 %v8918
        %v9015 = vunpack.c.l.b16 %v8919
        %v9016 = vunpack.c.l.b16 %v8920
        %v9017 = vunpack.c.l.b16 %v8921
        %v9018 = vunpack.c.l.b16 %v8922
        %v9019 = vunpack.c.l.b16 %v8923
        %v9020 = vunpack.c.l.b16 %v8924
        %v9021 = vunpack.c.l.b16 %v8925
        %v9022 = vunpack.c.l.b16 %v8926
        %v9023 = vunpack.c.l.b16 %v8927
        %v9024 = vunpack.c.l.b16 %v8928
        %v9025 = vunpack.c.l.b16 %v8929
        %v9026 = vunpack.c.l.b16 %v8930
        %v9027 = vunpack.c.l.b16 %v8931
        %v9028 = vpack.c.b16 %v8981, %v8980
        %v9029 = vpack.c.b16 %v8982, %v8982
        %v9030 = vpack.c.b16 %v8984, %v8983
        %v9031 = vpack.c.b16 %v8985, %v8985
        %v9032 = vpack.c.b16 %v8987, %v8986
        %v9033 = vpack.c.b16 %v8988, %v8988
        %v9034 = vpack.c.b16 %v8990, %v8989
        %v9035 = vpack.c.b16 %v8991, %v8991
        %v9036 = vpack.c.b16 %v8993, %v8992
        %v9037 = vpack.c.b16 %v8994, %v8994
        %v9038 = vpack.c.b16 %v8996, %v8995
        %v9039 = vpack.c.b16 %v8997, %v8997
        %v9040 = vpack.c.b16 %v8999, %v8998
        %v9041 = vpack.c.b16 %v9000, %v9000
        %v9042 = vpack.c.b16 %v9002, %v9001
        %v9043 = vpack.c.b16 %v9003, %v9003
        %v9044 = vpack.c.b16 %v9005, %v9004
        %v9045 = vpack.c.b16 %v9006, %v9006
        %v9046 = vpack.c.b16 %v9008, %v9007
        %v9047 = vpack.c.b16 %v9009, %v9009
        %v9048 = vpack.c.b16 %v9011, %v9010
        %v9049 = vpack.c.b16 %v9012, %v9012
        %v9050 = vpack.c.b16 %v9014, %v9013
        %v9051 = vpack.c.b16 %v9015, %v9015
        %v9052 = vpack.c.b16 %v9017, %v9016
        %v9053 = vpack.c.b16 %v9018, %v9018
        %v9054 = vpack.c.b16 %v9020, %v9019
        %v9055 = vpack.c.b16 %v9021, %v9021
        %v9056 = vpack.c.b16 %v9023, %v9022
        %v9057 = vpack.c.b16 %v9024, %v9024
        %v9058 = vpack.c.b16 %v9026, %v9025
        %v9059 = vpack.c.b16 %v9027, %v9027
        %v9061 = vshrl.u32 %v9028, 16
        %v9063 = vshll.u32 %v9028, 16
        %v9065 = vrot.slane %v9063, 1
        %v9066 = vor.u32 %v9061, %v9065
        %v9068 = vshll.u32 %v9029, 16
        %v9070 = vrot.slane %v9068, 1
        %v9071 = vsel %vm1544, %v9066, %v9070
        %v9073 = vshrl.u32 %v9030, 16
        %v9075 = vshll.u32 %v9030, 16
        %v9077 = vrot.slane %v9075, 1
        %v9078 = vor.u32 %v9073, %v9077
        %v9080 = vshll.u32 %v9031, 16
        %v9082 = vrot.slane %v9080, 1
        %v9083 = vsel %vm1544, %v9078, %v9082
        %v9085 = vshrl.u32 %v9032, 16
        %v9087 = vshll.u32 %v9032, 16
        %v9089 = vrot.slane %v9087, 1
        %v9090 = vor.u32 %v9085, %v9089
        %v9092 = vshll.u32 %v9033, 16
        %v9094 = vrot.slane %v9092, 1
        %v9095 = vsel %vm1544, %v9090, %v9094
        %v9097 = vshrl.u32 %v9034, 16
        %v9099 = vshll.u32 %v9034, 16
        %v9101 = vrot.slane %v9099, 1
        %v9102 = vor.u32 %v9097, %v9101
        %v9104 = vshll.u32 %v9035, 16
        %v9106 = vrot.slane %v9104, 1
        %v9107 = vsel %vm1544, %v9102, %v9106
        %v9109 = vshrl.u32 %v9036, 16
        %v9111 = vshll.u32 %v9036, 16
        %v9113 = vrot.slane %v9111, 1
        %v9114 = vor.u32 %v9109, %v9113
        %v9116 = vshll.u32 %v9037, 16
        %v9118 = vrot.slane %v9116, 1
        %v9119 = vsel %vm1544, %v9114, %v9118
        %v9121 = vshrl.u32 %v9038, 16
        %v9123 = vshll.u32 %v9038, 16
        %v9125 = vrot.slane %v9123, 1
        %v9126 = vor.u32 %v9121, %v9125
        %v9128 = vshll.u32 %v9039, 16
        %v9130 = vrot.slane %v9128, 1
        %v9131 = vsel %vm1544, %v9126, %v9130
        %v9133 = vshrl.u32 %v9040, 16
        %v9135 = vshll.u32 %v9040, 16
        %v9137 = vrot.slane %v9135, 1
        %v9138 = vor.u32 %v9133, %v9137
        %v9140 = vshll.u32 %v9041, 16
        %v9142 = vrot.slane %v9140, 1
        %v9143 = vsel %vm1544, %v9138, %v9142
        %v9145 = vshrl.u32 %v9042, 16
        %v9147 = vshll.u32 %v9042, 16
        %v9149 = vrot.slane %v9147, 1
        %v9150 = vor.u32 %v9145, %v9149
        %v9152 = vshll.u32 %v9043, 16
        %v9154 = vrot.slane %v9152, 1
        %v9155 = vsel %vm1544, %v9150, %v9154
        %v9157 = vshrl.u32 %v9044, 16
        %v9159 = vshll.u32 %v9044, 16
        %v9161 = vrot.slane %v9159, 1
        %v9162 = vor.u32 %v9157, %v9161
        %v9164 = vshll.u32 %v9045, 16
        %v9166 = vrot.slane %v9164, 1
        %v9167 = vsel %vm1544, %v9162, %v9166
        %v9169 = vshrl.u32 %v9046, 16
        %v9171 = vshll.u32 %v9046, 16
        %v9173 = vrot.slane %v9171, 1
        %v9174 = vor.u32 %v9169, %v9173
        %v9176 = vshll.u32 %v9047, 16
        %v9178 = vrot.slane %v9176, 1
        %v9179 = vsel %vm1544, %v9174, %v9178
        %v9181 = vshrl.u32 %v9048, 16
        %v9183 = vshll.u32 %v9048, 16
        %v9185 = vrot.slane %v9183, 1
        %v9186 = vor.u32 %v9181, %v9185
        %v9188 = vshll.u32 %v9049, 16
        %v9190 = vrot.slane %v9188, 1
        %v9191 = vsel %vm1544, %v9186, %v9190
        %v9193 = vshrl.u32 %v9050, 16
        %v9195 = vshll.u32 %v9050, 16
        %v9197 = vrot.slane %v9195, 1
        %v9198 = vor.u32 %v9193, %v9197
        %v9200 = vshll.u32 %v9051, 16
        %v9202 = vrot.slane %v9200, 1
        %v9203 = vsel %vm1544, %v9198, %v9202
        %v9205 = vshrl.u32 %v9052, 16
        %v9207 = vshll.u32 %v9052, 16
        %v9209 = vrot.slane %v9207, 1
        %v9210 = vor.u32 %v9205, %v9209
        %v9212 = vshll.u32 %v9053, 16
        %v9214 = vrot.slane %v9212, 1
        %v9215 = vsel %vm1544, %v9210, %v9214
        %v9217 = vshrl.u32 %v9054, 16
        %v9219 = vshll.u32 %v9054, 16
        %v9221 = vrot.slane %v9219, 1
        %v9222 = vor.u32 %v9217, %v9221
        %v9224 = vshll.u32 %v9055, 16
        %v9226 = vrot.slane %v9224, 1
        %v9227 = vsel %vm1544, %v9222, %v9226
        %v9229 = vshrl.u32 %v9056, 16
        %v9231 = vshll.u32 %v9056, 16
        %v9233 = vrot.slane %v9231, 1
        %v9234 = vor.u32 %v9229, %v9233
        %v9236 = vshll.u32 %v9057, 16
        %v9238 = vrot.slane %v9236, 1
        %v9239 = vsel %vm1544, %v9234, %v9238
        %v9241 = vshrl.u32 %v9058, 16
        %v9243 = vshll.u32 %v9058, 16
        %v9245 = vrot.slane %v9243, 1
        %v9246 = vor.u32 %v9241, %v9245
        %v9248 = vshll.u32 %v9059, 16
        %v9250 = vrot.slane %v9248, 1
        %v9251 = vsel %vm1544, %v9246, %v9250
        %9252 = vrot.lane.b32.xlu0 %v9071, 12
        %v9253 = vpop.permute.xlu0 %9252
        %9254 = vrot.lane.b32.xlu0 %v9083, 12
        %v9255 = vpop.permute.xlu0 %9254
        %9256 = vrot.lane.b32.xlu0 %v9095, 12
        %v9257 = vpop.permute.xlu0 %9256
        %9258 = vrot.lane.b32.xlu0 %v9107, 12
        %v9259 = vpop.permute.xlu0 %9258
        %9260 = vrot.lane.b32.xlu0 %v9119, 12
        %v9261 = vpop.permute.xlu0 %9260
        %9262 = vrot.lane.b32.xlu0 %v9131, 12
        %v9263 = vpop.permute.xlu0 %9262
        %9264 = vrot.lane.b32.xlu0 %v9143, 12
        %v9265 = vpop.permute.xlu0 %9264
        %9266 = vrot.lane.b32.xlu0 %v9155, 12
        %v9267 = vpop.permute.xlu0 %9266
        %9268 = vrot.lane.b32.xlu0 %v9167, 12
        %v9269 = vpop.permute.xlu0 %9268
        %9270 = vrot.lane.b32.xlu0 %v9179, 12
        %v9271 = vpop.permute.xlu0 %9270
        %9272 = vrot.lane.b32.xlu0 %v9191, 12
        %v9273 = vpop.permute.xlu0 %9272
        %9274 = vrot.lane.b32.xlu0 %v9203, 12
        %v9275 = vpop.permute.xlu0 %9274
        %9276 = vrot.lane.b32.xlu0 %v9215, 12
        %v9277 = vpop.permute.xlu0 %9276
        %9278 = vrot.lane.b32.xlu0 %v9227, 12
        %v9279 = vpop.permute.xlu0 %9278
        %9280 = vrot.lane.b32.xlu0 %v9239, 12
        %v9281 = vpop.permute.xlu0 %9280
        %9282 = vrot.lane.b32.xlu0 %v9251, 12
        %v9283 = vpop.permute.xlu0 %9282
        %vm9300 = vcmask 195680
        %9301 = vst.msk [vmem:[#allocation3] sm:$0xff] %vm9300, %v9253
        %9302 = vst.msk [vmem:[#allocation3 + $0x8] sm:$0xff] %vm9300, %v9255
        %9303 = vst.msk [vmem:[#allocation3 + $0x10] sm:$0xff] %vm9300, %v9257
        %9304 = vst.msk [vmem:[#allocation3 + $0x18] sm:$0xff] %vm9300, %v9259
        %9305 = vst.msk [vmem:[#allocation3 + $0x20] sm:$0xff] %vm9300, %v9261
        %9306 = vst.msk [vmem:[#allocation3 + $0x28] sm:$0xff] %vm9300, %v9263
        %9307 = vst.msk [vmem:[#allocation3 + $0x30] sm:$0xff] %vm9300, %v9265
        %9308 = vst.msk [vmem:[#allocation3 + $0x38] sm:$0xff] %vm9300, %v9267
        %9309 = vst.msk [vmem:[#allocation3 + $0x40] sm:$0xff] %vm9300, %v9269
        %9310 = vst.msk [vmem:[#allocation3 + $0x48] sm:$0xff] %vm9300, %v9271
        %9311 = vst.msk [vmem:[#allocation3 + $0x50] sm:$0xff] %vm9300, %v9273
        %9312 = vst.msk [vmem:[#allocation3 + $0x58] sm:$0xff] %vm9300, %v9275
        %9313 = vst.msk [vmem:[#allocation3 + $0x60] sm:$0xff] %vm9300, %v9277
        %9314 = vst.msk [vmem:[#allocation3 + $0x68] sm:$0xff] %vm9300, %v9279
        %9315 = vst.msk [vmem:[#allocation3 + $0x70] sm:$0xff] %vm9300, %v9281
        %9316 = vst.msk [vmem:[#allocation3 + $0x78] sm:$0xff] %vm9300, %v9283
        %v9317 = vld [vmem:[#allocation2] sm:$0xe]
        %v9318 = vld [vmem:[#allocation2 + $0x4] sm:$0xf]
        %v9319 = vld [vmem:[#allocation2 + $0x8] sm:$0x1]
        %v9320 = vld [vmem:[#allocation2 + $0xc] sm:$0xe]
        %v9321 = vld [vmem:[#allocation2 + $0x10] sm:$0xf]
        %v9322 = vld [vmem:[#allocation2 + $0x14] sm:$0x1]
        %v9323 = vld [vmem:[#allocation2 + $0x18] sm:$0xe]
        %v9324 = vld [vmem:[#allocation2 + $0x1c] sm:$0xf]
        %v9325 = vld [vmem:[#allocation2 + $0x20] sm:$0x1]
        %v9326 = vld [vmem:[#allocation2 + $0x24] sm:$0xe]
        %v9327 = vld [vmem:[#allocation2 + $0x28] sm:$0xf]
        %v9328 = vld [vmem:[#allocation2 + $0x2c] sm:$0x1]
        %v9329 = vld [vmem:[#allocation2 + $0x30] sm:$0xe]
        %v9330 = vld [vmem:[#allocation2 + $0x34] sm:$0xf]
        %v9331 = vld [vmem:[#allocation2 + $0x38] sm:$0x1]
        %v9332 = vld [vmem:[#allocation2 + $0x3c] sm:$0xe]
        %v9333 = vld [vmem:[#allocation2 + $0x40] sm:$0xf]
        %v9334 = vld [vmem:[#allocation2 + $0x44] sm:$0x1]
        %v9335 = vld [vmem:[#allocation2 + $0x48] sm:$0xe]
        %v9336 = vld [vmem:[#allocation2 + $0x4c] sm:$0xf]
        %v9337 = vld [vmem:[#allocation2 + $0x50] sm:$0x1]
        %v9338 = vld [vmem:[#allocation2 + $0x54] sm:$0xe]
        %v9339 = vld [vmem:[#allocation2 + $0x58] sm:$0xf]
        %v9340 = vld [vmem:[#allocation2 + $0x5c] sm:$0x1]
        %v9341 = vld [vmem:[#allocation2 + $0x60] sm:$0xe]
        %v9342 = vld [vmem:[#allocation2 + $0x64] sm:$0xf]
        %v9343 = vld [vmem:[#allocation2 + $0x68] sm:$0x1]
        %v9344 = vld [vmem:[#allocation2 + $0x6c] sm:$0xe]
        %v9345 = vld [vmem:[#allocation2 + $0x70] sm:$0xf]
        %v9346 = vld [vmem:[#allocation2 + $0x74] sm:$0x1]
        %v9347 = vld [vmem:[#allocation2 + $0x78] sm:$0xe]
        %v9348 = vld [vmem:[#allocation2 + $0x7c] sm:$0xf]
        %v9349 = vld [vmem:[#allocation2 + $0x80] sm:$0x1]
        %v9350 = vld [vmem:[#allocation2 + $0x84] sm:$0xe]
        %v9351 = vld [vmem:[#allocation2 + $0x88] sm:$0xf]
        %v9352 = vld [vmem:[#allocation2 + $0x8c] sm:$0x1]
        %v9353 = vld [vmem:[#allocation2 + $0x90] sm:$0xe]
        %v9354 = vld [vmem:[#allocation2 + $0x94] sm:$0xf]
        %v9355 = vld [vmem:[#allocation2 + $0x98] sm:$0x1]
        %v9356 = vld [vmem:[#allocation2 + $0x9c] sm:$0xe]
        %v9357 = vld [vmem:[#allocation2 + $0xa0] sm:$0xf]
        %v9358 = vld [vmem:[#allocation2 + $0xa4] sm:$0x1]
        %v9359 = vld [vmem:[#allocation2 + $0xa8] sm:$0xe]
        %v9360 = vld [vmem:[#allocation2 + $0xac] sm:$0xf]
        %v9361 = vld [vmem:[#allocation2 + $0xb0] sm:$0x1]
        %v9362 = vld [vmem:[#allocation2 + $0xb4] sm:$0xe]
        %v9363 = vld [vmem:[#allocation2 + $0xb8] sm:$0xf]
        %v9364 = vld [vmem:[#allocation2 + $0xbc] sm:$0x1]
        %v9413 = vunpack.c.l.b16 %v9317
        %v9414 = vunpack.c.l.b16 %v9318
        %v9415 = vunpack.c.l.b16 %v9319
        %v9416 = vunpack.c.l.b16 %v9320
        %v9417 = vunpack.c.l.b16 %v9321
        %v9418 = vunpack.c.l.b16 %v9322
        %v9419 = vunpack.c.l.b16 %v9323
        %v9420 = vunpack.c.l.b16 %v9324
        %v9421 = vunpack.c.l.b16 %v9325
        %v9422 = vunpack.c.l.b16 %v9326
        %v9423 = vunpack.c.l.b16 %v9327
        %v9424 = vunpack.c.l.b16 %v9328
        %v9425 = vunpack.c.l.b16 %v9329
        %v9426 = vunpack.c.l.b16 %v9330
        %v9427 = vunpack.c.l.b16 %v9331
        %v9428 = vunpack.c.l.b16 %v9332
        %v9429 = vunpack.c.l.b16 %v9333
        %v9430 = vunpack.c.l.b16 %v9334
        %v9431 = vunpack.c.l.b16 %v9335
        %v9432 = vunpack.c.l.b16 %v9336
        %v9433 = vunpack.c.l.b16 %v9337
        %v9434 = vunpack.c.l.b16 %v9338
        %v9435 = vunpack.c.l.b16 %v9339
        %v9436 = vunpack.c.l.b16 %v9340
        %v9437 = vunpack.c.l.b16 %v9341
        %v9438 = vunpack.c.l.b16 %v9342
        %v9439 = vunpack.c.l.b16 %v9343
        %v9440 = vunpack.c.l.b16 %v9344
        %v9441 = vunpack.c.l.b16 %v9345
        %v9442 = vunpack.c.l.b16 %v9346
        %v9443 = vunpack.c.l.b16 %v9347
        %v9444 = vunpack.c.l.b16 %v9348
        %v9445 = vunpack.c.l.b16 %v9349
        %v9446 = vunpack.c.l.b16 %v9350
        %v9447 = vunpack.c.l.b16 %v9351
        %v9448 = vunpack.c.l.b16 %v9352
        %v9449 = vunpack.c.l.b16 %v9353
        %v9450 = vunpack.c.l.b16 %v9354
        %v9451 = vunpack.c.l.b16 %v9355
        %v9452 = vunpack.c.l.b16 %v9356
        %v9453 = vunpack.c.l.b16 %v9357
        %v9454 = vunpack.c.l.b16 %v9358
        %v9455 = vunpack.c.l.b16 %v9359
        %v9456 = vunpack.c.l.b16 %v9360
        %v9457 = vunpack.c.l.b16 %v9361
        %v9458 = vunpack.c.l.b16 %v9362
        %v9459 = vunpack.c.l.b16 %v9363
        %v9460 = vunpack.c.l.b16 %v9364
        %v9461 = vpack.c.b16 %v9414, %v9413
        %v9462 = vpack.c.b16 %v9415, %v9415
        %v9463 = vpack.c.b16 %v9417, %v9416
        %v9464 = vpack.c.b16 %v9418, %v9418
        %v9465 = vpack.c.b16 %v9420, %v9419
        %v9466 = vpack.c.b16 %v9421, %v9421
        %v9467 = vpack.c.b16 %v9423, %v9422
        %v9468 = vpack.c.b16 %v9424, %v9424
        %v9469 = vpack.c.b16 %v9426, %v9425
        %v9470 = vpack.c.b16 %v9427, %v9427
        %v9471 = vpack.c.b16 %v9429, %v9428
        %v9472 = vpack.c.b16 %v9430, %v9430
        %v9473 = vpack.c.b16 %v9432, %v9431
        %v9474 = vpack.c.b16 %v9433, %v9433
        %v9475 = vpack.c.b16 %v9435, %v9434
        %v9476 = vpack.c.b16 %v9436, %v9436
        %v9477 = vpack.c.b16 %v9438, %v9437
        %v9478 = vpack.c.b16 %v9439, %v9439
        %v9479 = vpack.c.b16 %v9441, %v9440
        %v9480 = vpack.c.b16 %v9442, %v9442
        %v9481 = vpack.c.b16 %v9444, %v9443
        %v9482 = vpack.c.b16 %v9445, %v9445
        %v9483 = vpack.c.b16 %v9447, %v9446
        %v9484 = vpack.c.b16 %v9448, %v9448
        %v9485 = vpack.c.b16 %v9450, %v9449
        %v9486 = vpack.c.b16 %v9451, %v9451
        %v9487 = vpack.c.b16 %v9453, %v9452
        %v9488 = vpack.c.b16 %v9454, %v9454
        %v9489 = vpack.c.b16 %v9456, %v9455
        %v9490 = vpack.c.b16 %v9457, %v9457
        %v9491 = vpack.c.b16 %v9459, %v9458
        %v9492 = vpack.c.b16 %v9460, %v9460
        %v9493 = vrot.slane %v9461, 1
        %v9494 = vrot.slane %v9462, 1
        %v9495 = vsel %vm1978, %v9493, %v9494
        %v9496 = vrot.slane %v9463, 1
        %v9497 = vrot.slane %v9464, 1
        %v9498 = vsel %vm1978, %v9496, %v9497
        %v9499 = vrot.slane %v9465, 1
        %v9500 = vrot.slane %v9466, 1
        %v9501 = vsel %vm1978, %v9499, %v9500
        %v9502 = vrot.slane %v9467, 1
        %v9503 = vrot.slane %v9468, 1
        %v9504 = vsel %vm1978, %v9502, %v9503
        %v9505 = vrot.slane %v9469, 1
        %v9506 = vrot.slane %v9470, 1
        %v9507 = vsel %vm1978, %v9505, %v9506
        %v9508 = vrot.slane %v9471, 1
        %v9509 = vrot.slane %v9472, 1
        %v9510 = vsel %vm1978, %v9508, %v9509
        %v9511 = vrot.slane %v9473, 1
        %v9512 = vrot.slane %v9474, 1
        %v9513 = vsel %vm1978, %v9511, %v9512
        %v9514 = vrot.slane %v9475, 1
        %v9515 = vrot.slane %v9476, 1
        %v9516 = vsel %vm1978, %v9514, %v9515
        %v9517 = vrot.slane %v9477, 1
        %v9518 = vrot.slane %v9478, 1
        %v9519 = vsel %vm1978, %v9517, %v9518
        %v9520 = vrot.slane %v9479, 1
        %v9521 = vrot.slane %v9480, 1
        %v9522 = vsel %vm1978, %v9520, %v9521
        %v9523 = vrot.slane %v9481, 1
        %v9524 = vrot.slane %v9482, 1
        %v9525 = vsel %vm1978, %v9523, %v9524
        %v9526 = vrot.slane %v9483, 1
        %v9527 = vrot.slane %v9484, 1
        %v9528 = vsel %vm1978, %v9526, %v9527
        %v9529 = vrot.slane %v9485, 1
        %v9530 = vrot.slane %v9486, 1
        %v9531 = vsel %vm1978, %v9529, %v9530
        %v9532 = vrot.slane %v9487, 1
        %v9533 = vrot.slane %v9488, 1
        %v9534 = vsel %vm1978, %v9532, %v9533
        %v9535 = vrot.slane %v9489, 1
        %v9536 = vrot.slane %v9490, 1
        %v9537 = vsel %vm1978, %v9535, %v9536
        %v9538 = vrot.slane %v9491, 1
        %v9539 = vrot.slane %v9492, 1
        %v9540 = vsel %vm1978, %v9538, %v9539
        %9541 = vrot.lane.b32.xlu0 %v9495, 24
        %v9542 = vpop.permute.xlu0 %9541
        %9543 = vrot.lane.b32.xlu0 %v9498, 24
        %v9544 = vpop.permute.xlu0 %9543
        %9545 = vrot.lane.b32.xlu0 %v9501, 24
        %v9546 = vpop.permute.xlu0 %9545
        %9547 = vrot.lane.b32.xlu0 %v9504, 24
        %v9548 = vpop.permute.xlu0 %9547
        %9549 = vrot.lane.b32.xlu0 %v9507, 24
        %v9550 = vpop.permute.xlu0 %9549
        %9551 = vrot.lane.b32.xlu0 %v9510, 24
        %v9552 = vpop.permute.xlu0 %9551
        %9553 = vrot.lane.b32.xlu0 %v9513, 24
        %v9554 = vpop.permute.xlu0 %9553
        %9555 = vrot.lane.b32.xlu0 %v9516, 24
        %v9556 = vpop.permute.xlu0 %9555
        %9557 = vrot.lane.b32.xlu0 %v9519, 24
        %v9558 = vpop.permute.xlu0 %9557
        %9559 = vrot.lane.b32.xlu0 %v9522, 24
        %v9560 = vpop.permute.xlu0 %9559
        %9561 = vrot.lane.b32.xlu0 %v9525, 24
        %v9562 = vpop.permute.xlu0 %9561
        %9563 = vrot.lane.b32.xlu0 %v9528, 24
        %v9564 = vpop.permute.xlu0 %9563
        %9565 = vrot.lane.b32.xlu0 %v9531, 24
        %v9566 = vpop.permute.xlu0 %9565
        %9567 = vrot.lane.b32.xlu0 %v9534, 24
        %v9568 = vpop.permute.xlu0 %9567
        %9569 = vrot.lane.b32.xlu0 %v9537, 24
        %v9570 = vpop.permute.xlu0 %9569
        %9571 = vrot.lane.b32.xlu0 %v9540, 24
        %v9572 = vpop.permute.xlu0 %9571
        %vm9589 = vcmask 294080
        %9590 = vst.msk [vmem:[#allocation3] sm:$0xff] %vm9589, %v9542
        %9591 = vst.msk [vmem:[#allocation3 + $0x8] sm:$0xff] %vm9589, %v9544
        %9592 = vst.msk [vmem:[#allocation3 + $0x10] sm:$0xff] %vm9589, %v9546
        %9593 = vst.msk [vmem:[#allocation3 + $0x18] sm:$0xff] %vm9589, %v9548
        %9594 = vst.msk [vmem:[#allocation3 + $0x20] sm:$0xff] %vm9589, %v9550
        %9595 = vst.msk [vmem:[#allocation3 + $0x28] sm:$0xff] %vm9589, %v9552
        %9596 = vst.msk [vmem:[#allocation3 + $0x30] sm:$0xff] %vm9589, %v9554
        %9597 = vst.msk [vmem:[#allocation3 + $0x38] sm:$0xff] %vm9589, %v9556
        %9598 = vst.msk [vmem:[#allocation3 + $0x40] sm:$0xff] %vm9589, %v9558
        %9599 = vst.msk [vmem:[#allocation3 + $0x48] sm:$0xff] %vm9589, %v9560
        %9600 = vst.msk [vmem:[#allocation3 + $0x50] sm:$0xff] %vm9589, %v9562
        %9601 = vst.msk [vmem:[#allocation3 + $0x58] sm:$0xff] %vm9589, %v9564
        %9602 = vst.msk [vmem:[#allocation3 + $0x60] sm:$0xff] %vm9589, %v9566
        %9603 = vst.msk [vmem:[#allocation3 + $0x68] sm:$0xff] %vm9589, %v9568
        %9604 = vst.msk [vmem:[#allocation3 + $0x70] sm:$0xff] %vm9589, %v9570
        %9605 = vst.msk [vmem:[#allocation3 + $0x78] sm:$0xff] %vm9589, %v9572
        %v9606 = vld [vmem:[%s1106] sm:$0xf]
        %v9607 = vld [vmem:[%s1106 + $0x4] sm:$0xf]
        %v9608 = vld [vmem:[%s1106 + $0xc] sm:$0xf]
        %v9609 = vld [vmem:[%s1106 + $0x10] sm:$0xf]
        %v9610 = vld [vmem:[%s1106 + $0x18] sm:$0xf]
        %v9611 = vld [vmem:[%s1106 + $0x1c] sm:$0xf]
        %v9612 = vld [vmem:[%s1106 + $0x24] sm:$0xf]
        %v9613 = vld [vmem:[%s1106 + $0x28] sm:$0xf]
        %v9614 = vld [vmem:[%s1106 + $0x30] sm:$0xf]
        %v9615 = vld [vmem:[%s1106 + $0x34] sm:$0xf]
        %v9616 = vld [vmem:[%s1106 + $0x3c] sm:$0xf]
        %v9617 = vld [vmem:[%s1106 + $0x40] sm:$0xf]
        %v9618 = vld [vmem:[%s1106 + $0x48] sm:$0xf]
        %v9619 = vld [vmem:[%s1106 + $0x4c] sm:$0xf]
        %v9620 = vld [vmem:[%s1106 + $0x54] sm:$0xf]
        %v9621 = vld [vmem:[%s1106 + $0x58] sm:$0xf]
        %v9622 = vld [vmem:[%s1106 + $0x60] sm:$0xf]
        %v9623 = vld [vmem:[%s1106 + $0x64] sm:$0xf]
        %v9624 = vld [vmem:[%s1106 + $0x6c] sm:$0xf]
        %v9625 = vld [vmem:[%s1106 + $0x70] sm:$0xf]
        %v9626 = vld [vmem:[%s1106 + $0x78] sm:$0xf]
        %v9627 = vld [vmem:[%s1106 + $0x7c] sm:$0xf]
        %v9628 = vld [vmem:[%s1106 + $0x84] sm:$0xf]
        %v9629 = vld [vmem:[%s1106 + $0x88] sm:$0xf]
        %v9630 = vld [vmem:[%s1106 + $0x90] sm:$0xf]
        %v9631 = vld [vmem:[%s1106 + $0x94] sm:$0xf]
        %v9632 = vld [vmem:[%s1106 + $0x9c] sm:$0xf]
        %v9633 = vld [vmem:[%s1106 + $0xa0] sm:$0xf]
        %v9634 = vld [vmem:[%s1106 + $0xa8] sm:$0xf]
        %v9635 = vld [vmem:[%s1106 + $0xac] sm:$0xf]
        %v9636 = vld [vmem:[%s1106 + $0xb4] sm:$0xf]
        %v9637 = vld [vmem:[%s1106 + $0xb8] sm:$0xf]
        %v9670 = vunpack.c.l.b16 %v9606
        %v9671 = vunpack.c.l.b16 %v9607
        %v9672 = vunpack.c.l.b16 %v9608
        %v9673 = vunpack.c.l.b16 %v9609
        %v9674 = vunpack.c.l.b16 %v9610
        %v9675 = vunpack.c.l.b16 %v9611
        %v9676 = vunpack.c.l.b16 %v9612
        %v9677 = vunpack.c.l.b16 %v9613
        %v9678 = vunpack.c.l.b16 %v9614
        %v9679 = vunpack.c.l.b16 %v9615
        %v9680 = vunpack.c.l.b16 %v9616
        %v9681 = vunpack.c.l.b16 %v9617
        %v9682 = vunpack.c.l.b16 %v9618
        %v9683 = vunpack.c.l.b16 %v9619
        %v9684 = vunpack.c.l.b16 %v9620
        %v9685 = vunpack.c.l.b16 %v9621
        %v9686 = vunpack.c.l.b16 %v9622
        %v9687 = vunpack.c.l.b16 %v9623
        %v9688 = vunpack.c.l.b16 %v9624
        %v9689 = vunpack.c.l.b16 %v9625
        %v9690 = vunpack.c.l.b16 %v9626
        %v9691 = vunpack.c.l.b16 %v9627
        %v9692 = vunpack.c.l.b16 %v9628
        %v9693 = vunpack.c.l.b16 %v9629
        %v9694 = vunpack.c.l.b16 %v9630
        %v9695 = vunpack.c.l.b16 %v9631
        %v9696 = vunpack.c.l.b16 %v9632
        %v9697 = vunpack.c.l.b16 %v9633
        %v9698 = vunpack.c.l.b16 %v9634
        %v9699 = vunpack.c.l.b16 %v9635
        %v9700 = vunpack.c.l.b16 %v9636
        %v9701 = vunpack.c.l.b16 %v9637
        %v9702 = vpack.c.b16 %v9671, %v9670
        %v9703 = vpack.c.b16 %v9673, %v9672
        %v9704 = vpack.c.b16 %v9675, %v9674
        %v9705 = vpack.c.b16 %v9677, %v9676
        %v9706 = vpack.c.b16 %v9679, %v9678
        %v9707 = vpack.c.b16 %v9681, %v9680
        %v9708 = vpack.c.b16 %v9683, %v9682
        %v9709 = vpack.c.b16 %v9685, %v9684
        %v9710 = vpack.c.b16 %v9687, %v9686
        %v9711 = vpack.c.b16 %v9689, %v9688
        %v9712 = vpack.c.b16 %v9691, %v9690
        %v9713 = vpack.c.b16 %v9693, %v9692
        %v9714 = vpack.c.b16 %v9695, %v9694
        %v9715 = vpack.c.b16 %v9697, %v9696
        %v9716 = vpack.c.b16 %v9699, %v9698
        %v9717 = vpack.c.b16 %v9701, %v9700
        %9718 = vrot.lane.b32.xlu0 %v9702, 36
        %v9719 = vpop.permute.xlu0 %9718
        %9720 = vrot.lane.b32.xlu0 %v9703, 36
        %v9721 = vpop.permute.xlu0 %9720
        %9722 = vrot.lane.b32.xlu0 %v9704, 36
        %v9723 = vpop.permute.xlu0 %9722
        %9724 = vrot.lane.b32.xlu0 %v9705, 36
        %v9725 = vpop.permute.xlu0 %9724
        %9726 = vrot.lane.b32.xlu0 %v9706, 36
        %v9727 = vpop.permute.xlu0 %9726
        %9728 = vrot.lane.b32.xlu0 %v9707, 36
        %v9729 = vpop.permute.xlu0 %9728
        %9730 = vrot.lane.b32.xlu0 %v9708, 36
        %v9731 = vpop.permute.xlu0 %9730
        %9732 = vrot.lane.b32.xlu0 %v9709, 36
        %v9733 = vpop.permute.xlu0 %9732
        %9734 = vrot.lane.b32.xlu0 %v9710, 36
        %v9735 = vpop.permute.xlu0 %9734
        %9736 = vrot.lane.b32.xlu0 %v9711, 36
        %v9737 = vpop.permute.xlu0 %9736
        %9738 = vrot.lane.b32.xlu0 %v9712, 36
        %v9739 = vpop.permute.xlu0 %9738
        %9740 = vrot.lane.b32.xlu0 %v9713, 36
        %v9741 = vpop.permute.xlu0 %9740
        %9742 = vrot.lane.b32.xlu0 %v9714, 36
        %v9743 = vpop.permute.xlu0 %9742
        %9744 = vrot.lane.b32.xlu0 %v9715, 36
        %v9745 = vpop.permute.xlu0 %9744
        %9746 = vrot.lane.b32.xlu0 %v9716, 36
        %v9747 = vpop.permute.xlu0 %9746
        %9748 = vrot.lane.b32.xlu0 %v9717, 36
        %v9749 = vpop.permute.xlu0 %9748
        %vm9766 = vcmask 392480
        %9767 = vst.msk [vmem:[#allocation3] sm:$0xff] %vm9766, %v9719
        %9768 = vst.msk [vmem:[#allocation3 + $0x8] sm:$0xff] %vm9766, %v9721
        %9769 = vst.msk [vmem:[#allocation3 + $0x10] sm:$0xff] %vm9766, %v9723
        %9770 = vst.msk [vmem:[#allocation3 + $0x18] sm:$0xff] %vm9766, %v9725
        %9771 = vst.msk [vmem:[#allocation3 + $0x20] sm:$0xff] %vm9766, %v9727
        %9772 = vst.msk [vmem:[#allocation3 + $0x28] sm:$0xff] %vm9766, %v9729
        %9773 = vst.msk [vmem:[#allocation3 + $0x30] sm:$0xff] %vm9766, %v9731
        %9774 = vst.msk [vmem:[#allocation3 + $0x38] sm:$0xff] %vm9766, %v9733
        %9775 = vst.msk [vmem:[#allocation3 + $0x40] sm:$0xff] %vm9766, %v9735
        %9776 = vst.msk [vmem:[#allocation3 + $0x48] sm:$0xff] %vm9766, %v9737
        %9777 = vst.msk [vmem:[#allocation3 + $0x50] sm:$0xff] %vm9766, %v9739
        %9778 = vst.msk [vmem:[#allocation3 + $0x58] sm:$0xff] %vm9766, %v9741
        %9779 = vst.msk [vmem:[#allocation3 + $0x60] sm:$0xff] %vm9766, %v9743
        %9780 = vst.msk [vmem:[#allocation3 + $0x68] sm:$0xff] %vm9766, %v9745
        %9781 = vst.msk [vmem:[#allocation3 + $0x70] sm:$0xff] %vm9766, %v9747
        %9782 = vst.msk [vmem:[#allocation3 + $0x78] sm:$0xff] %vm9766, %v9749
        %v9783 = vld [vmem:[%s1106] sm:$0xf]
        %v9784 = vld [vmem:[%s1106 + $0x4] sm:$0xf]
        %v9785 = vld [vmem:[%s1106 + $0x8] sm:$0x1]
        %v9786 = vld [vmem:[%s1106 + $0xc] sm:$0xf]
        %v9787 = vld [vmem:[%s1106 + $0x10] sm:$0xf]
        %v9788 = vld [vmem:[%s1106 + $0x14] sm:$0x1]
        %v9789 = vld [vmem:[%s1106 + $0x18] sm:$0xf]
        %v9790 = vld [vmem:[%s1106 + $0x1c] sm:$0xf]
        %v9791 = vld [vmem:[%s1106 + $0x20] sm:$0x1]
        %v9792 = vld [vmem:[%s1106 + $0x24] sm:$0xf]
        %v9793 = vld [vmem:[%s1106 + $0x28] sm:$0xf]
        %v9794 = vld [vmem:[%s1106 + $0x2c] sm:$0x1]
        %v9795 = vld [vmem:[%s1106 + $0x30] sm:$0xf]
        %v9796 = vld [vmem:[%s1106 + $0x34] sm:$0xf]
        %v9797 = vld [vmem:[%s1106 + $0x38] sm:$0x1]
        %v9798 = vld [vmem:[%s1106 + $0x3c] sm:$0xf]
        %v9799 = vld [vmem:[%s1106 + $0x40] sm:$0xf]
        %v9800 = vld [vmem:[%s1106 + $0x44] sm:$0x1]
        %v9801 = vld [vmem:[%s1106 + $0x48] sm:$0xf]
        %v9802 = vld [vmem:[%s1106 + $0x4c] sm:$0xf]
        %v9803 = vld [vmem:[%s1106 + $0x50] sm:$0x1]
        %v9804 = vld [vmem:[%s1106 + $0x54] sm:$0xf]
        %v9805 = vld [vmem:[%s1106 + $0x58] sm:$0xf]
        %v9806 = vld [vmem:[%s1106 + $0x5c] sm:$0x1]
        %v9807 = vld [vmem:[%s1106 + $0x60] sm:$0xf]
        %v9808 = vld [vmem:[%s1106 + $0x64] sm:$0xf]
        %v9809 = vld [vmem:[%s1106 + $0x68] sm:$0x1]
        %v9810 = vld [vmem:[%s1106 + $0x6c] sm:$0xf]
        %v9811 = vld [vmem:[%s1106 + $0x70] sm:$0xf]
        %v9812 = vld [vmem:[%s1106 + $0x74] sm:$0x1]
        %v9813 = vld [vmem:[%s1106 + $0x78] sm:$0xf]
        %v9814 = vld [vmem:[%s1106 + $0x7c] sm:$0xf]
        %v9815 = vld [vmem:[%s1106 + $0x80] sm:$0x1]
        %v9816 = vld [vmem:[%s1106 + $0x84] sm:$0xf]
        %v9817 = vld [vmem:[%s1106 + $0x88] sm:$0xf]
        %v9818 = vld [vmem:[%s1106 + $0x8c] sm:$0x1]
        %v9819 = vld [vmem:[%s1106 + $0x90] sm:$0xf]
        %v9820 = vld [vmem:[%s1106 + $0x94] sm:$0xf]
        %v9821 = vld [vmem:[%s1106 + $0x98] sm:$0x1]
        %v9822 = vld [vmem:[%s1106 + $0x9c] sm:$0xf]
        %v9823 = vld [vmem:[%s1106 + $0xa0] sm:$0xf]
        %v9824 = vld [vmem:[%s1106 + $0xa4] sm:$0x1]
        %v9825 = vld [vmem:[%s1106 + $0xa8] sm:$0xf]
        %v9826 = vld [vmem:[%s1106 + $0xac] sm:$0xf]
        %v9827 = vld [vmem:[%s1106 + $0xb0] sm:$0x1]
        %v9828 = vld [vmem:[%s1106 + $0xb4] sm:$0xf]
        %v9829 = vld [vmem:[%s1106 + $0xb8] sm:$0xf]
        %v9830 = vld [vmem:[%s1106 + $0xbc] sm:$0x1]
        %v9879 = vunpack.c.l.b16 %v9783
        %v9880 = vunpack.c.l.b16 %v9784
        %v9881 = vunpack.c.l.b16 %v9785
        %v9882 = vunpack.c.l.b16 %v9786
        %v9883 = vunpack.c.l.b16 %v9787
        %v9884 = vunpack.c.l.b16 %v9788
        %v9885 = vunpack.c.l.b16 %v9789
        %v9886 = vunpack.c.l.b16 %v9790
        %v9887 = vunpack.c.l.b16 %v9791
        %v9888 = vunpack.c.l.b16 %v9792
        %v9889 = vunpack.c.l.b16 %v9793
        %v9890 = vunpack.c.l.b16 %v9794
        %v9891 = vunpack.c.l.b16 %v9795
        %v9892 = vunpack.c.l.b16 %v9796
        %v9893 = vunpack.c.l.b16 %v9797
        %v9894 = vunpack.c.l.b16 %v9798
        %v9895 = vunpack.c.l.b16 %v9799
        %v9896 = vunpack.c.l.b16 %v9800
        %v9897 = vunpack.c.l.b16 %v9801
        %v9898 = vunpack.c.l.b16 %v9802
        %v9899 = vunpack.c.l.b16 %v9803
        %v9900 = vunpack.c.l.b16 %v9804
        %v9901 = vunpack.c.l.b16 %v9805
        %v9902 = vunpack.c.l.b16 %v9806
        %v9903 = vunpack.c.l.b16 %v9807
        %v9904 = vunpack.c.l.b16 %v9808
        %v9905 = vunpack.c.l.b16 %v9809
        %v9906 = vunpack.c.l.b16 %v9810
        %v9907 = vunpack.c.l.b16 %v9811
        %v9908 = vunpack.c.l.b16 %v9812
        %v9909 = vunpack.c.l.b16 %v9813
        %v9910 = vunpack.c.l.b16 %v9814
        %v9911 = vunpack.c.l.b16 %v9815
        %v9912 = vunpack.c.l.b16 %v9816
        %v9913 = vunpack.c.l.b16 %v9817
        %v9914 = vunpack.c.l.b16 %v9818
        %v9915 = vunpack.c.l.b16 %v9819
        %v9916 = vunpack.c.l.b16 %v9820
        %v9917 = vunpack.c.l.b16 %v9821
        %v9918 = vunpack.c.l.b16 %v9822
        %v9919 = vunpack.c.l.b16 %v9823
        %v9920 = vunpack.c.l.b16 %v9824
        %v9921 = vunpack.c.l.b16 %v9825
        %v9922 = vunpack.c.l.b16 %v9826
        %v9923 = vunpack.c.l.b16 %v9827
        %v9924 = vunpack.c.l.b16 %v9828
        %v9925 = vunpack.c.l.b16 %v9829
        %v9926 = vunpack.c.l.b16 %v9830
        %v9927 = vpack.c.b16 %v9880, %v9879
        %v9928 = vpack.c.b16 %v9881, %v9881
        %v9929 = vpack.c.b16 %v9883, %v9882
        %v9930 = vpack.c.b16 %v9884, %v9884
        %v9931 = vpack.c.b16 %v9886, %v9885
        %v9932 = vpack.c.b16 %v9887, %v9887
        %v9933 = vpack.c.b16 %v9889, %v9888
        %v9934 = vpack.c.b16 %v9890, %v9890
        %v9935 = vpack.c.b16 %v9892, %v9891
        %v9936 = vpack.c.b16 %v9893, %v9893
        %v9937 = vpack.c.b16 %v9895, %v9894
        %v9938 = vpack.c.b16 %v9896, %v9896
        %v9939 = vpack.c.b16 %v9898, %v9897
        %v9940 = vpack.c.b16 %v9899, %v9899
        %v9941 = vpack.c.b16 %v9901, %v9900
        %v9942 = vpack.c.b16 %v9902, %v9902
        %v9943 = vpack.c.b16 %v9904, %v9903
        %v9944 = vpack.c.b16 %v9905, %v9905
        %v9945 = vpack.c.b16 %v9907, %v9906
        %v9946 = vpack.c.b16 %v9908, %v9908
        %v9947 = vpack.c.b16 %v9910, %v9909
        %v9948 = vpack.c.b16 %v9911, %v9911
        %v9949 = vpack.c.b16 %v9913, %v9912
        %v9950 = vpack.c.b16 %v9914, %v9914
        %v9951 = vpack.c.b16 %v9916, %v9915
        %v9952 = vpack.c.b16 %v9917, %v9917
        %v9953 = vpack.c.b16 %v9919, %v9918
        %v9954 = vpack.c.b16 %v9920, %v9920
        %v9955 = vpack.c.b16 %v9922, %v9921
        %v9956 = vpack.c.b16 %v9923, %v9923
        %v9957 = vpack.c.b16 %v9925, %v9924
        %v9958 = vpack.c.b16 %v9926, %v9926
        %v9960 = vshrl.u32 %v9927, 16
        %v9962 = vshll.u32 %v9927, 16
        %v9964 = vrot.slane %v9962, 1
        %v9965 = vor.u32 %v9960, %v9964
        %v9967 = vshll.u32 %v9928, 16
        %v9969 = vrot.slane %v9967, 1
        %v9970 = vsel %vm1544, %v9965, %v9969
        %v9972 = vshrl.u32 %v9929, 16
        %v9974 = vshll.u32 %v9929, 16
        %v9976 = vrot.slane %v9974, 1
        %v9977 = vor.u32 %v9972, %v9976
        %v9979 = vshll.u32 %v9930, 16
        %v9981 = vrot.slane %v9979, 1
        %v9982 = vsel %vm1544, %v9977, %v9981
        %v9984 = vshrl.u32 %v9931, 16
        %v9986 = vshll.u32 %v9931, 16
        %v9988 = vrot.slane %v9986, 1
        %v9989 = vor.u32 %v9984, %v9988
        %v9991 = vshll.u32 %v9932, 16
        %v9993 = vrot.slane %v9991, 1
        %v9994 = vsel %vm1544, %v9989, %v9993
        %v9996 = vshrl.u32 %v9933, 16
        %v9998 = vshll.u32 %v9933, 16
        %v10000 = vrot.slane %v9998, 1
        %v10001 = vor.u32 %v9996, %v10000
        %v10003 = vshll.u32 %v9934, 16
        %v10005 = vrot.slane %v10003, 1
        %v10006 = vsel %vm1544, %v10001, %v10005
        %v10008 = vshrl.u32 %v9935, 16
        %v10010 = vshll.u32 %v9935, 16
        %v10012 = vrot.slane %v10010, 1
        %v10013 = vor.u32 %v10008, %v10012
        %v10015 = vshll.u32 %v9936, 16
        %v10017 = vrot.slane %v10015, 1
        %v10018 = vsel %vm1544, %v10013, %v10017
        %v10020 = vshrl.u32 %v9937, 16
        %v10022 = vshll.u32 %v9937, 16
        %v10024 = vrot.slane %v10022, 1
        %v10025 = vor.u32 %v10020, %v10024
        %v10027 = vshll.u32 %v9938, 16
        %v10029 = vrot.slane %v10027, 1
        %v10030 = vsel %vm1544, %v10025, %v10029
        %v10032 = vshrl.u32 %v9939, 16
        %v10034 = vshll.u32 %v9939, 16
        %v10036 = vrot.slane %v10034, 1
        %v10037 = vor.u32 %v10032, %v10036
        %v10039 = vshll.u32 %v9940, 16
        %v10041 = vrot.slane %v10039, 1
        %v10042 = vsel %vm1544, %v10037, %v10041
        %v10044 = vshrl.u32 %v9941, 16
        %v10046 = vshll.u32 %v9941, 16
        %v10048 = vrot.slane %v10046, 1
        %v10049 = vor.u32 %v10044, %v10048
        %v10051 = vshll.u32 %v9942, 16
        %v10053 = vrot.slane %v10051, 1
        %v10054 = vsel %vm1544, %v10049, %v10053
        %v10056 = vshrl.u32 %v9943, 16
        %v10058 = vshll.u32 %v9943, 16
        %v10060 = vrot.slane %v10058, 1
        %v10061 = vor.u32 %v10056, %v10060
        %v10063 = vshll.u32 %v9944, 16
        %v10065 = vrot.slane %v10063, 1
        %v10066 = vsel %vm1544, %v10061, %v10065
        %v10068 = vshrl.u32 %v9945, 16
        %v10070 = vshll.u32 %v9945, 16
        %v10072 = vrot.slane %v10070, 1
        %v10073 = vor.u32 %v10068, %v10072
        %v10075 = vshll.u32 %v9946, 16
        %v10077 = vrot.slane %v10075, 1
        %v10078 = vsel %vm1544, %v10073, %v10077
        %v10080 = vshrl.u32 %v9947, 16
        %v10082 = vshll.u32 %v9947, 16
        %v10084 = vrot.slane %v10082, 1
        %v10085 = vor.u32 %v10080, %v10084
        %v10087 = vshll.u32 %v9948, 16
        %v10089 = vrot.slane %v10087, 1
        %v10090 = vsel %vm1544, %v10085, %v10089
        %v10092 = vshrl.u32 %v9949, 16
        %v10094 = vshll.u32 %v9949, 16
        %v10096 = vrot.slane %v10094, 1
        %v10097 = vor.u32 %v10092, %v10096
        %v10099 = vshll.u32 %v9950, 16
        %v10101 = vrot.slane %v10099, 1
        %v10102 = vsel %vm1544, %v10097, %v10101
        %v10104 = vshrl.u32 %v9951, 16
        %v10106 = vshll.u32 %v9951, 16
        %v10108 = vrot.slane %v10106, 1
        %v10109 = vor.u32 %v10104, %v10108
        %v10111 = vshll.u32 %v9952, 16
        %v10113 = vrot.slane %v10111, 1
        %v10114 = vsel %vm1544, %v10109, %v10113
        %v10116 = vshrl.u32 %v9953, 16
        %v10118 = vshll.u32 %v9953, 16
        %v10120 = vrot.slane %v10118, 1
        %v10121 = vor.u32 %v10116, %v10120
        %v10123 = vshll.u32 %v9954, 16
        %v10125 = vrot.slane %v10123, 1
        %v10126 = vsel %vm1544, %v10121, %v10125
        %v10128 = vshrl.u32 %v9955, 16
        %v10130 = vshll.u32 %v9955, 16
        %v10132 = vrot.slane %v10130, 1
        %v10133 = vor.u32 %v10128, %v10132
        %v10135 = vshll.u32 %v9956, 16
        %v10137 = vrot.slane %v10135, 1
        %v10138 = vsel %vm1544, %v10133, %v10137
        %v10140 = vshrl.u32 %v9957, 16
        %v10142 = vshll.u32 %v9957, 16
        %v10144 = vrot.slane %v10142, 1
        %v10145 = vor.u32 %v10140, %v10144
        %v10147 = vshll.u32 %v9958, 16
        %v10149 = vrot.slane %v10147, 1
        %v10150 = vsel %vm1544, %v10145, %v10149
        %10151 = vrot.lane.b32.xlu0 %v9970, 48
        %v10152 = vpop.permute.xlu0 %10151
        %10153 = vrot.lane.b32.xlu0 %v9982, 48
        %v10154 = vpop.permute.xlu0 %10153
        %10155 = vrot.lane.b32.xlu0 %v9994, 48
        %v10156 = vpop.permute.xlu0 %10155
        %10157 = vrot.lane.b32.xlu0 %v10006, 48
        %v10158 = vpop.permute.xlu0 %10157
        %10159 = vrot.lane.b32.xlu0 %v10018, 48
        %v10160 = vpop.permute.xlu0 %10159
        %10161 = vrot.lane.b32.xlu0 %v10030, 48
        %v10162 = vpop.permute.xlu0 %10161
        %10163 = vrot.lane.b32.xlu0 %v10042, 48
        %v10164 = vpop.permute.xlu0 %10163
        %10165 = vrot.lane.b32.xlu0 %v10054, 48
        %v10166 = vpop.permute.xlu0 %10165
        %10167 = vrot.lane.b32.xlu0 %v10066, 48
        %v10168 = vpop.permute.xlu0 %10167
        %10169 = vrot.lane.b32.xlu0 %v10078, 48
        %v10170 = vpop.permute.xlu0 %10169
        %10171 = vrot.lane.b32.xlu0 %v10090, 48
        %v10172 = vpop.permute.xlu0 %10171
        %10173 = vrot.lane.b32.xlu0 %v10102, 48
        %v10174 = vpop.permute.xlu0 %10173
        %10175 = vrot.lane.b32.xlu0 %v10114, 48
        %v10176 = vpop.permute.xlu0 %10175
        %10177 = vrot.lane.b32.xlu0 %v10126, 48
        %v10178 = vpop.permute.xlu0 %10177
        %10179 = vrot.lane.b32.xlu0 %v10138, 48
        %v10180 = vpop.permute.xlu0 %10179
        %10181 = vrot.lane.b32.xlu0 %v10150, 48
        %v10182 = vpop.permute.xlu0 %10181
        %vm10199 = vcmask 490880
        %10200 = vst.msk [vmem:[#allocation3] sm:$0xff] %vm10199, %v10152
        %10201 = vst.msk [vmem:[#allocation3 + $0x8] sm:$0xff] %vm10199, %v10154
        %10202 = vst.msk [vmem:[#allocation3 + $0x10] sm:$0xff] %vm10199, %v10156
        %10203 = vst.msk [vmem:[#allocation3 + $0x18] sm:$0xff] %vm10199, %v10158
        %10204 = vst.msk [vmem:[#allocation3 + $0x20] sm:$0xff] %vm10199, %v10160
        %10205 = vst.msk [vmem:[#allocation3 + $0x28] sm:$0xff] %vm10199, %v10162
        %10206 = vst.msk [vmem:[#allocation3 + $0x30] sm:$0xff] %vm10199, %v10164
        %10207 = vst.msk [vmem:[#allocation3 + $0x38] sm:$0xff] %vm10199, %v10166
        %10208 = vst.msk [vmem:[#allocation3 + $0x40] sm:$0xff] %vm10199, %v10168
        %10209 = vst.msk [vmem:[#allocation3 + $0x48] sm:$0xff] %vm10199, %v10170
        %10210 = vst.msk [vmem:[#allocation3 + $0x50] sm:$0xff] %vm10199, %v10172
        %10211 = vst.msk [vmem:[#allocation3 + $0x58] sm:$0xff] %vm10199, %v10174
        %10212 = vst.msk [vmem:[#allocation3 + $0x60] sm:$0xff] %vm10199, %v10176
        %10213 = vst.msk [vmem:[#allocation3 + $0x68] sm:$0xff] %vm10199, %v10178
        %10214 = vst.msk [vmem:[#allocation3 + $0x70] sm:$0xff] %vm10199, %v10180
        %10215 = vst.msk [vmem:[#allocation3 + $0x78] sm:$0xff] %vm10199, %v10182
        %v10216 = vld [vmem:[%s1106] sm:$0xe]
        %v10217 = vld [vmem:[%s1106 + $0x4] sm:$0xf]
        %v10218 = vld [vmem:[%s1106 + $0x8] sm:$0x1]
        %v10219 = vld [vmem:[%s1106 + $0xc] sm:$0xe]
        %v10220 = vld [vmem:[%s1106 + $0x10] sm:$0xf]
        %v10221 = vld [vmem:[%s1106 + $0x14] sm:$0x1]
        %v10222 = vld [vmem:[%s1106 + $0x18] sm:$0xe]
        %v10223 = vld [vmem:[%s1106 + $0x1c] sm:$0xf]
        %v10224 = vld [vmem:[%s1106 + $0x20] sm:$0x1]
        %v10225 = vld [vmem:[%s1106 + $0x24] sm:$0xe]
        %v10226 = vld [vmem:[%s1106 + $0x28] sm:$0xf]
        %v10227 = vld [vmem:[%s1106 + $0x2c] sm:$0x1]
        %v10228 = vld [vmem:[%s1106 + $0x30] sm:$0xe]
        %v10229 = vld [vmem:[%s1106 + $0x34] sm:$0xf]
        %v10230 = vld [vmem:[%s1106 + $0x38] sm:$0x1]
        %v10231 = vld [vmem:[%s1106 + $0x3c] sm:$0xe]
        %v10232 = vld [vmem:[%s1106 + $0x40] sm:$0xf]
        %v10233 = vld [vmem:[%s1106 + $0x44] sm:$0x1]
        %v10234 = vld [vmem:[%s1106 + $0x48] sm:$0xe]
        %v10235 = vld [vmem:[%s1106 + $0x4c] sm:$0xf]
        %v10236 = vld [vmem:[%s1106 + $0x50] sm:$0x1]
        %v10237 = vld [vmem:[%s1106 + $0x54] sm:$0xe]
        %v10238 = vld [vmem:[%s1106 + $0x58] sm:$0xf]
        %v10239 = vld [vmem:[%s1106 + $0x5c] sm:$0x1]
        %v10240 = vld [vmem:[%s1106 + $0x60] sm:$0xe]
        %v10241 = vld [vmem:[%s1106 + $0x64] sm:$0xf]
        %v10242 = vld [vmem:[%s1106 + $0x68] sm:$0x1]
        %v10243 = vld [vmem:[%s1106 + $0x6c] sm:$0xe]
        %v10244 = vld [vmem:[%s1106 + $0x70] sm:$0xf]
        %v10245 = vld [vmem:[%s1106 + $0x74] sm:$0x1]
        %v10246 = vld [vmem:[%s1106 + $0x78] sm:$0xe]
        %v10247 = vld [vmem:[%s1106 + $0x7c] sm:$0xf]
        %v10248 = vld [vmem:[%s1106 + $0x80] sm:$0x1]
        %v10249 = vld [vmem:[%s1106 + $0x84] sm:$0xe]
        %v10250 = vld [vmem:[%s1106 + $0x88] sm:$0xf]
        %v10251 = vld [vmem:[%s1106 + $0x8c] sm:$0x1]
        %v10252 = vld [vmem:[%s1106 + $0x90] sm:$0xe]
        %v10253 = vld [vmem:[%s1106 + $0x94] sm:$0xf]
        %v10254 = vld [vmem:[%s1106 + $0x98] sm:$0x1]
        %v10255 = vld [vmem:[%s1106 + $0x9c] sm:$0xe]
        %v10256 = vld [vmem:[%s1106 + $0xa0] sm:$0xf]
        %v10257 = vld [vmem:[%s1106 + $0xa4] sm:$0x1]
        %v10258 = vld [vmem:[%s1106 + $0xa8] sm:$0xe]
        %v10259 = vld [vmem:[%s1106 + $0xac] sm:$0xf]
        %v10260 = vld [vmem:[%s1106 + $0xb0] sm:$0x1]
        %v10261 = vld [vmem:[%s1106 + $0xb4] sm:$0xe]
        %v10262 = vld [vmem:[%s1106 + $0xb8] sm:$0xf]
        %v10263 = vld [vmem:[%s1106 + $0xbc] sm:$0x1]
        %v10312 = vunpack.c.l.b16 %v10216
        %v10313 = vunpack.c.l.b16 %v10217
        %v10314 = vunpack.c.l.b16 %v10218
        %v10315 = vunpack.c.l.b16 %v10219
        %v10316 = vunpack.c.l.b16 %v10220
        %v10317 = vunpack.c.l.b16 %v10221
        %v10318 = vunpack.c.l.b16 %v10222
        %v10319 = vunpack.c.l.b16 %v10223
        %v10320 = vunpack.c.l.b16 %v10224
        %v10321 = vunpack.c.l.b16 %v10225
        %v10322 = vunpack.c.l.b16 %v10226
        %v10323 = vunpack.c.l.b16 %v10227
        %v10324 = vunpack.c.l.b16 %v10228
        %v10325 = vunpack.c.l.b16 %v10229
        %v10326 = vunpack.c.l.b16 %v10230
        %v10327 = vunpack.c.l.b16 %v10231
        %v10328 = vunpack.c.l.b16 %v10232
        %v10329 = vunpack.c.l.b16 %v10233
        %v10330 = vunpack.c.l.b16 %v10234
        %v10331 = vunpack.c.l.b16 %v10235
        %v10332 = vunpack.c.l.b16 %v10236
        %v10333 = vunpack.c.l.b16 %v10237
        %v10334 = vunpack.c.l.b16 %v10238
        %v10335 = vunpack.c.l.b16 %v10239
        %v10336 = vunpack.c.l.b16 %v10240
        %v10337 = vunpack.c.l.b16 %v10241
        %v10338 = vunpack.c.l.b16 %v10242
        %v10339 = vunpack.c.l.b16 %v10243
        %v10340 = vunpack.c.l.b16 %v10244
        %v10341 = vunpack.c.l.b16 %v10245
        %v10342 = vunpack.c.l.b16 %v10246
        %v10343 = vunpack.c.l.b16 %v10247
        %v10344 = vunpack.c.l.b16 %v10248
        %v10345 = vunpack.c.l.b16 %v10249
        %v10346 = vunpack.c.l.b16 %v10250
        %v10347 = vunpack.c.l.b16 %v10251
        %v10348 = vunpack.c.l.b16 %v10252
        %v10349 = vunpack.c.l.b16 %v10253
        %v10350 = vunpack.c.l.b16 %v10254
        %v10351 = vunpack.c.l.b16 %v10255
        %v10352 = vunpack.c.l.b16 %v10256
        %v10353 = vunpack.c.l.b16 %v10257
        %v10354 = vunpack.c.l.b16 %v10258
        %v10355 = vunpack.c.l.b16 %v10259
        %v10356 = vunpack.c.l.b16 %v10260
        %v10357 = vunpack.c.l.b16 %v10261
        %v10358 = vunpack.c.l.b16 %v10262
        %v10359 = vunpack.c.l.b16 %v10263
        %v10360 = vpack.c.b16 %v10313, %v10312
        %v10361 = vpack.c.b16 %v10314, %v10314
        %v10362 = vpack.c.b16 %v10316, %v10315
        %v10363 = vpack.c.b16 %v10317, %v10317
        %v10364 = vpack.c.b16 %v10319, %v10318
        %v10365 = vpack.c.b16 %v10320, %v10320
        %v10366 = vpack.c.b16 %v10322, %v10321
        %v10367 = vpack.c.b16 %v10323, %v10323
        %v10368 = vpack.c.b16 %v10325, %v10324
        %v10369 = vpack.c.b16 %v10326, %v10326
        %v10370 = vpack.c.b16 %v10328, %v10327
        %v10371 = vpack.c.b16 %v10329, %v10329
        %v10372 = vpack.c.b16 %v10331, %v10330
        %v10373 = vpack.c.b16 %v10332, %v10332
        %v10374 = vpack.c.b16 %v10334, %v10333
        %v10375 = vpack.c.b16 %v10335, %v10335
        %v10376 = vpack.c.b16 %v10337, %v10336
        %v10377 = vpack.c.b16 %v10338, %v10338
        %v10378 = vpack.c.b16 %v10340, %v10339
        %v10379 = vpack.c.b16 %v10341, %v10341
        %v10380 = vpack.c.b16 %v10343, %v10342
        %v10381 = vpack.c.b16 %v10344, %v10344
        %v10382 = vpack.c.b16 %v10346, %v10345
        %v10383 = vpack.c.b16 %v10347, %v10347
        %v10384 = vpack.c.b16 %v10349, %v10348
        %v10385 = vpack.c.b16 %v10350, %v10350
        %v10386 = vpack.c.b16 %v10352, %v10351
        %v10387 = vpack.c.b16 %v10353, %v10353
        %v10388 = vpack.c.b16 %v10355, %v10354
        %v10389 = vpack.c.b16 %v10356, %v10356
        %v10390 = vpack.c.b16 %v10358, %v10357
        %v10391 = vpack.c.b16 %v10359, %v10359
        %v10392 = vrot.slane %v10360, 1
        %v10393 = vrot.slane %v10361, 1
        %v10394 = vsel %vm1978, %v10392, %v10393
        %v10395 = vrot.slane %v10362, 1
        %v10396 = vrot.slane %v10363, 1
        %v10397 = vsel %vm1978, %v10395, %v10396
        %v10398 = vrot.slane %v10364, 1
        %v10399 = vrot.slane %v10365, 1
        %v10400 = vsel %vm1978, %v10398, %v10399
        %v10401 = vrot.slane %v10366, 1
        %v10402 = vrot.slane %v10367, 1
        %v10403 = vsel %vm1978, %v10401, %v10402
        %v10404 = vrot.slane %v10368, 1
        %v10405 = vrot.slane %v10369, 1
        %v10406 = vsel %vm1978, %v10404, %v10405
        %v10407 = vrot.slane %v10370, 1
        %v10408 = vrot.slane %v10371, 1
        %v10409 = vsel %vm1978, %v10407, %v10408
        %v10410 = vrot.slane %v10372, 1
        %v10411 = vrot.slane %v10373, 1
        %v10412 = vsel %vm1978, %v10410, %v10411
        %v10413 = vrot.slane %v10374, 1
        %v10414 = vrot.slane %v10375, 1
        %v10415 = vsel %vm1978, %v10413, %v10414
        %v10416 = vrot.slane %v10376, 1
        %v10417 = vrot.slane %v10377, 1
        %v10418 = vsel %vm1978, %v10416, %v10417
        %v10419 = vrot.slane %v10378, 1
        %v10420 = vrot.slane %v10379, 1
        %v10421 = vsel %vm1978, %v10419, %v10420
        %v10422 = vrot.slane %v10380, 1
        %v10423 = vrot.slane %v10381, 1
        %v10424 = vsel %vm1978, %v10422, %v10423
        %v10425 = vrot.slane %v10382, 1
        %v10426 = vrot.slane %v10383, 1
        %v10427 = vsel %vm1978, %v10425, %v10426
        %v10428 = vrot.slane %v10384, 1
        %v10429 = vrot.slane %v10385, 1
        %v10430 = vsel %vm1978, %v10428, %v10429
        %v10431 = vrot.slane %v10386, 1
        %v10432 = vrot.slane %v10387, 1
        %v10433 = vsel %vm1978, %v10431, %v10432
        %v10434 = vrot.slane %v10388, 1
        %v10435 = vrot.slane %v10389, 1
        %v10436 = vsel %vm1978, %v10434, %v10435
        %v10437 = vrot.slane %v10390, 1
        %v10438 = vrot.slane %v10391, 1
        %v10439 = vsel %vm1978, %v10437, %v10438
        %10440 = vrot.lane.b32.xlu0 %v10394, 60
        %v10441 = vpop.permute.xlu0 %10440
        %10442 = vrot.lane.b32.xlu0 %v10397, 60
        %v10443 = vpop.permute.xlu0 %10442
        %10444 = vrot.lane.b32.xlu0 %v10400, 60
        %v10445 = vpop.permute.xlu0 %10444
        %10446 = vrot.lane.b32.xlu0 %v10403, 60
        %v10447 = vpop.permute.xlu0 %10446
        %10448 = vrot.lane.b32.xlu0 %v10406, 60
        %v10449 = vpop.permute.xlu0 %10448
        %10450 = vrot.lane.b32.xlu0 %v10409, 60
        %v10451 = vpop.permute.xlu0 %10450
        %10452 = vrot.lane.b32.xlu0 %v10412, 60
        %v10453 = vpop.permute.xlu0 %10452
        %10454 = vrot.lane.b32.xlu0 %v10415, 60
        %v10455 = vpop.permute.xlu0 %10454
        %10456 = vrot.lane.b32.xlu0 %v10418, 60
        %v10457 = vpop.permute.xlu0 %10456
        %10458 = vrot.lane.b32.xlu0 %v10421, 60
        %v10459 = vpop.permute.xlu0 %10458
        %10460 = vrot.lane.b32.xlu0 %v10424, 60
        %v10461 = vpop.permute.xlu0 %10460
        %10462 = vrot.lane.b32.xlu0 %v10427, 60
        %v10463 = vpop.permute.xlu0 %10462
        %10464 = vrot.lane.b32.xlu0 %v10430, 60
        %v10465 = vpop.permute.xlu0 %10464
        %10466 = vrot.lane.b32.xlu0 %v10433, 60
        %v10467 = vpop.permute.xlu0 %10466
        %10468 = vrot.lane.b32.xlu0 %v10436, 60
        %v10469 = vpop.permute.xlu0 %10468
        %10470 = vrot.lane.b32.xlu0 %v10439, 60
        %v10471 = vpop.permute.xlu0 %10470
        %vm10488 = vcmask 589280
        %10489 = vst.msk [vmem:[#allocation3] sm:$0xff] %vm10488, %v10441
        %10490 = vst.msk [vmem:[#allocation3 + $0x8] sm:$0xff] %vm10488, %v10443
        %10491 = vst.msk [vmem:[#allocation3 + $0x10] sm:$0xff] %vm10488, %v10445
        %10492 = vst.msk [vmem:[#allocation3 + $0x18] sm:$0xff] %vm10488, %v10447
        %10493 = vst.msk [vmem:[#allocation3 + $0x20] sm:$0xff] %vm10488, %v10449
        %10494 = vst.msk [vmem:[#allocation3 + $0x28] sm:$0xff] %vm10488, %v10451
        %10495 = vst.msk [vmem:[#allocation3 + $0x30] sm:$0xff] %vm10488, %v10453
        %10496 = vst.msk [vmem:[#allocation3 + $0x38] sm:$0xff] %vm10488, %v10455
        %10497 = vst.msk [vmem:[#allocation3 + $0x40] sm:$0xff] %vm10488, %v10457
        %10498 = vst.msk [vmem:[#allocation3 + $0x48] sm:$0xff] %vm10488, %v10459
        %10499 = vst.msk [vmem:[#allocation3 + $0x50] sm:$0xff] %vm10488, %v10461
        %10500 = vst.msk [vmem:[#allocation3 + $0x58] sm:$0xff] %vm10488, %v10463
        %10501 = vst.msk [vmem:[#allocation3 + $0x60] sm:$0xff] %vm10488, %v10465
        %10502 = vst.msk [vmem:[#allocation3 + $0x68] sm:$0xff] %vm10488, %v10467
        %10503 = vst.msk [vmem:[#allocation3 + $0x70] sm:$0xff] %vm10488, %v10469
        %10504 = vst.msk [vmem:[#allocation3 + $0x78] sm:$0xff] %vm10488, %v10471
        %v10505 = vld [vmem:[%s2991] sm:$0xf]
        %v10506 = vld [vmem:[%s2991 + $0x4] sm:$0xf]
        %v10507 = vld [vmem:[%s2991 + $0xc] sm:$0xf]
        %v10508 = vld [vmem:[%s2991 + $0x10] sm:$0xf]
        %v10509 = vld [vmem:[%s2991 + $0x18] sm:$0xf]
        %v10510 = vld [vmem:[%s2991 + $0x1c] sm:$0xf]
        %v10511 = vld [vmem:[%s2991 + $0x24] sm:$0xf]
        %v10512 = vld [vmem:[%s2991 + $0x28] sm:$0xf]
        %v10513 = vld [vmem:[%s2991 + $0x30] sm:$0xf]
        %v10514 = vld [vmem:[%s2991 + $0x34] sm:$0xf]
        %v10515 = vld [vmem:[%s2991 + $0x3c] sm:$0xf]
        %v10516 = vld [vmem:[%s2991 + $0x40] sm:$0xf]
        %v10517 = vld [vmem:[%s2991 + $0x48] sm:$0xf]
        %v10518 = vld [vmem:[%s2991 + $0x4c] sm:$0xf]
        %v10519 = vld [vmem:[%s2991 + $0x54] sm:$0xf]
        %v10520 = vld [vmem:[%s2991 + $0x58] sm:$0xf]
        %v10521 = vld [vmem:[%s2991 + $0x60] sm:$0xf]
        %v10522 = vld [vmem:[%s2991 + $0x64] sm:$0xf]
        %v10523 = vld [vmem:[%s2991 + $0x6c] sm:$0xf]
        %v10524 = vld [vmem:[%s2991 + $0x70] sm:$0xf]
        %v10525 = vld [vmem:[%s2991 + $0x78] sm:$0xf]
        %v10526 = vld [vmem:[%s2991 + $0x7c] sm:$0xf]
        %v10527 = vld [vmem:[%s2991 + $0x84] sm:$0xf]
        %v10528 = vld [vmem:[%s2991 + $0x88] sm:$0xf]
        %v10529 = vld [vmem:[%s2991 + $0x90] sm:$0xf]
        %v10530 = vld [vmem:[%s2991 + $0x94] sm:$0xf]
        %v10531 = vld [vmem:[%s2991 + $0x9c] sm:$0xf]
        %v10532 = vld [vmem:[%s2991 + $0xa0] sm:$0xf]
        %v10533 = vld [vmem:[%s2991 + $0xa8] sm:$0xf]
        %v10534 = vld [vmem:[%s2991 + $0xac] sm:$0xf]
        %v10535 = vld [vmem:[%s2991 + $0xb4] sm:$0xf]
        %v10536 = vld [vmem:[%s2991 + $0xb8] sm:$0xf]
        %v10569 = vunpack.c.l.b16 %v10505
        %v10570 = vunpack.c.l.b16 %v10506
        %v10571 = vunpack.c.l.b16 %v10507
        %v10572 = vunpack.c.l.b16 %v10508
        %v10573 = vunpack.c.l.b16 %v10509
        %v10574 = vunpack.c.l.b16 %v10510
        %v10575 = vunpack.c.l.b16 %v10511
        %v10576 = vunpack.c.l.b16 %v10512
        %v10577 = vunpack.c.l.b16 %v10513
        %v10578 = vunpack.c.l.b16 %v10514
        %v10579 = vunpack.c.l.b16 %v10515
        %v10580 = vunpack.c.l.b16 %v10516
        %v10581 = vunpack.c.l.b16 %v10517
        %v10582 = vunpack.c.l.b16 %v10518
        %v10583 = vunpack.c.l.b16 %v10519
        %v10584 = vunpack.c.l.b16 %v10520
        %v10585 = vunpack.c.l.b16 %v10521
        %v10586 = vunpack.c.l.b16 %v10522
        %v10587 = vunpack.c.l.b16 %v10523
        %v10588 = vunpack.c.l.b16 %v10524
        %v10589 = vunpack.c.l.b16 %v10525
        %v10590 = vunpack.c.l.b16 %v10526
        %v10591 = vunpack.c.l.b16 %v10527
        %v10592 = vunpack.c.l.b16 %v10528
        %v10593 = vunpack.c.l.b16 %v10529
        %v10594 = vunpack.c.l.b16 %v10530
        %v10595 = vunpack.c.l.b16 %v10531
        %v10596 = vunpack.c.l.b16 %v10532
        %v10597 = vunpack.c.l.b16 %v10533
        %v10598 = vunpack.c.l.b16 %v10534
        %v10599 = vunpack.c.l.b16 %v10535
        %v10600 = vunpack.c.l.b16 %v10536
        %v10601 = vpack.c.b16 %v10570, %v10569
        %v10602 = vpack.c.b16 %v10572, %v10571
        %v10603 = vpack.c.b16 %v10574, %v10573
        %v10604 = vpack.c.b16 %v10576, %v10575
        %v10605 = vpack.c.b16 %v10578, %v10577
        %v10606 = vpack.c.b16 %v10580, %v10579
        %v10607 = vpack.c.b16 %v10582, %v10581
        %v10608 = vpack.c.b16 %v10584, %v10583
        %v10609 = vpack.c.b16 %v10586, %v10585
        %v10610 = vpack.c.b16 %v10588, %v10587
        %v10611 = vpack.c.b16 %v10590, %v10589
        %v10612 = vpack.c.b16 %v10592, %v10591
        %v10613 = vpack.c.b16 %v10594, %v10593
        %v10614 = vpack.c.b16 %v10596, %v10595
        %v10615 = vpack.c.b16 %v10598, %v10597
        %v10616 = vpack.c.b16 %v10600, %v10599
        %10617 = vrot.lane.b32.xlu0 %v10601, 72
        %v10618 = vpop.permute.xlu0 %10617
        %10619 = vrot.lane.b32.xlu0 %v10602, 72
        %v10620 = vpop.permute.xlu0 %10619
        %10621 = vrot.lane.b32.xlu0 %v10603, 72
        %v10622 = vpop.permute.xlu0 %10621
        %10623 = vrot.lane.b32.xlu0 %v10604, 72
        %v10624 = vpop.permute.xlu0 %10623
        %10625 = vrot.lane.b32.xlu0 %v10605, 72
        %v10626 = vpop.permute.xlu0 %10625
        %10627 = vrot.lane.b32.xlu0 %v10606, 72
        %v10628 = vpop.permute.xlu0 %10627
        %10629 = vrot.lane.b32.xlu0 %v10607, 72
        %v10630 = vpop.permute.xlu0 %10629
        %10631 = vrot.lane.b32.xlu0 %v10608, 72
        %v10632 = vpop.permute.xlu0 %10631
        %10633 = vrot.lane.b32.xlu0 %v10609, 72
        %v10634 = vpop.permute.xlu0 %10633
        %10635 = vrot.lane.b32.xlu0 %v10610, 72
        %v10636 = vpop.permute.xlu0 %10635
        %10637 = vrot.lane.b32.xlu0 %v10611, 72
        %v10638 = vpop.permute.xlu0 %10637
        %10639 = vrot.lane.b32.xlu0 %v10612, 72
        %v10640 = vpop.permute.xlu0 %10639
        %10641 = vrot.lane.b32.xlu0 %v10613, 72
        %v10642 = vpop.permute.xlu0 %10641
        %10643 = vrot.lane.b32.xlu0 %v10614, 72
        %v10644 = vpop.permute.xlu0 %10643
        %10645 = vrot.lane.b32.xlu0 %v10615, 72
        %v10646 = vpop.permute.xlu0 %10645
        %10647 = vrot.lane.b32.xlu0 %v10616, 72
        %v10648 = vpop.permute.xlu0 %10647
        %vm10665 = vcmask 687680
        %10666 = vst.msk [vmem:[#allocation3] sm:$0xff] %vm10665, %v10618
        %10667 = vst.msk [vmem:[#allocation3 + $0x8] sm:$0xff] %vm10665, %v10620
        %10668 = vst.msk [vmem:[#allocation3 + $0x10] sm:$0xff] %vm10665, %v10622
        %10669 = vst.msk [vmem:[#allocation3 + $0x18] sm:$0xff] %vm10665, %v10624
        %10670 = vst.msk [vmem:[#allocation3 + $0x20] sm:$0xff] %vm10665, %v10626
        %10671 = vst.msk [vmem:[#allocation3 + $0x28] sm:$0xff] %vm10665, %v10628
        %10672 = vst.msk [vmem:[#allocation3 + $0x30] sm:$0xff] %vm10665, %v10630
        %10673 = vst.msk [vmem:[#allocation3 + $0x38] sm:$0xff] %vm10665, %v10632
        %10674 = vst.msk [vmem:[#allocation3 + $0x40] sm:$0xff] %vm10665, %v10634
        %10675 = vst.msk [vmem:[#allocation3 + $0x48] sm:$0xff] %vm10665, %v10636
        %10676 = vst.msk [vmem:[#allocation3 + $0x50] sm:$0xff] %vm10665, %v10638
        %10677 = vst.msk [vmem:[#allocation3 + $0x58] sm:$0xff] %vm10665, %v10640
        %10678 = vst.msk [vmem:[#allocation3 + $0x60] sm:$0xff] %vm10665, %v10642
        %10679 = vst.msk [vmem:[#allocation3 + $0x68] sm:$0xff] %vm10665, %v10644
        %10680 = vst.msk [vmem:[#allocation3 + $0x70] sm:$0xff] %vm10665, %v10646
        %10681 = vst.msk [vmem:[#allocation3 + $0x78] sm:$0xff] %vm10665, %v10648
        %v10682 = vld [vmem:[%s2991] sm:$0xf]
        %v10683 = vld [vmem:[%s2991 + $0x4] sm:$0xf]
        %v10684 = vld [vmem:[%s2991 + $0x8] sm:$0x1]
        %v10685 = vld [vmem:[%s2991 + $0xc] sm:$0xf]
        %v10686 = vld [vmem:[%s2991 + $0x10] sm:$0xf]
        %v10687 = vld [vmem:[%s2991 + $0x14] sm:$0x1]
        %v10688 = vld [vmem:[%s2991 + $0x18] sm:$0xf]
        %v10689 = vld [vmem:[%s2991 + $0x1c] sm:$0xf]
        %v10690 = vld [vmem:[%s2991 + $0x20] sm:$0x1]
        %v10691 = vld [vmem:[%s2991 + $0x24] sm:$0xf]
        %v10692 = vld [vmem:[%s2991 + $0x28] sm:$0xf]
        %v10693 = vld [vmem:[%s2991 + $0x2c] sm:$0x1]
        %v10694 = vld [vmem:[%s2991 + $0x30] sm:$0xf]
        %v10695 = vld [vmem:[%s2991 + $0x34] sm:$0xf]
        %v10696 = vld [vmem:[%s2991 + $0x38] sm:$0x1]
        %v10697 = vld [vmem:[%s2991 + $0x3c] sm:$0xf]
        %v10698 = vld [vmem:[%s2991 + $0x40] sm:$0xf]
        %v10699 = vld [vmem:[%s2991 + $0x44] sm:$0x1]
        %v10700 = vld [vmem:[%s2991 + $0x48] sm:$0xf]
        %v10701 = vld [vmem:[%s2991 + $0x4c] sm:$0xf]
        %v10702 = vld [vmem:[%s2991 + $0x50] sm:$0x1]
        %v10703 = vld [vmem:[%s2991 + $0x54] sm:$0xf]
        %v10704 = vld [vmem:[%s2991 + $0x58] sm:$0xf]
        %v10705 = vld [vmem:[%s2991 + $0x5c] sm:$0x1]
        %v10706 = vld [vmem:[%s2991 + $0x60] sm:$0xf]
        %v10707 = vld [vmem:[%s2991 + $0x64] sm:$0xf]
        %v10708 = vld [vmem:[%s2991 + $0x68] sm:$0x1]
        %v10709 = vld [vmem:[%s2991 + $0x6c] sm:$0xf]
        %v10710 = vld [vmem:[%s2991 + $0x70] sm:$0xf]
        %v10711 = vld [vmem:[%s2991 + $0x74] sm:$0x1]
        %v10712 = vld [vmem:[%s2991 + $0x78] sm:$0xf]
        %v10713 = vld [vmem:[%s2991 + $0x7c] sm:$0xf]
        %v10714 = vld [vmem:[%s2991 + $0x80] sm:$0x1]
        %v10715 = vld [vmem:[%s2991 + $0x84] sm:$0xf]
        %v10716 = vld [vmem:[%s2991 + $0x88] sm:$0xf]
        %v10717 = vld [vmem:[%s2991 + $0x8c] sm:$0x1]
        %v10718 = vld [vmem:[%s2991 + $0x90] sm:$0xf]
        %v10719 = vld [vmem:[%s2991 + $0x94] sm:$0xf]
        %v10720 = vld [vmem:[%s2991 + $0x98] sm:$0x1]
        %v10721 = vld [vmem:[%s2991 + $0x9c] sm:$0xf]
        %v10722 = vld [vmem:[%s2991 + $0xa0] sm:$0xf]
        %v10723 = vld [vmem:[%s2991 + $0xa4] sm:$0x1]
        %v10724 = vld [vmem:[%s2991 + $0xa8] sm:$0xf]
        %v10725 = vld [vmem:[%s2991 + $0xac] sm:$0xf]
        %v10726 = vld [vmem:[%s2991 + $0xb0] sm:$0x1]
        %v10727 = vld [vmem:[%s2991 + $0xb4] sm:$0xf]
        %v10728 = vld [vmem:[%s2991 + $0xb8] sm:$0xf]
        %v10729 = vld [vmem:[%s2991 + $0xbc] sm:$0x1]
        %v10778 = vunpack.c.l.b16 %v10682
        %v10779 = vunpack.c.l.b16 %v10683
        %v10780 = vunpack.c.l.b16 %v10684
        %v10781 = vunpack.c.l.b16 %v10685
        %v10782 = vunpack.c.l.b16 %v10686
        %v10783 = vunpack.c.l.b16 %v10687
        %v10784 = vunpack.c.l.b16 %v10688
        %v10785 = vunpack.c.l.b16 %v10689
        %v10786 = vunpack.c.l.b16 %v10690
        %v10787 = vunpack.c.l.b16 %v10691
        %v10788 = vunpack.c.l.b16 %v10692
        %v10789 = vunpack.c.l.b16 %v10693
        %v10790 = vunpack.c.l.b16 %v10694
        %v10791 = vunpack.c.l.b16 %v10695
        %v10792 = vunpack.c.l.b16 %v10696
        %v10793 = vunpack.c.l.b16 %v10697
        %v10794 = vunpack.c.l.b16 %v10698
        %v10795 = vunpack.c.l.b16 %v10699
        %v10796 = vunpack.c.l.b16 %v10700
        %v10797 = vunpack.c.l.b16 %v10701
        %v10798 = vunpack.c.l.b16 %v10702
        %v10799 = vunpack.c.l.b16 %v10703
        %v10800 = vunpack.c.l.b16 %v10704
        %v10801 = vunpack.c.l.b16 %v10705
        %v10802 = vunpack.c.l.b16 %v10706
        %v10803 = vunpack.c.l.b16 %v10707
        %v10804 = vunpack.c.l.b16 %v10708
        %v10805 = vunpack.c.l.b16 %v10709
        %v10806 = vunpack.c.l.b16 %v10710
        %v10807 = vunpack.c.l.b16 %v10711
        %v10808 = vunpack.c.l.b16 %v10712
        %v10809 = vunpack.c.l.b16 %v10713
        %v10810 = vunpack.c.l.b16 %v10714
        %v10811 = vunpack.c.l.b16 %v10715
        %v10812 = vunpack.c.l.b16 %v10716
        %v10813 = vunpack.c.l.b16 %v10717
        %v10814 = vunpack.c.l.b16 %v10718
        %v10815 = vunpack.c.l.b16 %v10719
        %v10816 = vunpack.c.l.b16 %v10720
        %v10817 = vunpack.c.l.b16 %v10721
        %v10818 = vunpack.c.l.b16 %v10722
        %v10819 = vunpack.c.l.b16 %v10723
        %v10820 = vunpack.c.l.b16 %v10724
        %v10821 = vunpack.c.l.b16 %v10725
        %v10822 = vunpack.c.l.b16 %v10726
        %v10823 = vunpack.c.l.b16 %v10727
        %v10824 = vunpack.c.l.b16 %v10728
        %v10825 = vunpack.c.l.b16 %v10729
        %v10826 = vpack.c.b16 %v10779, %v10778
        %v10827 = vpack.c.b16 %v10780, %v10780
        %v10828 = vpack.c.b16 %v10782, %v10781
        %v10829 = vpack.c.b16 %v10783, %v10783
        %v10830 = vpack.c.b16 %v10785, %v10784
        %v10831 = vpack.c.b16 %v10786, %v10786
        %v10832 = vpack.c.b16 %v10788, %v10787
        %v10833 = vpack.c.b16 %v10789, %v10789
        %v10834 = vpack.c.b16 %v10791, %v10790
        %v10835 = vpack.c.b16 %v10792, %v10792
        %v10836 = vpack.c.b16 %v10794, %v10793
        %v10837 = vpack.c.b16 %v10795, %v10795
        %v10838 = vpack.c.b16 %v10797, %v10796
        %v10839 = vpack.c.b16 %v10798, %v10798
        %v10840 = vpack.c.b16 %v10800, %v10799
        %v10841 = vpack.c.b16 %v10801, %v10801
        %v10842 = vpack.c.b16 %v10803, %v10802
        %v10843 = vpack.c.b16 %v10804, %v10804
        %v10844 = vpack.c.b16 %v10806, %v10805
        %v10845 = vpack.c.b16 %v10807, %v10807
        %v10846 = vpack.c.b16 %v10809, %v10808
        %v10847 = vpack.c.b16 %v10810, %v10810
        %v10848 = vpack.c.b16 %v10812, %v10811
        %v10849 = vpack.c.b16 %v10813, %v10813
        %v10850 = vpack.c.b16 %v10815, %v10814
        %v10851 = vpack.c.b16 %v10816, %v10816
        %v10852 = vpack.c.b16 %v10818, %v10817
        %v10853 = vpack.c.b16 %v10819, %v10819
        %v10854 = vpack.c.b16 %v10821, %v10820
        %v10855 = vpack.c.b16 %v10822, %v10822
        %v10856 = vpack.c.b16 %v10824, %v10823
        %v10857 = vpack.c.b16 %v10825, %v10825
        %v10859 = vshrl.u32 %v10826, 16
        %v10861 = vshll.u32 %v10826, 16
        %v10863 = vrot.slane %v10861, 1
        %v10864 = vor.u32 %v10859, %v10863
        %v10866 = vshll.u32 %v10827, 16
        %v10868 = vrot.slane %v10866, 1
        %v10869 = vsel %vm1544, %v10864, %v10868
        %v10871 = vshrl.u32 %v10828, 16
        %v10873 = vshll.u32 %v10828, 16
        %v10875 = vrot.slane %v10873, 1
        %v10876 = vor.u32 %v10871, %v10875
        %v10878 = vshll.u32 %v10829, 16
        %v10880 = vrot.slane %v10878, 1
        %v10881 = vsel %vm1544, %v10876, %v10880
        %v10883 = vshrl.u32 %v10830, 16
        %v10885 = vshll.u32 %v10830, 16
        %v10887 = vrot.slane %v10885, 1
        %v10888 = vor.u32 %v10883, %v10887
        %v10890 = vshll.u32 %v10831, 16
        %v10892 = vrot.slane %v10890, 1
        %v10893 = vsel %vm1544, %v10888, %v10892
        %v10895 = vshrl.u32 %v10832, 16
        %v10897 = vshll.u32 %v10832, 16
        %v10899 = vrot.slane %v10897, 1
        %v10900 = vor.u32 %v10895, %v10899
        %v10902 = vshll.u32 %v10833, 16
        %v10904 = vrot.slane %v10902, 1
        %v10905 = vsel %vm1544, %v10900, %v10904
        %v10907 = vshrl.u32 %v10834, 16
        %v10909 = vshll.u32 %v10834, 16
        %v10911 = vrot.slane %v10909, 1
        %v10912 = vor.u32 %v10907, %v10911
        %v10914 = vshll.u32 %v10835, 16
        %v10916 = vrot.slane %v10914, 1
        %v10917 = vsel %vm1544, %v10912, %v10916
        %v10919 = vshrl.u32 %v10836, 16
        %v10921 = vshll.u32 %v10836, 16
        %v10923 = vrot.slane %v10921, 1
        %v10924 = vor.u32 %v10919, %v10923
        %v10926 = vshll.u32 %v10837, 16
        %v10928 = vrot.slane %v10926, 1
        %v10929 = vsel %vm1544, %v10924, %v10928
        %v10931 = vshrl.u32 %v10838, 16
        %v10933 = vshll.u32 %v10838, 16
        %v10935 = vrot.slane %v10933, 1
        %v10936 = vor.u32 %v10931, %v10935
        %v10938 = vshll.u32 %v10839, 16
        %v10940 = vrot.slane %v10938, 1
        %v10941 = vsel %vm1544, %v10936, %v10940
        %v10943 = vshrl.u32 %v10840, 16
        %v10945 = vshll.u32 %v10840, 16
        %v10947 = vrot.slane %v10945, 1
        %v10948 = vor.u32 %v10943, %v10947
        %v10950 = vshll.u32 %v10841, 16
        %v10952 = vrot.slane %v10950, 1
        %v10953 = vsel %vm1544, %v10948, %v10952
        %v10955 = vshrl.u32 %v10842, 16
        %v10957 = vshll.u32 %v10842, 16
        %v10959 = vrot.slane %v10957, 1
        %v10960 = vor.u32 %v10955, %v10959
        %v10962 = vshll.u32 %v10843, 16
        %v10964 = vrot.slane %v10962, 1
        %v10965 = vsel %vm1544, %v10960, %v10964
        %v10967 = vshrl.u32 %v10844, 16
        %v10969 = vshll.u32 %v10844, 16
        %v10971 = vrot.slane %v10969, 1
        %v10972 = vor.u32 %v10967, %v10971
        %v10974 = vshll.u32 %v10845, 16
        %v10976 = vrot.slane %v10974, 1
        %v10977 = vsel %vm1544, %v10972, %v10976
        %v10979 = vshrl.u32 %v10846, 16
        %v10981 = vshll.u32 %v10846, 16
        %v10983 = vrot.slane %v10981, 1
        %v10984 = vor.u32 %v10979, %v10983
        %v10986 = vshll.u32 %v10847, 16
        %v10988 = vrot.slane %v10986, 1
        %v10989 = vsel %vm1544, %v10984, %v10988
        %v10991 = vshrl.u32 %v10848, 16
        %v10993 = vshll.u32 %v10848, 16
        %v10995 = vrot.slane %v10993, 1
        %v10996 = vor.u32 %v10991, %v10995
        %v10998 = vshll.u32 %v10849, 16
        %v11000 = vrot.slane %v10998, 1
        %v11001 = vsel %vm1544, %v10996, %v11000
        %v11003 = vshrl.u32 %v10850, 16
        %v11005 = vshll.u32 %v10850, 16
        %v11007 = vrot.slane %v11005, 1
        %v11008 = vor.u32 %v11003, %v11007
        %v11010 = vshll.u32 %v10851, 16
        %v11012 = vrot.slane %v11010, 1
        %v11013 = vsel %vm1544, %v11008, %v11012
        %v11015 = vshrl.u32 %v10852, 16
        %v11017 = vshll.u32 %v10852, 16
        %v11019 = vrot.slane %v11017, 1
        %v11020 = vor.u32 %v11015, %v11019
        %v11022 = vshll.u32 %v10853, 16
        %v11024 = vrot.slane %v11022, 1
        %v11025 = vsel %vm1544, %v11020, %v11024
        %v11027 = vshrl.u32 %v10854, 16
        %v11029 = vshll.u32 %v10854, 16
        %v11031 = vrot.slane %v11029, 1
        %v11032 = vor.u32 %v11027, %v11031
        %v11034 = vshll.u32 %v10855, 16
        %v11036 = vrot.slane %v11034, 1
        %v11037 = vsel %vm1544, %v11032, %v11036
        %v11039 = vshrl.u32 %v10856, 16
        %v11041 = vshll.u32 %v10856, 16
        %v11043 = vrot.slane %v11041, 1
        %v11044 = vor.u32 %v11039, %v11043
        %v11046 = vshll.u32 %v10857, 16
        %v11048 = vrot.slane %v11046, 1
        %v11049 = vsel %vm1544, %v11044, %v11048
        %11050 = vrot.lane.b32.xlu0 %v10869, 84
        %v11051 = vpop.permute.xlu0 %11050
        %11052 = vrot.lane.b32.xlu0 %v10881, 84
        %v11053 = vpop.permute.xlu0 %11052
        %11054 = vrot.lane.b32.xlu0 %v10893, 84
        %v11055 = vpop.permute.xlu0 %11054
        %11056 = vrot.lane.b32.xlu0 %v10905, 84
        %v11057 = vpop.permute.xlu0 %11056
        %11058 = vrot.lane.b32.xlu0 %v10917, 84
        %v11059 = vpop.permute.xlu0 %11058
        %11060 = vrot.lane.b32.xlu0 %v10929, 84
        %v11061 = vpop.permute.xlu0 %11060
        %11062 = vrot.lane.b32.xlu0 %v10941, 84
        %v11063 = vpop.permute.xlu0 %11062
        %11064 = vrot.lane.b32.xlu0 %v10953, 84
        %v11065 = vpop.permute.xlu0 %11064
        %11066 = vrot.lane.b32.xlu0 %v10965, 84
        %v11067 = vpop.permute.xlu0 %11066
        %11068 = vrot.lane.b32.xlu0 %v10977, 84
        %v11069 = vpop.permute.xlu0 %11068
        %11070 = vrot.lane.b32.xlu0 %v10989, 84
        %v11071 = vpop.permute.xlu0 %11070
        %11072 = vrot.lane.b32.xlu0 %v11001, 84
        %v11073 = vpop.permute.xlu0 %11072
        %11074 = vrot.lane.b32.xlu0 %v11013, 84
        %v11075 = vpop.permute.xlu0 %11074
        %11076 = vrot.lane.b32.xlu0 %v11025, 84
        %v11077 = vpop.permute.xlu0 %11076
        %11078 = vrot.lane.b32.xlu0 %v11037, 84
        %v11079 = vpop.permute.xlu0 %11078
        %11080 = vrot.lane.b32.xlu0 %v11049, 84
        %v11081 = vpop.permute.xlu0 %11080
        %vm11098 = vcmask 786080
        %11099 = vst.msk [vmem:[#allocation3] sm:$0xff] %vm11098, %v11051
        %11100 = vst.msk [vmem:[#allocation3 + $0x8] sm:$0xff] %vm11098, %v11053
        %11101 = vst.msk [vmem:[#allocation3 + $0x10] sm:$0xff] %vm11098, %v11055
        %11102 = vst.msk [vmem:[#allocation3 + $0x18] sm:$0xff] %vm11098, %v11057
        %11103 = vst.msk [vmem:[#allocation3 + $0x20] sm:$0xff] %vm11098, %v11059
        %11104 = vst.msk [vmem:[#allocation3 + $0x28] sm:$0xff] %vm11098, %v11061
        %11105 = vst.msk [vmem:[#allocation3 + $0x30] sm:$0xff] %vm11098, %v11063
        %11106 = vst.msk [vmem:[#allocation3 + $0x38] sm:$0xff] %vm11098, %v11065
        %11107 = vst.msk [vmem:[#allocation3 + $0x40] sm:$0xff] %vm11098, %v11067
        %11108 = vst.msk [vmem:[#allocation3 + $0x48] sm:$0xff] %vm11098, %v11069
        %11109 = vst.msk [vmem:[#allocation3 + $0x50] sm:$0xff] %vm11098, %v11071
        %11110 = vst.msk [vmem:[#allocation3 + $0x58] sm:$0xff] %vm11098, %v11073
        %11111 = vst.msk [vmem:[#allocation3 + $0x60] sm:$0xff] %vm11098, %v11075
        %11112 = vst.msk [vmem:[#allocation3 + $0x68] sm:$0xff] %vm11098, %v11077
        %11113 = vst.msk [vmem:[#allocation3 + $0x70] sm:$0xff] %vm11098, %v11079
        %11114 = vst.msk [vmem:[#allocation3 + $0x78] sm:$0xff] %vm11098, %v11081
        %v11115 = vld [vmem:[%s2991] sm:$0xe]
        %v11116 = vld [vmem:[%s2991 + $0x4] sm:$0xf]
        %v11117 = vld [vmem:[%s2991 + $0x8] sm:$0x1]
        %v11118 = vld [vmem:[%s2991 + $0xc] sm:$0xe]
        %v11119 = vld [vmem:[%s2991 + $0x10] sm:$0xf]
        %v11120 = vld [vmem:[%s2991 + $0x14] sm:$0x1]
        %v11121 = vld [vmem:[%s2991 + $0x18] sm:$0xe]
        %v11122 = vld [vmem:[%s2991 + $0x1c] sm:$0xf]
        %v11123 = vld [vmem:[%s2991 + $0x20] sm:$0x1]
        %v11124 = vld [vmem:[%s2991 + $0x24] sm:$0xe]
        %v11125 = vld [vmem:[%s2991 + $0x28] sm:$0xf]
        %v11126 = vld [vmem:[%s2991 + $0x2c] sm:$0x1]
        %v11127 = vld [vmem:[%s2991 + $0x30] sm:$0xe]
        %v11128 = vld [vmem:[%s2991 + $0x34] sm:$0xf]
        %v11129 = vld [vmem:[%s2991 + $0x38] sm:$0x1]
        %v11130 = vld [vmem:[%s2991 + $0x3c] sm:$0xe]
        %v11131 = vld [vmem:[%s2991 + $0x40] sm:$0xf]
        %v11132 = vld [vmem:[%s2991 + $0x44] sm:$0x1]
        %v11133 = vld [vmem:[%s2991 + $0x48] sm:$0xe]
        %v11134 = vld [vmem:[%s2991 + $0x4c] sm:$0xf]
        %v11135 = vld [vmem:[%s2991 + $0x50] sm:$0x1]
        %v11136 = vld [vmem:[%s2991 + $0x54] sm:$0xe]
        %v11137 = vld [vmem:[%s2991 + $0x58] sm:$0xf]
        %v11138 = vld [vmem:[%s2991 + $0x5c] sm:$0x1]
        %v11139 = vld [vmem:[%s2991 + $0x60] sm:$0xe]
        %v11140 = vld [vmem:[%s2991 + $0x64] sm:$0xf]
        %v11141 = vld [vmem:[%s2991 + $0x68] sm:$0x1]
        %v11142 = vld [vmem:[%s2991 + $0x6c] sm:$0xe]
        %v11143 = vld [vmem:[%s2991 + $0x70] sm:$0xf]
        %v11144 = vld [vmem:[%s2991 + $0x74] sm:$0x1]
        %v11145 = vld [vmem:[%s2991 + $0x78] sm:$0xe]
        %v11146 = vld [vmem:[%s2991 + $0x7c] sm:$0xf]
        %v11147 = vld [vmem:[%s2991 + $0x80] sm:$0x1]
        %v11148 = vld [vmem:[%s2991 + $0x84] sm:$0xe]
        %v11149 = vld [vmem:[%s2991 + $0x88] sm:$0xf]
        %v11150 = vld [vmem:[%s2991 + $0x8c] sm:$0x1]
        %v11151 = vld [vmem:[%s2991 + $0x90] sm:$0xe]
        %v11152 = vld [vmem:[%s2991 + $0x94] sm:$0xf]
        %v11153 = vld [vmem:[%s2991 + $0x98] sm:$0x1]
        %v11154 = vld [vmem:[%s2991 + $0x9c] sm:$0xe]
        %v11155 = vld [vmem:[%s2991 + $0xa0] sm:$0xf]
        %v11156 = vld [vmem:[%s2991 + $0xa4] sm:$0x1]
        %v11157 = vld [vmem:[%s2991 + $0xa8] sm:$0xe]
        %v11158 = vld [vmem:[%s2991 + $0xac] sm:$0xf]
        %v11159 = vld [vmem:[%s2991 + $0xb0] sm:$0x1]
        %v11160 = vld [vmem:[%s2991 + $0xb4] sm:$0xe]
        %v11161 = vld [vmem:[%s2991 + $0xb8] sm:$0xf]
        %v11162 = vld [vmem:[%s2991 + $0xbc] sm:$0x1]
        %v11211 = vunpack.c.l.b16 %v11115
        %v11212 = vunpack.c.l.b16 %v11116
        %v11213 = vunpack.c.l.b16 %v11117
        %v11214 = vunpack.c.l.b16 %v11118
        %v11215 = vunpack.c.l.b16 %v11119
        %v11216 = vunpack.c.l.b16 %v11120
        %v11217 = vunpack.c.l.b16 %v11121
        %v11218 = vunpack.c.l.b16 %v11122
        %v11219 = vunpack.c.l.b16 %v11123
        %v11220 = vunpack.c.l.b16 %v11124
        %v11221 = vunpack.c.l.b16 %v11125
        %v11222 = vunpack.c.l.b16 %v11126
        %v11223 = vunpack.c.l.b16 %v11127
        %v11224 = vunpack.c.l.b16 %v11128
        %v11225 = vunpack.c.l.b16 %v11129
        %v11226 = vunpack.c.l.b16 %v11130
        %v11227 = vunpack.c.l.b16 %v11131
        %v11228 = vunpack.c.l.b16 %v11132
        %v11229 = vunpack.c.l.b16 %v11133
        %v11230 = vunpack.c.l.b16 %v11134
        %v11231 = vunpack.c.l.b16 %v11135
        %v11232 = vunpack.c.l.b16 %v11136
        %v11233 = vunpack.c.l.b16 %v11137
        %v11234 = vunpack.c.l.b16 %v11138
        %v11235 = vunpack.c.l.b16 %v11139
        %v11236 = vunpack.c.l.b16 %v11140
        %v11237 = vunpack.c.l.b16 %v11141
        %v11238 = vunpack.c.l.b16 %v11142
        %v11239 = vunpack.c.l.b16 %v11143
        %v11240 = vunpack.c.l.b16 %v11144
        %v11241 = vunpack.c.l.b16 %v11145
        %v11242 = vunpack.c.l.b16 %v11146
        %v11243 = vunpack.c.l.b16 %v11147
        %v11244 = vunpack.c.l.b16 %v11148
        %v11245 = vunpack.c.l.b16 %v11149
        %v11246 = vunpack.c.l.b16 %v11150
        %v11247 = vunpack.c.l.b16 %v11151
        %v11248 = vunpack.c.l.b16 %v11152
        %v11249 = vunpack.c.l.b16 %v11153
        %v11250 = vunpack.c.l.b16 %v11154
        %v11251 = vunpack.c.l.b16 %v11155
        %v11252 = vunpack.c.l.b16 %v11156
        %v11253 = vunpack.c.l.b16 %v11157
        %v11254 = vunpack.c.l.b16 %v11158
        %v11255 = vunpack.c.l.b16 %v11159
        %v11256 = vunpack.c.l.b16 %v11160
        %v11257 = vunpack.c.l.b16 %v11161
        %v11258 = vunpack.c.l.b16 %v11162
        %v11259 = vpack.c.b16 %v11212, %v11211
        %v11260 = vpack.c.b16 %v11213, %v11213
        %v11261 = vpack.c.b16 %v11215, %v11214
        %v11262 = vpack.c.b16 %v11216, %v11216
        %v11263 = vpack.c.b16 %v11218, %v11217
        %v11264 = vpack.c.b16 %v11219, %v11219
        %v11265 = vpack.c.b16 %v11221, %v11220
        %v11266 = vpack.c.b16 %v11222, %v11222
        %v11267 = vpack.c.b16 %v11224, %v11223
        %v11268 = vpack.c.b16 %v11225, %v11225
        %v11269 = vpack.c.b16 %v11227, %v11226
        %v11270 = vpack.c.b16 %v11228, %v11228
        %v11271 = vpack.c.b16 %v11230, %v11229
        %v11272 = vpack.c.b16 %v11231, %v11231
        %v11273 = vpack.c.b16 %v11233, %v11232
        %v11274 = vpack.c.b16 %v11234, %v11234
        %v11275 = vpack.c.b16 %v11236, %v11235
        %v11276 = vpack.c.b16 %v11237, %v11237
        %v11277 = vpack.c.b16 %v11239, %v11238
        %v11278 = vpack.c.b16 %v11240, %v11240
        %v11279 = vpack.c.b16 %v11242, %v11241
        %v11280 = vpack.c.b16 %v11243, %v11243
        %v11281 = vpack.c.b16 %v11245, %v11244
        %v11282 = vpack.c.b16 %v11246, %v11246
        %v11283 = vpack.c.b16 %v11248, %v11247
        %v11284 = vpack.c.b16 %v11249, %v11249
        %v11285 = vpack.c.b16 %v11251, %v11250
        %v11286 = vpack.c.b16 %v11252, %v11252
        %v11287 = vpack.c.b16 %v11254, %v11253
        %v11288 = vpack.c.b16 %v11255, %v11255
        %v11289 = vpack.c.b16 %v11257, %v11256
        %v11290 = vpack.c.b16 %v11258, %v11258
        %v11291 = vrot.slane %v11259, 1
        %v11292 = vrot.slane %v11260, 1
        %v11293 = vsel %vm1978, %v11291, %v11292
        %v11294 = vrot.slane %v11261, 1
        %v11295 = vrot.slane %v11262, 1
        %v11296 = vsel %vm1978, %v11294, %v11295
        %v11297 = vrot.slane %v11263, 1
        %v11298 = vrot.slane %v11264, 1
        %v11299 = vsel %vm1978, %v11297, %v11298
        %v11300 = vrot.slane %v11265, 1
        %v11301 = vrot.slane %v11266, 1
        %v11302 = vsel %vm1978, %v11300, %v11301
        %v11303 = vrot.slane %v11267, 1
        %v11304 = vrot.slane %v11268, 1
        %v11305 = vsel %vm1978, %v11303, %v11304
        %v11306 = vrot.slane %v11269, 1
        %v11307 = vrot.slane %v11270, 1
        %v11308 = vsel %vm1978, %v11306, %v11307
        %v11309 = vrot.slane %v11271, 1
        %v11310 = vrot.slane %v11272, 1
        %v11311 = vsel %vm1978, %v11309, %v11310
        %v11312 = vrot.slane %v11273, 1
        %v11313 = vrot.slane %v11274, 1
        %v11314 = vsel %vm1978, %v11312, %v11313
        %v11315 = vrot.slane %v11275, 1
        %v11316 = vrot.slane %v11276, 1
        %v11317 = vsel %vm1978, %v11315, %v11316
        %v11318 = vrot.slane %v11277, 1
        %v11319 = vrot.slane %v11278, 1
        %v11320 = vsel %vm1978, %v11318, %v11319
        %v11321 = vrot.slane %v11279, 1
        %v11322 = vrot.slane %v11280, 1
        %v11323 = vsel %vm1978, %v11321, %v11322
        %v11324 = vrot.slane %v11281, 1
        %v11325 = vrot.slane %v11282, 1
        %v11326 = vsel %vm1978, %v11324, %v11325
        %v11327 = vrot.slane %v11283, 1
        %v11328 = vrot.slane %v11284, 1
        %v11329 = vsel %vm1978, %v11327, %v11328
        %v11330 = vrot.slane %v11285, 1
        %v11331 = vrot.slane %v11286, 1
        %v11332 = vsel %vm1978, %v11330, %v11331
        %v11333 = vrot.slane %v11287, 1
        %v11334 = vrot.slane %v11288, 1
        %v11335 = vsel %vm1978, %v11333, %v11334
        %v11336 = vrot.slane %v11289, 1
        %v11337 = vrot.slane %v11290, 1
        %v11338 = vsel %vm1978, %v11336, %v11337
        %11339 = vrot.lane.b32.xlu0 %v11293, 96
        %v11340 = vpop.permute.xlu0 %11339
        %11341 = vrot.lane.b32.xlu0 %v11296, 96
        %v11342 = vpop.permute.xlu0 %11341
        %11343 = vrot.lane.b32.xlu0 %v11299, 96
        %v11344 = vpop.permute.xlu0 %11343
        %11345 = vrot.lane.b32.xlu0 %v11302, 96
        %v11346 = vpop.permute.xlu0 %11345
        %11347 = vrot.lane.b32.xlu0 %v11305, 96
        %v11348 = vpop.permute.xlu0 %11347
        %11349 = vrot.lane.b32.xlu0 %v11308, 96
        %v11350 = vpop.permute.xlu0 %11349
        %11351 = vrot.lane.b32.xlu0 %v11311, 96
        %v11352 = vpop.permute.xlu0 %11351
        %11353 = vrot.lane.b32.xlu0 %v11314, 96
        %v11354 = vpop.permute.xlu0 %11353
        %11355 = vrot.lane.b32.xlu0 %v11317, 96
        %v11356 = vpop.permute.xlu0 %11355
        %11357 = vrot.lane.b32.xlu0 %v11320, 96
        %v11358 = vpop.permute.xlu0 %11357
        %11359 = vrot.lane.b32.xlu0 %v11323, 96
        %v11360 = vpop.permute.xlu0 %11359
        %11361 = vrot.lane.b32.xlu0 %v11326, 96
        %v11362 = vpop.permute.xlu0 %11361
        %11363 = vrot.lane.b32.xlu0 %v11329, 96
        %v11364 = vpop.permute.xlu0 %11363
        %11365 = vrot.lane.b32.xlu0 %v11332, 96
        %v11366 = vpop.permute.xlu0 %11365
        %11367 = vrot.lane.b32.xlu0 %v11335, 96
        %v11368 = vpop.permute.xlu0 %11367
        %11369 = vrot.lane.b32.xlu0 %v11338, 96
        %v11370 = vpop.permute.xlu0 %11369
        %vm11387 = vcmask 884480
        %11388 = vst.msk [vmem:[#allocation3] sm:$0xff] %vm11387, %v11340
        %11389 = vst.msk [vmem:[#allocation3 + $0x8] sm:$0xff] %vm11387, %v11342
        %11390 = vst.msk [vmem:[#allocation3 + $0x10] sm:$0xff] %vm11387, %v11344
        %11391 = vst.msk [vmem:[#allocation3 + $0x18] sm:$0xff] %vm11387, %v11346
        %11392 = vst.msk [vmem:[#allocation3 + $0x20] sm:$0xff] %vm11387, %v11348
        %11393 = vst.msk [vmem:[#allocation3 + $0x28] sm:$0xff] %vm11387, %v11350
        %11394 = vst.msk [vmem:[#allocation3 + $0x30] sm:$0xff] %vm11387, %v11352
        %11395 = vst.msk [vmem:[#allocation3 + $0x38] sm:$0xff] %vm11387, %v11354
        %11396 = vst.msk [vmem:[#allocation3 + $0x40] sm:$0xff] %vm11387, %v11356
        %11397 = vst.msk [vmem:[#allocation3 + $0x48] sm:$0xff] %vm11387, %v11358
        %11398 = vst.msk [vmem:[#allocation3 + $0x50] sm:$0xff] %vm11387, %v11360
        %11399 = vst.msk [vmem:[#allocation3 + $0x58] sm:$0xff] %vm11387, %v11362
        %11400 = vst.msk [vmem:[#allocation3 + $0x60] sm:$0xff] %vm11387, %v11364
        %11401 = vst.msk [vmem:[#allocation3 + $0x68] sm:$0xff] %vm11387, %v11366
        %11402 = vst.msk [vmem:[#allocation3 + $0x70] sm:$0xff] %vm11387, %v11368
        %11403 = vst.msk [vmem:[#allocation3 + $0x78] sm:$0xff] %vm11387, %v11370
        %v11404 = vld [vmem:[#allocation3] sm:$0xff]
        %v11405 = vld [vmem:[#allocation3 + $0x8] sm:$0xff]
        %v11406 = vld [vmem:[#allocation3 + $0x10] sm:$0xff]
        %v11407 = vld [vmem:[#allocation3 + $0x18] sm:$0xff]
        %v11408 = vld [vmem:[#allocation3 + $0x20] sm:$0xff]
        %v11409 = vld [vmem:[#allocation3 + $0x28] sm:$0xff]
        %v11410 = vld [vmem:[#allocation3 + $0x30] sm:$0xff]
        %v11411 = vld [vmem:[#allocation3 + $0x38] sm:$0xff]
        %v11412 = vld [vmem:[#allocation3 + $0x40] sm:$0xff]
        %v11413 = vld [vmem:[#allocation3 + $0x48] sm:$0xff]
        %v11414 = vld [vmem:[#allocation3 + $0x50] sm:$0xff]
        %v11415 = vld [vmem:[#allocation3 + $0x58] sm:$0xff]
        %v11416 = vld [vmem:[#allocation3 + $0x60] sm:$0xff]
        %v11417 = vld [vmem:[#allocation3 + $0x68] sm:$0xff]
        %v11418 = vld [vmem:[#allocation3 + $0x70] sm:$0xff]
        %v11419 = vld [vmem:[#allocation3 + $0x78] sm:$0xff]
        %v11420 = vld [vmem:[%s9] sm:$0xf]
        %v11421 = vld [vmem:[%s9 + $0x4] sm:$0xf]
        %v11422 = vld [vmem:[%s9 + $0x8] sm:$0xf]
        %v11423 = vld [vmem:[%s9 + $0xc] sm:$0xf]
        %v11424 = vld [vmem:[%s9 + $0x10] sm:$0xf]
        %v11425 = vld [vmem:[%s9 + $0x14] sm:$0xf]
        %v11426 = vld [vmem:[%s9 + $0x18] sm:$0xf]
        %v11427 = vld [vmem:[%s9 + $0x1c] sm:$0xf]
        %v11428 = vld [vmem:[%s9 + $0x20] sm:$0xf]
        %v11429 = vld [vmem:[%s9 + $0x24] sm:$0xf]
        %v11430 = vld [vmem:[%s9 + $0x28] sm:$0xf]
        %v11431 = vld [vmem:[%s9 + $0x2c] sm:$0xf]
        %v11432 = vld [vmem:[%s9 + $0x30] sm:$0xf]
        %v11433 = vld [vmem:[%s9 + $0x34] sm:$0x3]
        %v11448 = vunpack.c.l.b16 %v11420
        %v11449 = vunpack.c.l.b16 %v11421
        %v11450 = vunpack.c.l.b16 %v11422
        %v11451 = vunpack.c.l.b16 %v11423
        %v11452 = vunpack.c.l.b16 %v11424
        %v11453 = vunpack.c.l.b16 %v11425
        %v11454 = vunpack.c.l.b16 %v11426
        %v11455 = vunpack.c.l.b16 %v11427
        %v11456 = vunpack.c.l.b16 %v11428
        %v11457 = vunpack.c.l.b16 %v11429
        %v11458 = vunpack.c.l.b16 %v11430
        %v11459 = vunpack.c.l.b16 %v11431
        %v11460 = vunpack.c.l.b16 %v11432
        %v11461 = vunpack.c.l.b16 %v11433
        %v11462 = vpack.c.b16 %v11449, %v11448
        %v11463 = vpack.c.b16 %v11451, %v11450
        %v11464 = vpack.c.b16 %v11453, %v11452
        %v11465 = vpack.c.b16 %v11455, %v11454
        %v11466 = vpack.c.b16 %v11457, %v11456
        %v11467 = vpack.c.b16 %v11459, %v11458
        %v11468 = vpack.c.b16 %v11461, %v11460
        %vm11475 = vcmask 883712
        %v11477 = vsel %vm11475, %v11404, 0
        %v11480 = vsel %vm11475, %v11405, 0
        %v11483 = vsel %vm11475, %v11406, 0
        %v11486 = vsel %vm11475, %v11407, 0
        %v11489 = vsel %vm11475, %v11408, 0
        %v11492 = vsel %vm11475, %v11409, 0
        %v11495 = vsel %vm11475, %v11410, 0
        %v11498 = vsel %vm11475, %v11411, 0
        %v11501 = vsel %vm11475, %v11412, 0
        %v11504 = vsel %vm11475, %v11413, 0
        %v11507 = vsel %vm11475, %v11414, 0
        %v11510 = vsel %vm11475, %v11415, 0
        %v11513 = vsel %vm11475, %v11416, 0
        %v11516 = vsel %vm11475, %v11417, 0
        %v11519 = vsel %vm11475, %v11418, 0
        %v11522 = vsel %vm11475, %v11419, 0
        %vm11524 = vcmask 1045504
        %v11526 = vsel %vm11524, %v11468, 0
        %11528 = vmatprep.subr.bf16.mxu0 0
        %11529 = vmatpush1.bf16.msra.mxu0 %v11462
        %11530 = vmatprep.subr.bf16.mxu0 0
        %11531 = vmatpush1.bf16.msra.mxu0 %v11463
        %11532 = vmatprep.subr.bf16.mxu0 0
        %11533 = vmatpush1.bf16.msra.mxu0 %v11464
        %11534 = vmatprep.subr.bf16.mxu0 0
        %11535 = vmatpush1.bf16.msra.mxu0 %v11465
        %11536 = vmatprep.subr.bf16.mxu0 0
        %11537 = vmatpush1.bf16.msra.mxu0 %v11466
        %11538 = vmatprep.subr.bf16.mxu0 0
        %11539 = vmatpush1.bf16.msra.mxu0 %v11467
        %11540 = vmatprep.subr.bf16.mxu0 0
        %11541 = vmatpush1.bf16.msra.mxu0 %v11526
        %11542 = vmatprep.subr.bf16.mxu0 0
        %11543 = vmatpush1.bf16.msra.mxu0 0
        %11544 = vmatprep.subr.bf16.mxu0 0
        %11545 = vmatpush1.bf16.msra.mxu0 0
        %11546 = vmatprep.subr.bf16.mxu0 0
        %11547 = vmatpush1.bf16.msra.mxu0 0
        %11548 = vmatprep.subr.bf16.mxu0 0
        %11549 = vmatpush1.bf16.msra.mxu0 0
        %11550 = vmatprep.subr.bf16.mxu0 0
        %11551 = vmatpush1.bf16.msra.mxu0 0
        %11552 = vmatprep.subr.bf16.mxu0 0
        %11553 = vmatpush1.bf16.msra.mxu0 0
        %11554 = vmatprep.subr.bf16.mxu0 0
        %11555 = vmatpush1.bf16.msra.mxu0 0
        %11556 = vmatprep.subr.bf16.mxu0 0
        %11557 = vmatpush1.bf16.msra.mxu0 0
        %11558 = vmatprep.subr.bf16.mxu0 0
        %11559 = vmatpush1.bf16.msra.mxu0 0
        %11560 = vmatprep.mubr.bf16.mxu0 0
        %11561 = vmatmul.mubr.bf16.gmra.mrb[0].mxu0 %v11477
        %v11562 = vpop.f32.mrb[0].mxu0
        %v11563 = vadd.f32 0.0, %v11562
        %v11564 = vpop.f32.mrb[0].mxu0
        %v11565 = vpop.f32.mrb[0].mxu0
        %v11566 = vadd.f32 0.0, %v11565
        %v11567 = vpop.f32.mrb[0].mxu0
        %11568 = vmatprep.mubr.bf16.mxu0 0
        %11569 = vmatmul.mubr.bf16.gmra.mrb[0].mxu0 %v11480
        %v11570 = vpop.f32.mrb[0].mxu0
        %v11571 = vadd.f32 0.0, %v11570
        %v11572 = vpop.f32.mrb[0].mxu0
        %v11573 = vpop.f32.mrb[0].mxu0
        %v11574 = vadd.f32 0.0, %v11573
        %v11575 = vpop.f32.mrb[0].mxu0
        %11576 = vmatprep.mubr.bf16.mxu0 0
        %11577 = vmatmul.mubr.bf16.gmra.mrb[0].mxu0 %v11483
        %v11578 = vpop.f32.mrb[0].mxu0
        %v11579 = vadd.f32 0.0, %v11578
        %v11580 = vpop.f32.mrb[0].mxu0
        %v11581 = vpop.f32.mrb[0].mxu0
        %v11582 = vadd.f32 0.0, %v11581
        %v11583 = vpop.f32.mrb[0].mxu0
        %11584 = vmatprep.mubr.bf16.mxu0 0
        %11585 = vmatmul.mubr.bf16.gmra.mrb[0].mxu0 %v11486
        %v11586 = vpop.f32.mrb[0].mxu0
        %v11587 = vadd.f32 0.0, %v11586
        %v11588 = vpop.f32.mrb[0].mxu0
        %v11589 = vpop.f32.mrb[0].mxu0
        %v11590 = vadd.f32 0.0, %v11589
        %v11591 = vpop.f32.mrb[0].mxu0
        %11592 = vmatprep.mubr.bf16.mxu0 0
        %11593 = vmatmul.mubr.bf16.gmra.mrb[0].mxu0 %v11489
        %v11594 = vpop.f32.mrb[0].mxu0
        %v11595 = vadd.f32 0.0, %v11594
        %v11596 = vpop.f32.mrb[0].mxu0
        %v11597 = vpop.f32.mrb[0].mxu0
        %v11598 = vadd.f32 0.0, %v11597
        %v11599 = vpop.f32.mrb[0].mxu0
        %11600 = vmatprep.mubr.bf16.mxu0 0
        %11601 = vmatmul.mubr.bf16.gmra.mrb[0].mxu0 %v11492
        %v11602 = vpop.f32.mrb[0].mxu0
        %v11603 = vadd.f32 0.0, %v11602
        %v11604 = vpop.f32.mrb[0].mxu0
        %v11605 = vpop.f32.mrb[0].mxu0
        %v11606 = vadd.f32 0.0, %v11605
        %v11607 = vpop.f32.mrb[0].mxu0
        %11608 = vmatprep.mubr.bf16.mxu0 0
        %11609 = vmatmul.mubr.bf16.gmra.mrb[0].mxu0 %v11495
        %v11610 = vpop.f32.mrb[0].mxu0
        %v11611 = vadd.f32 0.0, %v11610
        %v11612 = vpop.f32.mrb[0].mxu0
        %v11613 = vpop.f32.mrb[0].mxu0
        %v11614 = vadd.f32 0.0, %v11613
        %v11615 = vpop.f32.mrb[0].mxu0
        %11616 = vmatprep.mubr.bf16.mxu0 0
        %11617 = vmatmul.mubr.bf16.gmra.mrb[0].mxu0 %v11498
        %v11618 = vpop.f32.mrb[0].mxu0
        %v11619 = vadd.f32 0.0, %v11618
        %v11620 = vpop.f32.mrb[0].mxu0
        %v11621 = vpop.f32.mrb[0].mxu0
        %v11622 = vadd.f32 0.0, %v11621
        %v11623 = vpop.f32.mrb[0].mxu0
        %11624 = vmatprep.mubr.bf16.mxu0 0
        %11625 = vmatmul.mubr.bf16.gmra.mrb[0].mxu0 %v11501
        %v11626 = vpop.f32.mrb[0].mxu0
        %v11627 = vadd.f32 0.0, %v11626
        %v11628 = vpop.f32.mrb[0].mxu0
        %v11629 = vpop.f32.mrb[0].mxu0
        %v11630 = vadd.f32 0.0, %v11629
        %v11631 = vpop.f32.mrb[0].mxu0
        %11632 = vmatprep.mubr.bf16.mxu0 0
        %11633 = vmatmul.mubr.bf16.gmra.mrb[0].mxu0 %v11504
        %v11634 = vpop.f32.mrb[0].mxu0
        %v11635 = vadd.f32 0.0, %v11634
        %v11636 = vpop.f32.mrb[0].mxu0
        %v11637 = vpop.f32.mrb[0].mxu0
        %v11638 = vadd.f32 0.0, %v11637
        %v11639 = vpop.f32.mrb[0].mxu0
        %11640 = vmatprep.mubr.bf16.mxu0 0
        %11641 = vmatmul.mubr.bf16.gmra.mrb[0].mxu0 %v11507
        %v11642 = vpop.f32.mrb[0].mxu0
        %v11643 = vadd.f32 0.0, %v11642
        %v11644 = vpop.f32.mrb[0].mxu0
        %v11645 = vpop.f32.mrb[0].mxu0
        %v11646 = vadd.f32 0.0, %v11645
        %v11647 = vpop.f32.mrb[0].mxu0
        %11648 = vmatprep.mubr.bf16.mxu0 0
        %11649 = vmatmul.mubr.bf16.gmra.mrb[0].mxu0 %v11510
        %v11650 = vpop.f32.mrb[0].mxu0
        %v11651 = vadd.f32 0.0, %v11650
        %v11652 = vpop.f32.mrb[0].mxu0
        %v11653 = vpop.f32.mrb[0].mxu0
        %v11654 = vadd.f32 0.0, %v11653
        %v11655 = vpop.f32.mrb[0].mxu0
        %11656 = vmatprep.mubr.bf16.mxu0 0
        %11657 = vmatmul.mubr.bf16.gmra.mrb[0].mxu0 %v11513
        %v11658 = vpop.f32.mrb[0].mxu0
        %v11659 = vadd.f32 0.0, %v11658
        %v11660 = vpop.f32.mrb[0].mxu0
        %v11661 = vpop.f32.mrb[0].mxu0
        %v11662 = vadd.f32 0.0, %v11661
        %v11663 = vpop.f32.mrb[0].mxu0
        %11664 = vmatprep.mubr.bf16.mxu0 0
        %11665 = vmatmul.mubr.bf16.gmra.mrb[0].mxu0 %v11516
        %v11666 = vpop.f32.mrb[0].mxu0
        %v11667 = vadd.f32 0.0, %v11666
        %v11668 = vpop.f32.mrb[0].mxu0
        %v11669 = vpop.f32.mrb[0].mxu0
        %v11670 = vadd.f32 0.0, %v11669
        %v11671 = vpop.f32.mrb[0].mxu0
        %11672 = vmatprep.mubr.bf16.mxu0 0
        %11673 = vmatmul.mubr.bf16.gmra.mrb[0].mxu0 %v11519
        %v11674 = vpop.f32.mrb[0].mxu0
        %v11675 = vadd.f32 0.0, %v11674
        %v11676 = vpop.f32.mrb[0].mxu0
        %v11677 = vpop.f32.mrb[0].mxu0
        %v11678 = vadd.f32 0.0, %v11677
        %v11679 = vpop.f32.mrb[0].mxu0
        %11680 = vmatprep.mubr.bf16.mxu0 0
        %11681 = vmatmul.mubr.bf16.gmra.mrb[0].mxu0 %v11522
        %v11682 = vpop.f32.mrb[0].mxu0
        %v11683 = vadd.f32 0.0, %v11682
        %v11684 = vpop.f32.mrb[0].mxu0
        %v11685 = vpop.f32.mrb[0].mxu0
        %v11686 = vadd.f32 0.0, %v11685
        %v11687 = vpop.f32.mrb[0].mxu0
        %11688 = vdwg.mxu0
        %11721 = vrot.lane.b32.xlu0 %v11563, 12
        %v11722 = vpop.permute.xlu0 %11721
        %11723 = vrot.lane.b32.xlu0 %v11566, 12
        %v11724 = vpop.permute.xlu0 %11723
        %11725 = vrot.lane.b32.xlu0 %v11571, 12
        %v11726 = vpop.permute.xlu0 %11725
        %11727 = vrot.lane.b32.xlu0 %v11574, 12
        %v11728 = vpop.permute.xlu0 %11727
        %11729 = vrot.lane.b32.xlu0 %v11579, 12
        %v11730 = vpop.permute.xlu0 %11729
        %11731 = vrot.lane.b32.xlu0 %v11582, 12
        %v11732 = vpop.permute.xlu0 %11731
        %11733 = vrot.lane.b32.xlu0 %v11587, 12
        %v11734 = vpop.permute.xlu0 %11733
        %11735 = vrot.lane.b32.xlu0 %v11590, 12
        %v11736 = vpop.permute.xlu0 %11735
        %11737 = vrot.lane.b32.xlu0 %v11595, 12
        %v11738 = vpop.permute.xlu0 %11737
        %11739 = vrot.lane.b32.xlu0 %v11598, 12
        %v11740 = vpop.permute.xlu0 %11739
        %11741 = vrot.lane.b32.xlu0 %v11603, 12
        %v11742 = vpop.permute.xlu0 %11741
        %11743 = vrot.lane.b32.xlu0 %v11606, 12
        %v11744 = vpop.permute.xlu0 %11743
        %11745 = vrot.lane.b32.xlu0 %v11611, 12
        %v11746 = vpop.permute.xlu0 %11745
        %11747 = vrot.lane.b32.xlu0 %v11614, 12
        %v11748 = vpop.permute.xlu0 %11747
        %11749 = vrot.lane.b32.xlu0 %v11619, 12
        %v11750 = vpop.permute.xlu0 %11749
        %11751 = vrot.lane.b32.xlu0 %v11622, 12
        %v11752 = vpop.permute.xlu0 %11751
        %11753 = vrot.lane.b32.xlu0 %v11627, 12
        %v11754 = vpop.permute.xlu0 %11753
        %11755 = vrot.lane.b32.xlu0 %v11630, 12
        %v11756 = vpop.permute.xlu0 %11755
        %11757 = vrot.lane.b32.xlu0 %v11635, 12
        %v11758 = vpop.permute.xlu0 %11757
        %11759 = vrot.lane.b32.xlu0 %v11638, 12
        %v11760 = vpop.permute.xlu0 %11759
        %11761 = vrot.lane.b32.xlu0 %v11643, 12
        %v11762 = vpop.permute.xlu0 %11761
        %11763 = vrot.lane.b32.xlu0 %v11646, 12
        %v11764 = vpop.permute.xlu0 %11763
        %11765 = vrot.lane.b32.xlu0 %v11651, 12
        %v11766 = vpop.permute.xlu0 %11765
        %11767 = vrot.lane.b32.xlu0 %v11654, 12
        %v11768 = vpop.permute.xlu0 %11767
        %11769 = vrot.lane.b32.xlu0 %v11659, 12
        %v11770 = vpop.permute.xlu0 %11769
        %11771 = vrot.lane.b32.xlu0 %v11662, 12
        %v11772 = vpop.permute.xlu0 %11771
        %11773 = vrot.lane.b32.xlu0 %v11667, 12
        %v11774 = vpop.permute.xlu0 %11773
        %11775 = vrot.lane.b32.xlu0 %v11670, 12
        %v11776 = vpop.permute.xlu0 %11775
        %11777 = vrot.lane.b32.xlu0 %v11675, 12
        %v11778 = vpop.permute.xlu0 %11777
        %11779 = vrot.lane.b32.xlu0 %v11678, 12
        %v11780 = vpop.permute.xlu0 %11779
        %11781 = vrot.lane.b32.xlu0 %v11683, 12
        %v11782 = vpop.permute.xlu0 %11781
        %11783 = vrot.lane.b32.xlu0 %v11686, 12
        %v11784 = vpop.permute.xlu0 %11783
        %11817 = vst.msk [vmem:[%s352] sm:$0xff] %vm2252, %v11722
        %11818 = vst.msk [vmem:[%s352 + $0x8] sm:$0xff] %vm2252, %v11724
        %11819 = vst.msk [vmem:[%s352 + $0x10] sm:$0xff] %vm2252, %v11726
        %11820 = vst.msk [vmem:[%s352 + $0x18] sm:$0xff] %vm2252, %v11728
        %11821 = vst.msk [vmem:[%s352 + $0x20] sm:$0xff] %vm2252, %v11730
        %11822 = vst.msk [vmem:[%s352 + $0x28] sm:$0xff] %vm2252, %v11732
        %11823 = vst.msk [vmem:[%s352 + $0x30] sm:$0xff] %vm2252, %v11734
        %11824 = vst.msk [vmem:[%s352 + $0x38] sm:$0xff] %vm2252, %v11736
        %11825 = vst.msk [vmem:[%s352 + $0x40] sm:$0xff] %vm2252, %v11738
        %11826 = vst.msk [vmem:[%s352 + $0x48] sm:$0xff] %vm2252, %v11740
        %11827 = vst.msk [vmem:[%s352 + $0x50] sm:$0xff] %vm2252, %v11742
        %11828 = vst.msk [vmem:[%s352 + $0x58] sm:$0xff] %vm2252, %v11744
        %11829 = vst.msk [vmem:[%s352 + $0x60] sm:$0xff] %vm2252, %v11746
        %11830 = vst.msk [vmem:[%s352 + $0x68] sm:$0xff] %vm2252, %v11748
        %11831 = vst.msk [vmem:[%s352 + $0x70] sm:$0xff] %vm2252, %v11750
        %11832 = vst.msk [vmem:[%s352 + $0x78] sm:$0xff] %vm2252, %v11752
        %11833 = vst.msk [vmem:[%s352 + $0x80] sm:$0xff] %vm2252, %v11754
        %11834 = vst.msk [vmem:[%s352 + $0x88] sm:$0xff] %vm2252, %v11756
        %11835 = vst.msk [vmem:[%s352 + $0x90] sm:$0xff] %vm2252, %v11758
        %11836 = vst.msk [vmem:[%s352 + $0x98] sm:$0xff] %vm2252, %v11760
        %11837 = vst.msk [vmem:[%s352 + $0xa0] sm:$0xff] %vm2252, %v11762
        %11838 = vst.msk [vmem:[%s352 + $0xa8] sm:$0xff] %vm2252, %v11764
        %11839 = vst.msk [vmem:[%s352 + $0xb0] sm:$0xff] %vm2252, %v11766
        %11840 = vst.msk [vmem:[%s352 + $0xb8] sm:$0xff] %vm2252, %v11768
        %11841 = vst.msk [vmem:[%s352 + $0xc0] sm:$0xff] %vm2252, %v11770
        %11842 = vst.msk [vmem:[%s352 + $0xc8] sm:$0xff] %vm2252, %v11772
        %11843 = vst.msk [vmem:[%s352 + $0xd0] sm:$0xff] %vm2252, %v11774
        %11844 = vst.msk [vmem:[%s352 + $0xd8] sm:$0xff] %vm2252, %v11776
        %11845 = vst.msk [vmem:[%s352 + $0xe0] sm:$0xff] %vm2252, %v11778
        %11846 = vst.msk [vmem:[%s352 + $0xe8] sm:$0xff] %vm2252, %v11780
        %11847 = vst.msk [vmem:[%s352 + $0xf0] sm:$0xff] %vm2252, %v11782
        %11848 = vst.msk [vmem:[%s352 + $0xf8] sm:$0xff] %vm2252, %v11784
        %s11849 = sand.u32 %s247, 1
        %s11850 = scalar_lea.sflag [#allocation5], %s11849
        %s11851 = sand.u32 %s247, 1
        %s11852 = smul.addr %s11851, 256
        %s11853 = scalar_lea.vmem [#allocation4], %s11852
        // Predicated region
        $region61: #{tpu_custom_call.1} parent=59 // pred_check
          %p11854 = pneg %p257
        $region62: #{tpu_custom_call.1} parent=59 // pred_check_branch
          %11856 = sbr.rel (%p11854) target = $region64
        $region63: #{tpu_custom_call.1} parent=59 // pred_region
          %s11858 = ssub.s32 4096, 4096
          %11859 = vsyncadd %s11850, %s11858
          %s11860 = smul.addr %s24, 32
          %s11861 = smul.addr %s11860, 128
          %s11862 = scalar_lea.hbm %s10, %s11861
          %s11863 = sshll.u32 %s11853, 4
          %s11864 = int_to_ptr.vmem [resolvable:$true] %s11863
          %11869 = dma.vmem_to_hbm [thread:$0]  %s11864, 4096, %s11862, %s11850, 128, 128, 8
        $region64: #{tpu_custom_call.1} parent=59 // pred_fallthru
          _
      $region60: #{tpu_custom_call.1} parent=5 // pred_fallthru
        _
      %p11870 = scmp.le.s32.totalorder 2, %s19
      // Predicated region
      $region65: #{tpu_custom_call.1} parent=5 // pred_check
        %p11871 = pneg %p11870
      $region66: #{tpu_custom_call.1} parent=5 // pred_check_branch
        %11873 = sbr.rel (%p11871) target = $region68
      $region67: #{tpu_custom_call.1} parent=5 // pred_region
        %s11874 = ssub.s32 %s19, 2
        // Predicated region
        $region69: #{tpu_custom_call.1} parent=67 // pred_check
          %p11875 = pneg %p263
        $region70: #{tpu_custom_call.1} parent=67 // pred_check_branch
          %11877 = sbr.rel (%p11875) target = $region72
        $region71: #{tpu_custom_call.1} parent=67 // pred_region
          %s11878 = sand.u32 %s248, 1
          %s11879 = scalar_lea.sflag [#allocation5], %s11878
          %s11880 = sand.u32 %s248, 1
          %s11881 = smul.addr %s11880, 256
          %s11882 = scalar_lea.vmem [#allocation4], %s11881
          %11883 = dma.done %s11879, 4096
        $region72: #{tpu_custom_call.1} parent=67 // pred_fallthru
          _
      $region68: #{tpu_custom_call.1} parent=5 // pred_fallthru
        _
    $region6: #{tpu_custom_call.1} parent=1 // loop_footer
      %s23 = sadd.s32 1, %s19
    $region7: #{tpu_custom_call.1} parent=1 // loop_footer_branch
      %18 = sbr.rel target = $region3
    $region8: #{tpu_custom_call.1} parent=1 // loop_exit
      _
    %11884 = vsyncpa [#allocation5], 1
    %s11885 = scalar_lea.sflag [#allocation5], 1
    %11886 = vsyncpa %s11885, 1

</llo_original>
